<compile_context>
chip_gen: v7x
topology: tpu7x:2x2x1
jax: 0.10.0
libtpu: 0.0.40
codegen_flags: <defaults>
</compile_context>

<pallas_src>
import functools

import jax
import jax.numpy as jnp
from jax.experimental import pallas as pl
from jax.experimental.pallas import tpu as pltpu


# ----------------------------------------------------------------------------
# Synthesized model dimensions (small, but lane-dense: feature dims = 128).
# ----------------------------------------------------------------------------
F = 128      # spectrogram frequency bins per frame
D = 128      # token dimension
H = 128      # hidden dimension
T0 = 8       # number of tokens produced by spec_enc (initial frames)
T_CTX = 4    # t_context_length  (token_generator context)
S_CTX = 3    # s_context_length  (spec_dec window = S_CTX + 1 tokens)


def _gelu(x):
    # tanh-approx GELU (mul/add/tanh only -> guaranteed Mosaic lowering).
    # TODO(synk): real submodules are ctor args and not visible; if they use
    # PyTorch nn.GELU() (exact erf form), swap in the erf formulation.
    c = 0.7978845608028654  # sqrt(2/pi)
    return 0.5 * x * (1.0 + jnp.tanh(c * (x + 0.044715 * (x * x * x))))


# ----------------------------------------------------------------------------
# Fused Pallas kernel: spec_enc -> autoregressive token loop -> spec_dec.
# ----------------------------------------------------------------------------
def _music_generator_kernel(
    spec_ref,                       # (T0, F)            f32
    we1_ref, we2_ref,               # (F, H), (H, D)     bf16
    be1_ref, be2_ref,               # (1, H), (1, D)     f32
    wg1_ref, wg2_ref,               # (T_CTX, D, H), (H, D)     bf16
    bg1_ref, bg2_ref,               # (1, H), (1, D)     f32
    wd1_ref, wd2_ref,               # (S_CTX+1, D, H), (H, F)   bf16
    bd1_ref, bd2_ref,               # (1, H), (1, F)     f32
    out_ref,                        # (L, F)             f32
    tok_ref,                        # scratch (>= T0+L, D) f32  -- token buffer
    *, target_length):
    # ---- spec_enc: two fused dense layers; hidden never leaves the chip ----
    x = spec_ref[...].astype(jnp.bfloat16)
    h = jnp.dot(x, we1_ref[...], preferred_element_type=jnp.float32)
    h = _gelu(h + be1_ref[...])
    t0 = jnp.dot(h.astype(jnp.bfloat16), we2_ref[...],
                 preferred_element_type=jnp.float32) + be2_ref[...]
    tok_ref[0:T0, :] = t0                                   # tokens[0:T0]

    # ---- autoregressive generation, statically unrolled -------------------
    # (target_length is a static Python int; static slices only -> no dynamic
    #  sublane indexing, everything lowers to plain vld/vst + MXU pushes.)
    for i in range(target_length):
        # token_generator( tokens[i : i + T_CTX] )
        ctx = tok_ref[i:i + T_CTX, :].astype(jnp.bfloat16)   # (T_CTX, D)
        hg = bg1_ref[...]                                    # (1, H) f32
        for p in range(T_CTX):                               # == Linear over
            hg = hg + jnp.dot(ctx[p:p + 1, :], wg1_ref[p],   # flattened ctx
                              preferred_element_type=jnp.float32)
        hg = _gelu(hg)
        pred = jnp.dot(hg.astype(jnp.bfloat16), wg2_ref[...],
                       preferred_element_type=jnp.float32) + bg2_ref[...]
        tok_ref[T0 + i:T0 + i + 1, :] = pred                 # torch.cat emu

        # spec_dec on spec_inputs[i] = tokens[-(S_CTX+1):]  (window-local
        # decoder, so decoding per step is identical to decoding the stack)
        lo = T0 + i - S_CTX
        win = tok_ref[lo:T0 + i + 1, :].astype(jnp.bfloat16)  # (S_CTX+1, D)
        hd = bd1_ref[...]
        for p in range(S_CTX + 1):
            hd = hd + jnp.dot(win[p:p + 1, :], wd1_ref[p],
                              preferred_element_type=jnp.float32)
        hd = _gelu(hd)
        frame = jnp.dot(hd.astype(jnp.bfloat16), wd2_ref[...],
                        preferred_element_type=jnp.float32) + bd2_ref[...]
        out_ref[i:i + 1, :] = frame.astype(out_ref.dtype)


def music_generator_forward(spec, params, *, target_length):
    """spec: (T0, F) f32  ->  decoded frames (target_length, F) f32."""
    bf = lambda w: w.astype(jnp.bfloat16)   # cast MXU operands once, biases f32
    args = (
        spec,
        bf(params["we1"]), bf(params["we2"]), params["be1"], params["be2"],
        bf(params["wg1"]), bf(params["wg2"]), params["bg1"], params["bg2"],
        bf(params["wd1"]), bf(params["wd2"]), params["bd1"], params["bd2"],
    )
    n_tok = T0 + target_length
    n_tok_pad = ((n_tok + 7) // 8) * 8      # sublane-align the token buffer
    vmem = pl.BlockSpec(memory_space=pltpu.MemorySpace.VMEM)
    return pl.pallas_call(
        functools.partial(_music_generator_kernel, target_length=target_length),
        out_shape=jax.ShapeDtypeStruct((target_length, F), jnp.float32),
        in_specs=[vmem] * len(args),
        out_specs=vmem,
        scratch_shapes=[pltpu.VMEM((n_tok_pad, D), jnp.float32)],
    )(*args)


# ----------------------------------------------------------------------------
# Deterministic synthetic parameters (no checkpoint load).
# ----------------------------------------------------------------------------
def init_params(key):
    ks = jax.random.split(key, 12)

    def u(k, shape, fan_in):
        s = 1.0 / jnp.sqrt(fan_in)
        return jax.random.uniform(k, shape, jnp.float32, -s, s)

    return {
        # spec_enc: frame-wise MLP  F -> H -> D
        "we1": u(ks[0], (F, H), F),              "be1": u(ks[1], (1, H), F),
        "we2": u(ks[2], (H, D), H),              "be2": u(ks[3], (1, D), H),
        # token_generator: Linear over flattened (T_CTX, D) context -> H -> D
        "wg1": u(ks[4], (T_CTX, D, H), T_CTX * D),
        "bg1": u(ks[5], (1, H), T_CTX * D),
        "wg2": u(ks[6], (H, D), H),              "bg2": u(ks[7], (1, D), H),
        # spec_dec: Linear over flattened (S_CTX+1, D) window -> H -> F
        "wd1": u(ks[8], (S_CTX + 1, D, H), (S_CTX + 1) * D),
        "bd1": u(ks[9], (1, H), (S_CTX + 1) * D),
        "wd2": u(ks[10], (H, F), H),             "bd2": u(ks[11], (1, F), H),
    }


# ----------------------------------------------------------------------------
# Pure-JAX reference mirroring Music_generator.forward step by step.
# (Same bf16-in / f32-accumulate policy as the kernel.)
# ----------------------------------------------------------------------------
def _dense(x, w, b):
    return jnp.dot(x.astype(jnp.bfloat16), w.astype(jnp.bfloat16),
                   preferred_element_type=jnp.float32) + b


def _spec_enc_ref(spec, p):
    h = _gelu(_dense(spec, p["we1"], p["be1"]))
    return _dense(h, p["we2"], p["be2"])                     # (T0, D)


def _token_generator_ref(ctx, p):
    hg = p["bg1"]
    for q in range(T_CTX):
        hg = hg + jnp.dot(ctx[q:q + 1].astype(jnp.bfloat16),
                          p["wg1"][q].astype(jnp.bfloat16),
                          preferred_element_type=jnp.float32)
    return _dense(_gelu(hg), p["wg2"], p["bg2"])             # (1, D)


def _spec_dec_ref(spec_inputs, p):
    rows = []
    for i in range(spec_inputs.shape[0]):
        hd = p["bd1"]
        for q in range(S_CTX + 1):
            hd = hd + jnp.dot(spec_inputs[i, q:q + 1].astype(jnp.bfloat16),
                              p["wd1"][q].astype(jnp.bfloat16),
                              preferred_element_type=jnp.float32)
        rows.append(_dense(_gelu(hd), p["wd2"], p["bd2"]))
    return jnp.concatenate(rows, axis=0)                     # (L, F)


def music_generator_reference(spec, params, *, target_length):
    tokens = _spec_enc_ref(spec, params)           # spec_enc(spec.unsqueeze(0))
    spec_inputs = []
    for i in range(target_length):
        pred = _token_generator_ref(tokens[i:i + T_CTX], params)
        tokens = jnp.concatenate([tokens, pred], axis=0)     # torch.cat
        spec_inputs.append(tokens[-1 - S_CTX:])              # last s_ctx+1
    spec_inputs = jnp.stack(spec_inputs)                     # (L, S_CTX+1, D)
    return _spec_dec_ref(spec_inputs, params)


if __name__ == "__main__":
    key = jax.random.PRNGKey(0)
    kx, kp = jax.random.split(key)

    spec = jax.random.normal(kx, (T0, F), jnp.float32)       # (8, 128)
    params = init_params(kp)
    target_length = 8

    fwd = jax.jit(functools.partial(music_generator_forward,
                                    target_length=target_length))
    y = jax.block_until_ready(fwd(spec, params))

    y_ref = music_generator_reference(spec, params, target_length=target_length)
    assert y.shape == (target_length, F), y.shape
    max_err = float(jnp.max(jnp.abs(y - y_ref)))
    assert max_err < 1e-3, max_err

    print("KERNEL_OK")
</pallas_src>

<mosaic_0001>
module attributes {stable_mosaic.version = 11 : i64} {
  func.func @_music_generator_kernel(%arg0: memref<8x128xf32, #tpu.memory_space<vmem>>, %arg1: memref<128x128xbf16, #tpu.memory_space<vmem>>, %arg2: memref<128x128xbf16, #tpu.memory_space<vmem>>, %arg3: memref<1x128xf32, #tpu.memory_space<vmem>>, %arg4: memref<1x128xf32, #tpu.memory_space<vmem>>, %arg5: memref<4x128x128xbf16, #tpu.memory_space<vmem>>, %arg6: memref<128x128xbf16, #tpu.memory_space<vmem>>, %arg7: memref<1x128xf32, #tpu.memory_space<vmem>>, %arg8: memref<1x128xf32, #tpu.memory_space<vmem>>, %arg9: memref<4x128x128xbf16, #tpu.memory_space<vmem>>, %arg10: memref<128x128xbf16, #tpu.memory_space<vmem>>, %arg11: memref<1x128xf32, #tpu.memory_space<vmem>>, %arg12: memref<1x128xf32, #tpu.memory_space<vmem>>, %arg13: memref<8x128xf32, #tpu.memory_space<vmem>>, %arg14: memref<16x128xf32, #tpu.memory_space<vmem>>) attributes {dimension_semantics = [], scalar_prefetch = 0 : i64, scratch_operands = 1 : i64, tpu.core_type = #tpu.core_type<tc>} {
    %c0 = arith.constant 0 : index
    %c0_0 = arith.constant 0 : index
    %0 = vector.load %arg0[%c0, %c0_0] : memref<8x128xf32, #tpu.memory_space<vmem>>, vector<8x128xf32>
    %1 = arith.truncf %0 : vector<8x128xf32> to vector<8x128xbf16>
    %c0_1 = arith.constant 0 : index
    %c0_2 = arith.constant 0 : index
    %2 = vector.load %arg1[%c0_1, %c0_2] : memref<128x128xbf16, #tpu.memory_space<vmem>>, vector<128x128xbf16>
    %cst = arith.constant dense<0.000000e+00> : vector<8x128xf32>
    %3 = tpu.matmul %1, %2, %cst {dimension_numbers = #tpu.dot_dimension_numbers<[1], [0], [0], [1], [0, 0, 1, 1], [], []>} : vector<8x128xbf16>, vector<128x128xbf16>, vector<8x128xf32> -> vector<8x128xf32>
    %c0_3 = arith.constant 0 : index
    %c0_4 = arith.constant 0 : index
    %4 = vector.load %arg3[%c0_3, %c0_4] : memref<1x128xf32, #tpu.memory_space<vmem>>, vector<1x128xf32>
    %5 = vector.broadcast %4 : vector<1x128xf32> to vector<8x128xf32>
    %6 = arith.addf %3, %5 : vector<8x128xf32>
    %cst_5 = arith.constant 5.000000e-01 : f32
    %7 = vector.broadcast %cst_5 : f32 to vector<8x128xf32>
    %8 = arith.mulf %7, %6 : vector<8x128xf32>
    %9 = arith.mulf %6, %6 : vector<8x128xf32>
    %10 = arith.mulf %9, %6 : vector<8x128xf32>
    %cst_6 = arith.constant 4.471500e-02 : f32
    %11 = vector.broadcast %cst_6 : f32 to vector<8x128xf32>
    %12 = arith.mulf %11, %10 : vector<8x128xf32>
    %13 = arith.addf %6, %12 : vector<8x128xf32>
    %cst_7 = arith.constant 0.797884583 : f32
    %14 = vector.broadcast %cst_7 : f32 to vector<8x128xf32>
    %15 = arith.mulf %14, %13 : vector<8x128xf32>
    %16 = math.tanh %15 : vector<8x128xf32>
    %cst_8 = arith.constant 1.000000e+00 : f32
    %17 = vector.broadcast %cst_8 : f32 to vector<8x128xf32>
    %18 = arith.addf %17, %16 : vector<8x128xf32>
    %19 = arith.mulf %8, %18 : vector<8x128xf32>
    %20 = arith.truncf %19 : vector<8x128xf32> to vector<8x128xbf16>
    %c0_9 = arith.constant 0 : index
    %c0_10 = arith.constant 0 : index
    %21 = vector.load %arg2[%c0_9, %c0_10] : memref<128x128xbf16, #tpu.memory_space<vmem>>, vector<128x128xbf16>
    %cst_11 = arith.constant dense<0.000000e+00> : vector<8x128xf32>
    %22 = tpu.matmul %20, %21, %cst_11 {dimension_numbers = #tpu.dot_dimension_numbers<[1], [0], [0], [1], [0, 0, 1, 1], [], []>} : vector<8x128xbf16>, vector<128x128xbf16>, vector<8x128xf32> -> vector<8x128xf32>
    %c0_12 = arith.constant 0 : index
    %c0_13 = arith.constant 0 : index
    %23 = vector.load %arg4[%c0_12, %c0_13] : memref<1x128xf32, #tpu.memory_space<vmem>>, vector<1x128xf32>
    %24 = vector.broadcast %23 : vector<1x128xf32> to vector<8x128xf32>
    %25 = arith.addf %22, %24 : vector<8x128xf32>
    %c0_14 = arith.constant 0 : index
    %c0_15 = arith.constant 0 : index
    %26 = vector.load %arg14[%c0_14, %c0_15] : memref<16x128xf32, #tpu.memory_space<vmem>>, vector<8x128xf32>
    tpu.vector_store %arg14[%c0_14, %c0_15], %25 {strides = array<i32>} : memref<16x128xf32, #tpu.memory_space<vmem>>, vector<8x128xf32>,
    %c0_16 = arith.constant 0 : index
    %c0_17 = arith.constant 0 : index
    %27 = vector.load %arg14[%c0_16, %c0_17] : memref<16x128xf32, #tpu.memory_space<vmem>>, vector<4x128xf32>
    %28 = arith.truncf %27 : vector<4x128xf32> to vector<4x128xbf16>
    %c0_18 = arith.constant 0 : index
    %c0_19 = arith.constant 0 : index
    %29 = vector.load %arg7[%c0_18, %c0_19] : memref<1x128xf32, #tpu.memory_space<vmem>>, vector<1x128xf32>
    %30 = vector.extract_strided_slice %28 {offsets = [0, 0], sizes = [1, 128], strides = [1, 1]} : vector<4x128xbf16> to vector<1x128xbf16>
    %c0_20 = arith.constant 0 : index
    %c0_21 = arith.constant 0 : index
    %c0_22 = arith.constant 0 : index
    %31 = vector.load %arg5[%c0_20, %c0_21, %c0_22] : memref<4x128x128xbf16, #tpu.memory_space<vmem>>, vector<1x128x128xbf16>
    %32 = vector.shape_cast %31 : vector<1x128x128xbf16> to vector<128x128xbf16>
    %cst_23 = arith.constant dense<0.000000e+00> : vector<1x128xf32>
    %33 = tpu.matmul %30, %32, %cst_23 {dimension_numbers = #tpu.dot_dimension_numbers<[1], [0], [0], [1], [0, 0, 1, 1], [], []>} : vector<1x128xbf16>, vector<128x128xbf16>, vector<1x128xf32> -> vector<1x128xf32>
    %34 = arith.addf %29, %33 : vector<1x128xf32>
    %35 = vector.extract_strided_slice %28 {offsets = [1, 0], sizes = [1, 128], strides = [1, 1]} : vector<4x128xbf16> to vector<1x128xbf16>
    %c1 = arith.constant 1 : index
    %c0_24 = arith.constant 0 : index
    %c0_25 = arith.constant 0 : index
    %36 = vector.load %arg5[%c1, %c0_24, %c0_25] : memref<4x128x128xbf16, #tpu.memory_space<vmem>>, vector<1x128x128xbf16>
    %37 = vector.shape_cast %36 : vector<1x128x128xbf16> to vector<128x128xbf16>
    %cst_26 = arith.constant dense<0.000000e+00> : vector<1x128xf32>
    %38 = tpu.matmul %35, %37, %cst_26 {dimension_numbers = #tpu.dot_dimension_numbers<[1], [0], [0], [1], [0, 0, 1, 1], [], []>} : vector<1x128xbf16>, vector<128x128xbf16>, vector<1x128xf32> -> vector<1x128xf32>
    %39 = arith.addf %34, %38 : vector<1x128xf32>
    %40 = vector.extract_strided_slice %28 {offsets = [2, 0], sizes = [1, 128], strides = [1, 1]} : vector<4x128xbf16> to vector<1x128xbf16>
    %c2 = arith.constant 2 : index
    %c0_27 = arith.constant 0 : index
    %c0_28 = arith.constant 0 : index
    %41 = vector.load %arg5[%c2, %c0_27, %c0_28] : memref<4x128x128xbf16, #tpu.memory_space<vmem>>, vector<1x128x128xbf16>
    %42 = vector.shape_cast %41 : vector<1x128x128xbf16> to vector<128x128xbf16>
    %cst_29 = arith.constant dense<0.000000e+00> : vector<1x128xf32>
    %43 = tpu.matmul %40, %42, %cst_29 {dimension_numbers = #tpu.dot_dimension_numbers<[1], [0], [0], [1], [0, 0, 1, 1], [], []>} : vector<1x128xbf16>, vector<128x128xbf16>, vector<1x128xf32> -> vector<1x128xf32>
    %44 = arith.addf %39, %43 : vector<1x128xf32>
    %45 = vector.extract_strided_slice %28 {offsets = [3, 0], sizes = [1, 128], strides = [1, 1]} : vector<4x128xbf16> to vector<1x128xbf16>
    %c3 = arith.constant 3 : index
    %c0_30 = arith.constant 0 : index
    %c0_31 = arith.constant 0 : index
    %46 = vector.load %arg5[%c3, %c0_30, %c0_31] : memref<4x128x128xbf16, #tpu.memory_space<vmem>>, vector<1x128x128xbf16>
    %47 = vector.shape_cast %46 : vector<1x128x128xbf16> to vector<128x128xbf16>
    %cst_32 = arith.constant dense<0.000000e+00> : vector<1x128xf32>
    %48 = tpu.matmul %45, %47, %cst_32 {dimension_numbers = #tpu.dot_dimension_numbers<[1], [0], [0], [1], [0, 0, 1, 1], [], []>} : vector<1x128xbf16>, vector<128x128xbf16>, vector<1x128xf32> -> vector<1x128xf32>
    %49 = arith.addf %44, %48 : vector<1x128xf32>
    %cst_33 = arith.constant 5.000000e-01 : f32
    %50 = vector.broadcast %cst_33 : f32 to vector<1x128xf32>
    %51 = arith.mulf %50, %49 : vector<1x128xf32>
    %52 = arith.mulf %49, %49 : vector<1x128xf32>
    %53 = arith.mulf %52, %49 : vector<1x128xf32>
    %cst_34 = arith.constant 4.471500e-02 : f32
    %54 = vector.broadcast %cst_34 : f32 to vector<1x128xf32>
    %55 = arith.mulf %54, %53 : vector<1x128xf32>
    %56 = arith.addf %49, %55 : vector<1x128xf32>
    %cst_35 = arith.constant 0.797884583 : f32
    %57 = vector.broadcast %cst_35 : f32 to vector<1x128xf32>
    %58 = arith.mulf %57, %56 : vector<1x128xf32>
    %59 = math.tanh %58 : vector<1x128xf32>
    %cst_36 = arith.constant 1.000000e+00 : f32
    %60 = vector.broadcast %cst_36 : f32 to vector<1x128xf32>
    %61 = arith.addf %60, %59 : vector<1x128xf32>
    %62 = arith.mulf %51, %61 : vector<1x128xf32>
    %63 = arith.truncf %62 : vector<1x128xf32> to vector<1x128xbf16>
    %c0_37 = arith.constant 0 : index
    %c0_38 = arith.constant 0 : index
    %64 = vector.load %arg6[%c0_37, %c0_38] : memref<128x128xbf16, #tpu.memory_space<vmem>>, vector<128x128xbf16>
    %cst_39 = arith.constant dense<0.000000e+00> : vector<1x128xf32>
    %65 = tpu.matmul %63, %64, %cst_39 {dimension_numbers = #tpu.dot_dimension_numbers<[1], [0], [0], [1], [0, 0, 1, 1], [], []>} : vector<1x128xbf16>, vector<128x128xbf16>, vector<1x128xf32> -> vector<1x128xf32>
    %c0_40 = arith.constant 0 : index
    %c0_41 = arith.constant 0 : index
    %66 = vector.load %arg8[%c0_40, %c0_41] : memref<1x128xf32, #tpu.memory_space<vmem>>, vector<1x128xf32>
    %67 = arith.addf %65, %66 : vector<1x128xf32>
    %c8 = arith.constant 8 : index
    %c0_42 = arith.constant 0 : index
    %68 = vector.load %arg14[%c8, %c0_42] : memref<16x128xf32, #tpu.memory_space<vmem>>, vector<1x128xf32>
    tpu.vector_store %arg14[%c8, %c0_42], %67 {strides = array<i32>} : memref<16x128xf32, #tpu.memory_space<vmem>>, vector<1x128xf32>,
    %c5 = arith.constant 5 : index
    %c0_43 = arith.constant 0 : index
    %69 = vector.load %arg14[%c5, %c0_43] : memref<16x128xf32, #tpu.memory_space<vmem>>, vector<4x128xf32>
    %70 = arith.truncf %69 : vector<4x128xf32> to vector<4x128xbf16>
    %c0_44 = arith.constant 0 : index
    %c0_45 = arith.constant 0 : index
    %71 = vector.load %arg11[%c0_44, %c0_45] : memref<1x128xf32, #tpu.memory_space<vmem>>, vector<1x128xf32>
    %72 = vector.extract_strided_slice %70 {offsets = [0, 0], sizes = [1, 128], strides = [1, 1]} : vector<4x128xbf16> to vector<1x128xbf16>
    %c0_46 = arith.constant 0 : index
    %c0_47 = arith.constant 0 : index
    %c0_48 = arith.constant 0 : index
    %73 = vector.load %arg9[%c0_46, %c0_47, %c0_48] : memref<4x128x128xbf16, #tpu.memory_space<vmem>>, vector<1x128x128xbf16>
    %74 = vector.shape_cast %73 : vector<1x128x128xbf16> to vector<128x128xbf16>
    %cst_49 = arith.constant dense<0.000000e+00> : vector<1x128xf32>
    %75 = tpu.matmul %72, %74, %cst_49 {dimension_numbers = #tpu.dot_dimension_numbers<[1], [0], [0], [1], [0, 0, 1, 1], [], []>} : vector<1x128xbf16>, vector<128x128xbf16>, vector<1x128xf32> -> vector<1x128xf32>
    %76 = arith.addf %71, %75 : vector<1x128xf32>
    %77 = vector.extract_strided_slice %70 {offsets = [1, 0], sizes = [1, 128], strides = [1, 1]} : vector<4x128xbf16> to vector<1x128xbf16>
    %c1_50 = arith.constant 1 : index
    %c0_51 = arith.constant 0 : index
    %c0_52 = arith.constant 0 : index
    %78 = vector.load %arg9[%c1_50, %c0_51, %c0_52] : memref<4x128x128xbf16, #tpu.memory_space<vmem>>, vector<1x128x128xbf16>
    %79 = vector.shape_cast %78 : vector<1x128x128xbf16> to vector<128x128xbf16>
    %cst_53 = arith.constant dense<0.000000e+00> : vector<1x128xf32>
    %80 = tpu.matmul %77, %79, %cst_53 {dimension_numbers = #tpu.dot_dimension_numbers<[1], [0], [0], [1], [0, 0, 1, 1], [], []>} : vector<1x128xbf16>, vector<128x128xbf16>, vector<1x128xf32> -> vector<1x128xf32>
    %81 = arith.addf %76, %80 : vector<1x128xf32>
    %82 = vector.extract_strided_slice %70 {offsets = [2, 0], sizes = [1, 128], strides = [1, 1]} : vector<4x128xbf16> to vector<1x128xbf16>
    %c2_54 = arith.constant 2 : index
    %c0_55 = arith.constant 0 : index
    %c0_56 = arith.constant 0 : index
    %83 = vector.load %arg9[%c2_54, %c0_55, %c0_56] : memref<4x128x128xbf16, #tpu.memory_space<vmem>>, vector<1x128x128xbf16>
    %84 = vector.shape_cast %83 : vector<1x128x128xbf16> to vector<128x128xbf16>
    %cst_57 = arith.constant dense<0.000000e+00> : vector<1x128xf32>
    %85 = tpu.matmul %82, %84, %cst_57 {dimension_numbers = #tpu.dot_dimension_numbers<[1], [0], [0], [1], [0, 0, 1, 1], [], []>} : vector<1x128xbf16>, vector<128x128xbf16>, vector<1x128xf32> -> vector<1x128xf32>
    %86 = arith.addf %81, %85 : vector<1x128xf32>
    %87 = vector.extract_strided_slice %70 {offsets = [3, 0], sizes = [1, 128], strides = [1, 1]} : vector<4x128xbf16> to vector<1x128xbf16>
    %c3_58 = arith.constant 3 : index
    %c0_59 = arith.constant 0 : index
    %c0_60 = arith.constant 0 : index
    %88 = vector.load %arg9[%c3_58, %c0_59, %c0_60] : memref<4x128x128xbf16, #tpu.memory_space<vmem>>, vector<1x128x128xbf16>
    %89 = vector.shape_cast %88 : vector<1x128x128xbf16> to vector<128x128xbf16>
    %cst_61 = arith.constant dense<0.000000e+00> : vector<1x128xf32>
    %90 = tpu.matmul %87, %89, %cst_61 {dimension_numbers = #tpu.dot_dimension_numbers<[1], [0], [0], [1], [0, 0, 1, 1], [], []>} : vector<1x128xbf16>, vector<128x128xbf16>, vector<1x128xf32> -> vector<1x128xf32>
    %91 = arith.addf %86, %90 : vector<1x128xf32>
    %cst_62 = arith.constant 5.000000e-01 : f32
    %92 = vector.broadcast %cst_62 : f32 to vector<1x128xf32>
    %93 = arith.mulf %92, %91 : vector<1x128xf32>
    %94 = arith.mulf %91, %91 : vector<1x128xf32>
    %95 = arith.mulf %94, %91 : vector<1x128xf32>
    %cst_63 = arith.constant 4.471500e-02 : f32
    %96 = vector.broadcast %cst_63 : f32 to vector<1x128xf32>
    %97 = arith.mulf %96, %95 : vector<1x128xf32>
    %98 = arith.addf %91, %97 : vector<1x128xf32>
    %cst_64 = arith.constant 0.797884583 : f32
    %99 = vector.broadcast %cst_64 : f32 to vector<1x128xf32>
    %100 = arith.mulf %99, %98 : vector<1x128xf32>
    %101 = math.tanh %100 : vector<1x128xf32>
    %cst_65 = arith.constant 1.000000e+00 : f32
    %102 = vector.broadcast %cst_65 : f32 to vector<1x128xf32>
    %103 = arith.addf %102, %101 : vector<1x128xf32>
    %104 = arith.mulf %93, %103 : vector<1x128xf32>
    %105 = arith.truncf %104 : vector<1x128xf32> to vector<1x128xbf16>
    %c0_66 = arith.constant 0 : index
    %c0_67 = arith.constant 0 : index
    %106 = vector.load %arg10[%c0_66, %c0_67] : memref<128x128xbf16, #tpu.memory_space<vmem>>, vector<128x128xbf16>
    %cst_68 = arith.constant dense<0.000000e+00> : vector<1x128xf32>
    %107 = tpu.matmul %105, %106, %cst_68 {dimension_numbers = #tpu.dot_dimension_numbers<[1], [0], [0], [1], [0, 0, 1, 1], [], []>} : vector<1x128xbf16>, vector<128x128xbf16>, vector<1x128xf32> -> vector<1x128xf32>
    %c0_69 = arith.constant 0 : index
    %c0_70 = arith.constant 0 : index
    %108 = vector.load %arg12[%c0_69, %c0_70] : memref<1x128xf32, #tpu.memory_space<vmem>>, vector<1x128xf32>
    %109 = arith.addf %107, %108 : vector<1x128xf32>
    %c0_71 = arith.constant 0 : index
    %c0_72 = arith.constant 0 : index
    %110 = vector.load %arg13[%c0_71, %c0_72] : memref<8x128xf32, #tpu.memory_space<vmem>>, vector<1x128xf32>
    tpu.vector_store %arg13[%c0_71, %c0_72], %109 {strides = array<i32>} : memref<8x128xf32, #tpu.memory_space<vmem>>, vector<1x128xf32>,
    %c1_73 = arith.constant 1 : index
    %c0_74 = arith.constant 0 : index
    %111 = vector.load %arg14[%c1_73, %c0_74] : memref<16x128xf32, #tpu.memory_space<vmem>>, vector<4x128xf32>
    %112 = arith.truncf %111 : vector<4x128xf32> to vector<4x128xbf16>
    %c0_75 = arith.constant 0 : index
    %c0_76 = arith.constant 0 : index
    %113 = vector.load %arg7[%c0_75, %c0_76] : memref<1x128xf32, #tpu.memory_space<vmem>>, vector<1x128xf32>
    %114 = vector.extract_strided_slice %112 {offsets = [0, 0], sizes = [1, 128], strides = [1, 1]} : vector<4x128xbf16> to vector<1x128xbf16>
    %c0_77 = arith.constant 0 : index
    %c0_78 = arith.constant 0 : index
    %c0_79 = arith.constant 0 : index
    %115 = vector.load %arg5[%c0_77, %c0_78, %c0_79] : memref<4x128x128xbf16, #tpu.memory_space<vmem>>, vector<1x128x128xbf16>
    %116 = vector.shape_cast %115 : vector<1x128x128xbf16> to vector<128x128xbf16>
    %cst_80 = arith.constant dense<0.000000e+00> : vector<1x128xf32>
    %117 = tpu.matmul %114, %116, %cst_80 {dimension_numbers = #tpu.dot_dimension_numbers<[1], [0], [0], [1], [0, 0, 1, 1], [], []>} : vector<1x128xbf16>, vector<128x128xbf16>, vector<1x128xf32> -> vector<1x128xf32>
    %118 = arith.addf %113, %117 : vector<1x128xf32>
    %119 = vector.extract_strided_slice %112 {offsets = [1, 0], sizes = [1, 128], strides = [1, 1]} : vector<4x128xbf16> to vector<1x128xbf16>
    %c1_81 = arith.constant 1 : index
    %c0_82 = arith.constant 0 : index
    %c0_83 = arith.constant 0 : index
    %120 = vector.load %arg5[%c1_81, %c0_82, %c0_83] : memref<4x128x128xbf16, #tpu.memory_space<vmem>>, vector<1x128x128xbf16>
    %121 = vector.shape_cast %120 : vector<1x128x128xbf16> to vector<128x128xbf16>
    %cst_84 = arith.constant dense<0.000000e+00> : vector<1x128xf32>
    %122 = tpu.matmul %119, %121, %cst_84 {dimension_numbers = #tpu.dot_dimension_numbers<[1], [0], [0], [1], [0, 0, 1, 1], [], []>} : vector<1x128xbf16>, vector<128x128xbf16>, vector<1x128xf32> -> vector<1x128xf32>
    %123 = arith.addf %118, %122 : vector<1x128xf32>
    %124 = vector.extract_strided_slice %112 {offsets = [2, 0], sizes = [1, 128], strides = [1, 1]} : vector<4x128xbf16> to vector<1x128xbf16>
    %c2_85 = arith.constant 2 : index
    %c0_86 = arith.constant 0 : index
    %c0_87 = arith.constant 0 : index
    %125 = vector.load %arg5[%c2_85, %c0_86, %c0_87] : memref<4x128x128xbf16, #tpu.memory_space<vmem>>, vector<1x128x128xbf16>
    %126 = vector.shape_cast %125 : vector<1x128x128xbf16> to vector<128x128xbf16>
    %cst_88 = arith.constant dense<0.000000e+00> : vector<1x128xf32>
    %127 = tpu.matmul %124, %126, %cst_88 {dimension_numbers = #tpu.dot_dimension_numbers<[1], [0], [0], [1], [0, 0, 1, 1], [], []>} : vector<1x128xbf16>, vector<128x128xbf16>, vector<1x128xf32> -> vector<1x128xf32>
    %128 = arith.addf %123, %127 : vector<1x128xf32>
    %129 = vector.extract_strided_slice %112 {offsets = [3, 0], sizes = [1, 128], strides = [1, 1]} : vector<4x128xbf16> to vector<1x128xbf16>
    %c3_89 = arith.constant 3 : index
    %c0_90 = arith.constant 0 : index
    %c0_91 = arith.constant 0 : index
    %130 = vector.load %arg5[%c3_89, %c0_90, %c0_91] : memref<4x128x128xbf16, #tpu.memory_space<vmem>>, vector<1x128x128xbf16>
    %131 = vector.shape_cast %130 : vector<1x128x128xbf16> to vector<128x128xbf16>
    %cst_92 = arith.constant dense<0.000000e+00> : vector<1x128xf32>
    %132 = tpu.matmul %129, %131, %cst_92 {dimension_numbers = #tpu.dot_dimension_numbers<[1], [0], [0], [1], [0, 0, 1, 1], [], []>} : vector<1x128xbf16>, vector<128x128xbf16>, vector<1x128xf32> -> vector<1x128xf32>
    %133 = arith.addf %128, %132 : vector<1x128xf32>
    %cst_93 = arith.constant 5.000000e-01 : f32
    %134 = vector.broadcast %cst_93 : f32 to vector<1x128xf32>
    %135 = arith.mulf %134, %133 : vector<1x128xf32>
    %136 = arith.mulf %133, %133 : vector<1x128xf32>
    %137 = arith.mulf %136, %133 : vector<1x128xf32>
    %cst_94 = arith.constant 4.471500e-02 : f32
    %138 = vector.broadcast %cst_94 : f32 to vector<1x128xf32>
    %139 = arith.mulf %138, %137 : vector<1x128xf32>
    %140 = arith.addf %133, %139 : vector<1x128xf32>
    %cst_95 = arith.constant 0.797884583 : f32
    %141 = vector.broadcast %cst_95 : f32 to vector<1x128xf32>
    %142 = arith.mulf %141, %140 : vector<1x128xf32>
    %143 = math.tanh %142 : vector<1x128xf32>
    %cst_96 = arith.constant 1.000000e+00 : f32
    %144 = vector.broadcast %cst_96 : f32 to vector<1x128xf32>
    %145 = arith.addf %144, %143 : vector<1x128xf32>
    %146 = arith.mulf %135, %145 : vector<1x128xf32>
    %147 = arith.truncf %146 : vector<1x128xf32> to vector<1x128xbf16>
    %c0_97 = arith.constant 0 : index
    %c0_98 = arith.constant 0 : index
    %148 = vector.load %arg6[%c0_97, %c0_98] : memref<128x128xbf16, #tpu.memory_space<vmem>>, vector<128x128xbf16>
    %cst_99 = arith.constant dense<0.000000e+00> : vector<1x128xf32>
    %149 = tpu.matmul %147, %148, %cst_99 {dimension_numbers = #tpu.dot_dimension_numbers<[1], [0], [0], [1], [0, 0, 1, 1], [], []>} : vector<1x128xbf16>, vector<128x128xbf16>, vector<1x128xf32> -> vector<1x128xf32>
    %c0_100 = arith.constant 0 : index
    %c0_101 = arith.constant 0 : index
    %150 = vector.load %arg8[%c0_100, %c0_101] : memref<1x128xf32, #tpu.memory_space<vmem>>, vector<1x128xf32>
    %151 = arith.addf %149, %150 : vector<1x128xf32>
    %c9 = arith.constant 9 : index
    %c0_102 = arith.constant 0 : index
    %152 = vector.load %arg14[%c9, %c0_102] : memref<16x128xf32, #tpu.memory_space<vmem>>, vector<1x128xf32>
    tpu.vector_store %arg14[%c9, %c0_102], %151 {strides = array<i32>} : memref<16x128xf32, #tpu.memory_space<vmem>>, vector<1x128xf32>,
    %c6 = arith.constant 6 : index
    %c0_103 = arith.constant 0 : index
    %153 = vector.load %arg14[%c6, %c0_103] : memref<16x128xf32, #tpu.memory_space<vmem>>, vector<4x128xf32>
    %154 = arith.truncf %153 : vector<4x128xf32> to vector<4x128xbf16>
    %c0_104 = arith.constant 0 : index
    %c0_105 = arith.constant 0 : index
    %155 = vector.load %arg11[%c0_104, %c0_105] : memref<1x128xf32, #tpu.memory_space<vmem>>, vector<1x128xf32>
    %156 = vector.extract_strided_slice %154 {offsets = [0, 0], sizes = [1, 128], strides = [1, 1]} : vector<4x128xbf16> to vector<1x128xbf16>
    %c0_106 = arith.constant 0 : index
    %c0_107 = arith.constant 0 : index
    %c0_108 = arith.constant 0 : index
    %157 = vector.load %arg9[%c0_106, %c0_107, %c0_108] : memref<4x128x128xbf16, #tpu.memory_space<vmem>>, vector<1x128x128xbf16>
    %158 = vector.shape_cast %157 : vector<1x128x128xbf16> to vector<128x128xbf16>
    %cst_109 = arith.constant dense<0.000000e+00> : vector<1x128xf32>
    %159 = tpu.matmul %156, %158, %cst_109 {dimension_numbers = #tpu.dot_dimension_numbers<[1], [0], [0], [1], [0, 0, 1, 1], [], []>} : vector<1x128xbf16>, vector<128x128xbf16>, vector<1x128xf32> -> vector<1x128xf32>
    %160 = arith.addf %155, %159 : vector<1x128xf32>
    %161 = vector.extract_strided_slice %154 {offsets = [1, 0], sizes = [1, 128], strides = [1, 1]} : vector<4x128xbf16> to vector<1x128xbf16>
    %c1_110 = arith.constant 1 : index
    %c0_111 = arith.constant 0 : index
    %c0_112 = arith.constant 0 : index
    %162 = vector.load %arg9[%c1_110, %c0_111, %c0_112] : memref<4x128x128xbf16, #tpu.memory_space<vmem>>, vector<1x128x128xbf16>
    %163 = vector.shape_cast %162 : vector<1x128x128xbf16> to vector<128x128xbf16>
    %cst_113 = arith.constant dense<0.000000e+00> : vector<1x128xf32>
    %164 = tpu.matmul %161, %163, %cst_113 {dimension_numbers = #tpu.dot_dimension_numbers<[1], [0], [0], [1], [0, 0, 1, 1], [], []>} : vector<1x128xbf16>, vector<128x128xbf16>, vector<1x128xf32> -> vector<1x128xf32>
    %165 = arith.addf %160, %164 : vector<1x128xf32>
    %166 = vector.extract_strided_slice %154 {offsets = [2, 0], sizes = [1, 128], strides = [1, 1]} : vector<4x128xbf16> to vector<1x128xbf16>
    %c2_114 = arith.constant 2 : index
    %c0_115 = arith.constant 0 : index
    %c0_116 = arith.constant 0 : index
    %167 = vector.load %arg9[%c2_114, %c0_115, %c0_116] : memref<4x128x128xbf16, #tpu.memory_space<vmem>>, vector<1x128x128xbf16>
    %168 = vector.shape_cast %167 : vector<1x128x128xbf16> to vector<128x128xbf16>
    %cst_117 = arith.constant dense<0.000000e+00> : vector<1x128xf32>
    %169 = tpu.matmul %166, %168, %cst_117 {dimension_numbers = #tpu.dot_dimension_numbers<[1], [0], [0], [1], [0, 0, 1, 1], [], []>} : vector<1x128xbf16>, vector<128x128xbf16>, vector<1x128xf32> -> vector<1x128xf32>
    %170 = arith.addf %165, %169 : vector<1x128xf32>
    %171 = vector.extract_strided_slice %154 {offsets = [3, 0], sizes = [1, 128], strides = [1, 1]} : vector<4x128xbf16> to vector<1x128xbf16>
    %c3_118 = arith.constant 3 : index
    %c0_119 = arith.constant 0 : index
    %c0_120 = arith.constant 0 : index
    %172 = vector.load %arg9[%c3_118, %c0_119, %c0_120] : memref<4x128x128xbf16, #tpu.memory_space<vmem>>, vector<1x128x128xbf16>
    %173 = vector.shape_cast %172 : vector<1x128x128xbf16> to vector<128x128xbf16>
    %cst_121 = arith.constant dense<0.000000e+00> : vector<1x128xf32>
    %174 = tpu.matmul %171, %173, %cst_121 {dimension_numbers = #tpu.dot_dimension_numbers<[1], [0], [0], [1], [0, 0, 1, 1], [], []>} : vector<1x128xbf16>, vector<128x128xbf16>, vector<1x128xf32> -> vector<1x128xf32>
    %175 = arith.addf %170, %174 : vector<1x128xf32>
    %cst_122 = arith.constant 5.000000e-01 : f32
    %176 = vector.broadcast %cst_122 : f32 to vector<1x128xf32>
    %177 = arith.mulf %176, %175 : vector<1x128xf32>
    %178 = arith.mulf %175, %175 : vector<1x128xf32>
    %179 = arith.mulf %178, %175 : vector<1x128xf32>
    %cst_123 = arith.constant 4.471500e-02 : f32
    %180 = vector.broadcast %cst_123 : f32 to vector<1x128xf32>
    %181 = arith.mulf %180, %179 : vector<1x128xf32>
    %182 = arith.addf %175, %181 : vector<1x128xf32>
    %cst_124 = arith.constant 0.797884583 : f32
    %183 = vector.broadcast %cst_124 : f32 to vector<1x128xf32>
    %184 = arith.mulf %183, %182 : vector<1x128xf32>
    %185 = math.tanh %184 : vector<1x128xf32>
    %cst_125 = arith.constant 1.000000e+00 : f32
    %186 = vector.broadcast %cst_125 : f32 to vector<1x128xf32>
    %187 = arith.addf %186, %185 : vector<1x128xf32>
    %188 = arith.mulf %177, %187 : vector<1x128xf32>
    %189 = arith.truncf %188 : vector<1x128xf32> to vector<1x128xbf16>
    %c0_126 = arith.constant 0 : index
    %c0_127 = arith.constant 0 : index
    %190 = vector.load %arg10[%c0_126, %c0_127] : memref<128x128xbf16, #tpu.memory_space<vmem>>, vector<128x128xbf16>
    %cst_128 = arith.constant dense<0.000000e+00> : vector<1x128xf32>
    %191 = tpu.matmul %189, %190, %cst_128 {dimension_numbers = #tpu.dot_dimension_numbers<[1], [0], [0], [1], [0, 0, 1, 1], [], []>} : vector<1x128xbf16>, vector<128x128xbf16>, vector<1x128xf32> -> vector<1x128xf32>
    %c0_129 = arith.constant 0 : index
    %c0_130 = arith.constant 0 : index
    %192 = vector.load %arg12[%c0_129, %c0_130] : memref<1x128xf32, #tpu.memory_space<vmem>>, vector<1x128xf32>
    %193 = arith.addf %191, %192 : vector<1x128xf32>
    %c1_131 = arith.constant 1 : index
    %c0_132 = arith.constant 0 : index
    %194 = vector.load %arg13[%c1_131, %c0_132] : memref<8x128xf32, #tpu.memory_space<vmem>>, vector<1x128xf32>
    tpu.vector_store %arg13[%c1_131, %c0_132], %193 {strides = array<i32>} : memref<8x128xf32, #tpu.memory_space<vmem>>, vector<1x128xf32>,
    %c2_133 = arith.constant 2 : index
    %c0_134 = arith.constant 0 : index
    %195 = vector.load %arg14[%c2_133, %c0_134] : memref<16x128xf32, #tpu.memory_space<vmem>>, vector<4x128xf32>
    %196 = arith.truncf %195 : vector<4x128xf32> to vector<4x128xbf16>
    %c0_135 = arith.constant 0 : index
    %c0_136 = arith.constant 0 : index
    %197 = vector.load %arg7[%c0_135, %c0_136] : memref<1x128xf32, #tpu.memory_space<vmem>>, vector<1x128xf32>
    %198 = vector.extract_strided_slice %196 {offsets = [0, 0], sizes = [1, 128], strides = [1, 1]} : vector<4x128xbf16> to vector<1x128xbf16>
    %c0_137 = arith.constant 0 : index
    %c0_138 = arith.constant 0 : index
    %c0_139 = arith.constant 0 : index
    %199 = vector.load %arg5[%c0_137, %c0_138, %c0_139] : memref<4x128x128xbf16, #tpu.memory_space<vmem>>, vector<1x128x128xbf16>
    %200 = vector.shape_cast %199 : vector<1x128x128xbf16> to vector<128x128xbf16>
    %cst_140 = arith.constant dense<0.000000e+00> : vector<1x128xf32>
    %201 = tpu.matmul %198, %200, %cst_140 {dimension_numbers = #tpu.dot_dimension_numbers<[1], [0], [0], [1], [0, 0, 1, 1], [], []>} : vector<1x128xbf16>, vector<128x128xbf16>, vector<1x128xf32> -> vector<1x128xf32>
    %202 = arith.addf %197, %201 : vector<1x128xf32>
    %203 = vector.extract_strided_slice %196 {offsets = [1, 0], sizes = [1, 128], strides = [1, 1]} : vector<4x128xbf16> to vector<1x128xbf16>
    %c1_141 = arith.constant 1 : index
    %c0_142 = arith.constant 0 : index
    %c0_143 = arith.constant 0 : index
    %204 = vector.load %arg5[%c1_141, %c0_142, %c0_143] : memref<4x128x128xbf16, #tpu.memory_space<vmem>>, vector<1x128x128xbf16>
    %205 = vector.shape_cast %204 : vector<1x128x128xbf16> to vector<128x128xbf16>
    %cst_144 = arith.constant dense<0.000000e+00> : vector<1x128xf32>
    %206 = tpu.matmul %203, %205, %cst_144 {dimension_numbers = #tpu.dot_dimension_numbers<[1], [0], [0], [1], [0, 0, 1, 1], [], []>} : vector<1x128xbf16>, vector<128x128xbf16>, vector<1x128xf32> -> vector<1x128xf32>
    %207 = arith.addf %202, %206 : vector<1x128xf32>
    %208 = vector.extract_strided_slice %196 {offsets = [2, 0], sizes = [1, 128], strides = [1, 1]} : vector<4x128xbf16> to vector<1x128xbf16>
    %c2_145 = arith.constant 2 : index
    %c0_146 = arith.constant 0 : index
    %c0_147 = arith.constant 0 : index
    %209 = vector.load %arg5[%c2_145, %c0_146, %c0_147] : memref<4x128x128xbf16, #tpu.memory_space<vmem>>, vector<1x128x128xbf16>
    %210 = vector.shape_cast %209 : vector<1x128x128xbf16> to vector<128x128xbf16>
    %cst_148 = arith.constant dense<0.000000e+00> : vector<1x128xf32>
    %211 = tpu.matmul %208, %210, %cst_148 {dimension_numbers = #tpu.dot_dimension_numbers<[1], [0], [0], [1], [0, 0, 1, 1], [], []>} : vector<1x128xbf16>, vector<128x128xbf16>, vector<1x128xf32> -> vector<1x128xf32>
    %212 = arith.addf %207, %211 : vector<1x128xf32>
    %213 = vector.extract_strided_slice %196 {offsets = [3, 0], sizes = [1, 128], strides = [1, 1]} : vector<4x128xbf16> to vector<1x128xbf16>
    %c3_149 = arith.constant 3 : index
    %c0_150 = arith.constant 0 : index
    %c0_151 = arith.constant 0 : index
    %214 = vector.load %arg5[%c3_149, %c0_150, %c0_151] : memref<4x128x128xbf16, #tpu.memory_space<vmem>>, vector<1x128x128xbf16>
    %215 = vector.shape_cast %214 : vector<1x128x128xbf16> to vector<128x128xbf16>
    %cst_152 = arith.constant dense<0.000000e+00> : vector<1x128xf32>
    %216 = tpu.matmul %213, %215, %cst_152 {dimension_numbers = #tpu.dot_dimension_numbers<[1], [0], [0], [1], [0, 0, 1, 1], [], []>} : vector<1x128xbf16>, vector<128x128xbf16>, vector<1x128xf32> -> vector<1x128xf32>
    %217 = arith.addf %212, %216 : vector<1x128xf32>
    %cst_153 = arith.constant 5.000000e-01 : f32
    %218 = vector.broadcast %cst_153 : f32 to vector<1x128xf32>
    %219 = arith.mulf %218, %217 : vector<1x128xf32>
    %220 = arith.mulf %217, %217 : vector<1x128xf32>
    %221 = arith.mulf %220, %217 : vector<1x128xf32>
    %cst_154 = arith.constant 4.471500e-02 : f32
    %222 = vector.broadcast %cst_154 : f32 to vector<1x128xf32>
    %223 = arith.mulf %222, %221 : vector<1x128xf32>
    %224 = arith.addf %217, %223 : vector<1x128xf32>
    %cst_155 = arith.constant 0.797884583 : f32
    %225 = vector.broadcast %cst_155 : f32 to vector<1x128xf32>
    %226 = arith.mulf %225, %224 : vector<1x128xf32>
    %227 = math.tanh %226 : vector<1x128xf32>
    %cst_156 = arith.constant 1.000000e+00 : f32
    %228 = vector.broadcast %cst_156 : f32 to vector<1x128xf32>
    %229 = arith.addf %228, %227 : vector<1x128xf32>
    %230 = arith.mulf %219, %229 : vector<1x128xf32>
    %231 = arith.truncf %230 : vector<1x128xf32> to vector<1x128xbf16>
    %c0_157 = arith.constant 0 : index
    %c0_158 = arith.constant 0 : index
    %232 = vector.load %arg6[%c0_157, %c0_158] : memref<128x128xbf16, #tpu.memory_space<vmem>>, vector<128x128xbf16>
    %cst_159 = arith.constant dense<0.000000e+00> : vector<1x128xf32>
    %233 = tpu.matmul %231, %232, %cst_159 {dimension_numbers = #tpu.dot_dimension_numbers<[1], [0], [0], [1], [0, 0, 1, 1], [], []>} : vector<1x128xbf16>, vector<128x128xbf16>, vector<1x128xf32> -> vector<1x128xf32>
    %c0_160 = arith.constant 0 : index
    %c0_161 = arith.constant 0 : index
    %234 = vector.load %arg8[%c0_160, %c0_161] : memref<1x128xf32, #tpu.memory_space<vmem>>, vector<1x128xf32>
    %235 = arith.addf %233, %234 : vector<1x128xf32>
    %c10 = arith.constant 10 : index
    %c0_162 = arith.constant 0 : index
    %236 = vector.load %arg14[%c10, %c0_162] : memref<16x128xf32, #tpu.memory_space<vmem>>, vector<1x128xf32>
    tpu.vector_store %arg14[%c10, %c0_162], %235 {strides = array<i32>} : memref<16x128xf32, #tpu.memory_space<vmem>>, vector<1x128xf32>,
    %c7 = arith.constant 7 : index
    %c0_163 = arith.constant 0 : index
    %237 = vector.load %arg14[%c7, %c0_163] : memref<16x128xf32, #tpu.memory_space<vmem>>, vector<4x128xf32>
    %238 = arith.truncf %237 : vector<4x128xf32> to vector<4x128xbf16>
    %c0_164 = arith.constant 0 : index
    %c0_165 = arith.constant 0 : index
    %239 = vector.load %arg11[%c0_164, %c0_165] : memref<1x128xf32, #tpu.memory_space<vmem>>, vector<1x128xf32>
    %240 = vector.extract_strided_slice %238 {offsets = [0, 0], sizes = [1, 128], strides = [1, 1]} : vector<4x128xbf16> to vector<1x128xbf16>
    %c0_166 = arith.constant 0 : index
    %c0_167 = arith.constant 0 : index
    %c0_168 = arith.constant 0 : index
    %241 = vector.load %arg9[%c0_166, %c0_167, %c0_168] : memref<4x128x128xbf16, #tpu.memory_space<vmem>>, vector<1x128x128xbf16>
    %242 = vector.shape_cast %241 : vector<1x128x128xbf16> to vector<128x128xbf16>
    %cst_169 = arith.constant dense<0.000000e+00> : vector<1x128xf32>
    %243 = tpu.matmul %240, %242, %cst_169 {dimension_numbers = #tpu.dot_dimension_numbers<[1], [0], [0], [1], [0, 0, 1, 1], [], []>} : vector<1x128xbf16>, vector<128x128xbf16>, vector<1x128xf32> -> vector<1x128xf32>
    %244 = arith.addf %239, %243 : vector<1x128xf32>
    %245 = vector.extract_strided_slice %238 {offsets = [1, 0], sizes = [1, 128], strides = [1, 1]} : vector<4x128xbf16> to vector<1x128xbf16>
    %c1_170 = arith.constant 1 : index
    %c0_171 = arith.constant 0 : index
    %c0_172 = arith.constant 0 : index
    %246 = vector.load %arg9[%c1_170, %c0_171, %c0_172] : memref<4x128x128xbf16, #tpu.memory_space<vmem>>, vector<1x128x128xbf16>
    %247 = vector.shape_cast %246 : vector<1x128x128xbf16> to vector<128x128xbf16>
    %cst_173 = arith.constant dense<0.000000e+00> : vector<1x128xf32>
    %248 = tpu.matmul %245, %247, %cst_173 {dimension_numbers = #tpu.dot_dimension_numbers<[1], [0], [0], [1], [0, 0, 1, 1], [], []>} : vector<1x128xbf16>, vector<128x128xbf16>, vector<1x128xf32> -> vector<1x128xf32>
    %249 = arith.addf %244, %248 : vector<1x128xf32>
    %250 = vector.extract_strided_slice %238 {offsets = [2, 0], sizes = [1, 128], strides = [1, 1]} : vector<4x128xbf16> to vector<1x128xbf16>
    %c2_174 = arith.constant 2 : index
    %c0_175 = arith.constant 0 : index
    %c0_176 = arith.constant 0 : index
    %251 = vector.load %arg9[%c2_174, %c0_175, %c0_176] : memref<4x128x128xbf16, #tpu.memory_space<vmem>>, vector<1x128x128xbf16>
    %252 = vector.shape_cast %251 : vector<1x128x128xbf16> to vector<128x128xbf16>
    %cst_177 = arith.constant dense<0.000000e+00> : vector<1x128xf32>
    %253 = tpu.matmul %250, %252, %cst_177 {dimension_numbers = #tpu.dot_dimension_numbers<[1], [0], [0], [1], [0, 0, 1, 1], [], []>} : vector<1x128xbf16>, vector<128x128xbf16>, vector<1x128xf32> -> vector<1x128xf32>
    %254 = arith.addf %249, %253 : vector<1x128xf32>
    %255 = vector.extract_strided_slice %238 {offsets = [3, 0], sizes = [1, 128], strides = [1, 1]} : vector<4x128xbf16> to vector<1x128xbf16>
    %c3_178 = arith.constant 3 : index
    %c0_179 = arith.constant 0 : index
    %c0_180 = arith.constant 0 : index
    %256 = vector.load %arg9[%c3_178, %c0_179, %c0_180] : memref<4x128x128xbf16, #tpu.memory_space<vmem>>, vector<1x128x128xbf16>
    %257 = vector.shape_cast %256 : vector<1x128x128xbf16> to vector<128x128xbf16>
    %cst_181 = arith.constant dense<0.000000e+00> : vector<1x128xf32>
    %258 = tpu.matmul %255, %257, %cst_181 {dimension_numbers = #tpu.dot_dimension_numbers<[1], [0], [0], [1], [0, 0, 1, 1], [], []>} : vector<1x128xbf16>, vector<128x128xbf16>, vector<1x128xf32> -> vector<1x128xf32>
    %259 = arith.addf %254, %258 : vector<1x128xf32>
    %cst_182 = arith.constant 5.000000e-01 : f32
    %260 = vector.broadcast %cst_182 : f32 to vector<1x128xf32>
    %261 = arith.mulf %260, %259 : vector<1x128xf32>
    %262 = arith.mulf %259, %259 : vector<1x128xf32>
    %263 = arith.mulf %262, %259 : vector<1x128xf32>
    %cst_183 = arith.constant 4.471500e-02 : f32
    %264 = vector.broadcast %cst_183 : f32 to vector<1x128xf32>
    %265 = arith.mulf %264, %263 : vector<1x128xf32>
    %266 = arith.addf %259, %265 : vector<1x128xf32>
    %cst_184 = arith.constant 0.797884583 : f32
    %267 = vector.broadcast %cst_184 : f32 to vector<1x128xf32>
    %268 = arith.mulf %267, %266 : vector<1x128xf32>
    %269 = math.tanh %268 : vector<1x128xf32>
    %cst_185 = arith.constant 1.000000e+00 : f32
    %270 = vector.broadcast %cst_185 : f32 to vector<1x128xf32>
    %271 = arith.addf %270, %269 : vector<1x128xf32>
    %272 = arith.mulf %261, %271 : vector<1x128xf32>
    %273 = arith.truncf %272 : vector<1x128xf32> to vector<1x128xbf16>
    %c0_186 = arith.constant 0 : index
    %c0_187 = arith.constant 0 : index
    %274 = vector.load %arg10[%c0_186, %c0_187] : memref<128x128xbf16, #tpu.memory_space<vmem>>, vector<128x128xbf16>
    %cst_188 = arith.constant dense<0.000000e+00> : vector<1x128xf32>
    %275 = tpu.matmul %273, %274, %cst_188 {dimension_numbers = #tpu.dot_dimension_numbers<[1], [0], [0], [1], [0, 0, 1, 1], [], []>} : vector<1x128xbf16>, vector<128x128xbf16>, vector<1x128xf32> -> vector<1x128xf32>
    %c0_189 = arith.constant 0 : index
    %c0_190 = arith.constant 0 : index
    %276 = vector.load %arg12[%c0_189, %c0_190] : memref<1x128xf32, #tpu.memory_space<vmem>>, vector<1x128xf32>
    %277 = arith.addf %275, %276 : vector<1x128xf32>
    %c2_191 = arith.constant 2 : index
    %c0_192 = arith.constant 0 : index
    %278 = vector.load %arg13[%c2_191, %c0_192] : memref<8x128xf32, #tpu.memory_space<vmem>>, vector<1x128xf32>
    tpu.vector_store %arg13[%c2_191, %c0_192], %277 {strides = array<i32>} : memref<8x128xf32, #tpu.memory_space<vmem>>, vector<1x128xf32>,
    %c3_193 = arith.constant 3 : index
    %c0_194 = arith.constant 0 : index
    %279 = vector.load %arg14[%c3_193, %c0_194] : memref<16x128xf32, #tpu.memory_space<vmem>>, vector<4x128xf32>
    %280 = arith.truncf %279 : vector<4x128xf32> to vector<4x128xbf16>
    %c0_195 = arith.constant 0 : index
    %c0_196 = arith.constant 0 : index
    %281 = vector.load %arg7[%c0_195, %c0_196] : memref<1x128xf32, #tpu.memory_space<vmem>>, vector<1x128xf32>
    %282 = vector.extract_strided_slice %280 {offsets = [0, 0], sizes = [1, 128], strides = [1, 1]} : vector<4x128xbf16> to vector<1x128xbf16>
    %c0_197 = arith.constant 0 : index
    %c0_198 = arith.constant 0 : index
    %c0_199 = arith.constant 0 : index
    %283 = vector.load %arg5[%c0_197, %c0_198, %c0_199] : memref<4x128x128xbf16, #tpu.memory_space<vmem>>, vector<1x128x128xbf16>
    %284 = vector.shape_cast %283 : vector<1x128x128xbf16> to vector<128x128xbf16>
    %cst_200 = arith.constant dense<0.000000e+00> : vector<1x128xf32>
    %285 = tpu.matmul %282, %284, %cst_200 {dimension_numbers = #tpu.dot_dimension_numbers<[1], [0], [0], [1], [0, 0, 1, 1], [], []>} : vector<1x128xbf16>, vector<128x128xbf16>, vector<1x128xf32> -> vector<1x128xf32>
    %286 = arith.addf %281, %285 : vector<1x128xf32>
    %287 = vector.extract_strided_slice %280 {offsets = [1, 0], sizes = [1, 128], strides = [1, 1]} : vector<4x128xbf16> to vector<1x128xbf16>
    %c1_201 = arith.constant 1 : index
    %c0_202 = arith.constant 0 : index
    %c0_203 = arith.constant 0 : index
    %288 = vector.load %arg5[%c1_201, %c0_202, %c0_203] : memref<4x128x128xbf16, #tpu.memory_space<vmem>>, vector<1x128x128xbf16>
    %289 = vector.shape_cast %288 : vector<1x128x128xbf16> to vector<128x128xbf16>
    %cst_204 = arith.constant dense<0.000000e+00> : vector<1x128xf32>
    %290 = tpu.matmul %287, %289, %cst_204 {dimension_numbers = #tpu.dot_dimension_numbers<[1], [0], [0], [1], [0, 0, 1, 1], [], []>} : vector<1x128xbf16>, vector<128x128xbf16>, vector<1x128xf32> -> vector<1x128xf32>
    %291 = arith.addf %286, %290 : vector<1x128xf32>
    %292 = vector.extract_strided_slice %280 {offsets = [2, 0], sizes = [1, 128], strides = [1, 1]} : vector<4x128xbf16> to vector<1x128xbf16>
    %c2_205 = arith.constant 2 : index
    %c0_206 = arith.constant 0 : index
    %c0_207 = arith.constant 0 : index
    %293 = vector.load %arg5[%c2_205, %c0_206, %c0_207] : memref<4x128x128xbf16, #tpu.memory_space<vmem>>, vector<1x128x128xbf16>
    %294 = vector.shape_cast %293 : vector<1x128x128xbf16> to vector<128x128xbf16>
    %cst_208 = arith.constant dense<0.000000e+00> : vector<1x128xf32>
    %295 = tpu.matmul %292, %294, %cst_208 {dimension_numbers = #tpu.dot_dimension_numbers<[1], [0], [0], [1], [0, 0, 1, 1], [], []>} : vector<1x128xbf16>, vector<128x128xbf16>, vector<1x128xf32> -> vector<1x128xf32>
    %296 = arith.addf %291, %295 : vector<1x128xf32>
    %297 = vector.extract_strided_slice %280 {offsets = [3, 0], sizes = [1, 128], strides = [1, 1]} : vector<4x128xbf16> to vector<1x128xbf16>
    %c3_209 = arith.constant 3 : index
    %c0_210 = arith.constant 0 : index
    %c0_211 = arith.constant 0 : index
    %298 = vector.load %arg5[%c3_209, %c0_210, %c0_211] : memref<4x128x128xbf16, #tpu.memory_space<vmem>>, vector<1x128x128xbf16>
    %299 = vector.shape_cast %298 : vector<1x128x128xbf16> to vector<128x128xbf16>
    %cst_212 = arith.constant dense<0.000000e+00> : vector<1x128xf32>
    %300 = tpu.matmul %297, %299, %cst_212 {dimension_numbers = #tpu.dot_dimension_numbers<[1], [0], [0], [1], [0, 0, 1, 1], [], []>} : vector<1x128xbf16>, vector<128x128xbf16>, vector<1x128xf32> -> vector<1x128xf32>
    %301 = arith.addf %296, %300 : vector<1x128xf32>
    %cst_213 = arith.constant 5.000000e-01 : f32
    %302 = vector.broadcast %cst_213 : f32 to vector<1x128xf32>
    %303 = arith.mulf %302, %301 : vector<1x128xf32>
    %304 = arith.mulf %301, %301 : vector<1x128xf32>
    %305 = arith.mulf %304, %301 : vector<1x128xf32>
    %cst_214 = arith.constant 4.471500e-02 : f32
    %306 = vector.broadcast %cst_214 : f32 to vector<1x128xf32>
    %307 = arith.mulf %306, %305 : vector<1x128xf32>
    %308 = arith.addf %301, %307 : vector<1x128xf32>
    %cst_215 = arith.constant 0.797884583 : f32
    %309 = vector.broadcast %cst_215 : f32 to vector<1x128xf32>
    %310 = arith.mulf %309, %308 : vector<1x128xf32>
    %311 = math.tanh %310 : vector<1x128xf32>
    %cst_216 = arith.constant 1.000000e+00 : f32
    %312 = vector.broadcast %cst_216 : f32 to vector<1x128xf32>
    %313 = arith.addf %312, %311 : vector<1x128xf32>
    %314 = arith.mulf %303, %313 : vector<1x128xf32>
    %315 = arith.truncf %314 : vector<1x128xf32> to vector<1x128xbf16>
    %c0_217 = arith.constant 0 : index
    %c0_218 = arith.constant 0 : index
    %316 = vector.load %arg6[%c0_217, %c0_218] : memref<128x128xbf16, #tpu.memory_space<vmem>>, vector<128x128xbf16>
    %cst_219 = arith.constant dense<0.000000e+00> : vector<1x128xf32>
    %317 = tpu.matmul %315, %316, %cst_219 {dimension_numbers = #tpu.dot_dimension_numbers<[1], [0], [0], [1], [0, 0, 1, 1], [], []>} : vector<1x128xbf16>, vector<128x128xbf16>, vector<1x128xf32> -> vector<1x128xf32>
    %c0_220 = arith.constant 0 : index
    %c0_221 = arith.constant 0 : index
    %318 = vector.load %arg8[%c0_220, %c0_221] : memref<1x128xf32, #tpu.memory_space<vmem>>, vector<1x128xf32>
    %319 = arith.addf %317, %318 : vector<1x128xf32>
    %c11 = arith.constant 11 : index
    %c0_222 = arith.constant 0 : index
    %320 = vector.load %arg14[%c11, %c0_222] : memref<16x128xf32, #tpu.memory_space<vmem>>, vector<1x128xf32>
    tpu.vector_store %arg14[%c11, %c0_222], %319 {strides = array<i32>} : memref<16x128xf32, #tpu.memory_space<vmem>>, vector<1x128xf32>,
    %c8_223 = arith.constant 8 : index
    %c0_224 = arith.constant 0 : index
    %321 = vector.load %arg14[%c8_223, %c0_224] : memref<16x128xf32, #tpu.memory_space<vmem>>, vector<4x128xf32>
    %322 = arith.truncf %321 : vector<4x128xf32> to vector<4x128xbf16>
    %c0_225 = arith.constant 0 : index
    %c0_226 = arith.constant 0 : index
    %323 = vector.load %arg11[%c0_225, %c0_226] : memref<1x128xf32, #tpu.memory_space<vmem>>, vector<1x128xf32>
    %324 = vector.extract_strided_slice %322 {offsets = [0, 0], sizes = [1, 128], strides = [1, 1]} : vector<4x128xbf16> to vector<1x128xbf16>
    %c0_227 = arith.constant 0 : index
    %c0_228 = arith.constant 0 : index
    %c0_229 = arith.constant 0 : index
    %325 = vector.load %arg9[%c0_227, %c0_228, %c0_229] : memref<4x128x128xbf16, #tpu.memory_space<vmem>>, vector<1x128x128xbf16>
    %326 = vector.shape_cast %325 : vector<1x128x128xbf16> to vector<128x128xbf16>
    %cst_230 = arith.constant dense<0.000000e+00> : vector<1x128xf32>
    %327 = tpu.matmul %324, %326, %cst_230 {dimension_numbers = #tpu.dot_dimension_numbers<[1], [0], [0], [1], [0, 0, 1, 1], [], []>} : vector<1x128xbf16>, vector<128x128xbf16>, vector<1x128xf32> -> vector<1x128xf32>
    %328 = arith.addf %323, %327 : vector<1x128xf32>
    %329 = vector.extract_strided_slice %322 {offsets = [1, 0], sizes = [1, 128], strides = [1, 1]} : vector<4x128xbf16> to vector<1x128xbf16>
    %c1_231 = arith.constant 1 : index
    %c0_232 = arith.constant 0 : index
    %c0_233 = arith.constant 0 : index
    %330 = vector.load %arg9[%c1_231, %c0_232, %c0_233] : memref<4x128x128xbf16, #tpu.memory_space<vmem>>, vector<1x128x128xbf16>
    %331 = vector.shape_cast %330 : vector<1x128x128xbf16> to vector<128x128xbf16>
    %cst_234 = arith.constant dense<0.000000e+00> : vector<1x128xf32>
    %332 = tpu.matmul %329, %331, %cst_234 {dimension_numbers = #tpu.dot_dimension_numbers<[1], [0], [0], [1], [0, 0, 1, 1], [], []>} : vector<1x128xbf16>, vector<128x128xbf16>, vector<1x128xf32> -> vector<1x128xf32>
    %333 = arith.addf %328, %332 : vector<1x128xf32>
    %334 = vector.extract_strided_slice %322 {offsets = [2, 0], sizes = [1, 128], strides = [1, 1]} : vector<4x128xbf16> to vector<1x128xbf16>
    %c2_235 = arith.constant 2 : index
    %c0_236 = arith.constant 0 : index
    %c0_237 = arith.constant 0 : index
    %335 = vector.load %arg9[%c2_235, %c0_236, %c0_237] : memref<4x128x128xbf16, #tpu.memory_space<vmem>>, vector<1x128x128xbf16>
    %336 = vector.shape_cast %335 : vector<1x128x128xbf16> to vector<128x128xbf16>
    %cst_238 = arith.constant dense<0.000000e+00> : vector<1x128xf32>
    %337 = tpu.matmul %334, %336, %cst_238 {dimension_numbers = #tpu.dot_dimension_numbers<[1], [0], [0], [1], [0, 0, 1, 1], [], []>} : vector<1x128xbf16>, vector<128x128xbf16>, vector<1x128xf32> -> vector<1x128xf32>
    %338 = arith.addf %333, %337 : vector<1x128xf32>
    %339 = vector.extract_strided_slice %322 {offsets = [3, 0], sizes = [1, 128], strides = [1, 1]} : vector<4x128xbf16> to vector<1x128xbf16>
    %c3_239 = arith.constant 3 : index
    %c0_240 = arith.constant 0 : index
    %c0_241 = arith.constant 0 : index
    %340 = vector.load %arg9[%c3_239, %c0_240, %c0_241] : memref<4x128x128xbf16, #tpu.memory_space<vmem>>, vector<1x128x128xbf16>
    %341 = vector.shape_cast %340 : vector<1x128x128xbf16> to vector<128x128xbf16>
    %cst_242 = arith.constant dense<0.000000e+00> : vector<1x128xf32>
    %342 = tpu.matmul %339, %341, %cst_242 {dimension_numbers = #tpu.dot_dimension_numbers<[1], [0], [0], [1], [0, 0, 1, 1], [], []>} : vector<1x128xbf16>, vector<128x128xbf16>, vector<1x128xf32> -> vector<1x128xf32>
    %343 = arith.addf %338, %342 : vector<1x128xf32>
    %cst_243 = arith.constant 5.000000e-01 : f32
    %344 = vector.broadcast %cst_243 : f32 to vector<1x128xf32>
    %345 = arith.mulf %344, %343 : vector<1x128xf32>
    %346 = arith.mulf %343, %343 : vector<1x128xf32>
    %347 = arith.mulf %346, %343 : vector<1x128xf32>
    %cst_244 = arith.constant 4.471500e-02 : f32
    %348 = vector.broadcast %cst_244 : f32 to vector<1x128xf32>
    %349 = arith.mulf %348, %347 : vector<1x128xf32>
    %350 = arith.addf %343, %349 : vector<1x128xf32>
    %cst_245 = arith.constant 0.797884583 : f32
    %351 = vector.broadcast %cst_245 : f32 to vector<1x128xf32>
    %352 = arith.mulf %351, %350 : vector<1x128xf32>
    %353 = math.tanh %352 : vector<1x128xf32>
    %cst_246 = arith.constant 1.000000e+00 : f32
    %354 = vector.broadcast %cst_246 : f32 to vector<1x128xf32>
    %355 = arith.addf %354, %353 : vector<1x128xf32>
    %356 = arith.mulf %345, %355 : vector<1x128xf32>
    %357 = arith.truncf %356 : vector<1x128xf32> to vector<1x128xbf16>
    %c0_247 = arith.constant 0 : index
    %c0_248 = arith.constant 0 : index
    %358 = vector.load %arg10[%c0_247, %c0_248] : memref<128x128xbf16, #tpu.memory_space<vmem>>, vector<128x128xbf16>
    %cst_249 = arith.constant dense<0.000000e+00> : vector<1x128xf32>
    %359 = tpu.matmul %357, %358, %cst_249 {dimension_numbers = #tpu.dot_dimension_numbers<[1], [0], [0], [1], [0, 0, 1, 1], [], []>} : vector<1x128xbf16>, vector<128x128xbf16>, vector<1x128xf32> -> vector<1x128xf32>
    %c0_250 = arith.constant 0 : index
    %c0_251 = arith.constant 0 : index
    %360 = vector.load %arg12[%c0_250, %c0_251] : memref<1x128xf32, #tpu.memory_space<vmem>>, vector<1x128xf32>
    %361 = arith.addf %359, %360 : vector<1x128xf32>
    %c3_252 = arith.constant 3 : index
    %c0_253 = arith.constant 0 : index
    %362 = vector.load %arg13[%c3_252, %c0_253] : memref<8x128xf32, #tpu.memory_space<vmem>>, vector<1x128xf32>
    tpu.vector_store %arg13[%c3_252, %c0_253], %361 {strides = array<i32>} : memref<8x128xf32, #tpu.memory_space<vmem>>, vector<1x128xf32>,
    %c4 = arith.constant 4 : index
    %c0_254 = arith.constant 0 : index
    %363 = vector.load %arg14[%c4, %c0_254] : memref<16x128xf32, #tpu.memory_space<vmem>>, vector<4x128xf32>
    %364 = arith.truncf %363 : vector<4x128xf32> to vector<4x128xbf16>
    %c0_255 = arith.constant 0 : index
    %c0_256 = arith.constant 0 : index
    %365 = vector.load %arg7[%c0_255, %c0_256] : memref<1x128xf32, #tpu.memory_space<vmem>>, vector<1x128xf32>
    %366 = vector.extract_strided_slice %364 {offsets = [0, 0], sizes = [1, 128], strides = [1, 1]} : vector<4x128xbf16> to vector<1x128xbf16>
    %c0_257 = arith.constant 0 : index
    %c0_258 = arith.constant 0 : index
    %c0_259 = arith.constant 0 : index
    %367 = vector.load %arg5[%c0_257, %c0_258, %c0_259] : memref<4x128x128xbf16, #tpu.memory_space<vmem>>, vector<1x128x128xbf16>
    %368 = vector.shape_cast %367 : vector<1x128x128xbf16> to vector<128x128xbf16>
    %cst_260 = arith.constant dense<0.000000e+00> : vector<1x128xf32>
    %369 = tpu.matmul %366, %368, %cst_260 {dimension_numbers = #tpu.dot_dimension_numbers<[1], [0], [0], [1], [0, 0, 1, 1], [], []>} : vector<1x128xbf16>, vector<128x128xbf16>, vector<1x128xf32> -> vector<1x128xf32>
    %370 = arith.addf %365, %369 : vector<1x128xf32>
    %371 = vector.extract_strided_slice %364 {offsets = [1, 0], sizes = [1, 128], strides = [1, 1]} : vector<4x128xbf16> to vector<1x128xbf16>
    %c1_261 = arith.constant 1 : index
    %c0_262 = arith.constant 0 : index
    %c0_263 = arith.constant 0 : index
    %372 = vector.load %arg5[%c1_261, %c0_262, %c0_263] : memref<4x128x128xbf16, #tpu.memory_space<vmem>>, vector<1x128x128xbf16>
    %373 = vector.shape_cast %372 : vector<1x128x128xbf16> to vector<128x128xbf16>
    %cst_264 = arith.constant dense<0.000000e+00> : vector<1x128xf32>
    %374 = tpu.matmul %371, %373, %cst_264 {dimension_numbers = #tpu.dot_dimension_numbers<[1], [0], [0], [1], [0, 0, 1, 1], [], []>} : vector<1x128xbf16>, vector<128x128xbf16>, vector<1x128xf32> -> vector<1x128xf32>
    %375 = arith.addf %370, %374 : vector<1x128xf32>
    %376 = vector.extract_strided_slice %364 {offsets = [2, 0], sizes = [1, 128], strides = [1, 1]} : vector<4x128xbf16> to vector<1x128xbf16>
    %c2_265 = arith.constant 2 : index
    %c0_266 = arith.constant 0 : index
    %c0_267 = arith.constant 0 : index
    %377 = vector.load %arg5[%c2_265, %c0_266, %c0_267] : memref<4x128x128xbf16, #tpu.memory_space<vmem>>, vector<1x128x128xbf16>
    %378 = vector.shape_cast %377 : vector<1x128x128xbf16> to vector<128x128xbf16>
    %cst_268 = arith.constant dense<0.000000e+00> : vector<1x128xf32>
    %379 = tpu.matmul %376, %378, %cst_268 {dimension_numbers = #tpu.dot_dimension_numbers<[1], [0], [0], [1], [0, 0, 1, 1], [], []>} : vector<1x128xbf16>, vector<128x128xbf16>, vector<1x128xf32> -> vector<1x128xf32>
    %380 = arith.addf %375, %379 : vector<1x128xf32>
    %381 = vector.extract_strided_slice %364 {offsets = [3, 0], sizes = [1, 128], strides = [1, 1]} : vector<4x128xbf16> to vector<1x128xbf16>
    %c3_269 = arith.constant 3 : index
    %c0_270 = arith.constant 0 : index
    %c0_271 = arith.constant 0 : index
    %382 = vector.load %arg5[%c3_269, %c0_270, %c0_271] : memref<4x128x128xbf16, #tpu.memory_space<vmem>>, vector<1x128x128xbf16>
    %383 = vector.shape_cast %382 : vector<1x128x128xbf16> to vector<128x128xbf16>
    %cst_272 = arith.constant dense<0.000000e+00> : vector<1x128xf32>
    %384 = tpu.matmul %381, %383, %cst_272 {dimension_numbers = #tpu.dot_dimension_numbers<[1], [0], [0], [1], [0, 0, 1, 1], [], []>} : vector<1x128xbf16>, vector<128x128xbf16>, vector<1x128xf32> -> vector<1x128xf32>
    %385 = arith.addf %380, %384 : vector<1x128xf32>
    %cst_273 = arith.constant 5.000000e-01 : f32
    %386 = vector.broadcast %cst_273 : f32 to vector<1x128xf32>
    %387 = arith.mulf %386, %385 : vector<1x128xf32>
    %388 = arith.mulf %385, %385 : vector<1x128xf32>
    %389 = arith.mulf %388, %385 : vector<1x128xf32>
    %cst_274 = arith.constant 4.471500e-02 : f32
    %390 = vector.broadcast %cst_274 : f32 to vector<1x128xf32>
    %391 = arith.mulf %390, %389 : vector<1x128xf32>
    %392 = arith.addf %385, %391 : vector<1x128xf32>
    %cst_275 = arith.constant 0.797884583 : f32
    %393 = vector.broadcast %cst_275 : f32 to vector<1x128xf32>
    %394 = arith.mulf %393, %392 : vector<1x128xf32>
    %395 = math.tanh %394 : vector<1x128xf32>
    %cst_276 = arith.constant 1.000000e+00 : f32
    %396 = vector.broadcast %cst_276 : f32 to vector<1x128xf32>
    %397 = arith.addf %396, %395 : vector<1x128xf32>
    %398 = arith.mulf %387, %397 : vector<1x128xf32>
    %399 = arith.truncf %398 : vector<1x128xf32> to vector<1x128xbf16>
    %c0_277 = arith.constant 0 : index
    %c0_278 = arith.constant 0 : index
    %400 = vector.load %arg6[%c0_277, %c0_278] : memref<128x128xbf16, #tpu.memory_space<vmem>>, vector<128x128xbf16>
    %cst_279 = arith.constant dense<0.000000e+00> : vector<1x128xf32>
    %401 = tpu.matmul %399, %400, %cst_279 {dimension_numbers = #tpu.dot_dimension_numbers<[1], [0], [0], [1], [0, 0, 1, 1], [], []>} : vector<1x128xbf16>, vector<128x128xbf16>, vector<1x128xf32> -> vector<1x128xf32>
    %c0_280 = arith.constant 0 : index
    %c0_281 = arith.constant 0 : index
    %402 = vector.load %arg8[%c0_280, %c0_281] : memref<1x128xf32, #tpu.memory_space<vmem>>, vector<1x128xf32>
    %403 = arith.addf %401, %402 : vector<1x128xf32>
    %c12 = arith.constant 12 : index
    %c0_282 = arith.constant 0 : index
    %404 = vector.load %arg14[%c12, %c0_282] : memref<16x128xf32, #tpu.memory_space<vmem>>, vector<1x128xf32>
    tpu.vector_store %arg14[%c12, %c0_282], %403 {strides = array<i32>} : memref<16x128xf32, #tpu.memory_space<vmem>>, vector<1x128xf32>,
    %c9_283 = arith.constant 9 : index
    %c0_284 = arith.constant 0 : index
    %405 = vector.load %arg14[%c9_283, %c0_284] : memref<16x128xf32, #tpu.memory_space<vmem>>, vector<4x128xf32>
    %406 = arith.truncf %405 : vector<4x128xf32> to vector<4x128xbf16>
    %c0_285 = arith.constant 0 : index
    %c0_286 = arith.constant 0 : index
    %407 = vector.load %arg11[%c0_285, %c0_286] : memref<1x128xf32, #tpu.memory_space<vmem>>, vector<1x128xf32>
    %408 = vector.extract_strided_slice %406 {offsets = [0, 0], sizes = [1, 128], strides = [1, 1]} : vector<4x128xbf16> to vector<1x128xbf16>
    %c0_287 = arith.constant 0 : index
    %c0_288 = arith.constant 0 : index
    %c0_289 = arith.constant 0 : index
    %409 = vector.load %arg9[%c0_287, %c0_288, %c0_289] : memref<4x128x128xbf16, #tpu.memory_space<vmem>>, vector<1x128x128xbf16>
    %410 = vector.shape_cast %409 : vector<1x128x128xbf16> to vector<128x128xbf16>
    %cst_290 = arith.constant dense<0.000000e+00> : vector<1x128xf32>
    %411 = tpu.matmul %408, %410, %cst_290 {dimension_numbers = #tpu.dot_dimension_numbers<[1], [0], [0], [1], [0, 0, 1, 1], [], []>} : vector<1x128xbf16>, vector<128x128xbf16>, vector<1x128xf32> -> vector<1x128xf32>
    %412 = arith.addf %407, %411 : vector<1x128xf32>
    %413 = vector.extract_strided_slice %406 {offsets = [1, 0], sizes = [1, 128], strides = [1, 1]} : vector<4x128xbf16> to vector<1x128xbf16>
    %c1_291 = arith.constant 1 : index
    %c0_292 = arith.constant 0 : index
    %c0_293 = arith.constant 0 : index
    %414 = vector.load %arg9[%c1_291, %c0_292, %c0_293] : memref<4x128x128xbf16, #tpu.memory_space<vmem>>, vector<1x128x128xbf16>
    %415 = vector.shape_cast %414 : vector<1x128x128xbf16> to vector<128x128xbf16>
    %cst_294 = arith.constant dense<0.000000e+00> : vector<1x128xf32>
    %416 = tpu.matmul %413, %415, %cst_294 {dimension_numbers = #tpu.dot_dimension_numbers<[1], [0], [0], [1], [0, 0, 1, 1], [], []>} : vector<1x128xbf16>, vector<128x128xbf16>, vector<1x128xf32> -> vector<1x128xf32>
    %417 = arith.addf %412, %416 : vector<1x128xf32>
    %418 = vector.extract_strided_slice %406 {offsets = [2, 0], sizes = [1, 128], strides = [1, 1]} : vector<4x128xbf16> to vector<1x128xbf16>
    %c2_295 = arith.constant 2 : index
    %c0_296 = arith.constant 0 : index
    %c0_297 = arith.constant 0 : index
    %419 = vector.load %arg9[%c2_295, %c0_296, %c0_297] : memref<4x128x128xbf16, #tpu.memory_space<vmem>>, vector<1x128x128xbf16>
    %420 = vector.shape_cast %419 : vector<1x128x128xbf16> to vector<128x128xbf16>
    %cst_298 = arith.constant dense<0.000000e+00> : vector<1x128xf32>
    %421 = tpu.matmul %418, %420, %cst_298 {dimension_numbers = #tpu.dot_dimension_numbers<[1], [0], [0], [1], [0, 0, 1, 1], [], []>} : vector<1x128xbf16>, vector<128x128xbf16>, vector<1x128xf32> -> vector<1x128xf32>
    %422 = arith.addf %417, %421 : vector<1x128xf32>
    %423 = vector.extract_strided_slice %406 {offsets = [3, 0], sizes = [1, 128], strides = [1, 1]} : vector<4x128xbf16> to vector<1x128xbf16>
    %c3_299 = arith.constant 3 : index
    %c0_300 = arith.constant 0 : index
    %c0_301 = arith.constant 0 : index
    %424 = vector.load %arg9[%c3_299, %c0_300, %c0_301] : memref<4x128x128xbf16, #tpu.memory_space<vmem>>, vector<1x128x128xbf16>
    %425 = vector.shape_cast %424 : vector<1x128x128xbf16> to vector<128x128xbf16>
    %cst_302 = arith.constant dense<0.000000e+00> : vector<1x128xf32>
    %426 = tpu.matmul %423, %425, %cst_302 {dimension_numbers = #tpu.dot_dimension_numbers<[1], [0], [0], [1], [0, 0, 1, 1], [], []>} : vector<1x128xbf16>, vector<128x128xbf16>, vector<1x128xf32> -> vector<1x128xf32>
    %427 = arith.addf %422, %426 : vector<1x128xf32>
    %cst_303 = arith.constant 5.000000e-01 : f32
    %428 = vector.broadcast %cst_303 : f32 to vector<1x128xf32>
    %429 = arith.mulf %428, %427 : vector<1x128xf32>
    %430 = arith.mulf %427, %427 : vector<1x128xf32>
    %431 = arith.mulf %430, %427 : vector<1x128xf32>
    %cst_304 = arith.constant 4.471500e-02 : f32
    %432 = vector.broadcast %cst_304 : f32 to vector<1x128xf32>
    %433 = arith.mulf %432, %431 : vector<1x128xf32>
    %434 = arith.addf %427, %433 : vector<1x128xf32>
    %cst_305 = arith.constant 0.797884583 : f32
    %435 = vector.broadcast %cst_305 : f32 to vector<1x128xf32>
    %436 = arith.mulf %435, %434 : vector<1x128xf32>
    %437 = math.tanh %436 : vector<1x128xf32>
    %cst_306 = arith.constant 1.000000e+00 : f32
    %438 = vector.broadcast %cst_306 : f32 to vector<1x128xf32>
    %439 = arith.addf %438, %437 : vector<1x128xf32>
    %440 = arith.mulf %429, %439 : vector<1x128xf32>
    %441 = arith.truncf %440 : vector<1x128xf32> to vector<1x128xbf16>
    %c0_307 = arith.constant 0 : index
    %c0_308 = arith.constant 0 : index
    %442 = vector.load %arg10[%c0_307, %c0_308] : memref<128x128xbf16, #tpu.memory_space<vmem>>, vector<128x128xbf16>
    %cst_309 = arith.constant dense<0.000000e+00> : vector<1x128xf32>
    %443 = tpu.matmul %441, %442, %cst_309 {dimension_numbers = #tpu.dot_dimension_numbers<[1], [0], [0], [1], [0, 0, 1, 1], [], []>} : vector<1x128xbf16>, vector<128x128xbf16>, vector<1x128xf32> -> vector<1x128xf32>
    %c0_310 = arith.constant 0 : index
    %c0_311 = arith.constant 0 : index
    %444 = vector.load %arg12[%c0_310, %c0_311] : memref<1x128xf32, #tpu.memory_space<vmem>>, vector<1x128xf32>
    %445 = arith.addf %443, %444 : vector<1x128xf32>
    %c4_312 = arith.constant 4 : index
    %c0_313 = arith.constant 0 : index
    %446 = vector.load %arg13[%c4_312, %c0_313] : memref<8x128xf32, #tpu.memory_space<vmem>>, vector<1x128xf32>
    tpu.vector_store %arg13[%c4_312, %c0_313], %445 {strides = array<i32>} : memref<8x128xf32, #tpu.memory_space<vmem>>, vector<1x128xf32>,
    %c5_314 = arith.constant 5 : index
    %c0_315 = arith.constant 0 : index
    %447 = vector.load %arg14[%c5_314, %c0_315] : memref<16x128xf32, #tpu.memory_space<vmem>>, vector<4x128xf32>
    %448 = arith.truncf %447 : vector<4x128xf32> to vector<4x128xbf16>
    %c0_316 = arith.constant 0 : index
    %c0_317 = arith.constant 0 : index
    %449 = vector.load %arg7[%c0_316, %c0_317] : memref<1x128xf32, #tpu.memory_space<vmem>>, vector<1x128xf32>
    %450 = vector.extract_strided_slice %448 {offsets = [0, 0], sizes = [1, 128], strides = [1, 1]} : vector<4x128xbf16> to vector<1x128xbf16>
    %c0_318 = arith.constant 0 : index
    %c0_319 = arith.constant 0 : index
    %c0_320 = arith.constant 0 : index
    %451 = vector.load %arg5[%c0_318, %c0_319, %c0_320] : memref<4x128x128xbf16, #tpu.memory_space<vmem>>, vector<1x128x128xbf16>
    %452 = vector.shape_cast %451 : vector<1x128x128xbf16> to vector<128x128xbf16>
    %cst_321 = arith.constant dense<0.000000e+00> : vector<1x128xf32>
    %453 = tpu.matmul %450, %452, %cst_321 {dimension_numbers = #tpu.dot_dimension_numbers<[1], [0], [0], [1], [0, 0, 1, 1], [], []>} : vector<1x128xbf16>, vector<128x128xbf16>, vector<1x128xf32> -> vector<1x128xf32>
    %454 = arith.addf %449, %453 : vector<1x128xf32>
    %455 = vector.extract_strided_slice %448 {offsets = [1, 0], sizes = [1, 128], strides = [1, 1]} : vector<4x128xbf16> to vector<1x128xbf16>
    %c1_322 = arith.constant 1 : index
    %c0_323 = arith.constant 0 : index
    %c0_324 = arith.constant 0 : index
    %456 = vector.load %arg5[%c1_322, %c0_323, %c0_324] : memref<4x128x128xbf16, #tpu.memory_space<vmem>>, vector<1x128x128xbf16>
    %457 = vector.shape_cast %456 : vector<1x128x128xbf16> to vector<128x128xbf16>
    %cst_325 = arith.constant dense<0.000000e+00> : vector<1x128xf32>
    %458 = tpu.matmul %455, %457, %cst_325 {dimension_numbers = #tpu.dot_dimension_numbers<[1], [0], [0], [1], [0, 0, 1, 1], [], []>} : vector<1x128xbf16>, vector<128x128xbf16>, vector<1x128xf32> -> vector<1x128xf32>
    %459 = arith.addf %454, %458 : vector<1x128xf32>
    %460 = vector.extract_strided_slice %448 {offsets = [2, 0], sizes = [1, 128], strides = [1, 1]} : vector<4x128xbf16> to vector<1x128xbf16>
    %c2_326 = arith.constant 2 : index
    %c0_327 = arith.constant 0 : index
    %c0_328 = arith.constant 0 : index
    %461 = vector.load %arg5[%c2_326, %c0_327, %c0_328] : memref<4x128x128xbf16, #tpu.memory_space<vmem>>, vector<1x128x128xbf16>
    %462 = vector.shape_cast %461 : vector<1x128x128xbf16> to vector<128x128xbf16>
    %cst_329 = arith.constant dense<0.000000e+00> : vector<1x128xf32>
    %463 = tpu.matmul %460, %462, %cst_329 {dimension_numbers = #tpu.dot_dimension_numbers<[1], [0], [0], [1], [0, 0, 1, 1], [], []>} : vector<1x128xbf16>, vector<128x128xbf16>, vector<1x128xf32> -> vector<1x128xf32>
    %464 = arith.addf %459, %463 : vector<1x128xf32>
    %465 = vector.extract_strided_slice %448 {offsets = [3, 0], sizes = [1, 128], strides = [1, 1]} : vector<4x128xbf16> to vector<1x128xbf16>
    %c3_330 = arith.constant 3 : index
    %c0_331 = arith.constant 0 : index
    %c0_332 = arith.constant 0 : index
    %466 = vector.load %arg5[%c3_330, %c0_331, %c0_332] : memref<4x128x128xbf16, #tpu.memory_space<vmem>>, vector<1x128x128xbf16>
    %467 = vector.shape_cast %466 : vector<1x128x128xbf16> to vector<128x128xbf16>
    %cst_333 = arith.constant dense<0.000000e+00> : vector<1x128xf32>
    %468 = tpu.matmul %465, %467, %cst_333 {dimension_numbers = #tpu.dot_dimension_numbers<[1], [0], [0], [1], [0, 0, 1, 1], [], []>} : vector<1x128xbf16>, vector<128x128xbf16>, vector<1x128xf32> -> vector<1x128xf32>
    %469 = arith.addf %464, %468 : vector<1x128xf32>
    %cst_334 = arith.constant 5.000000e-01 : f32
    %470 = vector.broadcast %cst_334 : f32 to vector<1x128xf32>
    %471 = arith.mulf %470, %469 : vector<1x128xf32>
    %472 = arith.mulf %469, %469 : vector<1x128xf32>
    %473 = arith.mulf %472, %469 : vector<1x128xf32>
    %cst_335 = arith.constant 4.471500e-02 : f32
    %474 = vector.broadcast %cst_335 : f32 to vector<1x128xf32>
    %475 = arith.mulf %474, %473 : vector<1x128xf32>
    %476 = arith.addf %469, %475 : vector<1x128xf32>
    %cst_336 = arith.constant 0.797884583 : f32
    %477 = vector.broadcast %cst_336 : f32 to vector<1x128xf32>
    %478 = arith.mulf %477, %476 : vector<1x128xf32>
    %479 = math.tanh %478 : vector<1x128xf32>
    %cst_337 = arith.constant 1.000000e+00 : f32
    %480 = vector.broadcast %cst_337 : f32 to vector<1x128xf32>
    %481 = arith.addf %480, %479 : vector<1x128xf32>
    %482 = arith.mulf %471, %481 : vector<1x128xf32>
    %483 = arith.truncf %482 : vector<1x128xf32> to vector<1x128xbf16>
    %c0_338 = arith.constant 0 : index
    %c0_339 = arith.constant 0 : index
    %484 = vector.load %arg6[%c0_338, %c0_339] : memref<128x128xbf16, #tpu.memory_space<vmem>>, vector<128x128xbf16>
    %cst_340 = arith.constant dense<0.000000e+00> : vector<1x128xf32>
    %485 = tpu.matmul %483, %484, %cst_340 {dimension_numbers = #tpu.dot_dimension_numbers<[1], [0], [0], [1], [0, 0, 1, 1], [], []>} : vector<1x128xbf16>, vector<128x128xbf16>, vector<1x128xf32> -> vector<1x128xf32>
    %c0_341 = arith.constant 0 : index
    %c0_342 = arith.constant 0 : index
    %486 = vector.load %arg8[%c0_341, %c0_342] : memref<1x128xf32, #tpu.memory_space<vmem>>, vector<1x128xf32>
    %487 = arith.addf %485, %486 : vector<1x128xf32>
    %c13 = arith.constant 13 : index
    %c0_343 = arith.constant 0 : index
    %488 = vector.load %arg14[%c13, %c0_343] : memref<16x128xf32, #tpu.memory_space<vmem>>, vector<1x128xf32>
    tpu.vector_store %arg14[%c13, %c0_343], %487 {strides = array<i32>} : memref<16x128xf32, #tpu.memory_space<vmem>>, vector<1x128xf32>,
    %c10_344 = arith.constant 10 : index
    %c0_345 = arith.constant 0 : index
    %489 = vector.load %arg14[%c10_344, %c0_345] : memref<16x128xf32, #tpu.memory_space<vmem>>, vector<4x128xf32>
    %490 = arith.truncf %489 : vector<4x128xf32> to vector<4x128xbf16>
    %c0_346 = arith.constant 0 : index
    %c0_347 = arith.constant 0 : index
    %491 = vector.load %arg11[%c0_346, %c0_347] : memref<1x128xf32, #tpu.memory_space<vmem>>, vector<1x128xf32>
    %492 = vector.extract_strided_slice %490 {offsets = [0, 0], sizes = [1, 128], strides = [1, 1]} : vector<4x128xbf16> to vector<1x128xbf16>
    %c0_348 = arith.constant 0 : index
    %c0_349 = arith.constant 0 : index
    %c0_350 = arith.constant 0 : index
    %493 = vector.load %arg9[%c0_348, %c0_349, %c0_350] : memref<4x128x128xbf16, #tpu.memory_space<vmem>>, vector<1x128x128xbf16>
    %494 = vector.shape_cast %493 : vector<1x128x128xbf16> to vector<128x128xbf16>
    %cst_351 = arith.constant dense<0.000000e+00> : vector<1x128xf32>
    %495 = tpu.matmul %492, %494, %cst_351 {dimension_numbers = #tpu.dot_dimension_numbers<[1], [0], [0], [1], [0, 0, 1, 1], [], []>} : vector<1x128xbf16>, vector<128x128xbf16>, vector<1x128xf32> -> vector<1x128xf32>
    %496 = arith.addf %491, %495 : vector<1x128xf32>
    %497 = vector.extract_strided_slice %490 {offsets = [1, 0], sizes = [1, 128], strides = [1, 1]} : vector<4x128xbf16> to vector<1x128xbf16>
    %c1_352 = arith.constant 1 : index
    %c0_353 = arith.constant 0 : index
    %c0_354 = arith.constant 0 : index
    %498 = vector.load %arg9[%c1_352, %c0_353, %c0_354] : memref<4x128x128xbf16, #tpu.memory_space<vmem>>, vector<1x128x128xbf16>
    %499 = vector.shape_cast %498 : vector<1x128x128xbf16> to vector<128x128xbf16>
    %cst_355 = arith.constant dense<0.000000e+00> : vector<1x128xf32>
    %500 = tpu.matmul %497, %499, %cst_355 {dimension_numbers = #tpu.dot_dimension_numbers<[1], [0], [0], [1], [0, 0, 1, 1], [], []>} : vector<1x128xbf16>, vector<128x128xbf16>, vector<1x128xf32> -> vector<1x128xf32>
    %501 = arith.addf %496, %500 : vector<1x128xf32>
    %502 = vector.extract_strided_slice %490 {offsets = [2, 0], sizes = [1, 128], strides = [1, 1]} : vector<4x128xbf16> to vector<1x128xbf16>
    %c2_356 = arith.constant 2 : index
    %c0_357 = arith.constant 0 : index
    %c0_358 = arith.constant 0 : index
    %503 = vector.load %arg9[%c2_356, %c0_357, %c0_358] : memref<4x128x128xbf16, #tpu.memory_space<vmem>>, vector<1x128x128xbf16>
    %504 = vector.shape_cast %503 : vector<1x128x128xbf16> to vector<128x128xbf16>
    %cst_359 = arith.constant dense<0.000000e+00> : vector<1x128xf32>
    %505 = tpu.matmul %502, %504, %cst_359 {dimension_numbers = #tpu.dot_dimension_numbers<[1], [0], [0], [1], [0, 0, 1, 1], [], []>} : vector<1x128xbf16>, vector<128x128xbf16>, vector<1x128xf32> -> vector<1x128xf32>
    %506 = arith.addf %501, %505 : vector<1x128xf32>
    %507 = vector.extract_strided_slice %490 {offsets = [3, 0], sizes = [1, 128], strides = [1, 1]} : vector<4x128xbf16> to vector<1x128xbf16>
    %c3_360 = arith.constant 3 : index
    %c0_361 = arith.constant 0 : index
    %c0_362 = arith.constant 0 : index
    %508 = vector.load %arg9[%c3_360, %c0_361, %c0_362] : memref<4x128x128xbf16, #tpu.memory_space<vmem>>, vector<1x128x128xbf16>
    %509 = vector.shape_cast %508 : vector<1x128x128xbf16> to vector<128x128xbf16>
    %cst_363 = arith.constant dense<0.000000e+00> : vector<1x128xf32>
    %510 = tpu.matmul %507, %509, %cst_363 {dimension_numbers = #tpu.dot_dimension_numbers<[1], [0], [0], [1], [0, 0, 1, 1], [], []>} : vector<1x128xbf16>, vector<128x128xbf16>, vector<1x128xf32> -> vector<1x128xf32>
    %511 = arith.addf %506, %510 : vector<1x128xf32>
    %cst_364 = arith.constant 5.000000e-01 : f32
    %512 = vector.broadcast %cst_364 : f32 to vector<1x128xf32>
    %513 = arith.mulf %512, %511 : vector<1x128xf32>
    %514 = arith.mulf %511, %511 : vector<1x128xf32>
    %515 = arith.mulf %514, %511 : vector<1x128xf32>
    %cst_365 = arith.constant 4.471500e-02 : f32
    %516 = vector.broadcast %cst_365 : f32 to vector<1x128xf32>
    %517 = arith.mulf %516, %515 : vector<1x128xf32>
    %518 = arith.addf %511, %517 : vector<1x128xf32>
    %cst_366 = arith.constant 0.797884583 : f32
    %519 = vector.broadcast %cst_366 : f32 to vector<1x128xf32>
    %520 = arith.mulf %519, %518 : vector<1x128xf32>
    %521 = math.tanh %520 : vector<1x128xf32>
    %cst_367 = arith.constant 1.000000e+00 : f32
    %522 = vector.broadcast %cst_367 : f32 to vector<1x128xf32>
    %523 = arith.addf %522, %521 : vector<1x128xf32>
    %524 = arith.mulf %513, %523 : vector<1x128xf32>
    %525 = arith.truncf %524 : vector<1x128xf32> to vector<1x128xbf16>
    %c0_368 = arith.constant 0 : index
    %c0_369 = arith.constant 0 : index
    %526 = vector.load %arg10[%c0_368, %c0_369] : memref<128x128xbf16, #tpu.memory_space<vmem>>, vector<128x128xbf16>
    %cst_370 = arith.constant dense<0.000000e+00> : vector<1x128xf32>
    %527 = tpu.matmul %525, %526, %cst_370 {dimension_numbers = #tpu.dot_dimension_numbers<[1], [0], [0], [1], [0, 0, 1, 1], [], []>} : vector<1x128xbf16>, vector<128x128xbf16>, vector<1x128xf32> -> vector<1x128xf32>
    %c0_371 = arith.constant 0 : index
    %c0_372 = arith.constant 0 : index
    %528 = vector.load %arg12[%c0_371, %c0_372] : memref<1x128xf32, #tpu.memory_space<vmem>>, vector<1x128xf32>
    %529 = arith.addf %527, %528 : vector<1x128xf32>
    %c5_373 = arith.constant 5 : index
    %c0_374 = arith.constant 0 : index
    %530 = vector.load %arg13[%c5_373, %c0_374] : memref<8x128xf32, #tpu.memory_space<vmem>>, vector<1x128xf32>
    tpu.vector_store %arg13[%c5_373, %c0_374], %529 {strides = array<i32>} : memref<8x128xf32, #tpu.memory_space<vmem>>, vector<1x128xf32>,
    %c6_375 = arith.constant 6 : index
    %c0_376 = arith.constant 0 : index
    %531 = vector.load %arg14[%c6_375, %c0_376] : memref<16x128xf32, #tpu.memory_space<vmem>>, vector<4x128xf32>
    %532 = arith.truncf %531 : vector<4x128xf32> to vector<4x128xbf16>
    %c0_377 = arith.constant 0 : index
    %c0_378 = arith.constant 0 : index
    %533 = vector.load %arg7[%c0_377, %c0_378] : memref<1x128xf32, #tpu.memory_space<vmem>>, vector<1x128xf32>
    %534 = vector.extract_strided_slice %532 {offsets = [0, 0], sizes = [1, 128], strides = [1, 1]} : vector<4x128xbf16> to vector<1x128xbf16>
    %c0_379 = arith.constant 0 : index
    %c0_380 = arith.constant 0 : index
    %c0_381 = arith.constant 0 : index
    %535 = vector.load %arg5[%c0_379, %c0_380, %c0_381] : memref<4x128x128xbf16, #tpu.memory_space<vmem>>, vector<1x128x128xbf16>
    %536 = vector.shape_cast %535 : vector<1x128x128xbf16> to vector<128x128xbf16>
    %cst_382 = arith.constant dense<0.000000e+00> : vector<1x128xf32>
    %537 = tpu.matmul %534, %536, %cst_382 {dimension_numbers = #tpu.dot_dimension_numbers<[1], [0], [0], [1], [0, 0, 1, 1], [], []>} : vector<1x128xbf16>, vector<128x128xbf16>, vector<1x128xf32> -> vector<1x128xf32>
    %538 = arith.addf %533, %537 : vector<1x128xf32>
    %539 = vector.extract_strided_slice %532 {offsets = [1, 0], sizes = [1, 128], strides = [1, 1]} : vector<4x128xbf16> to vector<1x128xbf16>
    %c1_383 = arith.constant 1 : index
    %c0_384 = arith.constant 0 : index
    %c0_385 = arith.constant 0 : index
    %540 = vector.load %arg5[%c1_383, %c0_384, %c0_385] : memref<4x128x128xbf16, #tpu.memory_space<vmem>>, vector<1x128x128xbf16>
    %541 = vector.shape_cast %540 : vector<1x128x128xbf16> to vector<128x128xbf16>
    %cst_386 = arith.constant dense<0.000000e+00> : vector<1x128xf32>
    %542 = tpu.matmul %539, %541, %cst_386 {dimension_numbers = #tpu.dot_dimension_numbers<[1], [0], [0], [1], [0, 0, 1, 1], [], []>} : vector<1x128xbf16>, vector<128x128xbf16>, vector<1x128xf32> -> vector<1x128xf32>
    %543 = arith.addf %538, %542 : vector<1x128xf32>
    %544 = vector.extract_strided_slice %532 {offsets = [2, 0], sizes = [1, 128], strides = [1, 1]} : vector<4x128xbf16> to vector<1x128xbf16>
    %c2_387 = arith.constant 2 : index
    %c0_388 = arith.constant 0 : index
    %c0_389 = arith.constant 0 : index
    %545 = vector.load %arg5[%c2_387, %c0_388, %c0_389] : memref<4x128x128xbf16, #tpu.memory_space<vmem>>, vector<1x128x128xbf16>
    %546 = vector.shape_cast %545 : vector<1x128x128xbf16> to vector<128x128xbf16>
    %cst_390 = arith.constant dense<0.000000e+00> : vector<1x128xf32>
    %547 = tpu.matmul %544, %546, %cst_390 {dimension_numbers = #tpu.dot_dimension_numbers<[1], [0], [0], [1], [0, 0, 1, 1], [], []>} : vector<1x128xbf16>, vector<128x128xbf16>, vector<1x128xf32> -> vector<1x128xf32>
    %548 = arith.addf %543, %547 : vector<1x128xf32>
    %549 = vector.extract_strided_slice %532 {offsets = [3, 0], sizes = [1, 128], strides = [1, 1]} : vector<4x128xbf16> to vector<1x128xbf16>
    %c3_391 = arith.constant 3 : index
    %c0_392 = arith.constant 0 : index
    %c0_393 = arith.constant 0 : index
    %550 = vector.load %arg5[%c3_391, %c0_392, %c0_393] : memref<4x128x128xbf16, #tpu.memory_space<vmem>>, vector<1x128x128xbf16>
    %551 = vector.shape_cast %550 : vector<1x128x128xbf16> to vector<128x128xbf16>
    %cst_394 = arith.constant dense<0.000000e+00> : vector<1x128xf32>
    %552 = tpu.matmul %549, %551, %cst_394 {dimension_numbers = #tpu.dot_dimension_numbers<[1], [0], [0], [1], [0, 0, 1, 1], [], []>} : vector<1x128xbf16>, vector<128x128xbf16>, vector<1x128xf32> -> vector<1x128xf32>
    %553 = arith.addf %548, %552 : vector<1x128xf32>
    %cst_395 = arith.constant 5.000000e-01 : f32
    %554 = vector.broadcast %cst_395 : f32 to vector<1x128xf32>
    %555 = arith.mulf %554, %553 : vector<1x128xf32>
    %556 = arith.mulf %553, %553 : vector<1x128xf32>
    %557 = arith.mulf %556, %553 : vector<1x128xf32>
    %cst_396 = arith.constant 4.471500e-02 : f32
    %558 = vector.broadcast %cst_396 : f32 to vector<1x128xf32>
    %559 = arith.mulf %558, %557 : vector<1x128xf32>
    %560 = arith.addf %553, %559 : vector<1x128xf32>
    %cst_397 = arith.constant 0.797884583 : f32
    %561 = vector.broadcast %cst_397 : f32 to vector<1x128xf32>
    %562 = arith.mulf %561, %560 : vector<1x128xf32>
    %563 = math.tanh %562 : vector<1x128xf32>
    %cst_398 = arith.constant 1.000000e+00 : f32
    %564 = vector.broadcast %cst_398 : f32 to vector<1x128xf32>
    %565 = arith.addf %564, %563 : vector<1x128xf32>
    %566 = arith.mulf %555, %565 : vector<1x128xf32>
    %567 = arith.truncf %566 : vector<1x128xf32> to vector<1x128xbf16>
    %c0_399 = arith.constant 0 : index
    %c0_400 = arith.constant 0 : index
    %568 = vector.load %arg6[%c0_399, %c0_400] : memref<128x128xbf16, #tpu.memory_space<vmem>>, vector<128x128xbf16>
    %cst_401 = arith.constant dense<0.000000e+00> : vector<1x128xf32>
    %569 = tpu.matmul %567, %568, %cst_401 {dimension_numbers = #tpu.dot_dimension_numbers<[1], [0], [0], [1], [0, 0, 1, 1], [], []>} : vector<1x128xbf16>, vector<128x128xbf16>, vector<1x128xf32> -> vector<1x128xf32>
    %c0_402 = arith.constant 0 : index
    %c0_403 = arith.constant 0 : index
    %570 = vector.load %arg8[%c0_402, %c0_403] : memref<1x128xf32, #tpu.memory_space<vmem>>, vector<1x128xf32>
    %571 = arith.addf %569, %570 : vector<1x128xf32>
    %c14 = arith.constant 14 : index
    %c0_404 = arith.constant 0 : index
    %572 = vector.load %arg14[%c14, %c0_404] : memref<16x128xf32, #tpu.memory_space<vmem>>, vector<1x128xf32>
    tpu.vector_store %arg14[%c14, %c0_404], %571 {strides = array<i32>} : memref<16x128xf32, #tpu.memory_space<vmem>>, vector<1x128xf32>,
    %c11_405 = arith.constant 11 : index
    %c0_406 = arith.constant 0 : index
    %573 = vector.load %arg14[%c11_405, %c0_406] : memref<16x128xf32, #tpu.memory_space<vmem>>, vector<4x128xf32>
    %574 = arith.truncf %573 : vector<4x128xf32> to vector<4x128xbf16>
    %c0_407 = arith.constant 0 : index
    %c0_408 = arith.constant 0 : index
    %575 = vector.load %arg11[%c0_407, %c0_408] : memref<1x128xf32, #tpu.memory_space<vmem>>, vector<1x128xf32>
    %576 = vector.extract_strided_slice %574 {offsets = [0, 0], sizes = [1, 128], strides = [1, 1]} : vector<4x128xbf16> to vector<1x128xbf16>
    %c0_409 = arith.constant 0 : index
    %c0_410 = arith.constant 0 : index
    %c0_411 = arith.constant 0 : index
    %577 = vector.load %arg9[%c0_409, %c0_410, %c0_411] : memref<4x128x128xbf16, #tpu.memory_space<vmem>>, vector<1x128x128xbf16>
    %578 = vector.shape_cast %577 : vector<1x128x128xbf16> to vector<128x128xbf16>
    %cst_412 = arith.constant dense<0.000000e+00> : vector<1x128xf32>
    %579 = tpu.matmul %576, %578, %cst_412 {dimension_numbers = #tpu.dot_dimension_numbers<[1], [0], [0], [1], [0, 0, 1, 1], [], []>} : vector<1x128xbf16>, vector<128x128xbf16>, vector<1x128xf32> -> vector<1x128xf32>
    %580 = arith.addf %575, %579 : vector<1x128xf32>
    %581 = vector.extract_strided_slice %574 {offsets = [1, 0], sizes = [1, 128], strides = [1, 1]} : vector<4x128xbf16> to vector<1x128xbf16>
    %c1_413 = arith.constant 1 : index
    %c0_414 = arith.constant 0 : index
    %c0_415 = arith.constant 0 : index
    %582 = vector.load %arg9[%c1_413, %c0_414, %c0_415] : memref<4x128x128xbf16, #tpu.memory_space<vmem>>, vector<1x128x128xbf16>
    %583 = vector.shape_cast %582 : vector<1x128x128xbf16> to vector<128x128xbf16>
    %cst_416 = arith.constant dense<0.000000e+00> : vector<1x128xf32>
    %584 = tpu.matmul %581, %583, %cst_416 {dimension_numbers = #tpu.dot_dimension_numbers<[1], [0], [0], [1], [0, 0, 1, 1], [], []>} : vector<1x128xbf16>, vector<128x128xbf16>, vector<1x128xf32> -> vector<1x128xf32>
    %585 = arith.addf %580, %584 : vector<1x128xf32>
    %586 = vector.extract_strided_slice %574 {offsets = [2, 0], sizes = [1, 128], strides = [1, 1]} : vector<4x128xbf16> to vector<1x128xbf16>
    %c2_417 = arith.constant 2 : index
    %c0_418 = arith.constant 0 : index
    %c0_419 = arith.constant 0 : index
    %587 = vector.load %arg9[%c2_417, %c0_418, %c0_419] : memref<4x128x128xbf16, #tpu.memory_space<vmem>>, vector<1x128x128xbf16>
    %588 = vector.shape_cast %587 : vector<1x128x128xbf16> to vector<128x128xbf16>
    %cst_420 = arith.constant dense<0.000000e+00> : vector<1x128xf32>
    %589 = tpu.matmul %586, %588, %cst_420 {dimension_numbers = #tpu.dot_dimension_numbers<[1], [0], [0], [1], [0, 0, 1, 1], [], []>} : vector<1x128xbf16>, vector<128x128xbf16>, vector<1x128xf32> -> vector<1x128xf32>
    %590 = arith.addf %585, %589 : vector<1x128xf32>
    %591 = vector.extract_strided_slice %574 {offsets = [3, 0], sizes = [1, 128], strides = [1, 1]} : vector<4x128xbf16> to vector<1x128xbf16>
    %c3_421 = arith.constant 3 : index
    %c0_422 = arith.constant 0 : index
    %c0_423 = arith.constant 0 : index
    %592 = vector.load %arg9[%c3_421, %c0_422, %c0_423] : memref<4x128x128xbf16, #tpu.memory_space<vmem>>, vector<1x128x128xbf16>
    %593 = vector.shape_cast %592 : vector<1x128x128xbf16> to vector<128x128xbf16>
    %cst_424 = arith.constant dense<0.000000e+00> : vector<1x128xf32>
    %594 = tpu.matmul %591, %593, %cst_424 {dimension_numbers = #tpu.dot_dimension_numbers<[1], [0], [0], [1], [0, 0, 1, 1], [], []>} : vector<1x128xbf16>, vector<128x128xbf16>, vector<1x128xf32> -> vector<1x128xf32>
    %595 = arith.addf %590, %594 : vector<1x128xf32>
    %cst_425 = arith.constant 5.000000e-01 : f32
    %596 = vector.broadcast %cst_425 : f32 to vector<1x128xf32>
    %597 = arith.mulf %596, %595 : vector<1x128xf32>
    %598 = arith.mulf %595, %595 : vector<1x128xf32>
    %599 = arith.mulf %598, %595 : vector<1x128xf32>
    %cst_426 = arith.constant 4.471500e-02 : f32
    %600 = vector.broadcast %cst_426 : f32 to vector<1x128xf32>
    %601 = arith.mulf %600, %599 : vector<1x128xf32>
    %602 = arith.addf %595, %601 : vector<1x128xf32>
    %cst_427 = arith.constant 0.797884583 : f32
    %603 = vector.broadcast %cst_427 : f32 to vector<1x128xf32>
    %604 = arith.mulf %603, %602 : vector<1x128xf32>
    %605 = math.tanh %604 : vector<1x128xf32>
    %cst_428 = arith.constant 1.000000e+00 : f32
    %606 = vector.broadcast %cst_428 : f32 to vector<1x128xf32>
    %607 = arith.addf %606, %605 : vector<1x128xf32>
    %608 = arith.mulf %597, %607 : vector<1x128xf32>
    %609 = arith.truncf %608 : vector<1x128xf32> to vector<1x128xbf16>
    %c0_429 = arith.constant 0 : index
    %c0_430 = arith.constant 0 : index
    %610 = vector.load %arg10[%c0_429, %c0_430] : memref<128x128xbf16, #tpu.memory_space<vmem>>, vector<128x128xbf16>
    %cst_431 = arith.constant dense<0.000000e+00> : vector<1x128xf32>
    %611 = tpu.matmul %609, %610, %cst_431 {dimension_numbers = #tpu.dot_dimension_numbers<[1], [0], [0], [1], [0, 0, 1, 1], [], []>} : vector<1x128xbf16>, vector<128x128xbf16>, vector<1x128xf32> -> vector<1x128xf32>
    %c0_432 = arith.constant 0 : index
    %c0_433 = arith.constant 0 : index
    %612 = vector.load %arg12[%c0_432, %c0_433] : memref<1x128xf32, #tpu.memory_space<vmem>>, vector<1x128xf32>
    %613 = arith.addf %611, %612 : vector<1x128xf32>
    %c6_434 = arith.constant 6 : index
    %c0_435 = arith.constant 0 : index
    %614 = vector.load %arg13[%c6_434, %c0_435] : memref<8x128xf32, #tpu.memory_space<vmem>>, vector<1x128xf32>
    tpu.vector_store %arg13[%c6_434, %c0_435], %613 {strides = array<i32>} : memref<8x128xf32, #tpu.memory_space<vmem>>, vector<1x128xf32>,
    %c7_436 = arith.constant 7 : index
    %c0_437 = arith.constant 0 : index
    %615 = vector.load %arg14[%c7_436, %c0_437] : memref<16x128xf32, #tpu.memory_space<vmem>>, vector<4x128xf32>
    %616 = arith.truncf %615 : vector<4x128xf32> to vector<4x128xbf16>
    %c0_438 = arith.constant 0 : index
    %c0_439 = arith.constant 0 : index
    %617 = vector.load %arg7[%c0_438, %c0_439] : memref<1x128xf32, #tpu.memory_space<vmem>>, vector<1x128xf32>
    %618 = vector.extract_strided_slice %616 {offsets = [0, 0], sizes = [1, 128], strides = [1, 1]} : vector<4x128xbf16> to vector<1x128xbf16>
    %c0_440 = arith.constant 0 : index
    %c0_441 = arith.constant 0 : index
    %c0_442 = arith.constant 0 : index
    %619 = vector.load %arg5[%c0_440, %c0_441, %c0_442] : memref<4x128x128xbf16, #tpu.memory_space<vmem>>, vector<1x128x128xbf16>
    %620 = vector.shape_cast %619 : vector<1x128x128xbf16> to vector<128x128xbf16>
    %cst_443 = arith.constant dense<0.000000e+00> : vector<1x128xf32>
    %621 = tpu.matmul %618, %620, %cst_443 {dimension_numbers = #tpu.dot_dimension_numbers<[1], [0], [0], [1], [0, 0, 1, 1], [], []>} : vector<1x128xbf16>, vector<128x128xbf16>, vector<1x128xf32> -> vector<1x128xf32>
    %622 = arith.addf %617, %621 : vector<1x128xf32>
    %623 = vector.extract_strided_slice %616 {offsets = [1, 0], sizes = [1, 128], strides = [1, 1]} : vector<4x128xbf16> to vector<1x128xbf16>
    %c1_444 = arith.constant 1 : index
    %c0_445 = arith.constant 0 : index
    %c0_446 = arith.constant 0 : index
    %624 = vector.load %arg5[%c1_444, %c0_445, %c0_446] : memref<4x128x128xbf16, #tpu.memory_space<vmem>>, vector<1x128x128xbf16>
    %625 = vector.shape_cast %624 : vector<1x128x128xbf16> to vector<128x128xbf16>
    %cst_447 = arith.constant dense<0.000000e+00> : vector<1x128xf32>
    %626 = tpu.matmul %623, %625, %cst_447 {dimension_numbers = #tpu.dot_dimension_numbers<[1], [0], [0], [1], [0, 0, 1, 1], [], []>} : vector<1x128xbf16>, vector<128x128xbf16>, vector<1x128xf32> -> vector<1x128xf32>
    %627 = arith.addf %622, %626 : vector<1x128xf32>
    %628 = vector.extract_strided_slice %616 {offsets = [2, 0], sizes = [1, 128], strides = [1, 1]} : vector<4x128xbf16> to vector<1x128xbf16>
    %c2_448 = arith.constant 2 : index
    %c0_449 = arith.constant 0 : index
    %c0_450 = arith.constant 0 : index
    %629 = vector.load %arg5[%c2_448, %c0_449, %c0_450] : memref<4x128x128xbf16, #tpu.memory_space<vmem>>, vector<1x128x128xbf16>
    %630 = vector.shape_cast %629 : vector<1x128x128xbf16> to vector<128x128xbf16>
    %cst_451 = arith.constant dense<0.000000e+00> : vector<1x128xf32>
    %631 = tpu.matmul %628, %630, %cst_451 {dimension_numbers = #tpu.dot_dimension_numbers<[1], [0], [0], [1], [0, 0, 1, 1], [], []>} : vector<1x128xbf16>, vector<128x128xbf16>, vector<1x128xf32> -> vector<1x128xf32>
    %632 = arith.addf %627, %631 : vector<1x128xf32>
    %633 = vector.extract_strided_slice %616 {offsets = [3, 0], sizes = [1, 128], strides = [1, 1]} : vector<4x128xbf16> to vector<1x128xbf16>
    %c3_452 = arith.constant 3 : index
    %c0_453 = arith.constant 0 : index
    %c0_454 = arith.constant 0 : index
    %634 = vector.load %arg5[%c3_452, %c0_453, %c0_454] : memref<4x128x128xbf16, #tpu.memory_space<vmem>>, vector<1x128x128xbf16>
    %635 = vector.shape_cast %634 : vector<1x128x128xbf16> to vector<128x128xbf16>
    %cst_455 = arith.constant dense<0.000000e+00> : vector<1x128xf32>
    %636 = tpu.matmul %633, %635, %cst_455 {dimension_numbers = #tpu.dot_dimension_numbers<[1], [0], [0], [1], [0, 0, 1, 1], [], []>} : vector<1x128xbf16>, vector<128x128xbf16>, vector<1x128xf32> -> vector<1x128xf32>
    %637 = arith.addf %632, %636 : vector<1x128xf32>
    %cst_456 = arith.constant 5.000000e-01 : f32
    %638 = vector.broadcast %cst_456 : f32 to vector<1x128xf32>
    %639 = arith.mulf %638, %637 : vector<1x128xf32>
    %640 = arith.mulf %637, %637 : vector<1x128xf32>
    %641 = arith.mulf %640, %637 : vector<1x128xf32>
    %cst_457 = arith.constant 4.471500e-02 : f32
    %642 = vector.broadcast %cst_457 : f32 to vector<1x128xf32>
    %643 = arith.mulf %642, %641 : vector<1x128xf32>
    %644 = arith.addf %637, %643 : vector<1x128xf32>
    %cst_458 = arith.constant 0.797884583 : f32
    %645 = vector.broadcast %cst_458 : f32 to vector<1x128xf32>
    %646 = arith.mulf %645, %644 : vector<1x128xf32>
    %647 = math.tanh %646 : vector<1x128xf32>
    %cst_459 = arith.constant 1.000000e+00 : f32
    %648 = vector.broadcast %cst_459 : f32 to vector<1x128xf32>
    %649 = arith.addf %648, %647 : vector<1x128xf32>
    %650 = arith.mulf %639, %649 : vector<1x128xf32>
    %651 = arith.truncf %650 : vector<1x128xf32> to vector<1x128xbf16>
    %c0_460 = arith.constant 0 : index
    %c0_461 = arith.constant 0 : index
    %652 = vector.load %arg6[%c0_460, %c0_461] : memref<128x128xbf16, #tpu.memory_space<vmem>>, vector<128x128xbf16>
    %cst_462 = arith.constant dense<0.000000e+00> : vector<1x128xf32>
    %653 = tpu.matmul %651, %652, %cst_462 {dimension_numbers = #tpu.dot_dimension_numbers<[1], [0], [0], [1], [0, 0, 1, 1], [], []>} : vector<1x128xbf16>, vector<128x128xbf16>, vector<1x128xf32> -> vector<1x128xf32>
    %c0_463 = arith.constant 0 : index
    %c0_464 = arith.constant 0 : index
    %654 = vector.load %arg8[%c0_463, %c0_464] : memref<1x128xf32, #tpu.memory_space<vmem>>, vector<1x128xf32>
    %655 = arith.addf %653, %654 : vector<1x128xf32>
    %c15 = arith.constant 15 : index
    %c0_465 = arith.constant 0 : index
    %656 = vector.load %arg14[%c15, %c0_465] : memref<16x128xf32, #tpu.memory_space<vmem>>, vector<1x128xf32>
    tpu.vector_store %arg14[%c15, %c0_465], %655 {strides = array<i32>} : memref<16x128xf32, #tpu.memory_space<vmem>>, vector<1x128xf32>,
    %c12_466 = arith.constant 12 : index
    %c0_467 = arith.constant 0 : index
    %657 = vector.load %arg14[%c12_466, %c0_467] : memref<16x128xf32, #tpu.memory_space<vmem>>, vector<4x128xf32>
    %658 = arith.truncf %657 : vector<4x128xf32> to vector<4x128xbf16>
    %c0_468 = arith.constant 0 : index
    %c0_469 = arith.constant 0 : index
    %659 = vector.load %arg11[%c0_468, %c0_469] : memref<1x128xf32, #tpu.memory_space<vmem>>, vector<1x128xf32>
    %660 = vector.extract_strided_slice %658 {offsets = [0, 0], sizes = [1, 128], strides = [1, 1]} : vector<4x128xbf16> to vector<1x128xbf16>
    %c0_470 = arith.constant 0 : index
    %c0_471 = arith.constant 0 : index
    %c0_472 = arith.constant 0 : index
    %661 = vector.load %arg9[%c0_470, %c0_471, %c0_472] : memref<4x128x128xbf16, #tpu.memory_space<vmem>>, vector<1x128x128xbf16>
    %662 = vector.shape_cast %661 : vector<1x128x128xbf16> to vector<128x128xbf16>
    %cst_473 = arith.constant dense<0.000000e+00> : vector<1x128xf32>
    %663 = tpu.matmul %660, %662, %cst_473 {dimension_numbers = #tpu.dot_dimension_numbers<[1], [0], [0], [1], [0, 0, 1, 1], [], []>} : vector<1x128xbf16>, vector<128x128xbf16>, vector<1x128xf32> -> vector<1x128xf32>
    %664 = arith.addf %659, %663 : vector<1x128xf32>
    %665 = vector.extract_strided_slice %658 {offsets = [1, 0], sizes = [1, 128], strides = [1, 1]} : vector<4x128xbf16> to vector<1x128xbf16>
    %c1_474 = arith.constant 1 : index
    %c0_475 = arith.constant 0 : index
    %c0_476 = arith.constant 0 : index
    %666 = vector.load %arg9[%c1_474, %c0_475, %c0_476] : memref<4x128x128xbf16, #tpu.memory_space<vmem>>, vector<1x128x128xbf16>
    %667 = vector.shape_cast %666 : vector<1x128x128xbf16> to vector<128x128xbf16>
    %cst_477 = arith.constant dense<0.000000e+00> : vector<1x128xf32>
    %668 = tpu.matmul %665, %667, %cst_477 {dimension_numbers = #tpu.dot_dimension_numbers<[1], [0], [0], [1], [0, 0, 1, 1], [], []>} : vector<1x128xbf16>, vector<128x128xbf16>, vector<1x128xf32> -> vector<1x128xf32>
    %669 = arith.addf %664, %668 : vector<1x128xf32>
    %670 = vector.extract_strided_slice %658 {offsets = [2, 0], sizes = [1, 128], strides = [1, 1]} : vector<4x128xbf16> to vector<1x128xbf16>
    %c2_478 = arith.constant 2 : index
    %c0_479 = arith.constant 0 : index
    %c0_480 = arith.constant 0 : index
    %671 = vector.load %arg9[%c2_478, %c0_479, %c0_480] : memref<4x128x128xbf16, #tpu.memory_space<vmem>>, vector<1x128x128xbf16>
    %672 = vector.shape_cast %671 : vector<1x128x128xbf16> to vector<128x128xbf16>
    %cst_481 = arith.constant dense<0.000000e+00> : vector<1x128xf32>
    %673 = tpu.matmul %670, %672, %cst_481 {dimension_numbers = #tpu.dot_dimension_numbers<[1], [0], [0], [1], [0, 0, 1, 1], [], []>} : vector<1x128xbf16>, vector<128x128xbf16>, vector<1x128xf32> -> vector<1x128xf32>
    %674 = arith.addf %669, %673 : vector<1x128xf32>
    %675 = vector.extract_strided_slice %658 {offsets = [3, 0], sizes = [1, 128], strides = [1, 1]} : vector<4x128xbf16> to vector<1x128xbf16>
    %c3_482 = arith.constant 3 : index
    %c0_483 = arith.constant 0 : index
    %c0_484 = arith.constant 0 : index
    %676 = vector.load %arg9[%c3_482, %c0_483, %c0_484] : memref<4x128x128xbf16, #tpu.memory_space<vmem>>, vector<1x128x128xbf16>
    %677 = vector.shape_cast %676 : vector<1x128x128xbf16> to vector<128x128xbf16>
    %cst_485 = arith.constant dense<0.000000e+00> : vector<1x128xf32>
    %678 = tpu.matmul %675, %677, %cst_485 {dimension_numbers = #tpu.dot_dimension_numbers<[1], [0], [0], [1], [0, 0, 1, 1], [], []>} : vector<1x128xbf16>, vector<128x128xbf16>, vector<1x128xf32> -> vector<1x128xf32>
    %679 = arith.addf %674, %678 : vector<1x128xf32>
    %cst_486 = arith.constant 5.000000e-01 : f32
    %680 = vector.broadcast %cst_486 : f32 to vector<1x128xf32>
    %681 = arith.mulf %680, %679 : vector<1x128xf32>
    %682 = arith.mulf %679, %679 : vector<1x128xf32>
    %683 = arith.mulf %682, %679 : vector<1x128xf32>
    %cst_487 = arith.constant 4.471500e-02 : f32
    %684 = vector.broadcast %cst_487 : f32 to vector<1x128xf32>
    %685 = arith.mulf %684, %683 : vector<1x128xf32>
    %686 = arith.addf %679, %685 : vector<1x128xf32>
    %cst_488 = arith.constant 0.797884583 : f32
    %687 = vector.broadcast %cst_488 : f32 to vector<1x128xf32>
    %688 = arith.mulf %687, %686 : vector<1x128xf32>
    %689 = math.tanh %688 : vector<1x128xf32>
    %cst_489 = arith.constant 1.000000e+00 : f32
    %690 = vector.broadcast %cst_489 : f32 to vector<1x128xf32>
    %691 = arith.addf %690, %689 : vector<1x128xf32>
    %692 = arith.mulf %681, %691 : vector<1x128xf32>
    %693 = arith.truncf %692 : vector<1x128xf32> to vector<1x128xbf16>
    %c0_490 = arith.constant 0 : index
    %c0_491 = arith.constant 0 : index
    %694 = vector.load %arg10[%c0_490, %c0_491] : memref<128x128xbf16, #tpu.memory_space<vmem>>, vector<128x128xbf16>
    %cst_492 = arith.constant dense<0.000000e+00> : vector<1x128xf32>
    %695 = tpu.matmul %693, %694, %cst_492 {dimension_numbers = #tpu.dot_dimension_numbers<[1], [0], [0], [1], [0, 0, 1, 1], [], []>} : vector<1x128xbf16>, vector<128x128xbf16>, vector<1x128xf32> -> vector<1x128xf32>
    %c0_493 = arith.constant 0 : index
    %c0_494 = arith.constant 0 : index
    %696 = vector.load %arg12[%c0_493, %c0_494] : memref<1x128xf32, #tpu.memory_space<vmem>>, vector<1x128xf32>
    %697 = arith.addf %695, %696 : vector<1x128xf32>
    %c7_495 = arith.constant 7 : index
    %c0_496 = arith.constant 0 : index
    %698 = vector.load %arg13[%c7_495, %c0_496] : memref<8x128xf32, #tpu.memory_space<vmem>>, vector<1x128xf32>
    tpu.vector_store %arg13[%c7_495, %c0_496], %697 {strides = array<i32>} : memref<8x128xf32, #tpu.memory_space<vmem>>, vector<1x128xf32>,
    return
  }
}

</mosaic_0001>

<llo_original>
// kernel: music_generator_forward.1
$region0: #{music_generator_forward.1}
  #allocation0 [shape = 'u32[]', space=smem, size = 0x4, offset = 0x4, fixed_abs, tag = 'smem constant byte address 0x4 - core index']
  #allocation1 [shape = 'u32[144,128]{1,0:T(1,128)}', space=vmem, size = 0x12000, scoped, tag = 'internal scratch']
  #allocation2 [shape = 'f32[16,128]{1,0:T(8,128)}', space=vmem, size = 0x2000, scoped, tag = 'scratch operand']
  %s0 = inlined_call_operand.vmem [shape: f32[8,128], index: 0, kind: input, shape index: {}]
  %s1 = inlined_call_operand.vmem [shape: bf16[128,128], index: 1, kind: input, shape index: {}]
  %s2 = inlined_call_operand.vmem [shape: bf16[128,128], index: 2, kind: input, shape index: {}]
  %s3 = inlined_call_operand.vmem [shape: f32[1,128], index: 3, kind: input, shape index: {}]
  %s4 = inlined_call_operand.vmem [shape: f32[1,128], index: 4, kind: input, shape index: {}]
  %s5 = inlined_call_operand.vmem [shape: bf16[4,128,128], index: 5, kind: input, shape index: {}]
  %s6 = inlined_call_operand.vmem [shape: bf16[128,128], index: 6, kind: input, shape index: {}]
  %s7 = inlined_call_operand.vmem [shape: f32[1,128], index: 7, kind: input, shape index: {}]
  %s8 = inlined_call_operand.vmem [shape: f32[1,128], index: 8, kind: input, shape index: {}]
  %s9 = inlined_call_operand.vmem [shape: bf16[4,128,128], index: 9, kind: input, shape index: {}]
  %s10 = inlined_call_operand.vmem [shape: bf16[128,128], index: 10, kind: input, shape index: {}]
  %s11 = inlined_call_operand.vmem [shape: f32[1,128], index: 11, kind: input, shape index: {}]
  %s12 = inlined_call_operand.vmem [shape: f32[1,128], index: 12, kind: input, shape index: {}]
  %s13 = inlined_call_operand.hbm [shape: f32[8,128], index: 13, kind: output, shape index: {}]
  %s14 = sld [smem:[#allocation0]]
  $region62: #{music_generator_forward.1} parent=0
    _
  %s16 = ssub.s32 1, %s14
  %s17 = scalar_select 0, %s16, %s14
  $region1: #{music_generator_forward.1} parent=0
    #allocation3 [shape = 'u8[4096]{0}', space=vmem, size = 0x1000, scoped, tag = 'output window, operand 0, single buffered']
    #allocation4 [shape = 's32[1]{0}', space=sflag, size = 0x4, scoped, tag = 'scoped memory for music_generator_forward.1']
    %18 = vsyncpa [#allocation4], 0
    // Predicated region
    $region2: #{music_generator_forward.1} parent=1 // pred_check
      _
    $region3: #{music_generator_forward.1} parent=1 // pred_check_branch
      %20 = sbr.rel (0) target = $region5
    $region4: #{music_generator_forward.1} parent=1 // pred_region
      _
    $region5: #{music_generator_forward.1} parent=1 // pred_fallthru
      _
    // Predicated region
    $region6: #{music_generator_forward.1} parent=1 // pred_check
      _
    $region7: #{music_generator_forward.1} parent=1 // pred_check_branch
      %22 = sbr.rel (0) target = $region9
    $region8: #{music_generator_forward.1} parent=1 // pred_region
      _
    $region9: #{music_generator_forward.1} parent=1 // pred_fallthru
      _
    // Predicated region
    $region10: #{music_generator_forward.1} parent=1 // pred_check
      _
    $region11: #{music_generator_forward.1} parent=1 // pred_check_branch
      %24 = sbr.rel (0) target = $region13
    $region12: #{music_generator_forward.1} parent=1 // pred_region
      _
    $region13: #{music_generator_forward.1} parent=1 // pred_fallthru
      _
    // Predicated region
    $region14: #{music_generator_forward.1} parent=1 // pred_check
      _
    $region15: #{music_generator_forward.1} parent=1 // pred_check_branch
      %26 = sbr.rel (0) target = $region17
    $region16: #{music_generator_forward.1} parent=1 // pred_region
      _
    $region17: #{music_generator_forward.1} parent=1 // pred_fallthru
      _
    // Predicated region
    $region18: #{music_generator_forward.1} parent=1 // pred_check
      _
    $region19: #{music_generator_forward.1} parent=1 // pred_check_branch
      %28 = sbr.rel (0) target = $region21
    $region20: #{music_generator_forward.1} parent=1 // pred_region
      _
    $region21: #{music_generator_forward.1} parent=1 // pred_fallthru
      _
    // Predicated region
    $region22: #{music_generator_forward.1} parent=1 // pred_check
      _
    $region23: #{music_generator_forward.1} parent=1 // pred_check_branch
      %30 = sbr.rel (0) target = $region25
    $region24: #{music_generator_forward.1} parent=1 // pred_region
      _
    $region25: #{music_generator_forward.1} parent=1 // pred_fallthru
      _
    // Predicated region
    $region26: #{music_generator_forward.1} parent=1 // pred_check
      _
    $region27: #{music_generator_forward.1} parent=1 // pred_check_branch
      %32 = sbr.rel (0) target = $region29
    $region28: #{music_generator_forward.1} parent=1 // pred_region
      _
    $region29: #{music_generator_forward.1} parent=1 // pred_fallthru
      _
    // Predicated region
    $region30: #{music_generator_forward.1} parent=1 // pred_check
      _
    $region31: #{music_generator_forward.1} parent=1 // pred_check_branch
      %34 = sbr.rel (0) target = $region33
    $region32: #{music_generator_forward.1} parent=1 // pred_region
      _
    $region33: #{music_generator_forward.1} parent=1 // pred_fallthru
      _
    // Predicated region
    $region34: #{music_generator_forward.1} parent=1 // pred_check
      _
    $region35: #{music_generator_forward.1} parent=1 // pred_check_branch
      %36 = sbr.rel (0) target = $region37
    $region36: #{music_generator_forward.1} parent=1 // pred_region
      _
    $region37: #{music_generator_forward.1} parent=1 // pred_fallthru
      _
    // Predicated region
    $region38: #{music_generator_forward.1} parent=1 // pred_check
      _
    $region39: #{music_generator_forward.1} parent=1 // pred_check_branch
      %38 = sbr.rel (0) target = $region41
    $region40: #{music_generator_forward.1} parent=1 // pred_region
      _
    $region41: #{music_generator_forward.1} parent=1 // pred_fallthru
      _
    // Predicated region
    $region42: #{music_generator_forward.1} parent=1 // pred_check
      _
    $region43: #{music_generator_forward.1} parent=1 // pred_check_branch
      %40 = sbr.rel (0) target = $region45
    $region44: #{music_generator_forward.1} parent=1 // pred_region
      _
    $region45: #{music_generator_forward.1} parent=1 // pred_fallthru
      _
    // Predicated region
    $region46: #{music_generator_forward.1} parent=1 // pred_check
      _
    $region47: #{music_generator_forward.1} parent=1 // pred_check_branch
      %42 = sbr.rel (0) target = $region49
    $region48: #{music_generator_forward.1} parent=1 // pred_region
      _
    $region49: #{music_generator_forward.1} parent=1 // pred_fallthru
      _
    // Predicated region
    $region50: #{music_generator_forward.1} parent=1 // pred_check
      _
    $region51: #{music_generator_forward.1} parent=1 // pred_check_branch
      %44 = sbr.rel (0) target = $region53
    $region52: #{music_generator_forward.1} parent=1 // pred_region
      _
    $region53: #{music_generator_forward.1} parent=1 // pred_fallthru
      _
    %v46 = vld [vmem:[%s0] sm:$0xff]
    %v47 = vpack.c.bf16 %v46, %v46
    %v48 = vld [vmem:[%s1] sm:$0xf]
    %v49 = vld [vmem:[%s1 + $0x4] sm:$0xf]
    %v50 = vld [vmem:[%s1 + $0x8] sm:$0xf]
    %v51 = vld [vmem:[%s1 + $0xc] sm:$0xf]
    %v52 = vld [vmem:[%s1 + $0x10] sm:$0xf]
    %v53 = vld [vmem:[%s1 + $0x14] sm:$0xf]
    %v54 = vld [vmem:[%s1 + $0x18] sm:$0xf]
    %v55 = vld [vmem:[%s1 + $0x1c] sm:$0xf]
    %v56 = vld [vmem:[%s1 + $0x20] sm:$0xf]
    %v57 = vld [vmem:[%s1 + $0x24] sm:$0xf]
    %v58 = vld [vmem:[%s1 + $0x28] sm:$0xf]
    %v59 = vld [vmem:[%s1 + $0x2c] sm:$0xf]
    %v60 = vld [vmem:[%s1 + $0x30] sm:$0xf]
    %v61 = vld [vmem:[%s1 + $0x34] sm:$0xf]
    %v62 = vld [vmem:[%s1 + $0x38] sm:$0xf]
    %v63 = vld [vmem:[%s1 + $0x3c] sm:$0xf]
    %v64 = vld [vmem:[%s3] sm:$0x1]
    %v66 = vlaneseq
    %v67 = vshrl.u32 %v66, 7
    %v68 = vsub.s32 0, %v67
    %v69 = vrot.slane %v64, %v68
    %v87 = vunpack.c.l.b16 %v48
    %v88 = vunpack.c.l.b16 %v49
    %v89 = vunpack.c.l.b16 %v50
    %v90 = vunpack.c.l.b16 %v51
    %v91 = vunpack.c.l.b16 %v52
    %v92 = vunpack.c.l.b16 %v53
    %v93 = vunpack.c.l.b16 %v54
    %v94 = vunpack.c.l.b16 %v55
    %v95 = vunpack.c.l.b16 %v56
    %v96 = vunpack.c.l.b16 %v57
    %v97 = vunpack.c.l.b16 %v58
    %v98 = vunpack.c.l.b16 %v59
    %v99 = vunpack.c.l.b16 %v60
    %v100 = vunpack.c.l.b16 %v61
    %v101 = vunpack.c.l.b16 %v62
    %v102 = vunpack.c.l.b16 %v63
    %v103 = vpack.c.b16 %v88, %v87
    %v104 = vpack.c.b16 %v90, %v89
    %v105 = vpack.c.b16 %v92, %v91
    %v106 = vpack.c.b16 %v94, %v93
    %v107 = vpack.c.b16 %v96, %v95
    %v108 = vpack.c.b16 %v98, %v97
    %v109 = vpack.c.b16 %v100, %v99
    %v110 = vpack.c.b16 %v102, %v101
    %119 = vmatprep.subr.bf16.mxu0 0
    %120 = vmatpush1.bf16.msra.mxu0 %v103
    %121 = vmatprep.subr.bf16.mxu0 0
    %122 = vmatpush1.bf16.msra.mxu0 %v104
    %123 = vmatprep.subr.bf16.mxu0 0
    %124 = vmatpush1.bf16.msra.mxu0 %v105
    %125 = vmatprep.subr.bf16.mxu0 0
    %126 = vmatpush1.bf16.msra.mxu0 %v106
    %127 = vmatprep.subr.bf16.mxu0 0
    %128 = vmatpush1.bf16.msra.mxu0 %v107
    %129 = vmatprep.subr.bf16.mxu0 0
    %130 = vmatpush1.bf16.msra.mxu0 %v108
    %131 = vmatprep.subr.bf16.mxu0 0
    %132 = vmatpush1.bf16.msra.mxu0 %v109
    %133 = vmatprep.subr.bf16.mxu0 0
    %134 = vmatpush1.bf16.msra.mxu0 %v110
    %135 = vmatprep.subr.bf16.mxu0 0
    %136 = vmatpush1.bf16.msra.mxu0 0
    %137 = vmatprep.subr.bf16.mxu0 0
    %138 = vmatpush1.bf16.msra.mxu0 0
    %139 = vmatprep.subr.bf16.mxu0 0
    %140 = vmatpush1.bf16.msra.mxu0 0
    %141 = vmatprep.subr.bf16.mxu0 0
    %142 = vmatpush1.bf16.msra.mxu0 0
    %143 = vmatprep.subr.bf16.mxu0 0
    %144 = vmatpush1.bf16.msra.mxu0 0
    %145 = vmatprep.subr.bf16.mxu0 0
    %146 = vmatpush1.bf16.msra.mxu0 0
    %147 = vmatprep.subr.bf16.mxu0 0
    %148 = vmatpush1.bf16.msra.mxu0 0
    %149 = vmatprep.subr.bf16.mxu0 0
    %150 = vmatpush1.bf16.msra.mxu0 0
    %151 = vmatprep.mubr.bf16.mxu0 0
    %152 = vmatmul.mubr.bf16.gmra.mrb[0].mxu0 %v47
    %v153 = vpop.f32.mrb[0].mxu0
    %v154 = vadd.f32 %v69, %v153
    %v155 = vpop.f32.mrb[0].mxu0
    %v156 = vpop.f32.mrb[0].mxu0
    %v157 = vpop.f32.mrb[0].mxu0
    %158 = vdwg.mxu0
    %v159 = vmul.f32 %v154, 0.5
    %v160 = vmul.f32 %v154, %v154
    %v161 = vmul.f32 %v160, %v154
    %v162 = vmul.f32 %v161, 0.044715
    %v163 = vadd.f32 %v154, %v162
    %v164 = vmul.f32 %v163, 0.7978846
    %v165 = vtanh.pop %v164
    %v166 = vadd.f32 %v165, 1.0
    %v167 = vmul.f32 %v159, %v166
    %v168 = vpack.c.bf16 %v167, %v167
    %v169 = vld [vmem:[%s2] sm:$0xf]
    %v170 = vld [vmem:[%s2 + $0x4] sm:$0xf]
    %v171 = vld [vmem:[%s2 + $0x8] sm:$0xf]
    %v172 = vld [vmem:[%s2 + $0xc] sm:$0xf]
    %v173 = vld [vmem:[%s2 + $0x10] sm:$0xf]
    %v174 = vld [vmem:[%s2 + $0x14] sm:$0xf]
    %v175 = vld [vmem:[%s2 + $0x18] sm:$0xf]
    %v176 = vld [vmem:[%s2 + $0x1c] sm:$0xf]
    %v177 = vld [vmem:[%s2 + $0x20] sm:$0xf]
    %v178 = vld [vmem:[%s2 + $0x24] sm:$0xf]
    %v179 = vld [vmem:[%s2 + $0x28] sm:$0xf]
    %v180 = vld [vmem:[%s2 + $0x2c] sm:$0xf]
    %v181 = vld [vmem:[%s2 + $0x30] sm:$0xf]
    %v182 = vld [vmem:[%s2 + $0x34] sm:$0xf]
    %v183 = vld [vmem:[%s2 + $0x38] sm:$0xf]
    %v184 = vld [vmem:[%s2 + $0x3c] sm:$0xf]
    %v185 = vld [vmem:[%s4] sm:$0x1]
    %v187 = vlaneseq
    %v188 = vshrl.u32 %v187, 7
    %v189 = vsub.s32 0, %v188
    %v190 = vrot.slane %v185, %v189
    %v208 = vunpack.c.l.b16 %v169
    %v209 = vunpack.c.l.b16 %v170
    %v210 = vunpack.c.l.b16 %v171
    %v211 = vunpack.c.l.b16 %v172
    %v212 = vunpack.c.l.b16 %v173
    %v213 = vunpack.c.l.b16 %v174
    %v214 = vunpack.c.l.b16 %v175
    %v215 = vunpack.c.l.b16 %v176
    %v216 = vunpack.c.l.b16 %v177
    %v217 = vunpack.c.l.b16 %v178
    %v218 = vunpack.c.l.b16 %v179
    %v219 = vunpack.c.l.b16 %v180
    %v220 = vunpack.c.l.b16 %v181
    %v221 = vunpack.c.l.b16 %v182
    %v222 = vunpack.c.l.b16 %v183
    %v223 = vunpack.c.l.b16 %v184
    %v224 = vpack.c.b16 %v209, %v208
    %v225 = vpack.c.b16 %v211, %v210
    %v226 = vpack.c.b16 %v213, %v212
    %v227 = vpack.c.b16 %v215, %v214
    %v228 = vpack.c.b16 %v217, %v216
    %v229 = vpack.c.b16 %v219, %v218
    %v230 = vpack.c.b16 %v221, %v220
    %v231 = vpack.c.b16 %v223, %v222
    %240 = vmatprep.subr.bf16.mxu0 0
    %241 = vmatpush1.bf16.msra.mxu0 %v224
    %242 = vmatprep.subr.bf16.mxu0 0
    %243 = vmatpush1.bf16.msra.mxu0 %v225
    %244 = vmatprep.subr.bf16.mxu0 0
    %245 = vmatpush1.bf16.msra.mxu0 %v226
    %246 = vmatprep.subr.bf16.mxu0 0
    %247 = vmatpush1.bf16.msra.mxu0 %v227
    %248 = vmatprep.subr.bf16.mxu0 0
    %249 = vmatpush1.bf16.msra.mxu0 %v228
    %250 = vmatprep.subr.bf16.mxu0 0
    %251 = vmatpush1.bf16.msra.mxu0 %v229
    %252 = vmatprep.subr.bf16.mxu0 0
    %253 = vmatpush1.bf16.msra.mxu0 %v230
    %254 = vmatprep.subr.bf16.mxu0 0
    %255 = vmatpush1.bf16.msra.mxu0 %v231
    %256 = vmatprep.subr.bf16.mxu0 0
    %257 = vmatpush1.bf16.msra.mxu0 0
    %258 = vmatprep.subr.bf16.mxu0 0
    %259 = vmatpush1.bf16.msra.mxu0 0
    %260 = vmatprep.subr.bf16.mxu0 0
    %261 = vmatpush1.bf16.msra.mxu0 0
    %262 = vmatprep.subr.bf16.mxu0 0
    %263 = vmatpush1.bf16.msra.mxu0 0
    %264 = vmatprep.subr.bf16.mxu0 0
    %265 = vmatpush1.bf16.msra.mxu0 0
    %266 = vmatprep.subr.bf16.mxu0 0
    %267 = vmatpush1.bf16.msra.mxu0 0
    %268 = vmatprep.subr.bf16.mxu0 0
    %269 = vmatpush1.bf16.msra.mxu0 0
    %270 = vmatprep.subr.bf16.mxu0 0
    %271 = vmatpush1.bf16.msra.mxu0 0
    %272 = vmatprep.mubr.bf16.mxu0 0
    %273 = vmatmul.mubr.bf16.gmra.mrb[0].mxu0 %v168
    %v274 = vpop.f32.mrb[0].mxu0
    %v275 = vadd.f32 %v190, %v274
    %v276 = vpop.f32.mrb[0].mxu0
    %v277 = vpop.f32.mrb[0].mxu0
    %v278 = vpop.f32.mrb[0].mxu0
    %279 = vdwg.mxu0
    %280 = vst [vmem:[#allocation2] sm:$0xff] %v275
    %v281 = vld [vmem:[#allocation2] sm:$0xf]
    %v282 = vpack.c.bf16 %v281, %v281
    %v283 = vld [vmem:[%s7] sm:$0x1]
    %v284 = vld [vmem:[%s5] sm:$0xf]
    %v285 = vld [vmem:[%s5 + $0x4] sm:$0xf]
    %v286 = vld [vmem:[%s5 + $0x8] sm:$0xf]
    %v287 = vld [vmem:[%s5 + $0xc] sm:$0xf]
    %v288 = vld [vmem:[%s5 + $0x10] sm:$0xf]
    %v289 = vld [vmem:[%s5 + $0x14] sm:$0xf]
    %v290 = vld [vmem:[%s5 + $0x18] sm:$0xf]
    %v291 = vld [vmem:[%s5 + $0x1c] sm:$0xf]
    %v292 = vld [vmem:[%s5 + $0x20] sm:$0xf]
    %v293 = vld [vmem:[%s5 + $0x24] sm:$0xf]
    %v294 = vld [vmem:[%s5 + $0x28] sm:$0xf]
    %v295 = vld [vmem:[%s5 + $0x2c] sm:$0xf]
    %v296 = vld [vmem:[%s5 + $0x30] sm:$0xf]
    %v297 = vld [vmem:[%s5 + $0x34] sm:$0xf]
    %v298 = vld [vmem:[%s5 + $0x38] sm:$0xf]
    %v299 = vld [vmem:[%s5 + $0x3c] sm:$0xf]
    %v316 = vunpack.c.l.b16 %v284
    %v317 = vunpack.c.l.b16 %v285
    %v318 = vunpack.c.l.b16 %v286
    %v319 = vunpack.c.l.b16 %v287
    %v320 = vunpack.c.l.b16 %v288
    %v321 = vunpack.c.l.b16 %v289
    %v322 = vunpack.c.l.b16 %v290
    %v323 = vunpack.c.l.b16 %v291
    %v324 = vunpack.c.l.b16 %v292
    %v325 = vunpack.c.l.b16 %v293
    %v326 = vunpack.c.l.b16 %v294
    %v327 = vunpack.c.l.b16 %v295
    %v328 = vunpack.c.l.b16 %v296
    %v329 = vunpack.c.l.b16 %v297
    %v330 = vunpack.c.l.b16 %v298
    %v331 = vunpack.c.l.b16 %v299
    %v332 = vpack.c.b16 %v317, %v316
    %v333 = vpack.c.b16 %v319, %v318
    %v334 = vpack.c.b16 %v321, %v320
    %v335 = vpack.c.b16 %v323, %v322
    %v336 = vpack.c.b16 %v325, %v324
    %v337 = vpack.c.b16 %v327, %v326
    %v338 = vpack.c.b16 %v329, %v328
    %v339 = vpack.c.b16 %v331, %v330
    %348 = vmatprep.subr.bf16.mxu0 0
    %349 = vmatpush1.bf16.msra.mxu0 %v332
    %350 = vmatprep.subr.bf16.mxu0 0
    %351 = vmatpush1.bf16.msra.mxu0 %v333
    %352 = vmatprep.subr.bf16.mxu0 0
    %353 = vmatpush1.bf16.msra.mxu0 %v334
    %354 = vmatprep.subr.bf16.mxu0 0
    %355 = vmatpush1.bf16.msra.mxu0 %v335
    %356 = vmatprep.subr.bf16.mxu0 0
    %357 = vmatpush1.bf16.msra.mxu0 %v336
    %358 = vmatprep.subr.bf16.mxu0 0
    %359 = vmatpush1.bf16.msra.mxu0 %v337
    %360 = vmatprep.subr.bf16.mxu0 0
    %361 = vmatpush1.bf16.msra.mxu0 %v338
    %362 = vmatprep.subr.bf16.mxu0 0
    %363 = vmatpush1.bf16.msra.mxu0 %v339
    %364 = vmatprep.subr.bf16.mxu0 0
    %365 = vmatpush1.bf16.msra.mxu0 0
    %366 = vmatprep.subr.bf16.mxu0 0
    %367 = vmatpush1.bf16.msra.mxu0 0
    %368 = vmatprep.subr.bf16.mxu0 0
    %369 = vmatpush1.bf16.msra.mxu0 0
    %370 = vmatprep.subr.bf16.mxu0 0
    %371 = vmatpush1.bf16.msra.mxu0 0
    %372 = vmatprep.subr.bf16.mxu0 0
    %373 = vmatpush1.bf16.msra.mxu0 0
    %374 = vmatprep.subr.bf16.mxu0 0
    %375 = vmatpush1.bf16.msra.mxu0 0
    %376 = vmatprep.subr.bf16.mxu0 0
    %377 = vmatpush1.bf16.msra.mxu0 0
    %378 = vmatprep.subr.bf16.mxu0 0
    %379 = vmatpush1.bf16.msra.mxu0 0
    %380 = vmatprep.mubr.bf16.mxu0 0
    %381 = vmatmul.mubr.bf16.gmra.mrb[0].mxu0 %v282
    %v382 = vpop.f32.mrb[0].mxu0
    %v383 = vadd.f32 0.0, %v382
    %v384 = vpop.f32.mrb[0].mxu0
    %v385 = vpop.f32.mrb[0].mxu0
    %v386 = vpop.f32.mrb[0].mxu0
    %387 = vdwg.mxu0
    %v388 = vadd.f32 %v283, %v383
    %s389 = scalar_lea.vmem %s5, 64
    %v390 = vld [vmem:[%s389] sm:$0xf]
    %v391 = vld [vmem:[%s389 + $0x4] sm:$0xf]
    %v392 = vld [vmem:[%s389 + $0x8] sm:$0xf]
    %v393 = vld [vmem:[%s389 + $0xc] sm:$0xf]
    %v394 = vld [vmem:[%s389 + $0x10] sm:$0xf]
    %v395 = vld [vmem:[%s389 + $0x14] sm:$0xf]
    %v396 = vld [vmem:[%s389 + $0x18] sm:$0xf]
    %v397 = vld [vmem:[%s389 + $0x1c] sm:$0xf]
    %v398 = vld [vmem:[%s389 + $0x20] sm:$0xf]
    %v399 = vld [vmem:[%s389 + $0x24] sm:$0xf]
    %v400 = vld [vmem:[%s389 + $0x28] sm:$0xf]
    %v401 = vld [vmem:[%s389 + $0x2c] sm:$0xf]
    %v402 = vld [vmem:[%s389 + $0x30] sm:$0xf]
    %v403 = vld [vmem:[%s389 + $0x34] sm:$0xf]
    %v404 = vld [vmem:[%s389 + $0x38] sm:$0xf]
    %v405 = vld [vmem:[%s389 + $0x3c] sm:$0xf]
    %v407 = vshrl.u32 %v282, 16
    %v426 = vunpack.c.l.b16 %v390
    %v427 = vunpack.c.l.b16 %v391
    %v428 = vunpack.c.l.b16 %v392
    %v429 = vunpack.c.l.b16 %v393
    %v430 = vunpack.c.l.b16 %v394
    %v431 = vunpack.c.l.b16 %v395
    %v432 = vunpack.c.l.b16 %v396
    %v433 = vunpack.c.l.b16 %v397
    %v434 = vunpack.c.l.b16 %v398
    %v435 = vunpack.c.l.b16 %v399
    %v436 = vunpack.c.l.b16 %v400
    %v437 = vunpack.c.l.b16 %v401
    %v438 = vunpack.c.l.b16 %v402
    %v439 = vunpack.c.l.b16 %v403
    %v440 = vunpack.c.l.b16 %v404
    %v441 = vunpack.c.l.b16 %v405
    %v442 = vpack.c.b16 %v427, %v426
    %v443 = vpack.c.b16 %v429, %v428
    %v444 = vpack.c.b16 %v431, %v430
    %v445 = vpack.c.b16 %v433, %v432
    %v446 = vpack.c.b16 %v435, %v434
    %v447 = vpack.c.b16 %v437, %v436
    %v448 = vpack.c.b16 %v439, %v438
    %v449 = vpack.c.b16 %v441, %v440
    %458 = vmatprep.subr.bf16.mxu0 0
    %459 = vmatpush1.bf16.msra.mxu0 %v442
    %460 = vmatprep.subr.bf16.mxu0 0
    %461 = vmatpush1.bf16.msra.mxu0 %v443
    %462 = vmatprep.subr.bf16.mxu0 0
    %463 = vmatpush1.bf16.msra.mxu0 %v444
    %464 = vmatprep.subr.bf16.mxu0 0
    %465 = vmatpush1.bf16.msra.mxu0 %v445
    %466 = vmatprep.subr.bf16.mxu0 0
    %467 = vmatpush1.bf16.msra.mxu0 %v446
    %468 = vmatprep.subr.bf16.mxu0 0
    %469 = vmatpush1.bf16.msra.mxu0 %v447
    %470 = vmatprep.subr.bf16.mxu0 0
    %471 = vmatpush1.bf16.msra.mxu0 %v448
    %472 = vmatprep.subr.bf16.mxu0 0
    %473 = vmatpush1.bf16.msra.mxu0 %v449
    %474 = vmatprep.subr.bf16.mxu0 0
    %475 = vmatpush1.bf16.msra.mxu0 0
    %476 = vmatprep.subr.bf16.mxu0 0
    %477 = vmatpush1.bf16.msra.mxu0 0
    %478 = vmatprep.subr.bf16.mxu0 0
    %479 = vmatpush1.bf16.msra.mxu0 0
    %480 = vmatprep.subr.bf16.mxu0 0
    %481 = vmatpush1.bf16.msra.mxu0 0
    %482 = vmatprep.subr.bf16.mxu0 0
    %483 = vmatpush1.bf16.msra.mxu0 0
    %484 = vmatprep.subr.bf16.mxu0 0
    %485 = vmatpush1.bf16.msra.mxu0 0
    %486 = vmatprep.subr.bf16.mxu0 0
    %487 = vmatpush1.bf16.msra.mxu0 0
    %488 = vmatprep.subr.bf16.mxu0 0
    %489 = vmatpush1.bf16.msra.mxu0 0
    %490 = vmatprep.mubr.bf16.mxu0 0
    %491 = vmatmul.mubr.bf16.gmra.mrb[0].mxu0 %v407
    %v492 = vpop.f32.mrb[0].mxu0
    %v493 = vadd.f32 0.0, %v492
    %v494 = vpop.f32.mrb[0].mxu0
    %v495 = vpop.f32.mrb[0].mxu0
    %v496 = vpop.f32.mrb[0].mxu0
    %497 = vdwg.mxu0
    %v498 = vadd.f32 %v388, %v493
    %s499 = scalar_lea.vmem %s5, 128
    %v500 = vld [vmem:[%s499] sm:$0xf]
    %v501 = vld [vmem:[%s499 + $0x4] sm:$0xf]
    %v502 = vld [vmem:[%s499 + $0x8] sm:$0xf]
    %v503 = vld [vmem:[%s499 + $0xc] sm:$0xf]
    %v504 = vld [vmem:[%s499 + $0x10] sm:$0xf]
    %v505 = vld [vmem:[%s499 + $0x14] sm:$0xf]
    %v506 = vld [vmem:[%s499 + $0x18] sm:$0xf]
    %v507 = vld [vmem:[%s499 + $0x1c] sm:$0xf]
    %v508 = vld [vmem:[%s499 + $0x20] sm:$0xf]
    %v509 = vld [vmem:[%s499 + $0x24] sm:$0xf]
    %v510 = vld [vmem:[%s499 + $0x28] sm:$0xf]
    %v511 = vld [vmem:[%s499 + $0x2c] sm:$0xf]
    %v512 = vld [vmem:[%s499 + $0x30] sm:$0xf]
    %v513 = vld [vmem:[%s499 + $0x34] sm:$0xf]
    %v514 = vld [vmem:[%s499 + $0x38] sm:$0xf]
    %v515 = vld [vmem:[%s499 + $0x3c] sm:$0xf]
    %v517 = vrot.slane %v282, 1
    %v535 = vunpack.c.l.b16 %v500
    %v536 = vunpack.c.l.b16 %v501
    %v537 = vunpack.c.l.b16 %v502
    %v538 = vunpack.c.l.b16 %v503
    %v539 = vunpack.c.l.b16 %v504
    %v540 = vunpack.c.l.b16 %v505
    %v541 = vunpack.c.l.b16 %v506
    %v542 = vunpack.c.l.b16 %v507
    %v543 = vunpack.c.l.b16 %v508
    %v544 = vunpack.c.l.b16 %v509
    %v545 = vunpack.c.l.b16 %v510
    %v546 = vunpack.c.l.b16 %v511
    %v547 = vunpack.c.l.b16 %v512
    %v548 = vunpack.c.l.b16 %v513
    %v549 = vunpack.c.l.b16 %v514
    %v550 = vunpack.c.l.b16 %v515
    %v551 = vpack.c.b16 %v536, %v535
    %v552 = vpack.c.b16 %v538, %v537
    %v553 = vpack.c.b16 %v540, %v539
    %v554 = vpack.c.b16 %v542, %v541
    %v555 = vpack.c.b16 %v544, %v543
    %v556 = vpack.c.b16 %v546, %v545
    %v557 = vpack.c.b16 %v548, %v547
    %v558 = vpack.c.b16 %v550, %v549
    %567 = vmatprep.subr.bf16.mxu0 0
    %568 = vmatpush1.bf16.msra.mxu0 %v551
    %569 = vmatprep.subr.bf16.mxu0 0
    %570 = vmatpush1.bf16.msra.mxu0 %v552
    %571 = vmatprep.subr.bf16.mxu0 0
    %572 = vmatpush1.bf16.msra.mxu0 %v553
    %573 = vmatprep.subr.bf16.mxu0 0
    %574 = vmatpush1.bf16.msra.mxu0 %v554
    %575 = vmatprep.subr.bf16.mxu0 0
    %576 = vmatpush1.bf16.msra.mxu0 %v555
    %577 = vmatprep.subr.bf16.mxu0 0
    %578 = vmatpush1.bf16.msra.mxu0 %v556
    %579 = vmatprep.subr.bf16.mxu0 0
    %580 = vmatpush1.bf16.msra.mxu0 %v557
    %581 = vmatprep.subr.bf16.mxu0 0
    %582 = vmatpush1.bf16.msra.mxu0 %v558
    %583 = vmatprep.subr.bf16.mxu0 0
    %584 = vmatpush1.bf16.msra.mxu0 0
    %585 = vmatprep.subr.bf16.mxu0 0
    %586 = vmatpush1.bf16.msra.mxu0 0
    %587 = vmatprep.subr.bf16.mxu0 0
    %588 = vmatpush1.bf16.msra.mxu0 0
    %589 = vmatprep.subr.bf16.mxu0 0
    %590 = vmatpush1.bf16.msra.mxu0 0
    %591 = vmatprep.subr.bf16.mxu0 0
    %592 = vmatpush1.bf16.msra.mxu0 0
    %593 = vmatprep.subr.bf16.mxu0 0
    %594 = vmatpush1.bf16.msra.mxu0 0
    %595 = vmatprep.subr.bf16.mxu0 0
    %596 = vmatpush1.bf16.msra.mxu0 0
    %597 = vmatprep.subr.bf16.mxu0 0
    %598 = vmatpush1.bf16.msra.mxu0 0
    %599 = vmatprep.mubr.bf16.mxu0 0
    %600 = vmatmul.mubr.bf16.gmra.mrb[0].mxu0 %v517
    %v601 = vpop.f32.mrb[0].mxu0
    %v602 = vadd.f32 0.0, %v601
    %v603 = vpop.f32.mrb[0].mxu0
    %v604 = vpop.f32.mrb[0].mxu0
    %v605 = vpop.f32.mrb[0].mxu0
    %606 = vdwg.mxu0
    %v607 = vadd.f32 %v498, %v602
    %s608 = scalar_lea.vmem %s5, 192
    %v609 = vld [vmem:[%s608] sm:$0xf]
    %v610 = vld [vmem:[%s608 + $0x4] sm:$0xf]
    %v611 = vld [vmem:[%s608 + $0x8] sm:$0xf]
    %v612 = vld [vmem:[%s608 + $0xc] sm:$0xf]
    %v613 = vld [vmem:[%s608 + $0x10] sm:$0xf]
    %v614 = vld [vmem:[%s608 + $0x14] sm:$0xf]
    %v615 = vld [vmem:[%s608 + $0x18] sm:$0xf]
    %v616 = vld [vmem:[%s608 + $0x1c] sm:$0xf]
    %v617 = vld [vmem:[%s608 + $0x20] sm:$0xf]
    %v618 = vld [vmem:[%s608 + $0x24] sm:$0xf]
    %v619 = vld [vmem:[%s608 + $0x28] sm:$0xf]
    %v620 = vld [vmem:[%s608 + $0x2c] sm:$0xf]
    %v621 = vld [vmem:[%s608 + $0x30] sm:$0xf]
    %v622 = vld [vmem:[%s608 + $0x34] sm:$0xf]
    %v623 = vld [vmem:[%s608 + $0x38] sm:$0xf]
    %v624 = vld [vmem:[%s608 + $0x3c] sm:$0xf]
    %v625 = vrot.slane %v407, 1
    %v643 = vunpack.c.l.b16 %v609
    %v644 = vunpack.c.l.b16 %v610
    %v645 = vunpack.c.l.b16 %v611
    %v646 = vunpack.c.l.b16 %v612
    %v647 = vunpack.c.l.b16 %v613
    %v648 = vunpack.c.l.b16 %v614
    %v649 = vunpack.c.l.b16 %v615
    %v650 = vunpack.c.l.b16 %v616
    %v651 = vunpack.c.l.b16 %v617
    %v652 = vunpack.c.l.b16 %v618
    %v653 = vunpack.c.l.b16 %v619
    %v654 = vunpack.c.l.b16 %v620
    %v655 = vunpack.c.l.b16 %v621
    %v656 = vunpack.c.l.b16 %v622
    %v657 = vunpack.c.l.b16 %v623
    %v658 = vunpack.c.l.b16 %v624
    %v659 = vpack.c.b16 %v644, %v643
    %v660 = vpack.c.b16 %v646, %v645
    %v661 = vpack.c.b16 %v648, %v647
    %v662 = vpack.c.b16 %v650, %v649
    %v663 = vpack.c.b16 %v652, %v651
    %v664 = vpack.c.b16 %v654, %v653
    %v665 = vpack.c.b16 %v656, %v655
    %v666 = vpack.c.b16 %v658, %v657
    %675 = vmatprep.subr.bf16.mxu0 0
    %676 = vmatpush1.bf16.msra.mxu0 %v659
    %677 = vmatprep.subr.bf16.mxu0 0
    %678 = vmatpush1.bf16.msra.mxu0 %v660
    %679 = vmatprep.subr.bf16.mxu0 0
    %680 = vmatpush1.bf16.msra.mxu0 %v661
    %681 = vmatprep.subr.bf16.mxu0 0
    %682 = vmatpush1.bf16.msra.mxu0 %v662
    %683 = vmatprep.subr.bf16.mxu0 0
    %684 = vmatpush1.bf16.msra.mxu0 %v663
    %685 = vmatprep.subr.bf16.mxu0 0
    %686 = vmatpush1.bf16.msra.mxu0 %v664
    %687 = vmatprep.subr.bf16.mxu0 0
    %688 = vmatpush1.bf16.msra.mxu0 %v665
    %689 = vmatprep.subr.bf16.mxu0 0
    %690 = vmatpush1.bf16.msra.mxu0 %v666
    %691 = vmatprep.subr.bf16.mxu0 0
    %692 = vmatpush1.bf16.msra.mxu0 0
    %693 = vmatprep.subr.bf16.mxu0 0
    %694 = vmatpush1.bf16.msra.mxu0 0
    %695 = vmatprep.subr.bf16.mxu0 0
    %696 = vmatpush1.bf16.msra.mxu0 0
    %697 = vmatprep.subr.bf16.mxu0 0
    %698 = vmatpush1.bf16.msra.mxu0 0
    %699 = vmatprep.subr.bf16.mxu0 0
    %700 = vmatpush1.bf16.msra.mxu0 0
    %701 = vmatprep.subr.bf16.mxu0 0
    %702 = vmatpush1.bf16.msra.mxu0 0
    %703 = vmatprep.subr.bf16.mxu0 0
    %704 = vmatpush1.bf16.msra.mxu0 0
    %705 = vmatprep.subr.bf16.mxu0 0
    %706 = vmatpush1.bf16.msra.mxu0 0
    %707 = vmatprep.mubr.bf16.mxu0 0
    %708 = vmatmul.mubr.bf16.gmra.mrb[0].mxu0 %v625
    %v709 = vpop.f32.mrb[0].mxu0
    %v710 = vadd.f32 0.0, %v709
    %v711 = vpop.f32.mrb[0].mxu0
    %v712 = vpop.f32.mrb[0].mxu0
    %v713 = vpop.f32.mrb[0].mxu0
    %714 = vdwg.mxu0
    %v715 = vadd.f32 %v607, %v710
    %v716 = vmul.f32 %v715, 0.5
    %v717 = vmul.f32 %v715, %v715
    %v718 = vmul.f32 %v717, %v715
    %v719 = vmul.f32 %v718, 0.044715
    %v720 = vadd.f32 %v715, %v719
    %v721 = vmul.f32 %v720, 0.7978846
    %v722 = vtanh.pop %v721
    %v723 = vadd.f32 %v722, 1.0
    %v724 = vmul.f32 %v716, %v723
    %v725 = vpack.c.bf16 %v724, %v724
    %v726 = vld [vmem:[%s6] sm:$0xf]
    %v727 = vld [vmem:[%s6 + $0x4] sm:$0xf]
    %v728 = vld [vmem:[%s6 + $0x8] sm:$0xf]
    %v729 = vld [vmem:[%s6 + $0xc] sm:$0xf]
    %v730 = vld [vmem:[%s6 + $0x10] sm:$0xf]
    %v731 = vld [vmem:[%s6 + $0x14] sm:$0xf]
    %v732 = vld [vmem:[%s6 + $0x18] sm:$0xf]
    %v733 = vld [vmem:[%s6 + $0x1c] sm:$0xf]
    %v734 = vld [vmem:[%s6 + $0x20] sm:$0xf]
    %v735 = vld [vmem:[%s6 + $0x24] sm:$0xf]
    %v736 = vld [vmem:[%s6 + $0x28] sm:$0xf]
    %v737 = vld [vmem:[%s6 + $0x2c] sm:$0xf]
    %v738 = vld [vmem:[%s6 + $0x30] sm:$0xf]
    %v739 = vld [vmem:[%s6 + $0x34] sm:$0xf]
    %v740 = vld [vmem:[%s6 + $0x38] sm:$0xf]
    %v741 = vld [vmem:[%s6 + $0x3c] sm:$0xf]
    %v742 = vld [vmem:[%s8] sm:$0x1]
    %v759 = vunpack.c.l.b16 %v726
    %v760 = vunpack.c.l.b16 %v727
    %v761 = vunpack.c.l.b16 %v728
    %v762 = vunpack.c.l.b16 %v729
    %v763 = vunpack.c.l.b16 %v730
    %v764 = vunpack.c.l.b16 %v731
    %v765 = vunpack.c.l.b16 %v732
    %v766 = vunpack.c.l.b16 %v733
    %v767 = vunpack.c.l.b16 %v734
    %v768 = vunpack.c.l.b16 %v735
    %v769 = vunpack.c.l.b16 %v736
    %v770 = vunpack.c.l.b16 %v737
    %v771 = vunpack.c.l.b16 %v738
    %v772 = vunpack.c.l.b16 %v739
    %v773 = vunpack.c.l.b16 %v740
    %v774 = vunpack.c.l.b16 %v741
    %v775 = vpack.c.b16 %v760, %v759
    %v776 = vpack.c.b16 %v762, %v761
    %v777 = vpack.c.b16 %v764, %v763
    %v778 = vpack.c.b16 %v766, %v765
    %v779 = vpack.c.b16 %v768, %v767
    %v780 = vpack.c.b16 %v770, %v769
    %v781 = vpack.c.b16 %v772, %v771
    %v782 = vpack.c.b16 %v774, %v773
    %791 = vmatprep.subr.bf16.mxu0 0
    %792 = vmatpush1.bf16.msra.mxu0 %v775
    %793 = vmatprep.subr.bf16.mxu0 0
    %794 = vmatpush1.bf16.msra.mxu0 %v776
    %795 = vmatprep.subr.bf16.mxu0 0
    %796 = vmatpush1.bf16.msra.mxu0 %v777
    %797 = vmatprep.subr.bf16.mxu0 0
    %798 = vmatpush1.bf16.msra.mxu0 %v778
    %799 = vmatprep.subr.bf16.mxu0 0
    %800 = vmatpush1.bf16.msra.mxu0 %v779
    %801 = vmatprep.subr.bf16.mxu0 0
    %802 = vmatpush1.bf16.msra.mxu0 %v780
    %803 = vmatprep.subr.bf16.mxu0 0
    %804 = vmatpush1.bf16.msra.mxu0 %v781
    %805 = vmatprep.subr.bf16.mxu0 0
    %806 = vmatpush1.bf16.msra.mxu0 %v782
    %807 = vmatprep.subr.bf16.mxu0 0
    %808 = vmatpush1.bf16.msra.mxu0 0
    %809 = vmatprep.subr.bf16.mxu0 0
    %810 = vmatpush1.bf16.msra.mxu0 0
    %811 = vmatprep.subr.bf16.mxu0 0
    %812 = vmatpush1.bf16.msra.mxu0 0
    %813 = vmatprep.subr.bf16.mxu0 0
    %814 = vmatpush1.bf16.msra.mxu0 0
    %815 = vmatprep.subr.bf16.mxu0 0
    %816 = vmatpush1.bf16.msra.mxu0 0
    %817 = vmatprep.subr.bf16.mxu0 0
    %818 = vmatpush1.bf16.msra.mxu0 0
    %819 = vmatprep.subr.bf16.mxu0 0
    %820 = vmatpush1.bf16.msra.mxu0 0
    %821 = vmatprep.subr.bf16.mxu0 0
    %822 = vmatpush1.bf16.msra.mxu0 0
    %823 = vmatprep.mubr.bf16.mxu0 0
    %824 = vmatmul.mubr.bf16.gmra.mrb[0].mxu0 %v725
    %v825 = vpop.f32.mrb[0].mxu0
    %v826 = vadd.f32 %v742, %v825
    %v827 = vpop.f32.mrb[0].mxu0
    %v828 = vpop.f32.mrb[0].mxu0
    %v829 = vpop.f32.mrb[0].mxu0
    %830 = vdwg.mxu0
    %831 = vst [vmem:[#allocation2 + $0x8] sm:$0x1] %v826
    %v832 = vld [vmem:[#allocation2 + $0x5] sm:$0xf]
    %v833 = vpack.c.bf16 %v832, %v832
    %v834 = vld [vmem:[%s11] sm:$0x1]
    %v835 = vld [vmem:[%s9] sm:$0xf]
    %v836 = vld [vmem:[%s9 + $0x4] sm:$0xf]
    %v837 = vld [vmem:[%s9 + $0x8] sm:$0xf]
    %v838 = vld [vmem:[%s9 + $0xc] sm:$0xf]
    %v839 = vld [vmem:[%s9 + $0x10] sm:$0xf]
    %v840 = vld [vmem:[%s9 + $0x14] sm:$0xf]
    %v841 = vld [vmem:[%s9 + $0x18] sm:$0xf]
    %v842 = vld [vmem:[%s9 + $0x1c] sm:$0xf]
    %v843 = vld [vmem:[%s9 + $0x20] sm:$0xf]
    %v844 = vld [vmem:[%s9 + $0x24] sm:$0xf]
    %v845 = vld [vmem:[%s9 + $0x28] sm:$0xf]
    %v846 = vld [vmem:[%s9 + $0x2c] sm:$0xf]
    %v847 = vld [vmem:[%s9 + $0x30] sm:$0xf]
    %v848 = vld [vmem:[%s9 + $0x34] sm:$0xf]
    %v849 = vld [vmem:[%s9 + $0x38] sm:$0xf]
    %v850 = vld [vmem:[%s9 + $0x3c] sm:$0xf]
    %v867 = vunpack.c.l.b16 %v835
    %v868 = vunpack.c.l.b16 %v836
    %v869 = vunpack.c.l.b16 %v837
    %v870 = vunpack.c.l.b16 %v838
    %v871 = vunpack.c.l.b16 %v839
    %v872 = vunpack.c.l.b16 %v840
    %v873 = vunpack.c.l.b16 %v841
    %v874 = vunpack.c.l.b16 %v842
    %v875 = vunpack.c.l.b16 %v843
    %v876 = vunpack.c.l.b16 %v844
    %v877 = vunpack.c.l.b16 %v845
    %v878 = vunpack.c.l.b16 %v846
    %v879 = vunpack.c.l.b16 %v847
    %v880 = vunpack.c.l.b16 %v848
    %v881 = vunpack.c.l.b16 %v849
    %v882 = vunpack.c.l.b16 %v850
    %v883 = vpack.c.b16 %v868, %v867
    %v884 = vpack.c.b16 %v870, %v869
    %v885 = vpack.c.b16 %v872, %v871
    %v886 = vpack.c.b16 %v874, %v873
    %v887 = vpack.c.b16 %v876, %v875
    %v888 = vpack.c.b16 %v878, %v877
    %v889 = vpack.c.b16 %v880, %v879
    %v890 = vpack.c.b16 %v882, %v881
    %899 = vmatprep.subr.bf16.mxu0 0
    %900 = vmatpush1.bf16.msra.mxu0 %v883
    %901 = vmatprep.subr.bf16.mxu0 0
    %902 = vmatpush1.bf16.msra.mxu0 %v884
    %903 = vmatprep.subr.bf16.mxu0 0
    %904 = vmatpush1.bf16.msra.mxu0 %v885
    %905 = vmatprep.subr.bf16.mxu0 0
    %906 = vmatpush1.bf16.msra.mxu0 %v886
    %907 = vmatprep.subr.bf16.mxu0 0
    %908 = vmatpush1.bf16.msra.mxu0 %v887
    %909 = vmatprep.subr.bf16.mxu0 0
    %910 = vmatpush1.bf16.msra.mxu0 %v888
    %911 = vmatprep.subr.bf16.mxu0 0
    %912 = vmatpush1.bf16.msra.mxu0 %v889
    %913 = vmatprep.subr.bf16.mxu0 0
    %914 = vmatpush1.bf16.msra.mxu0 %v890
    %915 = vmatprep.subr.bf16.mxu0 0
    %916 = vmatpush1.bf16.msra.mxu0 0
    %917 = vmatprep.subr.bf16.mxu0 0
    %918 = vmatpush1.bf16.msra.mxu0 0
    %919 = vmatprep.subr.bf16.mxu0 0
    %920 = vmatpush1.bf16.msra.mxu0 0
    %921 = vmatprep.subr.bf16.mxu0 0
    %922 = vmatpush1.bf16.msra.mxu0 0
    %923 = vmatprep.subr.bf16.mxu0 0
    %924 = vmatpush1.bf16.msra.mxu0 0
    %925 = vmatprep.subr.bf16.mxu0 0
    %926 = vmatpush1.bf16.msra.mxu0 0
    %927 = vmatprep.subr.bf16.mxu0 0
    %928 = vmatpush1.bf16.msra.mxu0 0
    %929 = vmatprep.subr.bf16.mxu0 0
    %930 = vmatpush1.bf16.msra.mxu0 0
    %931 = vmatprep.mubr.bf16.mxu0 0
    %932 = vmatmul.mubr.bf16.gmra.mrb[0].mxu0 %v833
    %v933 = vpop.f32.mrb[0].mxu0
    %v934 = vadd.f32 0.0, %v933
    %v935 = vpop.f32.mrb[0].mxu0
    %v936 = vpop.f32.mrb[0].mxu0
    %v937 = vpop.f32.mrb[0].mxu0
    %938 = vdwg.mxu0
    %v939 = vadd.f32 %v834, %v934
    %s940 = scalar_lea.vmem %s9, 64
    %v941 = vld [vmem:[%s940] sm:$0xf]
    %v942 = vld [vmem:[%s940 + $0x4] sm:$0xf]
    %v943 = vld [vmem:[%s940 + $0x8] sm:$0xf]
    %v944 = vld [vmem:[%s940 + $0xc] sm:$0xf]
    %v945 = vld [vmem:[%s940 + $0x10] sm:$0xf]
    %v946 = vld [vmem:[%s940 + $0x14] sm:$0xf]
    %v947 = vld [vmem:[%s940 + $0x18] sm:$0xf]
    %v948 = vld [vmem:[%s940 + $0x1c] sm:$0xf]
    %v949 = vld [vmem:[%s940 + $0x20] sm:$0xf]
    %v950 = vld [vmem:[%s940 + $0x24] sm:$0xf]
    %v951 = vld [vmem:[%s940 + $0x28] sm:$0xf]
    %v952 = vld [vmem:[%s940 + $0x2c] sm:$0xf]
    %v953 = vld [vmem:[%s940 + $0x30] sm:$0xf]
    %v954 = vld [vmem:[%s940 + $0x34] sm:$0xf]
    %v955 = vld [vmem:[%s940 + $0x38] sm:$0xf]
    %v956 = vld [vmem:[%s940 + $0x3c] sm:$0xf]
    %v958 = vshrl.u32 %v833, 16
    %v977 = vunpack.c.l.b16 %v941
    %v978 = vunpack.c.l.b16 %v942
    %v979 = vunpack.c.l.b16 %v943
    %v980 = vunpack.c.l.b16 %v944
    %v981 = vunpack.c.l.b16 %v945
    %v982 = vunpack.c.l.b16 %v946
    %v983 = vunpack.c.l.b16 %v947
    %v984 = vunpack.c.l.b16 %v948
    %v985 = vunpack.c.l.b16 %v949
    %v986 = vunpack.c.l.b16 %v950
    %v987 = vunpack.c.l.b16 %v951
    %v988 = vunpack.c.l.b16 %v952
    %v989 = vunpack.c.l.b16 %v953
    %v990 = vunpack.c.l.b16 %v954
    %v991 = vunpack.c.l.b16 %v955
    %v992 = vunpack.c.l.b16 %v956
    %v993 = vpack.c.b16 %v978, %v977
    %v994 = vpack.c.b16 %v980, %v979
    %v995 = vpack.c.b16 %v982, %v981
    %v996 = vpack.c.b16 %v984, %v983
    %v997 = vpack.c.b16 %v986, %v985
    %v998 = vpack.c.b16 %v988, %v987
    %v999 = vpack.c.b16 %v990, %v989
    %v1000 = vpack.c.b16 %v992, %v991
    %1009 = vmatprep.subr.bf16.mxu0 0
    %1010 = vmatpush1.bf16.msra.mxu0 %v993
    %1011 = vmatprep.subr.bf16.mxu0 0
    %1012 = vmatpush1.bf16.msra.mxu0 %v994
    %1013 = vmatprep.subr.bf16.mxu0 0
    %1014 = vmatpush1.bf16.msra.mxu0 %v995
    %1015 = vmatprep.subr.bf16.mxu0 0
    %1016 = vmatpush1.bf16.msra.mxu0 %v996
    %1017 = vmatprep.subr.bf16.mxu0 0
    %1018 = vmatpush1.bf16.msra.mxu0 %v997
    %1019 = vmatprep.subr.bf16.mxu0 0
    %1020 = vmatpush1.bf16.msra.mxu0 %v998
    %1021 = vmatprep.subr.bf16.mxu0 0
    %1022 = vmatpush1.bf16.msra.mxu0 %v999
    %1023 = vmatprep.subr.bf16.mxu0 0
    %1024 = vmatpush1.bf16.msra.mxu0 %v1000
    %1025 = vmatprep.subr.bf16.mxu0 0
    %1026 = vmatpush1.bf16.msra.mxu0 0
    %1027 = vmatprep.subr.bf16.mxu0 0
    %1028 = vmatpush1.bf16.msra.mxu0 0
    %1029 = vmatprep.subr.bf16.mxu0 0
    %1030 = vmatpush1.bf16.msra.mxu0 0
    %1031 = vmatprep.subr.bf16.mxu0 0
    %1032 = vmatpush1.bf16.msra.mxu0 0
    %1033 = vmatprep.subr.bf16.mxu0 0
    %1034 = vmatpush1.bf16.msra.mxu0 0
    %1035 = vmatprep.subr.bf16.mxu0 0
    %1036 = vmatpush1.bf16.msra.mxu0 0
    %1037 = vmatprep.subr.bf16.mxu0 0
    %1038 = vmatpush1.bf16.msra.mxu0 0
    %1039 = vmatprep.subr.bf16.mxu0 0
    %1040 = vmatpush1.bf16.msra.mxu0 0
    %1041 = vmatprep.mubr.bf16.mxu0 0
    %1042 = vmatmul.mubr.bf16.gmra.mrb[0].mxu0 %v958
    %v1043 = vpop.f32.mrb[0].mxu0
    %v1044 = vadd.f32 0.0, %v1043
    %v1045 = vpop.f32.mrb[0].mxu0
    %v1046 = vpop.f32.mrb[0].mxu0
    %v1047 = vpop.f32.mrb[0].mxu0
    %1048 = vdwg.mxu0
    %v1049 = vadd.f32 %v939, %v1044
    %s1050 = scalar_lea.vmem %s9, 128
    %v1051 = vld [vmem:[%s1050] sm:$0xf]
    %v1052 = vld [vmem:[%s1050 + $0x4] sm:$0xf]
    %v1053 = vld [vmem:[%s1050 + $0x8] sm:$0xf]
    %v1054 = vld [vmem:[%s1050 + $0xc] sm:$0xf]
    %v1055 = vld [vmem:[%s1050 + $0x10] sm:$0xf]
    %v1056 = vld [vmem:[%s1050 + $0x14] sm:$0xf]
    %v1057 = vld [vmem:[%s1050 + $0x18] sm:$0xf]
    %v1058 = vld [vmem:[%s1050 + $0x1c] sm:$0xf]
    %v1059 = vld [vmem:[%s1050 + $0x20] sm:$0xf]
    %v1060 = vld [vmem:[%s1050 + $0x24] sm:$0xf]
    %v1061 = vld [vmem:[%s1050 + $0x28] sm:$0xf]
    %v1062 = vld [vmem:[%s1050 + $0x2c] sm:$0xf]
    %v1063 = vld [vmem:[%s1050 + $0x30] sm:$0xf]
    %v1064 = vld [vmem:[%s1050 + $0x34] sm:$0xf]
    %v1065 = vld [vmem:[%s1050 + $0x38] sm:$0xf]
    %v1066 = vld [vmem:[%s1050 + $0x3c] sm:$0xf]
    %v1068 = vrot.slane %v833, 1
    %v1086 = vunpack.c.l.b16 %v1051
    %v1087 = vunpack.c.l.b16 %v1052
    %v1088 = vunpack.c.l.b16 %v1053
    %v1089 = vunpack.c.l.b16 %v1054
    %v1090 = vunpack.c.l.b16 %v1055
    %v1091 = vunpack.c.l.b16 %v1056
    %v1092 = vunpack.c.l.b16 %v1057
    %v1093 = vunpack.c.l.b16 %v1058
    %v1094 = vunpack.c.l.b16 %v1059
    %v1095 = vunpack.c.l.b16 %v1060
    %v1096 = vunpack.c.l.b16 %v1061
    %v1097 = vunpack.c.l.b16 %v1062
    %v1098 = vunpack.c.l.b16 %v1063
    %v1099 = vunpack.c.l.b16 %v1064
    %v1100 = vunpack.c.l.b16 %v1065
    %v1101 = vunpack.c.l.b16 %v1066
    %v1102 = vpack.c.b16 %v1087, %v1086
    %v1103 = vpack.c.b16 %v1089, %v1088
    %v1104 = vpack.c.b16 %v1091, %v1090
    %v1105 = vpack.c.b16 %v1093, %v1092
    %v1106 = vpack.c.b16 %v1095, %v1094
    %v1107 = vpack.c.b16 %v1097, %v1096
    %v1108 = vpack.c.b16 %v1099, %v1098
    %v1109 = vpack.c.b16 %v1101, %v1100
    %1118 = vmatprep.subr.bf16.mxu0 0
    %1119 = vmatpush1.bf16.msra.mxu0 %v1102
    %1120 = vmatprep.subr.bf16.mxu0 0
    %1121 = vmatpush1.bf16.msra.mxu0 %v1103
    %1122 = vmatprep.subr.bf16.mxu0 0
    %1123 = vmatpush1.bf16.msra.mxu0 %v1104
    %1124 = vmatprep.subr.bf16.mxu0 0
    %1125 = vmatpush1.bf16.msra.mxu0 %v1105
    %1126 = vmatprep.subr.bf16.mxu0 0
    %1127 = vmatpush1.bf16.msra.mxu0 %v1106
    %1128 = vmatprep.subr.bf16.mxu0 0
    %1129 = vmatpush1.bf16.msra.mxu0 %v1107
    %1130 = vmatprep.subr.bf16.mxu0 0
    %1131 = vmatpush1.bf16.msra.mxu0 %v1108
    %1132 = vmatprep.subr.bf16.mxu0 0
    %1133 = vmatpush1.bf16.msra.mxu0 %v1109
    %1134 = vmatprep.subr.bf16.mxu0 0
    %1135 = vmatpush1.bf16.msra.mxu0 0
    %1136 = vmatprep.subr.bf16.mxu0 0
    %1137 = vmatpush1.bf16.msra.mxu0 0
    %1138 = vmatprep.subr.bf16.mxu0 0
    %1139 = vmatpush1.bf16.msra.mxu0 0
    %1140 = vmatprep.subr.bf16.mxu0 0
    %1141 = vmatpush1.bf16.msra.mxu0 0
    %1142 = vmatprep.subr.bf16.mxu0 0
    %1143 = vmatpush1.bf16.msra.mxu0 0
    %1144 = vmatprep.subr.bf16.mxu0 0
    %1145 = vmatpush1.bf16.msra.mxu0 0
    %1146 = vmatprep.subr.bf16.mxu0 0
    %1147 = vmatpush1.bf16.msra.mxu0 0
    %1148 = vmatprep.subr.bf16.mxu0 0
    %1149 = vmatpush1.bf16.msra.mxu0 0
    %1150 = vmatprep.mubr.bf16.mxu0 0
    %1151 = vmatmul.mubr.bf16.gmra.mrb[0].mxu0 %v1068
    %v1152 = vpop.f32.mrb[0].mxu0
    %v1153 = vadd.f32 0.0, %v1152
    %v1154 = vpop.f32.mrb[0].mxu0
    %v1155 = vpop.f32.mrb[0].mxu0
    %v1156 = vpop.f32.mrb[0].mxu0
    %1157 = vdwg.mxu0
    %v1158 = vadd.f32 %v1049, %v1153
    %s1159 = scalar_lea.vmem %s9, 192
    %v1160 = vld [vmem:[%s1159] sm:$0xf]
    %v1161 = vld [vmem:[%s1159 + $0x4] sm:$0xf]
    %v1162 = vld [vmem:[%s1159 + $0x8] sm:$0xf]
    %v1163 = vld [vmem:[%s1159 + $0xc] sm:$0xf]
    %v1164 = vld [vmem:[%s1159 + $0x10] sm:$0xf]
    %v1165 = vld [vmem:[%s1159 + $0x14] sm:$0xf]
    %v1166 = vld [vmem:[%s1159 + $0x18] sm:$0xf]
    %v1167 = vld [vmem:[%s1159 + $0x1c] sm:$0xf]
    %v1168 = vld [vmem:[%s1159 + $0x20] sm:$0xf]
    %v1169 = vld [vmem:[%s1159 + $0x24] sm:$0xf]
    %v1170 = vld [vmem:[%s1159 + $0x28] sm:$0xf]
    %v1171 = vld [vmem:[%s1159 + $0x2c] sm:$0xf]
    %v1172 = vld [vmem:[%s1159 + $0x30] sm:$0xf]
    %v1173 = vld [vmem:[%s1159 + $0x34] sm:$0xf]
    %v1174 = vld [vmem:[%s1159 + $0x38] sm:$0xf]
    %v1175 = vld [vmem:[%s1159 + $0x3c] sm:$0xf]
    %v1176 = vrot.slane %v958, 1
    %v1194 = vunpack.c.l.b16 %v1160
    %v1195 = vunpack.c.l.b16 %v1161
    %v1196 = vunpack.c.l.b16 %v1162
    %v1197 = vunpack.c.l.b16 %v1163
    %v1198 = vunpack.c.l.b16 %v1164
    %v1199 = vunpack.c.l.b16 %v1165
    %v1200 = vunpack.c.l.b16 %v1166
    %v1201 = vunpack.c.l.b16 %v1167
    %v1202 = vunpack.c.l.b16 %v1168
    %v1203 = vunpack.c.l.b16 %v1169
    %v1204 = vunpack.c.l.b16 %v1170
    %v1205 = vunpack.c.l.b16 %v1171
    %v1206 = vunpack.c.l.b16 %v1172
    %v1207 = vunpack.c.l.b16 %v1173
    %v1208 = vunpack.c.l.b16 %v1174
    %v1209 = vunpack.c.l.b16 %v1175
    %v1210 = vpack.c.b16 %v1195, %v1194
    %v1211 = vpack.c.b16 %v1197, %v1196
    %v1212 = vpack.c.b16 %v1199, %v1198
    %v1213 = vpack.c.b16 %v1201, %v1200
    %v1214 = vpack.c.b16 %v1203, %v1202
    %v1215 = vpack.c.b16 %v1205, %v1204
    %v1216 = vpack.c.b16 %v1207, %v1206
    %v1217 = vpack.c.b16 %v1209, %v1208
    %1226 = vmatprep.subr.bf16.mxu0 0
    %1227 = vmatpush1.bf16.msra.mxu0 %v1210
    %1228 = vmatprep.subr.bf16.mxu0 0
    %1229 = vmatpush1.bf16.msra.mxu0 %v1211
    %1230 = vmatprep.subr.bf16.mxu0 0
    %1231 = vmatpush1.bf16.msra.mxu0 %v1212
    %1232 = vmatprep.subr.bf16.mxu0 0
    %1233 = vmatpush1.bf16.msra.mxu0 %v1213
    %1234 = vmatprep.subr.bf16.mxu0 0
    %1235 = vmatpush1.bf16.msra.mxu0 %v1214
    %1236 = vmatprep.subr.bf16.mxu0 0
    %1237 = vmatpush1.bf16.msra.mxu0 %v1215
    %1238 = vmatprep.subr.bf16.mxu0 0
    %1239 = vmatpush1.bf16.msra.mxu0 %v1216
    %1240 = vmatprep.subr.bf16.mxu0 0
    %1241 = vmatpush1.bf16.msra.mxu0 %v1217
    %1242 = vmatprep.subr.bf16.mxu0 0
    %1243 = vmatpush1.bf16.msra.mxu0 0
    %1244 = vmatprep.subr.bf16.mxu0 0
    %1245 = vmatpush1.bf16.msra.mxu0 0
    %1246 = vmatprep.subr.bf16.mxu0 0
    %1247 = vmatpush1.bf16.msra.mxu0 0
    %1248 = vmatprep.subr.bf16.mxu0 0
    %1249 = vmatpush1.bf16.msra.mxu0 0
    %1250 = vmatprep.subr.bf16.mxu0 0
    %1251 = vmatpush1.bf16.msra.mxu0 0
    %1252 = vmatprep.subr.bf16.mxu0 0
    %1253 = vmatpush1.bf16.msra.mxu0 0
    %1254 = vmatprep.subr.bf16.mxu0 0
    %1255 = vmatpush1.bf16.msra.mxu0 0
    %1256 = vmatprep.subr.bf16.mxu0 0
    %1257 = vmatpush1.bf16.msra.mxu0 0
    %1258 = vmatprep.mubr.bf16.mxu0 0
    %1259 = vmatmul.mubr.bf16.gmra.mrb[0].mxu0 %v1176
    %v1260 = vpop.f32.mrb[0].mxu0
    %v1261 = vadd.f32 0.0, %v1260
    %v1262 = vpop.f32.mrb[0].mxu0
    %v1263 = vpop.f32.mrb[0].mxu0
    %v1264 = vpop.f32.mrb[0].mxu0
    %1265 = vdwg.mxu0
    %v1266 = vadd.f32 %v1158, %v1261
    %v1267 = vmul.f32 %v1266, 0.5
    %v1268 = vmul.f32 %v1266, %v1266
    %v1269 = vmul.f32 %v1268, %v1266
    %v1270 = vmul.f32 %v1269, 0.044715
    %v1271 = vadd.f32 %v1266, %v1270
    %v1272 = vmul.f32 %v1271, 0.7978846
    %v1273 = vtanh.pop %v1272
    %v1274 = vadd.f32 %v1273, 1.0
    %v1275 = vmul.f32 %v1267, %v1274
    %v1276 = vpack.c.bf16 %v1275, %v1275
    %v1277 = vld [vmem:[%s10] sm:$0xf]
    %v1278 = vld [vmem:[%s10 + $0x4] sm:$0xf]
    %v1279 = vld [vmem:[%s10 + $0x8] sm:$0xf]
    %v1280 = vld [vmem:[%s10 + $0xc] sm:$0xf]
    %v1281 = vld [vmem:[%s10 + $0x10] sm:$0xf]
    %v1282 = vld [vmem:[%s10 + $0x14] sm:$0xf]
    %v1283 = vld [vmem:[%s10 + $0x18] sm:$0xf]
    %v1284 = vld [vmem:[%s10 + $0x1c] sm:$0xf]
    %v1285 = vld [vmem:[%s10 + $0x20] sm:$0xf]
    %v1286 = vld [vmem:[%s10 + $0x24] sm:$0xf]
    %v1287 = vld [vmem:[%s10 + $0x28] sm:$0xf]
    %v1288 = vld [vmem:[%s10 + $0x2c] sm:$0xf]
    %v1289 = vld [vmem:[%s10 + $0x30] sm:$0xf]
    %v1290 = vld [vmem:[%s10 + $0x34] sm:$0xf]
    %v1291 = vld [vmem:[%s10 + $0x38] sm:$0xf]
    %v1292 = vld [vmem:[%s10 + $0x3c] sm:$0xf]
    %v1293 = vld [vmem:[%s12] sm:$0x1]
    %v1310 = vunpack.c.l.b16 %v1277
    %v1311 = vunpack.c.l.b16 %v1278
    %v1312 = vunpack.c.l.b16 %v1279
    %v1313 = vunpack.c.l.b16 %v1280
    %v1314 = vunpack.c.l.b16 %v1281
    %v1315 = vunpack.c.l.b16 %v1282
    %v1316 = vunpack.c.l.b16 %v1283
    %v1317 = vunpack.c.l.b16 %v1284
    %v1318 = vunpack.c.l.b16 %v1285
    %v1319 = vunpack.c.l.b16 %v1286
    %v1320 = vunpack.c.l.b16 %v1287
    %v1321 = vunpack.c.l.b16 %v1288
    %v1322 = vunpack.c.l.b16 %v1289
    %v1323 = vunpack.c.l.b16 %v1290
    %v1324 = vunpack.c.l.b16 %v1291
    %v1325 = vunpack.c.l.b16 %v1292
    %v1326 = vpack.c.b16 %v1311, %v1310
    %v1327 = vpack.c.b16 %v1313, %v1312
    %v1328 = vpack.c.b16 %v1315, %v1314
    %v1329 = vpack.c.b16 %v1317, %v1316
    %v1330 = vpack.c.b16 %v1319, %v1318
    %v1331 = vpack.c.b16 %v1321, %v1320
    %v1332 = vpack.c.b16 %v1323, %v1322
    %v1333 = vpack.c.b16 %v1325, %v1324
    %1342 = vmatprep.subr.bf16.mxu0 0
    %1343 = vmatpush1.bf16.msra.mxu0 %v1326
    %1344 = vmatprep.subr.bf16.mxu0 0
    %1345 = vmatpush1.bf16.msra.mxu0 %v1327
    %1346 = vmatprep.subr.bf16.mxu0 0
    %1347 = vmatpush1.bf16.msra.mxu0 %v1328
    %1348 = vmatprep.subr.bf16.mxu0 0
    %1349 = vmatpush1.bf16.msra.mxu0 %v1329
    %1350 = vmatprep.subr.bf16.mxu0 0
    %1351 = vmatpush1.bf16.msra.mxu0 %v1330
    %1352 = vmatprep.subr.bf16.mxu0 0
    %1353 = vmatpush1.bf16.msra.mxu0 %v1331
    %1354 = vmatprep.subr.bf16.mxu0 0
    %1355 = vmatpush1.bf16.msra.mxu0 %v1332
    %1356 = vmatprep.subr.bf16.mxu0 0
    %1357 = vmatpush1.bf16.msra.mxu0 %v1333
    %1358 = vmatprep.subr.bf16.mxu0 0
    %1359 = vmatpush1.bf16.msra.mxu0 0
    %1360 = vmatprep.subr.bf16.mxu0 0
    %1361 = vmatpush1.bf16.msra.mxu0 0
    %1362 = vmatprep.subr.bf16.mxu0 0
    %1363 = vmatpush1.bf16.msra.mxu0 0
    %1364 = vmatprep.subr.bf16.mxu0 0
    %1365 = vmatpush1.bf16.msra.mxu0 0
    %1366 = vmatprep.subr.bf16.mxu0 0
    %1367 = vmatpush1.bf16.msra.mxu0 0
    %1368 = vmatprep.subr.bf16.mxu0 0
    %1369 = vmatpush1.bf16.msra.mxu0 0
    %1370 = vmatprep.subr.bf16.mxu0 0
    %1371 = vmatpush1.bf16.msra.mxu0 0
    %1372 = vmatprep.subr.bf16.mxu0 0
    %1373 = vmatpush1.bf16.msra.mxu0 0
    %1374 = vmatprep.mubr.bf16.mxu0 0
    %1375 = vmatmul.mubr.bf16.gmra.mrb[0].mxu0 %v1276
    %v1376 = vpop.f32.mrb[0].mxu0
    %v1377 = vadd.f32 %v1293, %v1376
    %v1378 = vpop.f32.mrb[0].mxu0
    %v1379 = vpop.f32.mrb[0].mxu0
    %v1380 = vpop.f32.mrb[0].mxu0
    %1381 = vdwg.mxu0
    %1382 = vst [vmem:[#allocation3] sm:$0x1] %v1377
    %v1383 = vld [vmem:[#allocation2 + $0x1] sm:$0xf]
    %v1384 = vpack.c.bf16 %v1383, %v1383
    %v1385 = vld [vmem:[%s7] sm:$0x1]
    %v1386 = vld [vmem:[%s5] sm:$0xf]
    %v1387 = vld [vmem:[%s5 + $0x4] sm:$0xf]
    %v1388 = vld [vmem:[%s5 + $0x8] sm:$0xf]
    %v1389 = vld [vmem:[%s5 + $0xc] sm:$0xf]
    %v1390 = vld [vmem:[%s5 + $0x10] sm:$0xf]
    %v1391 = vld [vmem:[%s5 + $0x14] sm:$0xf]
    %v1392 = vld [vmem:[%s5 + $0x18] sm:$0xf]
    %v1393 = vld [vmem:[%s5 + $0x1c] sm:$0xf]
    %v1394 = vld [vmem:[%s5 + $0x20] sm:$0xf]
    %v1395 = vld [vmem:[%s5 + $0x24] sm:$0xf]
    %v1396 = vld [vmem:[%s5 + $0x28] sm:$0xf]
    %v1397 = vld [vmem:[%s5 + $0x2c] sm:$0xf]
    %v1398 = vld [vmem:[%s5 + $0x30] sm:$0xf]
    %v1399 = vld [vmem:[%s5 + $0x34] sm:$0xf]
    %v1400 = vld [vmem:[%s5 + $0x38] sm:$0xf]
    %v1401 = vld [vmem:[%s5 + $0x3c] sm:$0xf]
    %v1418 = vunpack.c.l.b16 %v1386
    %v1419 = vunpack.c.l.b16 %v1387
    %v1420 = vunpack.c.l.b16 %v1388
    %v1421 = vunpack.c.l.b16 %v1389
    %v1422 = vunpack.c.l.b16 %v1390
    %v1423 = vunpack.c.l.b16 %v1391
    %v1424 = vunpack.c.l.b16 %v1392
    %v1425 = vunpack.c.l.b16 %v1393
    %v1426 = vunpack.c.l.b16 %v1394
    %v1427 = vunpack.c.l.b16 %v1395
    %v1428 = vunpack.c.l.b16 %v1396
    %v1429 = vunpack.c.l.b16 %v1397
    %v1430 = vunpack.c.l.b16 %v1398
    %v1431 = vunpack.c.l.b16 %v1399
    %v1432 = vunpack.c.l.b16 %v1400
    %v1433 = vunpack.c.l.b16 %v1401
    %v1434 = vpack.c.b16 %v1419, %v1418
    %v1435 = vpack.c.b16 %v1421, %v1420
    %v1436 = vpack.c.b16 %v1423, %v1422
    %v1437 = vpack.c.b16 %v1425, %v1424
    %v1438 = vpack.c.b16 %v1427, %v1426
    %v1439 = vpack.c.b16 %v1429, %v1428
    %v1440 = vpack.c.b16 %v1431, %v1430
    %v1441 = vpack.c.b16 %v1433, %v1432
    %1450 = vmatprep.subr.bf16.mxu0 0
    %1451 = vmatpush1.bf16.msra.mxu0 %v1434
    %1452 = vmatprep.subr.bf16.mxu0 0
    %1453 = vmatpush1.bf16.msra.mxu0 %v1435
    %1454 = vmatprep.subr.bf16.mxu0 0
    %1455 = vmatpush1.bf16.msra.mxu0 %v1436
    %1456 = vmatprep.subr.bf16.mxu0 0
    %1457 = vmatpush1.bf16.msra.mxu0 %v1437
    %1458 = vmatprep.subr.bf16.mxu0 0
    %1459 = vmatpush1.bf16.msra.mxu0 %v1438
    %1460 = vmatprep.subr.bf16.mxu0 0
    %1461 = vmatpush1.bf16.msra.mxu0 %v1439
    %1462 = vmatprep.subr.bf16.mxu0 0
    %1463 = vmatpush1.bf16.msra.mxu0 %v1440
    %1464 = vmatprep.subr.bf16.mxu0 0
    %1465 = vmatpush1.bf16.msra.mxu0 %v1441
    %1466 = vmatprep.subr.bf16.mxu0 0
    %1467 = vmatpush1.bf16.msra.mxu0 0
    %1468 = vmatprep.subr.bf16.mxu0 0
    %1469 = vmatpush1.bf16.msra.mxu0 0
    %1470 = vmatprep.subr.bf16.mxu0 0
    %1471 = vmatpush1.bf16.msra.mxu0 0
    %1472 = vmatprep.subr.bf16.mxu0 0
    %1473 = vmatpush1.bf16.msra.mxu0 0
    %1474 = vmatprep.subr.bf16.mxu0 0
    %1475 = vmatpush1.bf16.msra.mxu0 0
    %1476 = vmatprep.subr.bf16.mxu0 0
    %1477 = vmatpush1.bf16.msra.mxu0 0
    %1478 = vmatprep.subr.bf16.mxu0 0
    %1479 = vmatpush1.bf16.msra.mxu0 0
    %1480 = vmatprep.subr.bf16.mxu0 0
    %1481 = vmatpush1.bf16.msra.mxu0 0
    %1482 = vmatprep.mubr.bf16.mxu0 0
    %1483 = vmatmul.mubr.bf16.gmra.mrb[0].mxu0 %v1384
    %v1484 = vpop.f32.mrb[0].mxu0
    %v1485 = vadd.f32 0.0, %v1484
    %v1486 = vpop.f32.mrb[0].mxu0
    %v1487 = vpop.f32.mrb[0].mxu0
    %v1488 = vpop.f32.mrb[0].mxu0
    %1489 = vdwg.mxu0
    %v1490 = vadd.f32 %v1385, %v1485
    %v1491 = vld [vmem:[%s389] sm:$0xf]
    %v1492 = vld [vmem:[%s389 + $0x4] sm:$0xf]
    %v1493 = vld [vmem:[%s389 + $0x8] sm:$0xf]
    %v1494 = vld [vmem:[%s389 + $0xc] sm:$0xf]
    %v1495 = vld [vmem:[%s389 + $0x10] sm:$0xf]
    %v1496 = vld [vmem:[%s389 + $0x14] sm:$0xf]
    %v1497 = vld [vmem:[%s389 + $0x18] sm:$0xf]
    %v1498 = vld [vmem:[%s389 + $0x1c] sm:$0xf]
    %v1499 = vld [vmem:[%s389 + $0x20] sm:$0xf]
    %v1500 = vld [vmem:[%s389 + $0x24] sm:$0xf]
    %v1501 = vld [vmem:[%s389 + $0x28] sm:$0xf]
    %v1502 = vld [vmem:[%s389 + $0x2c] sm:$0xf]
    %v1503 = vld [vmem:[%s389 + $0x30] sm:$0xf]
    %v1504 = vld [vmem:[%s389 + $0x34] sm:$0xf]
    %v1505 = vld [vmem:[%s389 + $0x38] sm:$0xf]
    %v1506 = vld [vmem:[%s389 + $0x3c] sm:$0xf]
    %v1508 = vshrl.u32 %v1384, 16
    %v1527 = vunpack.c.l.b16 %v1491
    %v1528 = vunpack.c.l.b16 %v1492
    %v1529 = vunpack.c.l.b16 %v1493
    %v1530 = vunpack.c.l.b16 %v1494
    %v1531 = vunpack.c.l.b16 %v1495
    %v1532 = vunpack.c.l.b16 %v1496
    %v1533 = vunpack.c.l.b16 %v1497
    %v1534 = vunpack.c.l.b16 %v1498
    %v1535 = vunpack.c.l.b16 %v1499
    %v1536 = vunpack.c.l.b16 %v1500
    %v1537 = vunpack.c.l.b16 %v1501
    %v1538 = vunpack.c.l.b16 %v1502
    %v1539 = vunpack.c.l.b16 %v1503
    %v1540 = vunpack.c.l.b16 %v1504
    %v1541 = vunpack.c.l.b16 %v1505
    %v1542 = vunpack.c.l.b16 %v1506
    %v1543 = vpack.c.b16 %v1528, %v1527
    %v1544 = vpack.c.b16 %v1530, %v1529
    %v1545 = vpack.c.b16 %v1532, %v1531
    %v1546 = vpack.c.b16 %v1534, %v1533
    %v1547 = vpack.c.b16 %v1536, %v1535
    %v1548 = vpack.c.b16 %v1538, %v1537
    %v1549 = vpack.c.b16 %v1540, %v1539
    %v1550 = vpack.c.b16 %v1542, %v1541
    %1559 = vmatprep.subr.bf16.mxu0 0
    %1560 = vmatpush1.bf16.msra.mxu0 %v1543
    %1561 = vmatprep.subr.bf16.mxu0 0
    %1562 = vmatpush1.bf16.msra.mxu0 %v1544
    %1563 = vmatprep.subr.bf16.mxu0 0
    %1564 = vmatpush1.bf16.msra.mxu0 %v1545
    %1565 = vmatprep.subr.bf16.mxu0 0
    %1566 = vmatpush1.bf16.msra.mxu0 %v1546
    %1567 = vmatprep.subr.bf16.mxu0 0
    %1568 = vmatpush1.bf16.msra.mxu0 %v1547
    %1569 = vmatprep.subr.bf16.mxu0 0
    %1570 = vmatpush1.bf16.msra.mxu0 %v1548
    %1571 = vmatprep.subr.bf16.mxu0 0
    %1572 = vmatpush1.bf16.msra.mxu0 %v1549
    %1573 = vmatprep.subr.bf16.mxu0 0
    %1574 = vmatpush1.bf16.msra.mxu0 %v1550
    %1575 = vmatprep.subr.bf16.mxu0 0
    %1576 = vmatpush1.bf16.msra.mxu0 0
    %1577 = vmatprep.subr.bf16.mxu0 0
    %1578 = vmatpush1.bf16.msra.mxu0 0
    %1579 = vmatprep.subr.bf16.mxu0 0
    %1580 = vmatpush1.bf16.msra.mxu0 0
    %1581 = vmatprep.subr.bf16.mxu0 0
    %1582 = vmatpush1.bf16.msra.mxu0 0
    %1583 = vmatprep.subr.bf16.mxu0 0
    %1584 = vmatpush1.bf16.msra.mxu0 0
    %1585 = vmatprep.subr.bf16.mxu0 0
    %1586 = vmatpush1.bf16.msra.mxu0 0
    %1587 = vmatprep.subr.bf16.mxu0 0
    %1588 = vmatpush1.bf16.msra.mxu0 0
    %1589 = vmatprep.subr.bf16.mxu0 0
    %1590 = vmatpush1.bf16.msra.mxu0 0
    %1591 = vmatprep.mubr.bf16.mxu0 0
    %1592 = vmatmul.mubr.bf16.gmra.mrb[0].mxu0 %v1508
    %v1593 = vpop.f32.mrb[0].mxu0
    %v1594 = vadd.f32 0.0, %v1593
    %v1595 = vpop.f32.mrb[0].mxu0
    %v1596 = vpop.f32.mrb[0].mxu0
    %v1597 = vpop.f32.mrb[0].mxu0
    %1598 = vdwg.mxu0
    %v1599 = vadd.f32 %v1490, %v1594
    %v1600 = vld [vmem:[%s499] sm:$0xf]
    %v1601 = vld [vmem:[%s499 + $0x4] sm:$0xf]
    %v1602 = vld [vmem:[%s499 + $0x8] sm:$0xf]
    %v1603 = vld [vmem:[%s499 + $0xc] sm:$0xf]
    %v1604 = vld [vmem:[%s499 + $0x10] sm:$0xf]
    %v1605 = vld [vmem:[%s499 + $0x14] sm:$0xf]
    %v1606 = vld [vmem:[%s499 + $0x18] sm:$0xf]
    %v1607 = vld [vmem:[%s499 + $0x1c] sm:$0xf]
    %v1608 = vld [vmem:[%s499 + $0x20] sm:$0xf]
    %v1609 = vld [vmem:[%s499 + $0x24] sm:$0xf]
    %v1610 = vld [vmem:[%s499 + $0x28] sm:$0xf]
    %v1611 = vld [vmem:[%s499 + $0x2c] sm:$0xf]
    %v1612 = vld [vmem:[%s499 + $0x30] sm:$0xf]
    %v1613 = vld [vmem:[%s499 + $0x34] sm:$0xf]
    %v1614 = vld [vmem:[%s499 + $0x38] sm:$0xf]
    %v1615 = vld [vmem:[%s499 + $0x3c] sm:$0xf]
    %v1617 = vrot.slane %v1384, 1
    %v1635 = vunpack.c.l.b16 %v1600
    %v1636 = vunpack.c.l.b16 %v1601
    %v1637 = vunpack.c.l.b16 %v1602
    %v1638 = vunpack.c.l.b16 %v1603
    %v1639 = vunpack.c.l.b16 %v1604
    %v1640 = vunpack.c.l.b16 %v1605
    %v1641 = vunpack.c.l.b16 %v1606
    %v1642 = vunpack.c.l.b16 %v1607
    %v1643 = vunpack.c.l.b16 %v1608
    %v1644 = vunpack.c.l.b16 %v1609
    %v1645 = vunpack.c.l.b16 %v1610
    %v1646 = vunpack.c.l.b16 %v1611
    %v1647 = vunpack.c.l.b16 %v1612
    %v1648 = vunpack.c.l.b16 %v1613
    %v1649 = vunpack.c.l.b16 %v1614
    %v1650 = vunpack.c.l.b16 %v1615
    %v1651 = vpack.c.b16 %v1636, %v1635
    %v1652 = vpack.c.b16 %v1638, %v1637
    %v1653 = vpack.c.b16 %v1640, %v1639
    %v1654 = vpack.c.b16 %v1642, %v1641
    %v1655 = vpack.c.b16 %v1644, %v1643
    %v1656 = vpack.c.b16 %v1646, %v1645
    %v1657 = vpack.c.b16 %v1648, %v1647
    %v1658 = vpack.c.b16 %v1650, %v1649
    %1667 = vmatprep.subr.bf16.mxu0 0
    %1668 = vmatpush1.bf16.msra.mxu0 %v1651
    %1669 = vmatprep.subr.bf16.mxu0 0
    %1670 = vmatpush1.bf16.msra.mxu0 %v1652
    %1671 = vmatprep.subr.bf16.mxu0 0
    %1672 = vmatpush1.bf16.msra.mxu0 %v1653
    %1673 = vmatprep.subr.bf16.mxu0 0
    %1674 = vmatpush1.bf16.msra.mxu0 %v1654
    %1675 = vmatprep.subr.bf16.mxu0 0
    %1676 = vmatpush1.bf16.msra.mxu0 %v1655
    %1677 = vmatprep.subr.bf16.mxu0 0
    %1678 = vmatpush1.bf16.msra.mxu0 %v1656
    %1679 = vmatprep.subr.bf16.mxu0 0
    %1680 = vmatpush1.bf16.msra.mxu0 %v1657
    %1681 = vmatprep.subr.bf16.mxu0 0
    %1682 = vmatpush1.bf16.msra.mxu0 %v1658
    %1683 = vmatprep.subr.bf16.mxu0 0
    %1684 = vmatpush1.bf16.msra.mxu0 0
    %1685 = vmatprep.subr.bf16.mxu0 0
    %1686 = vmatpush1.bf16.msra.mxu0 0
    %1687 = vmatprep.subr.bf16.mxu0 0
    %1688 = vmatpush1.bf16.msra.mxu0 0
    %1689 = vmatprep.subr.bf16.mxu0 0
    %1690 = vmatpush1.bf16.msra.mxu0 0
    %1691 = vmatprep.subr.bf16.mxu0 0
    %1692 = vmatpush1.bf16.msra.mxu0 0
    %1693 = vmatprep.subr.bf16.mxu0 0
    %1694 = vmatpush1.bf16.msra.mxu0 0
    %1695 = vmatprep.subr.bf16.mxu0 0
    %1696 = vmatpush1.bf16.msra.mxu0 0
    %1697 = vmatprep.subr.bf16.mxu0 0
    %1698 = vmatpush1.bf16.msra.mxu0 0
    %1699 = vmatprep.mubr.bf16.mxu0 0
    %1700 = vmatmul.mubr.bf16.gmra.mrb[0].mxu0 %v1617
    %v1701 = vpop.f32.mrb[0].mxu0
    %v1702 = vadd.f32 0.0, %v1701
    %v1703 = vpop.f32.mrb[0].mxu0
    %v1704 = vpop.f32.mrb[0].mxu0
    %v1705 = vpop.f32.mrb[0].mxu0
    %1706 = vdwg.mxu0
    %v1707 = vadd.f32 %v1599, %v1702
    %v1708 = vld [vmem:[%s608] sm:$0xf]
    %v1709 = vld [vmem:[%s608 + $0x4] sm:$0xf]
    %v1710 = vld [vmem:[%s608 + $0x8] sm:$0xf]
    %v1711 = vld [vmem:[%s608 + $0xc] sm:$0xf]
    %v1712 = vld [vmem:[%s608 + $0x10] sm:$0xf]
    %v1713 = vld [vmem:[%s608 + $0x14] sm:$0xf]
    %v1714 = vld [vmem:[%s608 + $0x18] sm:$0xf]
    %v1715 = vld [vmem:[%s608 + $0x1c] sm:$0xf]
    %v1716 = vld [vmem:[%s608 + $0x20] sm:$0xf]
    %v1717 = vld [vmem:[%s608 + $0x24] sm:$0xf]
    %v1718 = vld [vmem:[%s608 + $0x28] sm:$0xf]
    %v1719 = vld [vmem:[%s608 + $0x2c] sm:$0xf]
    %v1720 = vld [vmem:[%s608 + $0x30] sm:$0xf]
    %v1721 = vld [vmem:[%s608 + $0x34] sm:$0xf]
    %v1722 = vld [vmem:[%s608 + $0x38] sm:$0xf]
    %v1723 = vld [vmem:[%s608 + $0x3c] sm:$0xf]
    %v1724 = vrot.slane %v1508, 1
    %v1742 = vunpack.c.l.b16 %v1708
    %v1743 = vunpack.c.l.b16 %v1709
    %v1744 = vunpack.c.l.b16 %v1710
    %v1745 = vunpack.c.l.b16 %v1711
    %v1746 = vunpack.c.l.b16 %v1712
    %v1747 = vunpack.c.l.b16 %v1713
    %v1748 = vunpack.c.l.b16 %v1714
    %v1749 = vunpack.c.l.b16 %v1715
    %v1750 = vunpack.c.l.b16 %v1716
    %v1751 = vunpack.c.l.b16 %v1717
    %v1752 = vunpack.c.l.b16 %v1718
    %v1753 = vunpack.c.l.b16 %v1719
    %v1754 = vunpack.c.l.b16 %v1720
    %v1755 = vunpack.c.l.b16 %v1721
    %v1756 = vunpack.c.l.b16 %v1722
    %v1757 = vunpack.c.l.b16 %v1723
    %v1758 = vpack.c.b16 %v1743, %v1742
    %v1759 = vpack.c.b16 %v1745, %v1744
    %v1760 = vpack.c.b16 %v1747, %v1746
    %v1761 = vpack.c.b16 %v1749, %v1748
    %v1762 = vpack.c.b16 %v1751, %v1750
    %v1763 = vpack.c.b16 %v1753, %v1752
    %v1764 = vpack.c.b16 %v1755, %v1754
    %v1765 = vpack.c.b16 %v1757, %v1756
    %1774 = vmatprep.subr.bf16.mxu0 0
    %1775 = vmatpush1.bf16.msra.mxu0 %v1758
    %1776 = vmatprep.subr.bf16.mxu0 0
    %1777 = vmatpush1.bf16.msra.mxu0 %v1759
    %1778 = vmatprep.subr.bf16.mxu0 0
    %1779 = vmatpush1.bf16.msra.mxu0 %v1760
    %1780 = vmatprep.subr.bf16.mxu0 0
    %1781 = vmatpush1.bf16.msra.mxu0 %v1761
    %1782 = vmatprep.subr.bf16.mxu0 0
    %1783 = vmatpush1.bf16.msra.mxu0 %v1762
    %1784 = vmatprep.subr.bf16.mxu0 0
    %1785 = vmatpush1.bf16.msra.mxu0 %v1763
    %1786 = vmatprep.subr.bf16.mxu0 0
    %1787 = vmatpush1.bf16.msra.mxu0 %v1764
    %1788 = vmatprep.subr.bf16.mxu0 0
    %1789 = vmatpush1.bf16.msra.mxu0 %v1765
    %1790 = vmatprep.subr.bf16.mxu0 0
    %1791 = vmatpush1.bf16.msra.mxu0 0
    %1792 = vmatprep.subr.bf16.mxu0 0
    %1793 = vmatpush1.bf16.msra.mxu0 0
    %1794 = vmatprep.subr.bf16.mxu0 0
    %1795 = vmatpush1.bf16.msra.mxu0 0
    %1796 = vmatprep.subr.bf16.mxu0 0
    %1797 = vmatpush1.bf16.msra.mxu0 0
    %1798 = vmatprep.subr.bf16.mxu0 0
    %1799 = vmatpush1.bf16.msra.mxu0 0
    %1800 = vmatprep.subr.bf16.mxu0 0
    %1801 = vmatpush1.bf16.msra.mxu0 0
    %1802 = vmatprep.subr.bf16.mxu0 0
    %1803 = vmatpush1.bf16.msra.mxu0 0
    %1804 = vmatprep.subr.bf16.mxu0 0
    %1805 = vmatpush1.bf16.msra.mxu0 0
    %1806 = vmatprep.mubr.bf16.mxu0 0
    %1807 = vmatmul.mubr.bf16.gmra.mrb[0].mxu0 %v1724
    %v1808 = vpop.f32.mrb[0].mxu0
    %v1809 = vadd.f32 0.0, %v1808
    %v1810 = vpop.f32.mrb[0].mxu0
    %v1811 = vpop.f32.mrb[0].mxu0
    %v1812 = vpop.f32.mrb[0].mxu0
    %1813 = vdwg.mxu0
    %v1814 = vadd.f32 %v1707, %v1809
    %v1815 = vmul.f32 %v1814, 0.5
    %v1816 = vmul.f32 %v1814, %v1814
    %v1817 = vmul.f32 %v1816, %v1814
    %v1818 = vmul.f32 %v1817, 0.044715
    %v1819 = vadd.f32 %v1814, %v1818
    %v1820 = vmul.f32 %v1819, 0.7978846
    %v1821 = vtanh.pop %v1820
    %v1822 = vadd.f32 %v1821, 1.0
    %v1823 = vmul.f32 %v1815, %v1822
    %v1824 = vpack.c.bf16 %v1823, %v1823
    %v1825 = vld [vmem:[%s6] sm:$0xf]
    %v1826 = vld [vmem:[%s6 + $0x4] sm:$0xf]
    %v1827 = vld [vmem:[%s6 + $0x8] sm:$0xf]
    %v1828 = vld [vmem:[%s6 + $0xc] sm:$0xf]
    %v1829 = vld [vmem:[%s6 + $0x10] sm:$0xf]
    %v1830 = vld [vmem:[%s6 + $0x14] sm:$0xf]
    %v1831 = vld [vmem:[%s6 + $0x18] sm:$0xf]
    %v1832 = vld [vmem:[%s6 + $0x1c] sm:$0xf]
    %v1833 = vld [vmem:[%s6 + $0x20] sm:$0xf]
    %v1834 = vld [vmem:[%s6 + $0x24] sm:$0xf]
    %v1835 = vld [vmem:[%s6 + $0x28] sm:$0xf]
    %v1836 = vld [vmem:[%s6 + $0x2c] sm:$0xf]
    %v1837 = vld [vmem:[%s6 + $0x30] sm:$0xf]
    %v1838 = vld [vmem:[%s6 + $0x34] sm:$0xf]
    %v1839 = vld [vmem:[%s6 + $0x38] sm:$0xf]
    %v1840 = vld [vmem:[%s6 + $0x3c] sm:$0xf]
    %v1841 = vld [vmem:[%s8] sm:$0x1]
    %v1858 = vunpack.c.l.b16 %v1825
    %v1859 = vunpack.c.l.b16 %v1826
    %v1860 = vunpack.c.l.b16 %v1827
    %v1861 = vunpack.c.l.b16 %v1828
    %v1862 = vunpack.c.l.b16 %v1829
    %v1863 = vunpack.c.l.b16 %v1830
    %v1864 = vunpack.c.l.b16 %v1831
    %v1865 = vunpack.c.l.b16 %v1832
    %v1866 = vunpack.c.l.b16 %v1833
    %v1867 = vunpack.c.l.b16 %v1834
    %v1868 = vunpack.c.l.b16 %v1835
    %v1869 = vunpack.c.l.b16 %v1836
    %v1870 = vunpack.c.l.b16 %v1837
    %v1871 = vunpack.c.l.b16 %v1838
    %v1872 = vunpack.c.l.b16 %v1839
    %v1873 = vunpack.c.l.b16 %v1840
    %v1874 = vpack.c.b16 %v1859, %v1858
    %v1875 = vpack.c.b16 %v1861, %v1860
    %v1876 = vpack.c.b16 %v1863, %v1862
    %v1877 = vpack.c.b16 %v1865, %v1864
    %v1878 = vpack.c.b16 %v1867, %v1866
    %v1879 = vpack.c.b16 %v1869, %v1868
    %v1880 = vpack.c.b16 %v1871, %v1870
    %v1881 = vpack.c.b16 %v1873, %v1872
    %1890 = vmatprep.subr.bf16.mxu0 0
    %1891 = vmatpush1.bf16.msra.mxu0 %v1874
    %1892 = vmatprep.subr.bf16.mxu0 0
    %1893 = vmatpush1.bf16.msra.mxu0 %v1875
    %1894 = vmatprep.subr.bf16.mxu0 0
    %1895 = vmatpush1.bf16.msra.mxu0 %v1876
    %1896 = vmatprep.subr.bf16.mxu0 0
    %1897 = vmatpush1.bf16.msra.mxu0 %v1877
    %1898 = vmatprep.subr.bf16.mxu0 0
    %1899 = vmatpush1.bf16.msra.mxu0 %v1878
    %1900 = vmatprep.subr.bf16.mxu0 0
    %1901 = vmatpush1.bf16.msra.mxu0 %v1879
    %1902 = vmatprep.subr.bf16.mxu0 0
    %1903 = vmatpush1.bf16.msra.mxu0 %v1880
    %1904 = vmatprep.subr.bf16.mxu0 0
    %1905 = vmatpush1.bf16.msra.mxu0 %v1881
    %1906 = vmatprep.subr.bf16.mxu0 0
    %1907 = vmatpush1.bf16.msra.mxu0 0
    %1908 = vmatprep.subr.bf16.mxu0 0
    %1909 = vmatpush1.bf16.msra.mxu0 0
    %1910 = vmatprep.subr.bf16.mxu0 0
    %1911 = vmatpush1.bf16.msra.mxu0 0
    %1912 = vmatprep.subr.bf16.mxu0 0
    %1913 = vmatpush1.bf16.msra.mxu0 0
    %1914 = vmatprep.subr.bf16.mxu0 0
    %1915 = vmatpush1.bf16.msra.mxu0 0
    %1916 = vmatprep.subr.bf16.mxu0 0
    %1917 = vmatpush1.bf16.msra.mxu0 0
    %1918 = vmatprep.subr.bf16.mxu0 0
    %1919 = vmatpush1.bf16.msra.mxu0 0
    %1920 = vmatprep.subr.bf16.mxu0 0
    %1921 = vmatpush1.bf16.msra.mxu0 0
    %1922 = vmatprep.mubr.bf16.mxu0 0
    %1923 = vmatmul.mubr.bf16.gmra.mrb[0].mxu0 %v1824
    %v1924 = vpop.f32.mrb[0].mxu0
    %v1925 = vadd.f32 %v1841, %v1924
    %v1926 = vpop.f32.mrb[0].mxu0
    %v1927 = vpop.f32.mrb[0].mxu0
    %v1928 = vpop.f32.mrb[0].mxu0
    %1929 = vdwg.mxu0
    %1930 = vst [vmem:[#allocation2 + $0x9] sm:$0x1] %v1925
    %v1931 = vld [vmem:[#allocation2 + $0x6] sm:$0xf]
    %v1932 = vpack.c.bf16 %v1931, %v1931
    %v1933 = vld [vmem:[%s11] sm:$0x1]
    %v1934 = vld [vmem:[%s9] sm:$0xf]
    %v1935 = vld [vmem:[%s9 + $0x4] sm:$0xf]
    %v1936 = vld [vmem:[%s9 + $0x8] sm:$0xf]
    %v1937 = vld [vmem:[%s9 + $0xc] sm:$0xf]
    %v1938 = vld [vmem:[%s9 + $0x10] sm:$0xf]
    %v1939 = vld [vmem:[%s9 + $0x14] sm:$0xf]
    %v1940 = vld [vmem:[%s9 + $0x18] sm:$0xf]
    %v1941 = vld [vmem:[%s9 + $0x1c] sm:$0xf]
    %v1942 = vld [vmem:[%s9 + $0x20] sm:$0xf]
    %v1943 = vld [vmem:[%s9 + $0x24] sm:$0xf]
    %v1944 = vld [vmem:[%s9 + $0x28] sm:$0xf]
    %v1945 = vld [vmem:[%s9 + $0x2c] sm:$0xf]
    %v1946 = vld [vmem:[%s9 + $0x30] sm:$0xf]
    %v1947 = vld [vmem:[%s9 + $0x34] sm:$0xf]
    %v1948 = vld [vmem:[%s9 + $0x38] sm:$0xf]
    %v1949 = vld [vmem:[%s9 + $0x3c] sm:$0xf]
    %v1966 = vunpack.c.l.b16 %v1934
    %v1967 = vunpack.c.l.b16 %v1935
    %v1968 = vunpack.c.l.b16 %v1936
    %v1969 = vunpack.c.l.b16 %v1937
    %v1970 = vunpack.c.l.b16 %v1938
    %v1971 = vunpack.c.l.b16 %v1939
    %v1972 = vunpack.c.l.b16 %v1940
    %v1973 = vunpack.c.l.b16 %v1941
    %v1974 = vunpack.c.l.b16 %v1942
    %v1975 = vunpack.c.l.b16 %v1943
    %v1976 = vunpack.c.l.b16 %v1944
    %v1977 = vunpack.c.l.b16 %v1945
    %v1978 = vunpack.c.l.b16 %v1946
    %v1979 = vunpack.c.l.b16 %v1947
    %v1980 = vunpack.c.l.b16 %v1948
    %v1981 = vunpack.c.l.b16 %v1949
    %v1982 = vpack.c.b16 %v1967, %v1966
    %v1983 = vpack.c.b16 %v1969, %v1968
    %v1984 = vpack.c.b16 %v1971, %v1970
    %v1985 = vpack.c.b16 %v1973, %v1972
    %v1986 = vpack.c.b16 %v1975, %v1974
    %v1987 = vpack.c.b16 %v1977, %v1976
    %v1988 = vpack.c.b16 %v1979, %v1978
    %v1989 = vpack.c.b16 %v1981, %v1980
    %1998 = vmatprep.subr.bf16.mxu0 0
    %1999 = vmatpush1.bf16.msra.mxu0 %v1982
    %2000 = vmatprep.subr.bf16.mxu0 0
    %2001 = vmatpush1.bf16.msra.mxu0 %v1983
    %2002 = vmatprep.subr.bf16.mxu0 0
    %2003 = vmatpush1.bf16.msra.mxu0 %v1984
    %2004 = vmatprep.subr.bf16.mxu0 0
    %2005 = vmatpush1.bf16.msra.mxu0 %v1985
    %2006 = vmatprep.subr.bf16.mxu0 0
    %2007 = vmatpush1.bf16.msra.mxu0 %v1986
    %2008 = vmatprep.subr.bf16.mxu0 0
    %2009 = vmatpush1.bf16.msra.mxu0 %v1987
    %2010 = vmatprep.subr.bf16.mxu0 0
    %2011 = vmatpush1.bf16.msra.mxu0 %v1988
    %2012 = vmatprep.subr.bf16.mxu0 0
    %2013 = vmatpush1.bf16.msra.mxu0 %v1989
    %2014 = vmatprep.subr.bf16.mxu0 0
    %2015 = vmatpush1.bf16.msra.mxu0 0
    %2016 = vmatprep.subr.bf16.mxu0 0
    %2017 = vmatpush1.bf16.msra.mxu0 0
    %2018 = vmatprep.subr.bf16.mxu0 0
    %2019 = vmatpush1.bf16.msra.mxu0 0
    %2020 = vmatprep.subr.bf16.mxu0 0
    %2021 = vmatpush1.bf16.msra.mxu0 0
    %2022 = vmatprep.subr.bf16.mxu0 0
    %2023 = vmatpush1.bf16.msra.mxu0 0
    %2024 = vmatprep.subr.bf16.mxu0 0
    %2025 = vmatpush1.bf16.msra.mxu0 0
    %2026 = vmatprep.subr.bf16.mxu0 0
    %2027 = vmatpush1.bf16.msra.mxu0 0
    %2028 = vmatprep.subr.bf16.mxu0 0
    %2029 = vmatpush1.bf16.msra.mxu0 0
    %2030 = vmatprep.mubr.bf16.mxu0 0
    %2031 = vmatmul.mubr.bf16.gmra.mrb[0].mxu0 %v1932
    %v2032 = vpop.f32.mrb[0].mxu0
    %v2033 = vadd.f32 0.0, %v2032
    %v2034 = vpop.f32.mrb[0].mxu0
    %v2035 = vpop.f32.mrb[0].mxu0
    %v2036 = vpop.f32.mrb[0].mxu0
    %2037 = vdwg.mxu0
    %v2038 = vadd.f32 %v1933, %v2033
    %v2039 = vld [vmem:[%s940] sm:$0xf]
    %v2040 = vld [vmem:[%s940 + $0x4] sm:$0xf]
    %v2041 = vld [vmem:[%s940 + $0x8] sm:$0xf]
    %v2042 = vld [vmem:[%s940 + $0xc] sm:$0xf]
    %v2043 = vld [vmem:[%s940 + $0x10] sm:$0xf]
    %v2044 = vld [vmem:[%s940 + $0x14] sm:$0xf]
    %v2045 = vld [vmem:[%s940 + $0x18] sm:$0xf]
    %v2046 = vld [vmem:[%s940 + $0x1c] sm:$0xf]
    %v2047 = vld [vmem:[%s940 + $0x20] sm:$0xf]
    %v2048 = vld [vmem:[%s940 + $0x24] sm:$0xf]
    %v2049 = vld [vmem:[%s940 + $0x28] sm:$0xf]
    %v2050 = vld [vmem:[%s940 + $0x2c] sm:$0xf]
    %v2051 = vld [vmem:[%s940 + $0x30] sm:$0xf]
    %v2052 = vld [vmem:[%s940 + $0x34] sm:$0xf]
    %v2053 = vld [vmem:[%s940 + $0x38] sm:$0xf]
    %v2054 = vld [vmem:[%s940 + $0x3c] sm:$0xf]
    %v2056 = vshrl.u32 %v1932, 16
    %v2075 = vunpack.c.l.b16 %v2039
    %v2076 = vunpack.c.l.b16 %v2040
    %v2077 = vunpack.c.l.b16 %v2041
    %v2078 = vunpack.c.l.b16 %v2042
    %v2079 = vunpack.c.l.b16 %v2043
    %v2080 = vunpack.c.l.b16 %v2044
    %v2081 = vunpack.c.l.b16 %v2045
    %v2082 = vunpack.c.l.b16 %v2046
    %v2083 = vunpack.c.l.b16 %v2047
    %v2084 = vunpack.c.l.b16 %v2048
    %v2085 = vunpack.c.l.b16 %v2049
    %v2086 = vunpack.c.l.b16 %v2050
    %v2087 = vunpack.c.l.b16 %v2051
    %v2088 = vunpack.c.l.b16 %v2052
    %v2089 = vunpack.c.l.b16 %v2053
    %v2090 = vunpack.c.l.b16 %v2054
    %v2091 = vpack.c.b16 %v2076, %v2075
    %v2092 = vpack.c.b16 %v2078, %v2077
    %v2093 = vpack.c.b16 %v2080, %v2079
    %v2094 = vpack.c.b16 %v2082, %v2081
    %v2095 = vpack.c.b16 %v2084, %v2083
    %v2096 = vpack.c.b16 %v2086, %v2085
    %v2097 = vpack.c.b16 %v2088, %v2087
    %v2098 = vpack.c.b16 %v2090, %v2089
    %2107 = vmatprep.subr.bf16.mxu0 0
    %2108 = vmatpush1.bf16.msra.mxu0 %v2091
    %2109 = vmatprep.subr.bf16.mxu0 0
    %2110 = vmatpush1.bf16.msra.mxu0 %v2092
    %2111 = vmatprep.subr.bf16.mxu0 0
    %2112 = vmatpush1.bf16.msra.mxu0 %v2093
    %2113 = vmatprep.subr.bf16.mxu0 0
    %2114 = vmatpush1.bf16.msra.mxu0 %v2094
    %2115 = vmatprep.subr.bf16.mxu0 0
    %2116 = vmatpush1.bf16.msra.mxu0 %v2095
    %2117 = vmatprep.subr.bf16.mxu0 0
    %2118 = vmatpush1.bf16.msra.mxu0 %v2096
    %2119 = vmatprep.subr.bf16.mxu0 0
    %2120 = vmatpush1.bf16.msra.mxu0 %v2097
    %2121 = vmatprep.subr.bf16.mxu0 0
    %2122 = vmatpush1.bf16.msra.mxu0 %v2098
    %2123 = vmatprep.subr.bf16.mxu0 0
    %2124 = vmatpush1.bf16.msra.mxu0 0
    %2125 = vmatprep.subr.bf16.mxu0 0
    %2126 = vmatpush1.bf16.msra.mxu0 0
    %2127 = vmatprep.subr.bf16.mxu0 0
    %2128 = vmatpush1.bf16.msra.mxu0 0
    %2129 = vmatprep.subr.bf16.mxu0 0
    %2130 = vmatpush1.bf16.msra.mxu0 0
    %2131 = vmatprep.subr.bf16.mxu0 0
    %2132 = vmatpush1.bf16.msra.mxu0 0
    %2133 = vmatprep.subr.bf16.mxu0 0
    %2134 = vmatpush1.bf16.msra.mxu0 0
    %2135 = vmatprep.subr.bf16.mxu0 0
    %2136 = vmatpush1.bf16.msra.mxu0 0
    %2137 = vmatprep.subr.bf16.mxu0 0
    %2138 = vmatpush1.bf16.msra.mxu0 0
    %2139 = vmatprep.mubr.bf16.mxu0 0
    %2140 = vmatmul.mubr.bf16.gmra.mrb[0].mxu0 %v2056
    %v2141 = vpop.f32.mrb[0].mxu0
    %v2142 = vadd.f32 0.0, %v2141
    %v2143 = vpop.f32.mrb[0].mxu0
    %v2144 = vpop.f32.mrb[0].mxu0
    %v2145 = vpop.f32.mrb[0].mxu0
    %2146 = vdwg.mxu0
    %v2147 = vadd.f32 %v2038, %v2142
    %v2148 = vld [vmem:[%s1050] sm:$0xf]
    %v2149 = vld [vmem:[%s1050 + $0x4] sm:$0xf]
    %v2150 = vld [vmem:[%s1050 + $0x8] sm:$0xf]
    %v2151 = vld [vmem:[%s1050 + $0xc] sm:$0xf]
    %v2152 = vld [vmem:[%s1050 + $0x10] sm:$0xf]
    %v2153 = vld [vmem:[%s1050 + $0x14] sm:$0xf]
    %v2154 = vld [vmem:[%s1050 + $0x18] sm:$0xf]
    %v2155 = vld [vmem:[%s1050 + $0x1c] sm:$0xf]
    %v2156 = vld [vmem:[%s1050 + $0x20] sm:$0xf]
    %v2157 = vld [vmem:[%s1050 + $0x24] sm:$0xf]
    %v2158 = vld [vmem:[%s1050 + $0x28] sm:$0xf]
    %v2159 = vld [vmem:[%s1050 + $0x2c] sm:$0xf]
    %v2160 = vld [vmem:[%s1050 + $0x30] sm:$0xf]
    %v2161 = vld [vmem:[%s1050 + $0x34] sm:$0xf]
    %v2162 = vld [vmem:[%s1050 + $0x38] sm:$0xf]
    %v2163 = vld [vmem:[%s1050 + $0x3c] sm:$0xf]
    %v2165 = vrot.slane %v1932, 1
    %v2183 = vunpack.c.l.b16 %v2148
    %v2184 = vunpack.c.l.b16 %v2149
    %v2185 = vunpack.c.l.b16 %v2150
    %v2186 = vunpack.c.l.b16 %v2151
    %v2187 = vunpack.c.l.b16 %v2152
    %v2188 = vunpack.c.l.b16 %v2153
    %v2189 = vunpack.c.l.b16 %v2154
    %v2190 = vunpack.c.l.b16 %v2155
    %v2191 = vunpack.c.l.b16 %v2156
    %v2192 = vunpack.c.l.b16 %v2157
    %v2193 = vunpack.c.l.b16 %v2158
    %v2194 = vunpack.c.l.b16 %v2159
    %v2195 = vunpack.c.l.b16 %v2160
    %v2196 = vunpack.c.l.b16 %v2161
    %v2197 = vunpack.c.l.b16 %v2162
    %v2198 = vunpack.c.l.b16 %v2163
    %v2199 = vpack.c.b16 %v2184, %v2183
    %v2200 = vpack.c.b16 %v2186, %v2185
    %v2201 = vpack.c.b16 %v2188, %v2187
    %v2202 = vpack.c.b16 %v2190, %v2189
    %v2203 = vpack.c.b16 %v2192, %v2191
    %v2204 = vpack.c.b16 %v2194, %v2193
    %v2205 = vpack.c.b16 %v2196, %v2195
    %v2206 = vpack.c.b16 %v2198, %v2197
    %2215 = vmatprep.subr.bf16.mxu0 0
    %2216 = vmatpush1.bf16.msra.mxu0 %v2199
    %2217 = vmatprep.subr.bf16.mxu0 0
    %2218 = vmatpush1.bf16.msra.mxu0 %v2200
    %2219 = vmatprep.subr.bf16.mxu0 0
    %2220 = vmatpush1.bf16.msra.mxu0 %v2201
    %2221 = vmatprep.subr.bf16.mxu0 0
    %2222 = vmatpush1.bf16.msra.mxu0 %v2202
    %2223 = vmatprep.subr.bf16.mxu0 0
    %2224 = vmatpush1.bf16.msra.mxu0 %v2203
    %2225 = vmatprep.subr.bf16.mxu0 0
    %2226 = vmatpush1.bf16.msra.mxu0 %v2204
    %2227 = vmatprep.subr.bf16.mxu0 0
    %2228 = vmatpush1.bf16.msra.mxu0 %v2205
    %2229 = vmatprep.subr.bf16.mxu0 0
    %2230 = vmatpush1.bf16.msra.mxu0 %v2206
    %2231 = vmatprep.subr.bf16.mxu0 0
    %2232 = vmatpush1.bf16.msra.mxu0 0
    %2233 = vmatprep.subr.bf16.mxu0 0
    %2234 = vmatpush1.bf16.msra.mxu0 0
    %2235 = vmatprep.subr.bf16.mxu0 0
    %2236 = vmatpush1.bf16.msra.mxu0 0
    %2237 = vmatprep.subr.bf16.mxu0 0
    %2238 = vmatpush1.bf16.msra.mxu0 0
    %2239 = vmatprep.subr.bf16.mxu0 0
    %2240 = vmatpush1.bf16.msra.mxu0 0
    %2241 = vmatprep.subr.bf16.mxu0 0
    %2242 = vmatpush1.bf16.msra.mxu0 0
    %2243 = vmatprep.subr.bf16.mxu0 0
    %2244 = vmatpush1.bf16.msra.mxu0 0
    %2245 = vmatprep.subr.bf16.mxu0 0
    %2246 = vmatpush1.bf16.msra.mxu0 0
    %2247 = vmatprep.mubr.bf16.mxu0 0
    %2248 = vmatmul.mubr.bf16.gmra.mrb[0].mxu0 %v2165
    %v2249 = vpop.f32.mrb[0].mxu0
    %v2250 = vadd.f32 0.0, %v2249
    %v2251 = vpop.f32.mrb[0].mxu0
    %v2252 = vpop.f32.mrb[0].mxu0
    %v2253 = vpop.f32.mrb[0].mxu0
    %2254 = vdwg.mxu0
    %v2255 = vadd.f32 %v2147, %v2250
    %v2256 = vld [vmem:[%s1159] sm:$0xf]
    %v2257 = vld [vmem:[%s1159 + $0x4] sm:$0xf]
    %v2258 = vld [vmem:[%s1159 + $0x8] sm:$0xf]
    %v2259 = vld [vmem:[%s1159 + $0xc] sm:$0xf]
    %v2260 = vld [vmem:[%s1159 + $0x10] sm:$0xf]
    %v2261 = vld [vmem:[%s1159 + $0x14] sm:$0xf]
    %v2262 = vld [vmem:[%s1159 + $0x18] sm:$0xf]
    %v2263 = vld [vmem:[%s1159 + $0x1c] sm:$0xf]
    %v2264 = vld [vmem:[%s1159 + $0x20] sm:$0xf]
    %v2265 = vld [vmem:[%s1159 + $0x24] sm:$0xf]
    %v2266 = vld [vmem:[%s1159 + $0x28] sm:$0xf]
    %v2267 = vld [vmem:[%s1159 + $0x2c] sm:$0xf]
    %v2268 = vld [vmem:[%s1159 + $0x30] sm:$0xf]
    %v2269 = vld [vmem:[%s1159 + $0x34] sm:$0xf]
    %v2270 = vld [vmem:[%s1159 + $0x38] sm:$0xf]
    %v2271 = vld [vmem:[%s1159 + $0x3c] sm:$0xf]
    %v2272 = vrot.slane %v2056, 1
    %v2290 = vunpack.c.l.b16 %v2256
    %v2291 = vunpack.c.l.b16 %v2257
    %v2292 = vunpack.c.l.b16 %v2258
    %v2293 = vunpack.c.l.b16 %v2259
    %v2294 = vunpack.c.l.b16 %v2260
    %v2295 = vunpack.c.l.b16 %v2261
    %v2296 = vunpack.c.l.b16 %v2262
    %v2297 = vunpack.c.l.b16 %v2263
    %v2298 = vunpack.c.l.b16 %v2264
    %v2299 = vunpack.c.l.b16 %v2265
    %v2300 = vunpack.c.l.b16 %v2266
    %v2301 = vunpack.c.l.b16 %v2267
    %v2302 = vunpack.c.l.b16 %v2268
    %v2303 = vunpack.c.l.b16 %v2269
    %v2304 = vunpack.c.l.b16 %v2270
    %v2305 = vunpack.c.l.b16 %v2271
    %v2306 = vpack.c.b16 %v2291, %v2290
    %v2307 = vpack.c.b16 %v2293, %v2292
    %v2308 = vpack.c.b16 %v2295, %v2294
    %v2309 = vpack.c.b16 %v2297, %v2296
    %v2310 = vpack.c.b16 %v2299, %v2298
    %v2311 = vpack.c.b16 %v2301, %v2300
    %v2312 = vpack.c.b16 %v2303, %v2302
    %v2313 = vpack.c.b16 %v2305, %v2304
    %2322 = vmatprep.subr.bf16.mxu0 0
    %2323 = vmatpush1.bf16.msra.mxu0 %v2306
    %2324 = vmatprep.subr.bf16.mxu0 0
    %2325 = vmatpush1.bf16.msra.mxu0 %v2307
    %2326 = vmatprep.subr.bf16.mxu0 0
    %2327 = vmatpush1.bf16.msra.mxu0 %v2308
    %2328 = vmatprep.subr.bf16.mxu0 0
    %2329 = vmatpush1.bf16.msra.mxu0 %v2309
    %2330 = vmatprep.subr.bf16.mxu0 0
    %2331 = vmatpush1.bf16.msra.mxu0 %v2310
    %2332 = vmatprep.subr.bf16.mxu0 0
    %2333 = vmatpush1.bf16.msra.mxu0 %v2311
    %2334 = vmatprep.subr.bf16.mxu0 0
    %2335 = vmatpush1.bf16.msra.mxu0 %v2312
    %2336 = vmatprep.subr.bf16.mxu0 0
    %2337 = vmatpush1.bf16.msra.mxu0 %v2313
    %2338 = vmatprep.subr.bf16.mxu0 0
    %2339 = vmatpush1.bf16.msra.mxu0 0
    %2340 = vmatprep.subr.bf16.mxu0 0
    %2341 = vmatpush1.bf16.msra.mxu0 0
    %2342 = vmatprep.subr.bf16.mxu0 0
    %2343 = vmatpush1.bf16.msra.mxu0 0
    %2344 = vmatprep.subr.bf16.mxu0 0
    %2345 = vmatpush1.bf16.msra.mxu0 0
    %2346 = vmatprep.subr.bf16.mxu0 0
    %2347 = vmatpush1.bf16.msra.mxu0 0
    %2348 = vmatprep.subr.bf16.mxu0 0
    %2349 = vmatpush1.bf16.msra.mxu0 0
    %2350 = vmatprep.subr.bf16.mxu0 0
    %2351 = vmatpush1.bf16.msra.mxu0 0
    %2352 = vmatprep.subr.bf16.mxu0 0
    %2353 = vmatpush1.bf16.msra.mxu0 0
    %2354 = vmatprep.mubr.bf16.mxu0 0
    %2355 = vmatmul.mubr.bf16.gmra.mrb[0].mxu0 %v2272
    %v2356 = vpop.f32.mrb[0].mxu0
    %v2357 = vadd.f32 0.0, %v2356
    %v2358 = vpop.f32.mrb[0].mxu0
    %v2359 = vpop.f32.mrb[0].mxu0
    %v2360 = vpop.f32.mrb[0].mxu0
    %2361 = vdwg.mxu0
    %v2362 = vadd.f32 %v2255, %v2357
    %v2363 = vmul.f32 %v2362, 0.5
    %v2364 = vmul.f32 %v2362, %v2362
    %v2365 = vmul.f32 %v2364, %v2362
    %v2366 = vmul.f32 %v2365, 0.044715
    %v2367 = vadd.f32 %v2362, %v2366
    %v2368 = vmul.f32 %v2367, 0.7978846
    %v2369 = vtanh.pop %v2368
    %v2370 = vadd.f32 %v2369, 1.0
    %v2371 = vmul.f32 %v2363, %v2370
    %v2372 = vpack.c.bf16 %v2371, %v2371
    %v2373 = vld [vmem:[%s10] sm:$0xf]
    %v2374 = vld [vmem:[%s10 + $0x4] sm:$0xf]
    %v2375 = vld [vmem:[%s10 + $0x8] sm:$0xf]
    %v2376 = vld [vmem:[%s10 + $0xc] sm:$0xf]
    %v2377 = vld [vmem:[%s10 + $0x10] sm:$0xf]
    %v2378 = vld [vmem:[%s10 + $0x14] sm:$0xf]
    %v2379 = vld [vmem:[%s10 + $0x18] sm:$0xf]
    %v2380 = vld [vmem:[%s10 + $0x1c] sm:$0xf]
    %v2381 = vld [vmem:[%s10 + $0x20] sm:$0xf]
    %v2382 = vld [vmem:[%s10 + $0x24] sm:$0xf]
    %v2383 = vld [vmem:[%s10 + $0x28] sm:$0xf]
    %v2384 = vld [vmem:[%s10 + $0x2c] sm:$0xf]
    %v2385 = vld [vmem:[%s10 + $0x30] sm:$0xf]
    %v2386 = vld [vmem:[%s10 + $0x34] sm:$0xf]
    %v2387 = vld [vmem:[%s10 + $0x38] sm:$0xf]
    %v2388 = vld [vmem:[%s10 + $0x3c] sm:$0xf]
    %v2389 = vld [vmem:[%s12] sm:$0x1]
    %v2406 = vunpack.c.l.b16 %v2373
    %v2407 = vunpack.c.l.b16 %v2374
    %v2408 = vunpack.c.l.b16 %v2375
    %v2409 = vunpack.c.l.b16 %v2376
    %v2410 = vunpack.c.l.b16 %v2377
    %v2411 = vunpack.c.l.b16 %v2378
    %v2412 = vunpack.c.l.b16 %v2379
    %v2413 = vunpack.c.l.b16 %v2380
    %v2414 = vunpack.c.l.b16 %v2381
    %v2415 = vunpack.c.l.b16 %v2382
    %v2416 = vunpack.c.l.b16 %v2383
    %v2417 = vunpack.c.l.b16 %v2384
    %v2418 = vunpack.c.l.b16 %v2385
    %v2419 = vunpack.c.l.b16 %v2386
    %v2420 = vunpack.c.l.b16 %v2387
    %v2421 = vunpack.c.l.b16 %v2388
    %v2422 = vpack.c.b16 %v2407, %v2406
    %v2423 = vpack.c.b16 %v2409, %v2408
    %v2424 = vpack.c.b16 %v2411, %v2410
    %v2425 = vpack.c.b16 %v2413, %v2412
    %v2426 = vpack.c.b16 %v2415, %v2414
    %v2427 = vpack.c.b16 %v2417, %v2416
    %v2428 = vpack.c.b16 %v2419, %v2418
    %v2429 = vpack.c.b16 %v2421, %v2420
    %2438 = vmatprep.subr.bf16.mxu0 0
    %2439 = vmatpush1.bf16.msra.mxu0 %v2422
    %2440 = vmatprep.subr.bf16.mxu0 0
    %2441 = vmatpush1.bf16.msra.mxu0 %v2423
    %2442 = vmatprep.subr.bf16.mxu0 0
    %2443 = vmatpush1.bf16.msra.mxu0 %v2424
    %2444 = vmatprep.subr.bf16.mxu0 0
    %2445 = vmatpush1.bf16.msra.mxu0 %v2425
    %2446 = vmatprep.subr.bf16.mxu0 0
    %2447 = vmatpush1.bf16.msra.mxu0 %v2426
    %2448 = vmatprep.subr.bf16.mxu0 0
    %2449 = vmatpush1.bf16.msra.mxu0 %v2427
    %2450 = vmatprep.subr.bf16.mxu0 0
    %2451 = vmatpush1.bf16.msra.mxu0 %v2428
    %2452 = vmatprep.subr.bf16.mxu0 0
    %2453 = vmatpush1.bf16.msra.mxu0 %v2429
    %2454 = vmatprep.subr.bf16.mxu0 0
    %2455 = vmatpush1.bf16.msra.mxu0 0
    %2456 = vmatprep.subr.bf16.mxu0 0
    %2457 = vmatpush1.bf16.msra.mxu0 0
    %2458 = vmatprep.subr.bf16.mxu0 0
    %2459 = vmatpush1.bf16.msra.mxu0 0
    %2460 = vmatprep.subr.bf16.mxu0 0
    %2461 = vmatpush1.bf16.msra.mxu0 0
    %2462 = vmatprep.subr.bf16.mxu0 0
    %2463 = vmatpush1.bf16.msra.mxu0 0
    %2464 = vmatprep.subr.bf16.mxu0 0
    %2465 = vmatpush1.bf16.msra.mxu0 0
    %2466 = vmatprep.subr.bf16.mxu0 0
    %2467 = vmatpush1.bf16.msra.mxu0 0
    %2468 = vmatprep.subr.bf16.mxu0 0
    %2469 = vmatpush1.bf16.msra.mxu0 0
    %2470 = vmatprep.mubr.bf16.mxu0 0
    %2471 = vmatmul.mubr.bf16.gmra.mrb[0].mxu0 %v2372
    %v2472 = vpop.f32.mrb[0].mxu0
    %v2473 = vadd.f32 %v2389, %v2472
    %v2474 = vpop.f32.mrb[0].mxu0
    %v2475 = vpop.f32.mrb[0].mxu0
    %v2476 = vpop.f32.mrb[0].mxu0
    %2477 = vdwg.mxu0
    %2478 = vst [vmem:[#allocation3 + $0x1] sm:$0x1] %v2473
    %v2479 = vld [vmem:[#allocation2 + $0x2] sm:$0xf]
    %v2480 = vpack.c.bf16 %v2479, %v2479
    %v2481 = vld [vmem:[%s7] sm:$0x1]
    %v2482 = vld [vmem:[%s5] sm:$0xf]
    %v2483 = vld [vmem:[%s5 + $0x4] sm:$0xf]
    %v2484 = vld [vmem:[%s5 + $0x8] sm:$0xf]
    %v2485 = vld [vmem:[%s5 + $0xc] sm:$0xf]
    %v2486 = vld [vmem:[%s5 + $0x10] sm:$0xf]
    %v2487 = vld [vmem:[%s5 + $0x14] sm:$0xf]
    %v2488 = vld [vmem:[%s5 + $0x18] sm:$0xf]
    %v2489 = vld [vmem:[%s5 + $0x1c] sm:$0xf]
    %v2490 = vld [vmem:[%s5 + $0x20] sm:$0xf]
    %v2491 = vld [vmem:[%s5 + $0x24] sm:$0xf]
    %v2492 = vld [vmem:[%s5 + $0x28] sm:$0xf]
    %v2493 = vld [vmem:[%s5 + $0x2c] sm:$0xf]
    %v2494 = vld [vmem:[%s5 + $0x30] sm:$0xf]
    %v2495 = vld [vmem:[%s5 + $0x34] sm:$0xf]
    %v2496 = vld [vmem:[%s5 + $0x38] sm:$0xf]
    %v2497 = vld [vmem:[%s5 + $0x3c] sm:$0xf]
    %v2514 = vunpack.c.l.b16 %v2482
    %v2515 = vunpack.c.l.b16 %v2483
    %v2516 = vunpack.c.l.b16 %v2484
    %v2517 = vunpack.c.l.b16 %v2485
    %v2518 = vunpack.c.l.b16 %v2486
    %v2519 = vunpack.c.l.b16 %v2487
    %v2520 = vunpack.c.l.b16 %v2488
    %v2521 = vunpack.c.l.b16 %v2489
    %v2522 = vunpack.c.l.b16 %v2490
    %v2523 = vunpack.c.l.b16 %v2491
    %v2524 = vunpack.c.l.b16 %v2492
    %v2525 = vunpack.c.l.b16 %v2493
    %v2526 = vunpack.c.l.b16 %v2494
    %v2527 = vunpack.c.l.b16 %v2495
    %v2528 = vunpack.c.l.b16 %v2496
    %v2529 = vunpack.c.l.b16 %v2497
    %v2530 = vpack.c.b16 %v2515, %v2514
    %v2531 = vpack.c.b16 %v2517, %v2516
    %v2532 = vpack.c.b16 %v2519, %v2518
    %v2533 = vpack.c.b16 %v2521, %v2520
    %v2534 = vpack.c.b16 %v2523, %v2522
    %v2535 = vpack.c.b16 %v2525, %v2524
    %v2536 = vpack.c.b16 %v2527, %v2526
    %v2537 = vpack.c.b16 %v2529, %v2528
    %2546 = vmatprep.subr.bf16.mxu0 0
    %2547 = vmatpush1.bf16.msra.mxu0 %v2530
    %2548 = vmatprep.subr.bf16.mxu0 0
    %2549 = vmatpush1.bf16.msra.mxu0 %v2531
    %2550 = vmatprep.subr.bf16.mxu0 0
    %2551 = vmatpush1.bf16.msra.mxu0 %v2532
    %2552 = vmatprep.subr.bf16.mxu0 0
    %2553 = vmatpush1.bf16.msra.mxu0 %v2533
    %2554 = vmatprep.subr.bf16.mxu0 0
    %2555 = vmatpush1.bf16.msra.mxu0 %v2534
    %2556 = vmatprep.subr.bf16.mxu0 0
    %2557 = vmatpush1.bf16.msra.mxu0 %v2535
    %2558 = vmatprep.subr.bf16.mxu0 0
    %2559 = vmatpush1.bf16.msra.mxu0 %v2536
    %2560 = vmatprep.subr.bf16.mxu0 0
    %2561 = vmatpush1.bf16.msra.mxu0 %v2537
    %2562 = vmatprep.subr.bf16.mxu0 0
    %2563 = vmatpush1.bf16.msra.mxu0 0
    %2564 = vmatprep.subr.bf16.mxu0 0
    %2565 = vmatpush1.bf16.msra.mxu0 0
    %2566 = vmatprep.subr.bf16.mxu0 0
    %2567 = vmatpush1.bf16.msra.mxu0 0
    %2568 = vmatprep.subr.bf16.mxu0 0
    %2569 = vmatpush1.bf16.msra.mxu0 0
    %2570 = vmatprep.subr.bf16.mxu0 0
    %2571 = vmatpush1.bf16.msra.mxu0 0
    %2572 = vmatprep.subr.bf16.mxu0 0
    %2573 = vmatpush1.bf16.msra.mxu0 0
    %2574 = vmatprep.subr.bf16.mxu0 0
    %2575 = vmatpush1.bf16.msra.mxu0 0
    %2576 = vmatprep.subr.bf16.mxu0 0
    %2577 = vmatpush1.bf16.msra.mxu0 0
    %2578 = vmatprep.mubr.bf16.mxu0 0
    %2579 = vmatmul.mubr.bf16.gmra.mrb[0].mxu0 %v2480
    %v2580 = vpop.f32.mrb[0].mxu0
    %v2581 = vadd.f32 0.0, %v2580
    %v2582 = vpop.f32.mrb[0].mxu0
    %v2583 = vpop.f32.mrb[0].mxu0
    %v2584 = vpop.f32.mrb[0].mxu0
    %2585 = vdwg.mxu0
    %v2586 = vadd.f32 %v2481, %v2581
    %v2587 = vld [vmem:[%s389] sm:$0xf]
    %v2588 = vld [vmem:[%s389 + $0x4] sm:$0xf]
    %v2589 = vld [vmem:[%s389 + $0x8] sm:$0xf]
    %v2590 = vld [vmem:[%s389 + $0xc] sm:$0xf]
    %v2591 = vld [vmem:[%s389 + $0x10] sm:$0xf]
    %v2592 = vld [vmem:[%s389 + $0x14] sm:$0xf]
    %v2593 = vld [vmem:[%s389 + $0x18] sm:$0xf]
    %v2594 = vld [vmem:[%s389 + $0x1c] sm:$0xf]
    %v2595 = vld [vmem:[%s389 + $0x20] sm:$0xf]
    %v2596 = vld [vmem:[%s389 + $0x24] sm:$0xf]
    %v2597 = vld [vmem:[%s389 + $0x28] sm:$0xf]
    %v2598 = vld [vmem:[%s389 + $0x2c] sm:$0xf]
    %v2599 = vld [vmem:[%s389 + $0x30] sm:$0xf]
    %v2600 = vld [vmem:[%s389 + $0x34] sm:$0xf]
    %v2601 = vld [vmem:[%s389 + $0x38] sm:$0xf]
    %v2602 = vld [vmem:[%s389 + $0x3c] sm:$0xf]
    %v2604 = vshrl.u32 %v2480, 16
    %v2623 = vunpack.c.l.b16 %v2587
    %v2624 = vunpack.c.l.b16 %v2588
    %v2625 = vunpack.c.l.b16 %v2589
    %v2626 = vunpack.c.l.b16 %v2590
    %v2627 = vunpack.c.l.b16 %v2591
    %v2628 = vunpack.c.l.b16 %v2592
    %v2629 = vunpack.c.l.b16 %v2593
    %v2630 = vunpack.c.l.b16 %v2594
    %v2631 = vunpack.c.l.b16 %v2595
    %v2632 = vunpack.c.l.b16 %v2596
    %v2633 = vunpack.c.l.b16 %v2597
    %v2634 = vunpack.c.l.b16 %v2598
    %v2635 = vunpack.c.l.b16 %v2599
    %v2636 = vunpack.c.l.b16 %v2600
    %v2637 = vunpack.c.l.b16 %v2601
    %v2638 = vunpack.c.l.b16 %v2602
    %v2639 = vpack.c.b16 %v2624, %v2623
    %v2640 = vpack.c.b16 %v2626, %v2625
    %v2641 = vpack.c.b16 %v2628, %v2627
    %v2642 = vpack.c.b16 %v2630, %v2629
    %v2643 = vpack.c.b16 %v2632, %v2631
    %v2644 = vpack.c.b16 %v2634, %v2633
    %v2645 = vpack.c.b16 %v2636, %v2635
    %v2646 = vpack.c.b16 %v2638, %v2637
    %2655 = vmatprep.subr.bf16.mxu0 0
    %2656 = vmatpush1.bf16.msra.mxu0 %v2639
    %2657 = vmatprep.subr.bf16.mxu0 0
    %2658 = vmatpush1.bf16.msra.mxu0 %v2640
    %2659 = vmatprep.subr.bf16.mxu0 0
    %2660 = vmatpush1.bf16.msra.mxu0 %v2641
    %2661 = vmatprep.subr.bf16.mxu0 0
    %2662 = vmatpush1.bf16.msra.mxu0 %v2642
    %2663 = vmatprep.subr.bf16.mxu0 0
    %2664 = vmatpush1.bf16.msra.mxu0 %v2643
    %2665 = vmatprep.subr.bf16.mxu0 0
    %2666 = vmatpush1.bf16.msra.mxu0 %v2644
    %2667 = vmatprep.subr.bf16.mxu0 0
    %2668 = vmatpush1.bf16.msra.mxu0 %v2645
    %2669 = vmatprep.subr.bf16.mxu0 0
    %2670 = vmatpush1.bf16.msra.mxu0 %v2646
    %2671 = vmatprep.subr.bf16.mxu0 0
    %2672 = vmatpush1.bf16.msra.mxu0 0
    %2673 = vmatprep.subr.bf16.mxu0 0
    %2674 = vmatpush1.bf16.msra.mxu0 0
    %2675 = vmatprep.subr.bf16.mxu0 0
    %2676 = vmatpush1.bf16.msra.mxu0 0
    %2677 = vmatprep.subr.bf16.mxu0 0
    %2678 = vmatpush1.bf16.msra.mxu0 0
    %2679 = vmatprep.subr.bf16.mxu0 0
    %2680 = vmatpush1.bf16.msra.mxu0 0
    %2681 = vmatprep.subr.bf16.mxu0 0
    %2682 = vmatpush1.bf16.msra.mxu0 0
    %2683 = vmatprep.subr.bf16.mxu0 0
    %2684 = vmatpush1.bf16.msra.mxu0 0
    %2685 = vmatprep.subr.bf16.mxu0 0
    %2686 = vmatpush1.bf16.msra.mxu0 0
    %2687 = vmatprep.mubr.bf16.mxu0 0
    %2688 = vmatmul.mubr.bf16.gmra.mrb[0].mxu0 %v2604
    %v2689 = vpop.f32.mrb[0].mxu0
    %v2690 = vadd.f32 0.0, %v2689
    %v2691 = vpop.f32.mrb[0].mxu0
    %v2692 = vpop.f32.mrb[0].mxu0
    %v2693 = vpop.f32.mrb[0].mxu0
    %2694 = vdwg.mxu0
    %v2695 = vadd.f32 %v2586, %v2690
    %v2696 = vld [vmem:[%s499] sm:$0xf]
    %v2697 = vld [vmem:[%s499 + $0x4] sm:$0xf]
    %v2698 = vld [vmem:[%s499 + $0x8] sm:$0xf]
    %v2699 = vld [vmem:[%s499 + $0xc] sm:$0xf]
    %v2700 = vld [vmem:[%s499 + $0x10] sm:$0xf]
    %v2701 = vld [vmem:[%s499 + $0x14] sm:$0xf]
    %v2702 = vld [vmem:[%s499 + $0x18] sm:$0xf]
    %v2703 = vld [vmem:[%s499 + $0x1c] sm:$0xf]
    %v2704 = vld [vmem:[%s499 + $0x20] sm:$0xf]
    %v2705 = vld [vmem:[%s499 + $0x24] sm:$0xf]
    %v2706 = vld [vmem:[%s499 + $0x28] sm:$0xf]
    %v2707 = vld [vmem:[%s499 + $0x2c] sm:$0xf]
    %v2708 = vld [vmem:[%s499 + $0x30] sm:$0xf]
    %v2709 = vld [vmem:[%s499 + $0x34] sm:$0xf]
    %v2710 = vld [vmem:[%s499 + $0x38] sm:$0xf]
    %v2711 = vld [vmem:[%s499 + $0x3c] sm:$0xf]
    %v2713 = vrot.slane %v2480, 1
    %v2731 = vunpack.c.l.b16 %v2696
    %v2732 = vunpack.c.l.b16 %v2697
    %v2733 = vunpack.c.l.b16 %v2698
    %v2734 = vunpack.c.l.b16 %v2699
    %v2735 = vunpack.c.l.b16 %v2700
    %v2736 = vunpack.c.l.b16 %v2701
    %v2737 = vunpack.c.l.b16 %v2702
    %v2738 = vunpack.c.l.b16 %v2703
    %v2739 = vunpack.c.l.b16 %v2704
    %v2740 = vunpack.c.l.b16 %v2705
    %v2741 = vunpack.c.l.b16 %v2706
    %v2742 = vunpack.c.l.b16 %v2707
    %v2743 = vunpack.c.l.b16 %v2708
    %v2744 = vunpack.c.l.b16 %v2709
    %v2745 = vunpack.c.l.b16 %v2710
    %v2746 = vunpack.c.l.b16 %v2711
    %v2747 = vpack.c.b16 %v2732, %v2731
    %v2748 = vpack.c.b16 %v2734, %v2733
    %v2749 = vpack.c.b16 %v2736, %v2735
    %v2750 = vpack.c.b16 %v2738, %v2737
    %v2751 = vpack.c.b16 %v2740, %v2739
    %v2752 = vpack.c.b16 %v2742, %v2741
    %v2753 = vpack.c.b16 %v2744, %v2743
    %v2754 = vpack.c.b16 %v2746, %v2745
    %2763 = vmatprep.subr.bf16.mxu0 0
    %2764 = vmatpush1.bf16.msra.mxu0 %v2747
    %2765 = vmatprep.subr.bf16.mxu0 0
    %2766 = vmatpush1.bf16.msra.mxu0 %v2748
    %2767 = vmatprep.subr.bf16.mxu0 0
    %2768 = vmatpush1.bf16.msra.mxu0 %v2749
    %2769 = vmatprep.subr.bf16.mxu0 0
    %2770 = vmatpush1.bf16.msra.mxu0 %v2750
    %2771 = vmatprep.subr.bf16.mxu0 0
    %2772 = vmatpush1.bf16.msra.mxu0 %v2751
    %2773 = vmatprep.subr.bf16.mxu0 0
    %2774 = vmatpush1.bf16.msra.mxu0 %v2752
    %2775 = vmatprep.subr.bf16.mxu0 0
    %2776 = vmatpush1.bf16.msra.mxu0 %v2753
    %2777 = vmatprep.subr.bf16.mxu0 0
    %2778 = vmatpush1.bf16.msra.mxu0 %v2754
    %2779 = vmatprep.subr.bf16.mxu0 0
    %2780 = vmatpush1.bf16.msra.mxu0 0
    %2781 = vmatprep.subr.bf16.mxu0 0
    %2782 = vmatpush1.bf16.msra.mxu0 0
    %2783 = vmatprep.subr.bf16.mxu0 0
    %2784 = vmatpush1.bf16.msra.mxu0 0
    %2785 = vmatprep.subr.bf16.mxu0 0
    %2786 = vmatpush1.bf16.msra.mxu0 0
    %2787 = vmatprep.subr.bf16.mxu0 0
    %2788 = vmatpush1.bf16.msra.mxu0 0
    %2789 = vmatprep.subr.bf16.mxu0 0
    %2790 = vmatpush1.bf16.msra.mxu0 0
    %2791 = vmatprep.subr.bf16.mxu0 0
    %2792 = vmatpush1.bf16.msra.mxu0 0
    %2793 = vmatprep.subr.bf16.mxu0 0
    %2794 = vmatpush1.bf16.msra.mxu0 0
    %2795 = vmatprep.mubr.bf16.mxu0 0
    %2796 = vmatmul.mubr.bf16.gmra.mrb[0].mxu0 %v2713
    %v2797 = vpop.f32.mrb[0].mxu0
    %v2798 = vadd.f32 0.0, %v2797
    %v2799 = vpop.f32.mrb[0].mxu0
    %v2800 = vpop.f32.mrb[0].mxu0
    %v2801 = vpop.f32.mrb[0].mxu0
    %2802 = vdwg.mxu0
    %v2803 = vadd.f32 %v2695, %v2798
    %v2804 = vld [vmem:[%s608] sm:$0xf]
    %v2805 = vld [vmem:[%s608 + $0x4] sm:$0xf]
    %v2806 = vld [vmem:[%s608 + $0x8] sm:$0xf]
    %v2807 = vld [vmem:[%s608 + $0xc] sm:$0xf]
    %v2808 = vld [vmem:[%s608 + $0x10] sm:$0xf]
    %v2809 = vld [vmem:[%s608 + $0x14] sm:$0xf]
    %v2810 = vld [vmem:[%s608 + $0x18] sm:$0xf]
    %v2811 = vld [vmem:[%s608 + $0x1c] sm:$0xf]
    %v2812 = vld [vmem:[%s608 + $0x20] sm:$0xf]
    %v2813 = vld [vmem:[%s608 + $0x24] sm:$0xf]
    %v2814 = vld [vmem:[%s608 + $0x28] sm:$0xf]
    %v2815 = vld [vmem:[%s608 + $0x2c] sm:$0xf]
    %v2816 = vld [vmem:[%s608 + $0x30] sm:$0xf]
    %v2817 = vld [vmem:[%s608 + $0x34] sm:$0xf]
    %v2818 = vld [vmem:[%s608 + $0x38] sm:$0xf]
    %v2819 = vld [vmem:[%s608 + $0x3c] sm:$0xf]
    %v2820 = vrot.slane %v2604, 1
    %v2838 = vunpack.c.l.b16 %v2804
    %v2839 = vunpack.c.l.b16 %v2805
    %v2840 = vunpack.c.l.b16 %v2806
    %v2841 = vunpack.c.l.b16 %v2807
    %v2842 = vunpack.c.l.b16 %v2808
    %v2843 = vunpack.c.l.b16 %v2809
    %v2844 = vunpack.c.l.b16 %v2810
    %v2845 = vunpack.c.l.b16 %v2811
    %v2846 = vunpack.c.l.b16 %v2812
    %v2847 = vunpack.c.l.b16 %v2813
    %v2848 = vunpack.c.l.b16 %v2814
    %v2849 = vunpack.c.l.b16 %v2815
    %v2850 = vunpack.c.l.b16 %v2816
    %v2851 = vunpack.c.l.b16 %v2817
    %v2852 = vunpack.c.l.b16 %v2818
    %v2853 = vunpack.c.l.b16 %v2819
    %v2854 = vpack.c.b16 %v2839, %v2838
    %v2855 = vpack.c.b16 %v2841, %v2840
    %v2856 = vpack.c.b16 %v2843, %v2842
    %v2857 = vpack.c.b16 %v2845, %v2844
    %v2858 = vpack.c.b16 %v2847, %v2846
    %v2859 = vpack.c.b16 %v2849, %v2848
    %v2860 = vpack.c.b16 %v2851, %v2850
    %v2861 = vpack.c.b16 %v2853, %v2852
    %2870 = vmatprep.subr.bf16.mxu0 0
    %2871 = vmatpush1.bf16.msra.mxu0 %v2854
    %2872 = vmatprep.subr.bf16.mxu0 0
    %2873 = vmatpush1.bf16.msra.mxu0 %v2855
    %2874 = vmatprep.subr.bf16.mxu0 0
    %2875 = vmatpush1.bf16.msra.mxu0 %v2856
    %2876 = vmatprep.subr.bf16.mxu0 0
    %2877 = vmatpush1.bf16.msra.mxu0 %v2857
    %2878 = vmatprep.subr.bf16.mxu0 0
    %2879 = vmatpush1.bf16.msra.mxu0 %v2858
    %2880 = vmatprep.subr.bf16.mxu0 0
    %2881 = vmatpush1.bf16.msra.mxu0 %v2859
    %2882 = vmatprep.subr.bf16.mxu0 0
    %2883 = vmatpush1.bf16.msra.mxu0 %v2860
    %2884 = vmatprep.subr.bf16.mxu0 0
    %2885 = vmatpush1.bf16.msra.mxu0 %v2861
    %2886 = vmatprep.subr.bf16.mxu0 0
    %2887 = vmatpush1.bf16.msra.mxu0 0
    %2888 = vmatprep.subr.bf16.mxu0 0
    %2889 = vmatpush1.bf16.msra.mxu0 0
    %2890 = vmatprep.subr.bf16.mxu0 0
    %2891 = vmatpush1.bf16.msra.mxu0 0
    %2892 = vmatprep.subr.bf16.mxu0 0
    %2893 = vmatpush1.bf16.msra.mxu0 0
    %2894 = vmatprep.subr.bf16.mxu0 0
    %2895 = vmatpush1.bf16.msra.mxu0 0
    %2896 = vmatprep.subr.bf16.mxu0 0
    %2897 = vmatpush1.bf16.msra.mxu0 0
    %2898 = vmatprep.subr.bf16.mxu0 0
    %2899 = vmatpush1.bf16.msra.mxu0 0
    %2900 = vmatprep.subr.bf16.mxu0 0
    %2901 = vmatpush1.bf16.msra.mxu0 0
    %2902 = vmatprep.mubr.bf16.mxu0 0
    %2903 = vmatmul.mubr.bf16.gmra.mrb[0].mxu0 %v2820
    %v2904 = vpop.f32.mrb[0].mxu0
    %v2905 = vadd.f32 0.0, %v2904
    %v2906 = vpop.f32.mrb[0].mxu0
    %v2907 = vpop.f32.mrb[0].mxu0
    %v2908 = vpop.f32.mrb[0].mxu0
    %2909 = vdwg.mxu0
    %v2910 = vadd.f32 %v2803, %v2905
    %v2911 = vmul.f32 %v2910, 0.5
    %v2912 = vmul.f32 %v2910, %v2910
    %v2913 = vmul.f32 %v2912, %v2910
    %v2914 = vmul.f32 %v2913, 0.044715
    %v2915 = vadd.f32 %v2910, %v2914
    %v2916 = vmul.f32 %v2915, 0.7978846
    %v2917 = vtanh.pop %v2916
    %v2918 = vadd.f32 %v2917, 1.0
    %v2919 = vmul.f32 %v2911, %v2918
    %v2920 = vpack.c.bf16 %v2919, %v2919
    %v2921 = vld [vmem:[%s6] sm:$0xf]
    %v2922 = vld [vmem:[%s6 + $0x4] sm:$0xf]
    %v2923 = vld [vmem:[%s6 + $0x8] sm:$0xf]
    %v2924 = vld [vmem:[%s6 + $0xc] sm:$0xf]
    %v2925 = vld [vmem:[%s6 + $0x10] sm:$0xf]
    %v2926 = vld [vmem:[%s6 + $0x14] sm:$0xf]
    %v2927 = vld [vmem:[%s6 + $0x18] sm:$0xf]
    %v2928 = vld [vmem:[%s6 + $0x1c] sm:$0xf]
    %v2929 = vld [vmem:[%s6 + $0x20] sm:$0xf]
    %v2930 = vld [vmem:[%s6 + $0x24] sm:$0xf]
    %v2931 = vld [vmem:[%s6 + $0x28] sm:$0xf]
    %v2932 = vld [vmem:[%s6 + $0x2c] sm:$0xf]
    %v2933 = vld [vmem:[%s6 + $0x30] sm:$0xf]
    %v2934 = vld [vmem:[%s6 + $0x34] sm:$0xf]
    %v2935 = vld [vmem:[%s6 + $0x38] sm:$0xf]
    %v2936 = vld [vmem:[%s6 + $0x3c] sm:$0xf]
    %v2937 = vld [vmem:[%s8] sm:$0x1]
    %v2954 = vunpack.c.l.b16 %v2921
    %v2955 = vunpack.c.l.b16 %v2922
    %v2956 = vunpack.c.l.b16 %v2923
    %v2957 = vunpack.c.l.b16 %v2924
    %v2958 = vunpack.c.l.b16 %v2925
    %v2959 = vunpack.c.l.b16 %v2926
    %v2960 = vunpack.c.l.b16 %v2927
    %v2961 = vunpack.c.l.b16 %v2928
    %v2962 = vunpack.c.l.b16 %v2929
    %v2963 = vunpack.c.l.b16 %v2930
    %v2964 = vunpack.c.l.b16 %v2931
    %v2965 = vunpack.c.l.b16 %v2932
    %v2966 = vunpack.c.l.b16 %v2933
    %v2967 = vunpack.c.l.b16 %v2934
    %v2968 = vunpack.c.l.b16 %v2935
    %v2969 = vunpack.c.l.b16 %v2936
    %v2970 = vpack.c.b16 %v2955, %v2954
    %v2971 = vpack.c.b16 %v2957, %v2956
    %v2972 = vpack.c.b16 %v2959, %v2958
    %v2973 = vpack.c.b16 %v2961, %v2960
    %v2974 = vpack.c.b16 %v2963, %v2962
    %v2975 = vpack.c.b16 %v2965, %v2964
    %v2976 = vpack.c.b16 %v2967, %v2966
    %v2977 = vpack.c.b16 %v2969, %v2968
    %2986 = vmatprep.subr.bf16.mxu0 0
    %2987 = vmatpush1.bf16.msra.mxu0 %v2970
    %2988 = vmatprep.subr.bf16.mxu0 0
    %2989 = vmatpush1.bf16.msra.mxu0 %v2971
    %2990 = vmatprep.subr.bf16.mxu0 0
    %2991 = vmatpush1.bf16.msra.mxu0 %v2972
    %2992 = vmatprep.subr.bf16.mxu0 0
    %2993 = vmatpush1.bf16.msra.mxu0 %v2973
    %2994 = vmatprep.subr.bf16.mxu0 0
    %2995 = vmatpush1.bf16.msra.mxu0 %v2974
    %2996 = vmatprep.subr.bf16.mxu0 0
    %2997 = vmatpush1.bf16.msra.mxu0 %v2975
    %2998 = vmatprep.subr.bf16.mxu0 0
    %2999 = vmatpush1.bf16.msra.mxu0 %v2976
    %3000 = vmatprep.subr.bf16.mxu0 0
    %3001 = vmatpush1.bf16.msra.mxu0 %v2977
    %3002 = vmatprep.subr.bf16.mxu0 0
    %3003 = vmatpush1.bf16.msra.mxu0 0
    %3004 = vmatprep.subr.bf16.mxu0 0
    %3005 = vmatpush1.bf16.msra.mxu0 0
    %3006 = vmatprep.subr.bf16.mxu0 0
    %3007 = vmatpush1.bf16.msra.mxu0 0
    %3008 = vmatprep.subr.bf16.mxu0 0
    %3009 = vmatpush1.bf16.msra.mxu0 0
    %3010 = vmatprep.subr.bf16.mxu0 0
    %3011 = vmatpush1.bf16.msra.mxu0 0
    %3012 = vmatprep.subr.bf16.mxu0 0
    %3013 = vmatpush1.bf16.msra.mxu0 0
    %3014 = vmatprep.subr.bf16.mxu0 0
    %3015 = vmatpush1.bf16.msra.mxu0 0
    %3016 = vmatprep.subr.bf16.mxu0 0
    %3017 = vmatpush1.bf16.msra.mxu0 0
    %3018 = vmatprep.mubr.bf16.mxu0 0
    %3019 = vmatmul.mubr.bf16.gmra.mrb[0].mxu0 %v2920
    %v3020 = vpop.f32.mrb[0].mxu0
    %v3021 = vadd.f32 %v2937, %v3020
    %v3022 = vpop.f32.mrb[0].mxu0
    %v3023 = vpop.f32.mrb[0].mxu0
    %v3024 = vpop.f32.mrb[0].mxu0
    %3025 = vdwg.mxu0
    %3026 = vst [vmem:[#allocation2 + $0xa] sm:$0x1] %v3021
    %v3027 = vld [vmem:[#allocation2 + $0x7] sm:$0xf]
    %v3028 = vpack.c.bf16 %v3027, %v3027
    %v3029 = vld [vmem:[%s11] sm:$0x1]
    %v3030 = vld [vmem:[%s9] sm:$0xf]
    %v3031 = vld [vmem:[%s9 + $0x4] sm:$0xf]
    %v3032 = vld [vmem:[%s9 + $0x8] sm:$0xf]
    %v3033 = vld [vmem:[%s9 + $0xc] sm:$0xf]
    %v3034 = vld [vmem:[%s9 + $0x10] sm:$0xf]
    %v3035 = vld [vmem:[%s9 + $0x14] sm:$0xf]
    %v3036 = vld [vmem:[%s9 + $0x18] sm:$0xf]
    %v3037 = vld [vmem:[%s9 + $0x1c] sm:$0xf]
    %v3038 = vld [vmem:[%s9 + $0x20] sm:$0xf]
    %v3039 = vld [vmem:[%s9 + $0x24] sm:$0xf]
    %v3040 = vld [vmem:[%s9 + $0x28] sm:$0xf]
    %v3041 = vld [vmem:[%s9 + $0x2c] sm:$0xf]
    %v3042 = vld [vmem:[%s9 + $0x30] sm:$0xf]
    %v3043 = vld [vmem:[%s9 + $0x34] sm:$0xf]
    %v3044 = vld [vmem:[%s9 + $0x38] sm:$0xf]
    %v3045 = vld [vmem:[%s9 + $0x3c] sm:$0xf]
    %v3062 = vunpack.c.l.b16 %v3030
    %v3063 = vunpack.c.l.b16 %v3031
    %v3064 = vunpack.c.l.b16 %v3032
    %v3065 = vunpack.c.l.b16 %v3033
    %v3066 = vunpack.c.l.b16 %v3034
    %v3067 = vunpack.c.l.b16 %v3035
    %v3068 = vunpack.c.l.b16 %v3036
    %v3069 = vunpack.c.l.b16 %v3037
    %v3070 = vunpack.c.l.b16 %v3038
    %v3071 = vunpack.c.l.b16 %v3039
    %v3072 = vunpack.c.l.b16 %v3040
    %v3073 = vunpack.c.l.b16 %v3041
    %v3074 = vunpack.c.l.b16 %v3042
    %v3075 = vunpack.c.l.b16 %v3043
    %v3076 = vunpack.c.l.b16 %v3044
    %v3077 = vunpack.c.l.b16 %v3045
    %v3078 = vpack.c.b16 %v3063, %v3062
    %v3079 = vpack.c.b16 %v3065, %v3064
    %v3080 = vpack.c.b16 %v3067, %v3066
    %v3081 = vpack.c.b16 %v3069, %v3068
    %v3082 = vpack.c.b16 %v3071, %v3070
    %v3083 = vpack.c.b16 %v3073, %v3072
    %v3084 = vpack.c.b16 %v3075, %v3074
    %v3085 = vpack.c.b16 %v3077, %v3076
    %3094 = vmatprep.subr.bf16.mxu0 0
    %3095 = vmatpush1.bf16.msra.mxu0 %v3078
    %3096 = vmatprep.subr.bf16.mxu0 0
    %3097 = vmatpush1.bf16.msra.mxu0 %v3079
    %3098 = vmatprep.subr.bf16.mxu0 0
    %3099 = vmatpush1.bf16.msra.mxu0 %v3080
    %3100 = vmatprep.subr.bf16.mxu0 0
    %3101 = vmatpush1.bf16.msra.mxu0 %v3081
    %3102 = vmatprep.subr.bf16.mxu0 0
    %3103 = vmatpush1.bf16.msra.mxu0 %v3082
    %3104 = vmatprep.subr.bf16.mxu0 0
    %3105 = vmatpush1.bf16.msra.mxu0 %v3083
    %3106 = vmatprep.subr.bf16.mxu0 0
    %3107 = vmatpush1.bf16.msra.mxu0 %v3084
    %3108 = vmatprep.subr.bf16.mxu0 0
    %3109 = vmatpush1.bf16.msra.mxu0 %v3085
    %3110 = vmatprep.subr.bf16.mxu0 0
    %3111 = vmatpush1.bf16.msra.mxu0 0
    %3112 = vmatprep.subr.bf16.mxu0 0
    %3113 = vmatpush1.bf16.msra.mxu0 0
    %3114 = vmatprep.subr.bf16.mxu0 0
    %3115 = vmatpush1.bf16.msra.mxu0 0
    %3116 = vmatprep.subr.bf16.mxu0 0
    %3117 = vmatpush1.bf16.msra.mxu0 0
    %3118 = vmatprep.subr.bf16.mxu0 0
    %3119 = vmatpush1.bf16.msra.mxu0 0
    %3120 = vmatprep.subr.bf16.mxu0 0
    %3121 = vmatpush1.bf16.msra.mxu0 0
    %3122 = vmatprep.subr.bf16.mxu0 0
    %3123 = vmatpush1.bf16.msra.mxu0 0
    %3124 = vmatprep.subr.bf16.mxu0 0
    %3125 = vmatpush1.bf16.msra.mxu0 0
    %3126 = vmatprep.mubr.bf16.mxu0 0
    %3127 = vmatmul.mubr.bf16.gmra.mrb[0].mxu0 %v3028
    %v3128 = vpop.f32.mrb[0].mxu0
    %v3129 = vadd.f32 0.0, %v3128
    %v3130 = vpop.f32.mrb[0].mxu0
    %v3131 = vpop.f32.mrb[0].mxu0
    %v3132 = vpop.f32.mrb[0].mxu0
    %3133 = vdwg.mxu0
    %v3134 = vadd.f32 %v3029, %v3129
    %v3135 = vld [vmem:[%s940] sm:$0xf]
    %v3136 = vld [vmem:[%s940 + $0x4] sm:$0xf]
    %v3137 = vld [vmem:[%s940 + $0x8] sm:$0xf]
    %v3138 = vld [vmem:[%s940 + $0xc] sm:$0xf]
    %v3139 = vld [vmem:[%s940 + $0x10] sm:$0xf]
    %v3140 = vld [vmem:[%s940 + $0x14] sm:$0xf]
    %v3141 = vld [vmem:[%s940 + $0x18] sm:$0xf]
    %v3142 = vld [vmem:[%s940 + $0x1c] sm:$0xf]
    %v3143 = vld [vmem:[%s940 + $0x20] sm:$0xf]
    %v3144 = vld [vmem:[%s940 + $0x24] sm:$0xf]
    %v3145 = vld [vmem:[%s940 + $0x28] sm:$0xf]
    %v3146 = vld [vmem:[%s940 + $0x2c] sm:$0xf]
    %v3147 = vld [vmem:[%s940 + $0x30] sm:$0xf]
    %v3148 = vld [vmem:[%s940 + $0x34] sm:$0xf]
    %v3149 = vld [vmem:[%s940 + $0x38] sm:$0xf]
    %v3150 = vld [vmem:[%s940 + $0x3c] sm:$0xf]
    %v3152 = vshrl.u32 %v3028, 16
    %v3171 = vunpack.c.l.b16 %v3135
    %v3172 = vunpack.c.l.b16 %v3136
    %v3173 = vunpack.c.l.b16 %v3137
    %v3174 = vunpack.c.l.b16 %v3138
    %v3175 = vunpack.c.l.b16 %v3139
    %v3176 = vunpack.c.l.b16 %v3140
    %v3177 = vunpack.c.l.b16 %v3141
    %v3178 = vunpack.c.l.b16 %v3142
    %v3179 = vunpack.c.l.b16 %v3143
    %v3180 = vunpack.c.l.b16 %v3144
    %v3181 = vunpack.c.l.b16 %v3145
    %v3182 = vunpack.c.l.b16 %v3146
    %v3183 = vunpack.c.l.b16 %v3147
    %v3184 = vunpack.c.l.b16 %v3148
    %v3185 = vunpack.c.l.b16 %v3149
    %v3186 = vunpack.c.l.b16 %v3150
    %v3187 = vpack.c.b16 %v3172, %v3171
    %v3188 = vpack.c.b16 %v3174, %v3173
    %v3189 = vpack.c.b16 %v3176, %v3175
    %v3190 = vpack.c.b16 %v3178, %v3177
    %v3191 = vpack.c.b16 %v3180, %v3179
    %v3192 = vpack.c.b16 %v3182, %v3181
    %v3193 = vpack.c.b16 %v3184, %v3183
    %v3194 = vpack.c.b16 %v3186, %v3185
    %3203 = vmatprep.subr.bf16.mxu0 0
    %3204 = vmatpush1.bf16.msra.mxu0 %v3187
    %3205 = vmatprep.subr.bf16.mxu0 0
    %3206 = vmatpush1.bf16.msra.mxu0 %v3188
    %3207 = vmatprep.subr.bf16.mxu0 0
    %3208 = vmatpush1.bf16.msra.mxu0 %v3189
    %3209 = vmatprep.subr.bf16.mxu0 0
    %3210 = vmatpush1.bf16.msra.mxu0 %v3190
    %3211 = vmatprep.subr.bf16.mxu0 0
    %3212 = vmatpush1.bf16.msra.mxu0 %v3191
    %3213 = vmatprep.subr.bf16.mxu0 0
    %3214 = vmatpush1.bf16.msra.mxu0 %v3192
    %3215 = vmatprep.subr.bf16.mxu0 0
    %3216 = vmatpush1.bf16.msra.mxu0 %v3193
    %3217 = vmatprep.subr.bf16.mxu0 0
    %3218 = vmatpush1.bf16.msra.mxu0 %v3194
    %3219 = vmatprep.subr.bf16.mxu0 0
    %3220 = vmatpush1.bf16.msra.mxu0 0
    %3221 = vmatprep.subr.bf16.mxu0 0
    %3222 = vmatpush1.bf16.msra.mxu0 0
    %3223 = vmatprep.subr.bf16.mxu0 0
    %3224 = vmatpush1.bf16.msra.mxu0 0
    %3225 = vmatprep.subr.bf16.mxu0 0
    %3226 = vmatpush1.bf16.msra.mxu0 0
    %3227 = vmatprep.subr.bf16.mxu0 0
    %3228 = vmatpush1.bf16.msra.mxu0 0
    %3229 = vmatprep.subr.bf16.mxu0 0
    %3230 = vmatpush1.bf16.msra.mxu0 0
    %3231 = vmatprep.subr.bf16.mxu0 0
    %3232 = vmatpush1.bf16.msra.mxu0 0
    %3233 = vmatprep.subr.bf16.mxu0 0
    %3234 = vmatpush1.bf16.msra.mxu0 0
    %3235 = vmatprep.mubr.bf16.mxu0 0
    %3236 = vmatmul.mubr.bf16.gmra.mrb[0].mxu0 %v3152
    %v3237 = vpop.f32.mrb[0].mxu0
    %v3238 = vadd.f32 0.0, %v3237
    %v3239 = vpop.f32.mrb[0].mxu0
    %v3240 = vpop.f32.mrb[0].mxu0
    %v3241 = vpop.f32.mrb[0].mxu0
    %3242 = vdwg.mxu0
    %v3243 = vadd.f32 %v3134, %v3238
    %v3244 = vld [vmem:[%s1050] sm:$0xf]
    %v3245 = vld [vmem:[%s1050 + $0x4] sm:$0xf]
    %v3246 = vld [vmem:[%s1050 + $0x8] sm:$0xf]
    %v3247 = vld [vmem:[%s1050 + $0xc] sm:$0xf]
    %v3248 = vld [vmem:[%s1050 + $0x10] sm:$0xf]
    %v3249 = vld [vmem:[%s1050 + $0x14] sm:$0xf]
    %v3250 = vld [vmem:[%s1050 + $0x18] sm:$0xf]
    %v3251 = vld [vmem:[%s1050 + $0x1c] sm:$0xf]
    %v3252 = vld [vmem:[%s1050 + $0x20] sm:$0xf]
    %v3253 = vld [vmem:[%s1050 + $0x24] sm:$0xf]
    %v3254 = vld [vmem:[%s1050 + $0x28] sm:$0xf]
    %v3255 = vld [vmem:[%s1050 + $0x2c] sm:$0xf]
    %v3256 = vld [vmem:[%s1050 + $0x30] sm:$0xf]
    %v3257 = vld [vmem:[%s1050 + $0x34] sm:$0xf]
    %v3258 = vld [vmem:[%s1050 + $0x38] sm:$0xf]
    %v3259 = vld [vmem:[%s1050 + $0x3c] sm:$0xf]
    %v3261 = vrot.slane %v3028, 1
    %v3279 = vunpack.c.l.b16 %v3244
    %v3280 = vunpack.c.l.b16 %v3245
    %v3281 = vunpack.c.l.b16 %v3246
    %v3282 = vunpack.c.l.b16 %v3247
    %v3283 = vunpack.c.l.b16 %v3248
    %v3284 = vunpack.c.l.b16 %v3249
    %v3285 = vunpack.c.l.b16 %v3250
    %v3286 = vunpack.c.l.b16 %v3251
    %v3287 = vunpack.c.l.b16 %v3252
    %v3288 = vunpack.c.l.b16 %v3253
    %v3289 = vunpack.c.l.b16 %v3254
    %v3290 = vunpack.c.l.b16 %v3255
    %v3291 = vunpack.c.l.b16 %v3256
    %v3292 = vunpack.c.l.b16 %v3257
    %v3293 = vunpack.c.l.b16 %v3258
    %v3294 = vunpack.c.l.b16 %v3259
    %v3295 = vpack.c.b16 %v3280, %v3279
    %v3296 = vpack.c.b16 %v3282, %v3281
    %v3297 = vpack.c.b16 %v3284, %v3283
    %v3298 = vpack.c.b16 %v3286, %v3285
    %v3299 = vpack.c.b16 %v3288, %v3287
    %v3300 = vpack.c.b16 %v3290, %v3289
    %v3301 = vpack.c.b16 %v3292, %v3291
    %v3302 = vpack.c.b16 %v3294, %v3293
    %3311 = vmatprep.subr.bf16.mxu0 0
    %3312 = vmatpush1.bf16.msra.mxu0 %v3295
    %3313 = vmatprep.subr.bf16.mxu0 0
    %3314 = vmatpush1.bf16.msra.mxu0 %v3296
    %3315 = vmatprep.subr.bf16.mxu0 0
    %3316 = vmatpush1.bf16.msra.mxu0 %v3297
    %3317 = vmatprep.subr.bf16.mxu0 0
    %3318 = vmatpush1.bf16.msra.mxu0 %v3298
    %3319 = vmatprep.subr.bf16.mxu0 0
    %3320 = vmatpush1.bf16.msra.mxu0 %v3299
    %3321 = vmatprep.subr.bf16.mxu0 0
    %3322 = vmatpush1.bf16.msra.mxu0 %v3300
    %3323 = vmatprep.subr.bf16.mxu0 0
    %3324 = vmatpush1.bf16.msra.mxu0 %v3301
    %3325 = vmatprep.subr.bf16.mxu0 0
    %3326 = vmatpush1.bf16.msra.mxu0 %v3302
    %3327 = vmatprep.subr.bf16.mxu0 0
    %3328 = vmatpush1.bf16.msra.mxu0 0
    %3329 = vmatprep.subr.bf16.mxu0 0
    %3330 = vmatpush1.bf16.msra.mxu0 0
    %3331 = vmatprep.subr.bf16.mxu0 0
    %3332 = vmatpush1.bf16.msra.mxu0 0
    %3333 = vmatprep.subr.bf16.mxu0 0
    %3334 = vmatpush1.bf16.msra.mxu0 0
    %3335 = vmatprep.subr.bf16.mxu0 0
    %3336 = vmatpush1.bf16.msra.mxu0 0
    %3337 = vmatprep.subr.bf16.mxu0 0
    %3338 = vmatpush1.bf16.msra.mxu0 0
    %3339 = vmatprep.subr.bf16.mxu0 0
    %3340 = vmatpush1.bf16.msra.mxu0 0
    %3341 = vmatprep.subr.bf16.mxu0 0
    %3342 = vmatpush1.bf16.msra.mxu0 0
    %3343 = vmatprep.mubr.bf16.mxu0 0
    %3344 = vmatmul.mubr.bf16.gmra.mrb[0].mxu0 %v3261
    %v3345 = vpop.f32.mrb[0].mxu0
    %v3346 = vadd.f32 0.0, %v3345
    %v3347 = vpop.f32.mrb[0].mxu0
    %v3348 = vpop.f32.mrb[0].mxu0
    %v3349 = vpop.f32.mrb[0].mxu0
    %3350 = vdwg.mxu0
    %v3351 = vadd.f32 %v3243, %v3346
    %v3352 = vld [vmem:[%s1159] sm:$0xf]
    %v3353 = vld [vmem:[%s1159 + $0x4] sm:$0xf]
    %v3354 = vld [vmem:[%s1159 + $0x8] sm:$0xf]
    %v3355 = vld [vmem:[%s1159 + $0xc] sm:$0xf]
    %v3356 = vld [vmem:[%s1159 + $0x10] sm:$0xf]
    %v3357 = vld [vmem:[%s1159 + $0x14] sm:$0xf]
    %v3358 = vld [vmem:[%s1159 + $0x18] sm:$0xf]
    %v3359 = vld [vmem:[%s1159 + $0x1c] sm:$0xf]
    %v3360 = vld [vmem:[%s1159 + $0x20] sm:$0xf]
    %v3361 = vld [vmem:[%s1159 + $0x24] sm:$0xf]
    %v3362 = vld [vmem:[%s1159 + $0x28] sm:$0xf]
    %v3363 = vld [vmem:[%s1159 + $0x2c] sm:$0xf]
    %v3364 = vld [vmem:[%s1159 + $0x30] sm:$0xf]
    %v3365 = vld [vmem:[%s1159 + $0x34] sm:$0xf]
    %v3366 = vld [vmem:[%s1159 + $0x38] sm:$0xf]
    %v3367 = vld [vmem:[%s1159 + $0x3c] sm:$0xf]
    %v3368 = vrot.slane %v3152, 1
    %v3386 = vunpack.c.l.b16 %v3352
    %v3387 = vunpack.c.l.b16 %v3353
    %v3388 = vunpack.c.l.b16 %v3354
    %v3389 = vunpack.c.l.b16 %v3355
    %v3390 = vunpack.c.l.b16 %v3356
    %v3391 = vunpack.c.l.b16 %v3357
    %v3392 = vunpack.c.l.b16 %v3358
    %v3393 = vunpack.c.l.b16 %v3359
    %v3394 = vunpack.c.l.b16 %v3360
    %v3395 = vunpack.c.l.b16 %v3361
    %v3396 = vunpack.c.l.b16 %v3362
    %v3397 = vunpack.c.l.b16 %v3363
    %v3398 = vunpack.c.l.b16 %v3364
    %v3399 = vunpack.c.l.b16 %v3365
    %v3400 = vunpack.c.l.b16 %v3366
    %v3401 = vunpack.c.l.b16 %v3367
    %v3402 = vpack.c.b16 %v3387, %v3386
    %v3403 = vpack.c.b16 %v3389, %v3388
    %v3404 = vpack.c.b16 %v3391, %v3390
    %v3405 = vpack.c.b16 %v3393, %v3392
    %v3406 = vpack.c.b16 %v3395, %v3394
    %v3407 = vpack.c.b16 %v3397, %v3396
    %v3408 = vpack.c.b16 %v3399, %v3398
    %v3409 = vpack.c.b16 %v3401, %v3400
    %3418 = vmatprep.subr.bf16.mxu0 0
    %3419 = vmatpush1.bf16.msra.mxu0 %v3402
    %3420 = vmatprep.subr.bf16.mxu0 0
    %3421 = vmatpush1.bf16.msra.mxu0 %v3403
    %3422 = vmatprep.subr.bf16.mxu0 0
    %3423 = vmatpush1.bf16.msra.mxu0 %v3404
    %3424 = vmatprep.subr.bf16.mxu0 0
    %3425 = vmatpush1.bf16.msra.mxu0 %v3405
    %3426 = vmatprep.subr.bf16.mxu0 0
    %3427 = vmatpush1.bf16.msra.mxu0 %v3406
    %3428 = vmatprep.subr.bf16.mxu0 0
    %3429 = vmatpush1.bf16.msra.mxu0 %v3407
    %3430 = vmatprep.subr.bf16.mxu0 0
    %3431 = vmatpush1.bf16.msra.mxu0 %v3408
    %3432 = vmatprep.subr.bf16.mxu0 0
    %3433 = vmatpush1.bf16.msra.mxu0 %v3409
    %3434 = vmatprep.subr.bf16.mxu0 0
    %3435 = vmatpush1.bf16.msra.mxu0 0
    %3436 = vmatprep.subr.bf16.mxu0 0
    %3437 = vmatpush1.bf16.msra.mxu0 0
    %3438 = vmatprep.subr.bf16.mxu0 0
    %3439 = vmatpush1.bf16.msra.mxu0 0
    %3440 = vmatprep.subr.bf16.mxu0 0
    %3441 = vmatpush1.bf16.msra.mxu0 0
    %3442 = vmatprep.subr.bf16.mxu0 0
    %3443 = vmatpush1.bf16.msra.mxu0 0
    %3444 = vmatprep.subr.bf16.mxu0 0
    %3445 = vmatpush1.bf16.msra.mxu0 0
    %3446 = vmatprep.subr.bf16.mxu0 0
    %3447 = vmatpush1.bf16.msra.mxu0 0
    %3448 = vmatprep.subr.bf16.mxu0 0
    %3449 = vmatpush1.bf16.msra.mxu0 0
    %3450 = vmatprep.mubr.bf16.mxu0 0
    %3451 = vmatmul.mubr.bf16.gmra.mrb[0].mxu0 %v3368
    %v3452 = vpop.f32.mrb[0].mxu0
    %v3453 = vadd.f32 0.0, %v3452
    %v3454 = vpop.f32.mrb[0].mxu0
    %v3455 = vpop.f32.mrb[0].mxu0
    %v3456 = vpop.f32.mrb[0].mxu0
    %3457 = vdwg.mxu0
    %v3458 = vadd.f32 %v3351, %v3453
    %v3459 = vmul.f32 %v3458, 0.5
    %v3460 = vmul.f32 %v3458, %v3458
    %v3461 = vmul.f32 %v3460, %v3458
    %v3462 = vmul.f32 %v3461, 0.044715
    %v3463 = vadd.f32 %v3458, %v3462
    %v3464 = vmul.f32 %v3463, 0.7978846
    %v3465 = vtanh.pop %v3464
    %v3466 = vadd.f32 %v3465, 1.0
    %v3467 = vmul.f32 %v3459, %v3466
    %v3468 = vpack.c.bf16 %v3467, %v3467
    %v3469 = vld [vmem:[%s10] sm:$0xf]
    %v3470 = vld [vmem:[%s10 + $0x4] sm:$0xf]
    %v3471 = vld [vmem:[%s10 + $0x8] sm:$0xf]
    %v3472 = vld [vmem:[%s10 + $0xc] sm:$0xf]
    %v3473 = vld [vmem:[%s10 + $0x10] sm:$0xf]
    %v3474 = vld [vmem:[%s10 + $0x14] sm:$0xf]
    %v3475 = vld [vmem:[%s10 + $0x18] sm:$0xf]
    %v3476 = vld [vmem:[%s10 + $0x1c] sm:$0xf]
    %v3477 = vld [vmem:[%s10 + $0x20] sm:$0xf]
    %v3478 = vld [vmem:[%s10 + $0x24] sm:$0xf]
    %v3479 = vld [vmem:[%s10 + $0x28] sm:$0xf]
    %v3480 = vld [vmem:[%s10 + $0x2c] sm:$0xf]
    %v3481 = vld [vmem:[%s10 + $0x30] sm:$0xf]
    %v3482 = vld [vmem:[%s10 + $0x34] sm:$0xf]
    %v3483 = vld [vmem:[%s10 + $0x38] sm:$0xf]
    %v3484 = vld [vmem:[%s10 + $0x3c] sm:$0xf]
    %v3485 = vld [vmem:[%s12] sm:$0x1]
    %v3502 = vunpack.c.l.b16 %v3469
    %v3503 = vunpack.c.l.b16 %v3470
    %v3504 = vunpack.c.l.b16 %v3471
    %v3505 = vunpack.c.l.b16 %v3472
    %v3506 = vunpack.c.l.b16 %v3473
    %v3507 = vunpack.c.l.b16 %v3474
    %v3508 = vunpack.c.l.b16 %v3475
    %v3509 = vunpack.c.l.b16 %v3476
    %v3510 = vunpack.c.l.b16 %v3477
    %v3511 = vunpack.c.l.b16 %v3478
    %v3512 = vunpack.c.l.b16 %v3479
    %v3513 = vunpack.c.l.b16 %v3480
    %v3514 = vunpack.c.l.b16 %v3481
    %v3515 = vunpack.c.l.b16 %v3482
    %v3516 = vunpack.c.l.b16 %v3483
    %v3517 = vunpack.c.l.b16 %v3484
    %v3518 = vpack.c.b16 %v3503, %v3502
    %v3519 = vpack.c.b16 %v3505, %v3504
    %v3520 = vpack.c.b16 %v3507, %v3506
    %v3521 = vpack.c.b16 %v3509, %v3508
    %v3522 = vpack.c.b16 %v3511, %v3510
    %v3523 = vpack.c.b16 %v3513, %v3512
    %v3524 = vpack.c.b16 %v3515, %v3514
    %v3525 = vpack.c.b16 %v3517, %v3516
    %3534 = vmatprep.subr.bf16.mxu0 0
    %3535 = vmatpush1.bf16.msra.mxu0 %v3518
    %3536 = vmatprep.subr.bf16.mxu0 0
    %3537 = vmatpush1.bf16.msra.mxu0 %v3519
    %3538 = vmatprep.subr.bf16.mxu0 0
    %3539 = vmatpush1.bf16.msra.mxu0 %v3520
    %3540 = vmatprep.subr.bf16.mxu0 0
    %3541 = vmatpush1.bf16.msra.mxu0 %v3521
    %3542 = vmatprep.subr.bf16.mxu0 0
    %3543 = vmatpush1.bf16.msra.mxu0 %v3522
    %3544 = vmatprep.subr.bf16.mxu0 0
    %3545 = vmatpush1.bf16.msra.mxu0 %v3523
    %3546 = vmatprep.subr.bf16.mxu0 0
    %3547 = vmatpush1.bf16.msra.mxu0 %v3524
    %3548 = vmatprep.subr.bf16.mxu0 0
    %3549 = vmatpush1.bf16.msra.mxu0 %v3525
    %3550 = vmatprep.subr.bf16.mxu0 0
    %3551 = vmatpush1.bf16.msra.mxu0 0
    %3552 = vmatprep.subr.bf16.mxu0 0
    %3553 = vmatpush1.bf16.msra.mxu0 0
    %3554 = vmatprep.subr.bf16.mxu0 0
    %3555 = vmatpush1.bf16.msra.mxu0 0
    %3556 = vmatprep.subr.bf16.mxu0 0
    %3557 = vmatpush1.bf16.msra.mxu0 0
    %3558 = vmatprep.subr.bf16.mxu0 0
    %3559 = vmatpush1.bf16.msra.mxu0 0
    %3560 = vmatprep.subr.bf16.mxu0 0
    %3561 = vmatpush1.bf16.msra.mxu0 0
    %3562 = vmatprep.subr.bf16.mxu0 0
    %3563 = vmatpush1.bf16.msra.mxu0 0
    %3564 = vmatprep.subr.bf16.mxu0 0
    %3565 = vmatpush1.bf16.msra.mxu0 0
    %3566 = vmatprep.mubr.bf16.mxu0 0
    %3567 = vmatmul.mubr.bf16.gmra.mrb[0].mxu0 %v3468
    %v3568 = vpop.f32.mrb[0].mxu0
    %v3569 = vadd.f32 %v3485, %v3568
    %v3570 = vpop.f32.mrb[0].mxu0
    %v3571 = vpop.f32.mrb[0].mxu0
    %v3572 = vpop.f32.mrb[0].mxu0
    %3573 = vdwg.mxu0
    %3574 = vst [vmem:[#allocation3 + $0x2] sm:$0x1] %v3569
    %v3575 = vld [vmem:[#allocation2 + $0x3] sm:$0xf]
    %v3576 = vpack.c.bf16 %v3575, %v3575
    %v3577 = vld [vmem:[%s7] sm:$0x1]
    %v3578 = vld [vmem:[%s5] sm:$0xf]
    %v3579 = vld [vmem:[%s5 + $0x4] sm:$0xf]
    %v3580 = vld [vmem:[%s5 + $0x8] sm:$0xf]
    %v3581 = vld [vmem:[%s5 + $0xc] sm:$0xf]
    %v3582 = vld [vmem:[%s5 + $0x10] sm:$0xf]
    %v3583 = vld [vmem:[%s5 + $0x14] sm:$0xf]
    %v3584 = vld [vmem:[%s5 + $0x18] sm:$0xf]
    %v3585 = vld [vmem:[%s5 + $0x1c] sm:$0xf]
    %v3586 = vld [vmem:[%s5 + $0x20] sm:$0xf]
    %v3587 = vld [vmem:[%s5 + $0x24] sm:$0xf]
    %v3588 = vld [vmem:[%s5 + $0x28] sm:$0xf]
    %v3589 = vld [vmem:[%s5 + $0x2c] sm:$0xf]
    %v3590 = vld [vmem:[%s5 + $0x30] sm:$0xf]
    %v3591 = vld [vmem:[%s5 + $0x34] sm:$0xf]
    %v3592 = vld [vmem:[%s5 + $0x38] sm:$0xf]
    %v3593 = vld [vmem:[%s5 + $0x3c] sm:$0xf]
    %v3610 = vunpack.c.l.b16 %v3578
    %v3611 = vunpack.c.l.b16 %v3579
    %v3612 = vunpack.c.l.b16 %v3580
    %v3613 = vunpack.c.l.b16 %v3581
    %v3614 = vunpack.c.l.b16 %v3582
    %v3615 = vunpack.c.l.b16 %v3583
    %v3616 = vunpack.c.l.b16 %v3584
    %v3617 = vunpack.c.l.b16 %v3585
    %v3618 = vunpack.c.l.b16 %v3586
    %v3619 = vunpack.c.l.b16 %v3587
    %v3620 = vunpack.c.l.b16 %v3588
    %v3621 = vunpack.c.l.b16 %v3589
    %v3622 = vunpack.c.l.b16 %v3590
    %v3623 = vunpack.c.l.b16 %v3591
    %v3624 = vunpack.c.l.b16 %v3592
    %v3625 = vunpack.c.l.b16 %v3593
    %v3626 = vpack.c.b16 %v3611, %v3610
    %v3627 = vpack.c.b16 %v3613, %v3612
    %v3628 = vpack.c.b16 %v3615, %v3614
    %v3629 = vpack.c.b16 %v3617, %v3616
    %v3630 = vpack.c.b16 %v3619, %v3618
    %v3631 = vpack.c.b16 %v3621, %v3620
    %v3632 = vpack.c.b16 %v3623, %v3622
    %v3633 = vpack.c.b16 %v3625, %v3624
    %3642 = vmatprep.subr.bf16.mxu0 0
    %3643 = vmatpush1.bf16.msra.mxu0 %v3626
    %3644 = vmatprep.subr.bf16.mxu0 0
    %3645 = vmatpush1.bf16.msra.mxu0 %v3627
    %3646 = vmatprep.subr.bf16.mxu0 0
    %3647 = vmatpush1.bf16.msra.mxu0 %v3628
    %3648 = vmatprep.subr.bf16.mxu0 0
    %3649 = vmatpush1.bf16.msra.mxu0 %v3629
    %3650 = vmatprep.subr.bf16.mxu0 0
    %3651 = vmatpush1.bf16.msra.mxu0 %v3630
    %3652 = vmatprep.subr.bf16.mxu0 0
    %3653 = vmatpush1.bf16.msra.mxu0 %v3631
    %3654 = vmatprep.subr.bf16.mxu0 0
    %3655 = vmatpush1.bf16.msra.mxu0 %v3632
    %3656 = vmatprep.subr.bf16.mxu0 0
    %3657 = vmatpush1.bf16.msra.mxu0 %v3633
    %3658 = vmatprep.subr.bf16.mxu0 0
    %3659 = vmatpush1.bf16.msra.mxu0 0
    %3660 = vmatprep.subr.bf16.mxu0 0
    %3661 = vmatpush1.bf16.msra.mxu0 0
    %3662 = vmatprep.subr.bf16.mxu0 0
    %3663 = vmatpush1.bf16.msra.mxu0 0
    %3664 = vmatprep.subr.bf16.mxu0 0
    %3665 = vmatpush1.bf16.msra.mxu0 0
    %3666 = vmatprep.subr.bf16.mxu0 0
    %3667 = vmatpush1.bf16.msra.mxu0 0
    %3668 = vmatprep.subr.bf16.mxu0 0
    %3669 = vmatpush1.bf16.msra.mxu0 0
    %3670 = vmatprep.subr.bf16.mxu0 0
    %3671 = vmatpush1.bf16.msra.mxu0 0
    %3672 = vmatprep.subr.bf16.mxu0 0
    %3673 = vmatpush1.bf16.msra.mxu0 0
    %3674 = vmatprep.mubr.bf16.mxu0 0
    %3675 = vmatmul.mubr.bf16.gmra.mrb[0].mxu0 %v3576
    %v3676 = vpop.f32.mrb[0].mxu0
    %v3677 = vadd.f32 0.0, %v3676
    %v3678 = vpop.f32.mrb[0].mxu0
    %v3679 = vpop.f32.mrb[0].mxu0
    %v3680 = vpop.f32.mrb[0].mxu0
    %3681 = vdwg.mxu0
    %v3682 = vadd.f32 %v3577, %v3677
    %v3683 = vld [vmem:[%s389] sm:$0xf]
    %v3684 = vld [vmem:[%s389 + $0x4] sm:$0xf]
    %v3685 = vld [vmem:[%s389 + $0x8] sm:$0xf]
    %v3686 = vld [vmem:[%s389 + $0xc] sm:$0xf]
    %v3687 = vld [vmem:[%s389 + $0x10] sm:$0xf]
    %v3688 = vld [vmem:[%s389 + $0x14] sm:$0xf]
    %v3689 = vld [vmem:[%s389 + $0x18] sm:$0xf]
    %v3690 = vld [vmem:[%s389 + $0x1c] sm:$0xf]
    %v3691 = vld [vmem:[%s389 + $0x20] sm:$0xf]
    %v3692 = vld [vmem:[%s389 + $0x24] sm:$0xf]
    %v3693 = vld [vmem:[%s389 + $0x28] sm:$0xf]
    %v3694 = vld [vmem:[%s389 + $0x2c] sm:$0xf]
    %v3695 = vld [vmem:[%s389 + $0x30] sm:$0xf]
    %v3696 = vld [vmem:[%s389 + $0x34] sm:$0xf]
    %v3697 = vld [vmem:[%s389 + $0x38] sm:$0xf]
    %v3698 = vld [vmem:[%s389 + $0x3c] sm:$0xf]
    %v3700 = vshrl.u32 %v3576, 16
    %v3719 = vunpack.c.l.b16 %v3683
    %v3720 = vunpack.c.l.b16 %v3684
    %v3721 = vunpack.c.l.b16 %v3685
    %v3722 = vunpack.c.l.b16 %v3686
    %v3723 = vunpack.c.l.b16 %v3687
    %v3724 = vunpack.c.l.b16 %v3688
    %v3725 = vunpack.c.l.b16 %v3689
    %v3726 = vunpack.c.l.b16 %v3690
    %v3727 = vunpack.c.l.b16 %v3691
    %v3728 = vunpack.c.l.b16 %v3692
    %v3729 = vunpack.c.l.b16 %v3693
    %v3730 = vunpack.c.l.b16 %v3694
    %v3731 = vunpack.c.l.b16 %v3695
    %v3732 = vunpack.c.l.b16 %v3696
    %v3733 = vunpack.c.l.b16 %v3697
    %v3734 = vunpack.c.l.b16 %v3698
    %v3735 = vpack.c.b16 %v3720, %v3719
    %v3736 = vpack.c.b16 %v3722, %v3721
    %v3737 = vpack.c.b16 %v3724, %v3723
    %v3738 = vpack.c.b16 %v3726, %v3725
    %v3739 = vpack.c.b16 %v3728, %v3727
    %v3740 = vpack.c.b16 %v3730, %v3729
    %v3741 = vpack.c.b16 %v3732, %v3731
    %v3742 = vpack.c.b16 %v3734, %v3733
    %3751 = vmatprep.subr.bf16.mxu0 0
    %3752 = vmatpush1.bf16.msra.mxu0 %v3735
    %3753 = vmatprep.subr.bf16.mxu0 0
    %3754 = vmatpush1.bf16.msra.mxu0 %v3736
    %3755 = vmatprep.subr.bf16.mxu0 0
    %3756 = vmatpush1.bf16.msra.mxu0 %v3737
    %3757 = vmatprep.subr.bf16.mxu0 0
    %3758 = vmatpush1.bf16.msra.mxu0 %v3738
    %3759 = vmatprep.subr.bf16.mxu0 0
    %3760 = vmatpush1.bf16.msra.mxu0 %v3739
    %3761 = vmatprep.subr.bf16.mxu0 0
    %3762 = vmatpush1.bf16.msra.mxu0 %v3740
    %3763 = vmatprep.subr.bf16.mxu0 0
    %3764 = vmatpush1.bf16.msra.mxu0 %v3741
    %3765 = vmatprep.subr.bf16.mxu0 0
    %3766 = vmatpush1.bf16.msra.mxu0 %v3742
    %3767 = vmatprep.subr.bf16.mxu0 0
    %3768 = vmatpush1.bf16.msra.mxu0 0
    %3769 = vmatprep.subr.bf16.mxu0 0
    %3770 = vmatpush1.bf16.msra.mxu0 0
    %3771 = vmatprep.subr.bf16.mxu0 0
    %3772 = vmatpush1.bf16.msra.mxu0 0
    %3773 = vmatprep.subr.bf16.mxu0 0
    %3774 = vmatpush1.bf16.msra.mxu0 0
    %3775 = vmatprep.subr.bf16.mxu0 0
    %3776 = vmatpush1.bf16.msra.mxu0 0
    %3777 = vmatprep.subr.bf16.mxu0 0
    %3778 = vmatpush1.bf16.msra.mxu0 0
    %3779 = vmatprep.subr.bf16.mxu0 0
    %3780 = vmatpush1.bf16.msra.mxu0 0
    %3781 = vmatprep.subr.bf16.mxu0 0
    %3782 = vmatpush1.bf16.msra.mxu0 0
    %3783 = vmatprep.mubr.bf16.mxu0 0
    %3784 = vmatmul.mubr.bf16.gmra.mrb[0].mxu0 %v3700
    %v3785 = vpop.f32.mrb[0].mxu0
    %v3786 = vadd.f32 0.0, %v3785
    %v3787 = vpop.f32.mrb[0].mxu0
    %v3788 = vpop.f32.mrb[0].mxu0
    %v3789 = vpop.f32.mrb[0].mxu0
    %3790 = vdwg.mxu0
    %v3791 = vadd.f32 %v3682, %v3786
    %v3792 = vld [vmem:[%s499] sm:$0xf]
    %v3793 = vld [vmem:[%s499 + $0x4] sm:$0xf]
    %v3794 = vld [vmem:[%s499 + $0x8] sm:$0xf]
    %v3795 = vld [vmem:[%s499 + $0xc] sm:$0xf]
    %v3796 = vld [vmem:[%s499 + $0x10] sm:$0xf]
    %v3797 = vld [vmem:[%s499 + $0x14] sm:$0xf]
    %v3798 = vld [vmem:[%s499 + $0x18] sm:$0xf]
    %v3799 = vld [vmem:[%s499 + $0x1c] sm:$0xf]
    %v3800 = vld [vmem:[%s499 + $0x20] sm:$0xf]
    %v3801 = vld [vmem:[%s499 + $0x24] sm:$0xf]
    %v3802 = vld [vmem:[%s499 + $0x28] sm:$0xf]
    %v3803 = vld [vmem:[%s499 + $0x2c] sm:$0xf]
    %v3804 = vld [vmem:[%s499 + $0x30] sm:$0xf]
    %v3805 = vld [vmem:[%s499 + $0x34] sm:$0xf]
    %v3806 = vld [vmem:[%s499 + $0x38] sm:$0xf]
    %v3807 = vld [vmem:[%s499 + $0x3c] sm:$0xf]
    %v3809 = vrot.slane %v3576, 1
    %v3827 = vunpack.c.l.b16 %v3792
    %v3828 = vunpack.c.l.b16 %v3793
    %v3829 = vunpack.c.l.b16 %v3794
    %v3830 = vunpack.c.l.b16 %v3795
    %v3831 = vunpack.c.l.b16 %v3796
    %v3832 = vunpack.c.l.b16 %v3797
    %v3833 = vunpack.c.l.b16 %v3798
    %v3834 = vunpack.c.l.b16 %v3799
    %v3835 = vunpack.c.l.b16 %v3800
    %v3836 = vunpack.c.l.b16 %v3801
    %v3837 = vunpack.c.l.b16 %v3802
    %v3838 = vunpack.c.l.b16 %v3803
    %v3839 = vunpack.c.l.b16 %v3804
    %v3840 = vunpack.c.l.b16 %v3805
    %v3841 = vunpack.c.l.b16 %v3806
    %v3842 = vunpack.c.l.b16 %v3807
    %v3843 = vpack.c.b16 %v3828, %v3827
    %v3844 = vpack.c.b16 %v3830, %v3829
    %v3845 = vpack.c.b16 %v3832, %v3831
    %v3846 = vpack.c.b16 %v3834, %v3833
    %v3847 = vpack.c.b16 %v3836, %v3835
    %v3848 = vpack.c.b16 %v3838, %v3837
    %v3849 = vpack.c.b16 %v3840, %v3839
    %v3850 = vpack.c.b16 %v3842, %v3841
    %3859 = vmatprep.subr.bf16.mxu0 0
    %3860 = vmatpush1.bf16.msra.mxu0 %v3843
    %3861 = vmatprep.subr.bf16.mxu0 0
    %3862 = vmatpush1.bf16.msra.mxu0 %v3844
    %3863 = vmatprep.subr.bf16.mxu0 0
    %3864 = vmatpush1.bf16.msra.mxu0 %v3845
    %3865 = vmatprep.subr.bf16.mxu0 0
    %3866 = vmatpush1.bf16.msra.mxu0 %v3846
    %3867 = vmatprep.subr.bf16.mxu0 0
    %3868 = vmatpush1.bf16.msra.mxu0 %v3847
    %3869 = vmatprep.subr.bf16.mxu0 0
    %3870 = vmatpush1.bf16.msra.mxu0 %v3848
    %3871 = vmatprep.subr.bf16.mxu0 0
    %3872 = vmatpush1.bf16.msra.mxu0 %v3849
    %3873 = vmatprep.subr.bf16.mxu0 0
    %3874 = vmatpush1.bf16.msra.mxu0 %v3850
    %3875 = vmatprep.subr.bf16.mxu0 0
    %3876 = vmatpush1.bf16.msra.mxu0 0
    %3877 = vmatprep.subr.bf16.mxu0 0
    %3878 = vmatpush1.bf16.msra.mxu0 0
    %3879 = vmatprep.subr.bf16.mxu0 0
    %3880 = vmatpush1.bf16.msra.mxu0 0
    %3881 = vmatprep.subr.bf16.mxu0 0
    %3882 = vmatpush1.bf16.msra.mxu0 0
    %3883 = vmatprep.subr.bf16.mxu0 0
    %3884 = vmatpush1.bf16.msra.mxu0 0
    %3885 = vmatprep.subr.bf16.mxu0 0
    %3886 = vmatpush1.bf16.msra.mxu0 0
    %3887 = vmatprep.subr.bf16.mxu0 0
    %3888 = vmatpush1.bf16.msra.mxu0 0
    %3889 = vmatprep.subr.bf16.mxu0 0
    %3890 = vmatpush1.bf16.msra.mxu0 0
    %3891 = vmatprep.mubr.bf16.mxu0 0
    %3892 = vmatmul.mubr.bf16.gmra.mrb[0].mxu0 %v3809
    %v3893 = vpop.f32.mrb[0].mxu0
    %v3894 = vadd.f32 0.0, %v3893
    %v3895 = vpop.f32.mrb[0].mxu0
    %v3896 = vpop.f32.mrb[0].mxu0
    %v3897 = vpop.f32.mrb[0].mxu0
    %3898 = vdwg.mxu0
    %v3899 = vadd.f32 %v3791, %v3894
    %v3900 = vld [vmem:[%s608] sm:$0xf]
    %v3901 = vld [vmem:[%s608 + $0x4] sm:$0xf]
    %v3902 = vld [vmem:[%s608 + $0x8] sm:$0xf]
    %v3903 = vld [vmem:[%s608 + $0xc] sm:$0xf]
    %v3904 = vld [vmem:[%s608 + $0x10] sm:$0xf]
    %v3905 = vld [vmem:[%s608 + $0x14] sm:$0xf]
    %v3906 = vld [vmem:[%s608 + $0x18] sm:$0xf]
    %v3907 = vld [vmem:[%s608 + $0x1c] sm:$0xf]
    %v3908 = vld [vmem:[%s608 + $0x20] sm:$0xf]
    %v3909 = vld [vmem:[%s608 + $0x24] sm:$0xf]
    %v3910 = vld [vmem:[%s608 + $0x28] sm:$0xf]
    %v3911 = vld [vmem:[%s608 + $0x2c] sm:$0xf]
    %v3912 = vld [vmem:[%s608 + $0x30] sm:$0xf]
    %v3913 = vld [vmem:[%s608 + $0x34] sm:$0xf]
    %v3914 = vld [vmem:[%s608 + $0x38] sm:$0xf]
    %v3915 = vld [vmem:[%s608 + $0x3c] sm:$0xf]
    %v3916 = vrot.slane %v3700, 1
    %v3934 = vunpack.c.l.b16 %v3900
    %v3935 = vunpack.c.l.b16 %v3901
    %v3936 = vunpack.c.l.b16 %v3902
    %v3937 = vunpack.c.l.b16 %v3903
    %v3938 = vunpack.c.l.b16 %v3904
    %v3939 = vunpack.c.l.b16 %v3905
    %v3940 = vunpack.c.l.b16 %v3906
    %v3941 = vunpack.c.l.b16 %v3907
    %v3942 = vunpack.c.l.b16 %v3908
    %v3943 = vunpack.c.l.b16 %v3909
    %v3944 = vunpack.c.l.b16 %v3910
    %v3945 = vunpack.c.l.b16 %v3911
    %v3946 = vunpack.c.l.b16 %v3912
    %v3947 = vunpack.c.l.b16 %v3913
    %v3948 = vunpack.c.l.b16 %v3914
    %v3949 = vunpack.c.l.b16 %v3915
    %v3950 = vpack.c.b16 %v3935, %v3934
    %v3951 = vpack.c.b16 %v3937, %v3936
    %v3952 = vpack.c.b16 %v3939, %v3938
    %v3953 = vpack.c.b16 %v3941, %v3940
    %v3954 = vpack.c.b16 %v3943, %v3942
    %v3955 = vpack.c.b16 %v3945, %v3944
    %v3956 = vpack.c.b16 %v3947, %v3946
    %v3957 = vpack.c.b16 %v3949, %v3948
    %3966 = vmatprep.subr.bf16.mxu0 0
    %3967 = vmatpush1.bf16.msra.mxu0 %v3950
    %3968 = vmatprep.subr.bf16.mxu0 0
    %3969 = vmatpush1.bf16.msra.mxu0 %v3951
    %3970 = vmatprep.subr.bf16.mxu0 0
    %3971 = vmatpush1.bf16.msra.mxu0 %v3952
    %3972 = vmatprep.subr.bf16.mxu0 0
    %3973 = vmatpush1.bf16.msra.mxu0 %v3953
    %3974 = vmatprep.subr.bf16.mxu0 0
    %3975 = vmatpush1.bf16.msra.mxu0 %v3954
    %3976 = vmatprep.subr.bf16.mxu0 0
    %3977 = vmatpush1.bf16.msra.mxu0 %v3955
    %3978 = vmatprep.subr.bf16.mxu0 0
    %3979 = vmatpush1.bf16.msra.mxu0 %v3956
    %3980 = vmatprep.subr.bf16.mxu0 0
    %3981 = vmatpush1.bf16.msra.mxu0 %v3957
    %3982 = vmatprep.subr.bf16.mxu0 0
    %3983 = vmatpush1.bf16.msra.mxu0 0
    %3984 = vmatprep.subr.bf16.mxu0 0
    %3985 = vmatpush1.bf16.msra.mxu0 0
    %3986 = vmatprep.subr.bf16.mxu0 0
    %3987 = vmatpush1.bf16.msra.mxu0 0
    %3988 = vmatprep.subr.bf16.mxu0 0
    %3989 = vmatpush1.bf16.msra.mxu0 0
    %3990 = vmatprep.subr.bf16.mxu0 0
    %3991 = vmatpush1.bf16.msra.mxu0 0
    %3992 = vmatprep.subr.bf16.mxu0 0
    %3993 = vmatpush1.bf16.msra.mxu0 0
    %3994 = vmatprep.subr.bf16.mxu0 0
    %3995 = vmatpush1.bf16.msra.mxu0 0
    %3996 = vmatprep.subr.bf16.mxu0 0
    %3997 = vmatpush1.bf16.msra.mxu0 0
    %3998 = vmatprep.mubr.bf16.mxu0 0
    %3999 = vmatmul.mubr.bf16.gmra.mrb[0].mxu0 %v3916
    %v4000 = vpop.f32.mrb[0].mxu0
    %v4001 = vadd.f32 0.0, %v4000
    %v4002 = vpop.f32.mrb[0].mxu0
    %v4003 = vpop.f32.mrb[0].mxu0
    %v4004 = vpop.f32.mrb[0].mxu0
    %4005 = vdwg.mxu0
    %v4006 = vadd.f32 %v3899, %v4001
    %v4007 = vmul.f32 %v4006, 0.5
    %v4008 = vmul.f32 %v4006, %v4006
    %v4009 = vmul.f32 %v4008, %v4006
    %v4010 = vmul.f32 %v4009, 0.044715
    %v4011 = vadd.f32 %v4006, %v4010
    %v4012 = vmul.f32 %v4011, 0.7978846
    %v4013 = vtanh.pop %v4012
    %v4014 = vadd.f32 %v4013, 1.0
    %v4015 = vmul.f32 %v4007, %v4014
    %v4016 = vpack.c.bf16 %v4015, %v4015
    %v4017 = vld [vmem:[%s6] sm:$0xf]
    %v4018 = vld [vmem:[%s6 + $0x4] sm:$0xf]
    %v4019 = vld [vmem:[%s6 + $0x8] sm:$0xf]
    %v4020 = vld [vmem:[%s6 + $0xc] sm:$0xf]
    %v4021 = vld [vmem:[%s6 + $0x10] sm:$0xf]
    %v4022 = vld [vmem:[%s6 + $0x14] sm:$0xf]
    %v4023 = vld [vmem:[%s6 + $0x18] sm:$0xf]
    %v4024 = vld [vmem:[%s6 + $0x1c] sm:$0xf]
    %v4025 = vld [vmem:[%s6 + $0x20] sm:$0xf]
    %v4026 = vld [vmem:[%s6 + $0x24] sm:$0xf]
    %v4027 = vld [vmem:[%s6 + $0x28] sm:$0xf]
    %v4028 = vld [vmem:[%s6 + $0x2c] sm:$0xf]
    %v4029 = vld [vmem:[%s6 + $0x30] sm:$0xf]
    %v4030 = vld [vmem:[%s6 + $0x34] sm:$0xf]
    %v4031 = vld [vmem:[%s6 + $0x38] sm:$0xf]
    %v4032 = vld [vmem:[%s6 + $0x3c] sm:$0xf]
    %v4033 = vld [vmem:[%s8] sm:$0x1]
    %v4050 = vunpack.c.l.b16 %v4017
    %v4051 = vunpack.c.l.b16 %v4018
    %v4052 = vunpack.c.l.b16 %v4019
    %v4053 = vunpack.c.l.b16 %v4020
    %v4054 = vunpack.c.l.b16 %v4021
    %v4055 = vunpack.c.l.b16 %v4022
    %v4056 = vunpack.c.l.b16 %v4023
    %v4057 = vunpack.c.l.b16 %v4024
    %v4058 = vunpack.c.l.b16 %v4025
    %v4059 = vunpack.c.l.b16 %v4026
    %v4060 = vunpack.c.l.b16 %v4027
    %v4061 = vunpack.c.l.b16 %v4028
    %v4062 = vunpack.c.l.b16 %v4029
    %v4063 = vunpack.c.l.b16 %v4030
    %v4064 = vunpack.c.l.b16 %v4031
    %v4065 = vunpack.c.l.b16 %v4032
    %v4066 = vpack.c.b16 %v4051, %v4050
    %v4067 = vpack.c.b16 %v4053, %v4052
    %v4068 = vpack.c.b16 %v4055, %v4054
    %v4069 = vpack.c.b16 %v4057, %v4056
    %v4070 = vpack.c.b16 %v4059, %v4058
    %v4071 = vpack.c.b16 %v4061, %v4060
    %v4072 = vpack.c.b16 %v4063, %v4062
    %v4073 = vpack.c.b16 %v4065, %v4064
    %4082 = vmatprep.subr.bf16.mxu0 0
    %4083 = vmatpush1.bf16.msra.mxu0 %v4066
    %4084 = vmatprep.subr.bf16.mxu0 0
    %4085 = vmatpush1.bf16.msra.mxu0 %v4067
    %4086 = vmatprep.subr.bf16.mxu0 0
    %4087 = vmatpush1.bf16.msra.mxu0 %v4068
    %4088 = vmatprep.subr.bf16.mxu0 0
    %4089 = vmatpush1.bf16.msra.mxu0 %v4069
    %4090 = vmatprep.subr.bf16.mxu0 0
    %4091 = vmatpush1.bf16.msra.mxu0 %v4070
    %4092 = vmatprep.subr.bf16.mxu0 0
    %4093 = vmatpush1.bf16.msra.mxu0 %v4071
    %4094 = vmatprep.subr.bf16.mxu0 0
    %4095 = vmatpush1.bf16.msra.mxu0 %v4072
    %4096 = vmatprep.subr.bf16.mxu0 0
    %4097 = vmatpush1.bf16.msra.mxu0 %v4073
    %4098 = vmatprep.subr.bf16.mxu0 0
    %4099 = vmatpush1.bf16.msra.mxu0 0
    %4100 = vmatprep.subr.bf16.mxu0 0
    %4101 = vmatpush1.bf16.msra.mxu0 0
    %4102 = vmatprep.subr.bf16.mxu0 0
    %4103 = vmatpush1.bf16.msra.mxu0 0
    %4104 = vmatprep.subr.bf16.mxu0 0
    %4105 = vmatpush1.bf16.msra.mxu0 0
    %4106 = vmatprep.subr.bf16.mxu0 0
    %4107 = vmatpush1.bf16.msra.mxu0 0
    %4108 = vmatprep.subr.bf16.mxu0 0
    %4109 = vmatpush1.bf16.msra.mxu0 0
    %4110 = vmatprep.subr.bf16.mxu0 0
    %4111 = vmatpush1.bf16.msra.mxu0 0
    %4112 = vmatprep.subr.bf16.mxu0 0
    %4113 = vmatpush1.bf16.msra.mxu0 0
    %4114 = vmatprep.mubr.bf16.mxu0 0
    %4115 = vmatmul.mubr.bf16.gmra.mrb[0].mxu0 %v4016
    %v4116 = vpop.f32.mrb[0].mxu0
    %v4117 = vadd.f32 %v4033, %v4116
    %v4118 = vpop.f32.mrb[0].mxu0
    %v4119 = vpop.f32.mrb[0].mxu0
    %v4120 = vpop.f32.mrb[0].mxu0
    %4121 = vdwg.mxu0
    %4122 = vst [vmem:[#allocation2 + $0xb] sm:$0x1] %v4117
    %v4123 = vld [vmem:[#allocation2 + $0x8] sm:$0xf]
    %v4124 = vpack.c.bf16 %v4123, %v4123
    %v4125 = vld [vmem:[%s11] sm:$0x1]
    %v4126 = vld [vmem:[%s9] sm:$0xf]
    %v4127 = vld [vmem:[%s9 + $0x4] sm:$0xf]
    %v4128 = vld [vmem:[%s9 + $0x8] sm:$0xf]
    %v4129 = vld [vmem:[%s9 + $0xc] sm:$0xf]
    %v4130 = vld [vmem:[%s9 + $0x10] sm:$0xf]
    %v4131 = vld [vmem:[%s9 + $0x14] sm:$0xf]
    %v4132 = vld [vmem:[%s9 + $0x18] sm:$0xf]
    %v4133 = vld [vmem:[%s9 + $0x1c] sm:$0xf]
    %v4134 = vld [vmem:[%s9 + $0x20] sm:$0xf]
    %v4135 = vld [vmem:[%s9 + $0x24] sm:$0xf]
    %v4136 = vld [vmem:[%s9 + $0x28] sm:$0xf]
    %v4137 = vld [vmem:[%s9 + $0x2c] sm:$0xf]
    %v4138 = vld [vmem:[%s9 + $0x30] sm:$0xf]
    %v4139 = vld [vmem:[%s9 + $0x34] sm:$0xf]
    %v4140 = vld [vmem:[%s9 + $0x38] sm:$0xf]
    %v4141 = vld [vmem:[%s9 + $0x3c] sm:$0xf]
    %v4158 = vunpack.c.l.b16 %v4126
    %v4159 = vunpack.c.l.b16 %v4127
    %v4160 = vunpack.c.l.b16 %v4128
    %v4161 = vunpack.c.l.b16 %v4129
    %v4162 = vunpack.c.l.b16 %v4130
    %v4163 = vunpack.c.l.b16 %v4131
    %v4164 = vunpack.c.l.b16 %v4132
    %v4165 = vunpack.c.l.b16 %v4133
    %v4166 = vunpack.c.l.b16 %v4134
    %v4167 = vunpack.c.l.b16 %v4135
    %v4168 = vunpack.c.l.b16 %v4136
    %v4169 = vunpack.c.l.b16 %v4137
    %v4170 = vunpack.c.l.b16 %v4138
    %v4171 = vunpack.c.l.b16 %v4139
    %v4172 = vunpack.c.l.b16 %v4140
    %v4173 = vunpack.c.l.b16 %v4141
    %v4174 = vpack.c.b16 %v4159, %v4158
    %v4175 = vpack.c.b16 %v4161, %v4160
    %v4176 = vpack.c.b16 %v4163, %v4162
    %v4177 = vpack.c.b16 %v4165, %v4164
    %v4178 = vpack.c.b16 %v4167, %v4166
    %v4179 = vpack.c.b16 %v4169, %v4168
    %v4180 = vpack.c.b16 %v4171, %v4170
    %v4181 = vpack.c.b16 %v4173, %v4172
    %4190 = vmatprep.subr.bf16.mxu0 0
    %4191 = vmatpush1.bf16.msra.mxu0 %v4174
    %4192 = vmatprep.subr.bf16.mxu0 0
    %4193 = vmatpush1.bf16.msra.mxu0 %v4175
    %4194 = vmatprep.subr.bf16.mxu0 0
    %4195 = vmatpush1.bf16.msra.mxu0 %v4176
    %4196 = vmatprep.subr.bf16.mxu0 0
    %4197 = vmatpush1.bf16.msra.mxu0 %v4177
    %4198 = vmatprep.subr.bf16.mxu0 0
    %4199 = vmatpush1.bf16.msra.mxu0 %v4178
    %4200 = vmatprep.subr.bf16.mxu0 0
    %4201 = vmatpush1.bf16.msra.mxu0 %v4179
    %4202 = vmatprep.subr.bf16.mxu0 0
    %4203 = vmatpush1.bf16.msra.mxu0 %v4180
    %4204 = vmatprep.subr.bf16.mxu0 0
    %4205 = vmatpush1.bf16.msra.mxu0 %v4181
    %4206 = vmatprep.subr.bf16.mxu0 0
    %4207 = vmatpush1.bf16.msra.mxu0 0
    %4208 = vmatprep.subr.bf16.mxu0 0
    %4209 = vmatpush1.bf16.msra.mxu0 0
    %4210 = vmatprep.subr.bf16.mxu0 0
    %4211 = vmatpush1.bf16.msra.mxu0 0
    %4212 = vmatprep.subr.bf16.mxu0 0
    %4213 = vmatpush1.bf16.msra.mxu0 0
    %4214 = vmatprep.subr.bf16.mxu0 0
    %4215 = vmatpush1.bf16.msra.mxu0 0
    %4216 = vmatprep.subr.bf16.mxu0 0
    %4217 = vmatpush1.bf16.msra.mxu0 0
    %4218 = vmatprep.subr.bf16.mxu0 0
    %4219 = vmatpush1.bf16.msra.mxu0 0
    %4220 = vmatprep.subr.bf16.mxu0 0
    %4221 = vmatpush1.bf16.msra.mxu0 0
    %4222 = vmatprep.mubr.bf16.mxu0 0
    %4223 = vmatmul.mubr.bf16.gmra.mrb[0].mxu0 %v4124
    %v4224 = vpop.f32.mrb[0].mxu0
    %v4225 = vadd.f32 0.0, %v4224
    %v4226 = vpop.f32.mrb[0].mxu0
    %v4227 = vpop.f32.mrb[0].mxu0
    %v4228 = vpop.f32.mrb[0].mxu0
    %4229 = vdwg.mxu0
    %v4230 = vadd.f32 %v4125, %v4225
    %v4231 = vld [vmem:[%s940] sm:$0xf]
    %v4232 = vld [vmem:[%s940 + $0x4] sm:$0xf]
    %v4233 = vld [vmem:[%s940 + $0x8] sm:$0xf]
    %v4234 = vld [vmem:[%s940 + $0xc] sm:$0xf]
    %v4235 = vld [vmem:[%s940 + $0x10] sm:$0xf]
    %v4236 = vld [vmem:[%s940 + $0x14] sm:$0xf]
    %v4237 = vld [vmem:[%s940 + $0x18] sm:$0xf]
    %v4238 = vld [vmem:[%s940 + $0x1c] sm:$0xf]
    %v4239 = vld [vmem:[%s940 + $0x20] sm:$0xf]
    %v4240 = vld [vmem:[%s940 + $0x24] sm:$0xf]
    %v4241 = vld [vmem:[%s940 + $0x28] sm:$0xf]
    %v4242 = vld [vmem:[%s940 + $0x2c] sm:$0xf]
    %v4243 = vld [vmem:[%s940 + $0x30] sm:$0xf]
    %v4244 = vld [vmem:[%s940 + $0x34] sm:$0xf]
    %v4245 = vld [vmem:[%s940 + $0x38] sm:$0xf]
    %v4246 = vld [vmem:[%s940 + $0x3c] sm:$0xf]
    %v4248 = vshrl.u32 %v4124, 16
    %v4267 = vunpack.c.l.b16 %v4231
    %v4268 = vunpack.c.l.b16 %v4232
    %v4269 = vunpack.c.l.b16 %v4233
    %v4270 = vunpack.c.l.b16 %v4234
    %v4271 = vunpack.c.l.b16 %v4235
    %v4272 = vunpack.c.l.b16 %v4236
    %v4273 = vunpack.c.l.b16 %v4237
    %v4274 = vunpack.c.l.b16 %v4238
    %v4275 = vunpack.c.l.b16 %v4239
    %v4276 = vunpack.c.l.b16 %v4240
    %v4277 = vunpack.c.l.b16 %v4241
    %v4278 = vunpack.c.l.b16 %v4242
    %v4279 = vunpack.c.l.b16 %v4243
    %v4280 = vunpack.c.l.b16 %v4244
    %v4281 = vunpack.c.l.b16 %v4245
    %v4282 = vunpack.c.l.b16 %v4246
    %v4283 = vpack.c.b16 %v4268, %v4267
    %v4284 = vpack.c.b16 %v4270, %v4269
    %v4285 = vpack.c.b16 %v4272, %v4271
    %v4286 = vpack.c.b16 %v4274, %v4273
    %v4287 = vpack.c.b16 %v4276, %v4275
    %v4288 = vpack.c.b16 %v4278, %v4277
    %v4289 = vpack.c.b16 %v4280, %v4279
    %v4290 = vpack.c.b16 %v4282, %v4281
    %4299 = vmatprep.subr.bf16.mxu0 0
    %4300 = vmatpush1.bf16.msra.mxu0 %v4283
    %4301 = vmatprep.subr.bf16.mxu0 0
    %4302 = vmatpush1.bf16.msra.mxu0 %v4284
    %4303 = vmatprep.subr.bf16.mxu0 0
    %4304 = vmatpush1.bf16.msra.mxu0 %v4285
    %4305 = vmatprep.subr.bf16.mxu0 0
    %4306 = vmatpush1.bf16.msra.mxu0 %v4286
    %4307 = vmatprep.subr.bf16.mxu0 0
    %4308 = vmatpush1.bf16.msra.mxu0 %v4287
    %4309 = vmatprep.subr.bf16.mxu0 0
    %4310 = vmatpush1.bf16.msra.mxu0 %v4288
    %4311 = vmatprep.subr.bf16.mxu0 0
    %4312 = vmatpush1.bf16.msra.mxu0 %v4289
    %4313 = vmatprep.subr.bf16.mxu0 0
    %4314 = vmatpush1.bf16.msra.mxu0 %v4290
    %4315 = vmatprep.subr.bf16.mxu0 0
    %4316 = vmatpush1.bf16.msra.mxu0 0
    %4317 = vmatprep.subr.bf16.mxu0 0
    %4318 = vmatpush1.bf16.msra.mxu0 0
    %4319 = vmatprep.subr.bf16.mxu0 0
    %4320 = vmatpush1.bf16.msra.mxu0 0
    %4321 = vmatprep.subr.bf16.mxu0 0
    %4322 = vmatpush1.bf16.msra.mxu0 0
    %4323 = vmatprep.subr.bf16.mxu0 0
    %4324 = vmatpush1.bf16.msra.mxu0 0
    %4325 = vmatprep.subr.bf16.mxu0 0
    %4326 = vmatpush1.bf16.msra.mxu0 0
    %4327 = vmatprep.subr.bf16.mxu0 0
    %4328 = vmatpush1.bf16.msra.mxu0 0
    %4329 = vmatprep.subr.bf16.mxu0 0
    %4330 = vmatpush1.bf16.msra.mxu0 0
    %4331 = vmatprep.mubr.bf16.mxu0 0
    %4332 = vmatmul.mubr.bf16.gmra.mrb[0].mxu0 %v4248
    %v4333 = vpop.f32.mrb[0].mxu0
    %v4334 = vadd.f32 0.0, %v4333
    %v4335 = vpop.f32.mrb[0].mxu0
    %v4336 = vpop.f32.mrb[0].mxu0
    %v4337 = vpop.f32.mrb[0].mxu0
    %4338 = vdwg.mxu0
    %v4339 = vadd.f32 %v4230, %v4334
    %v4340 = vld [vmem:[%s1050] sm:$0xf]
    %v4341 = vld [vmem:[%s1050 + $0x4] sm:$0xf]
    %v4342 = vld [vmem:[%s1050 + $0x8] sm:$0xf]
    %v4343 = vld [vmem:[%s1050 + $0xc] sm:$0xf]
    %v4344 = vld [vmem:[%s1050 + $0x10] sm:$0xf]
    %v4345 = vld [vmem:[%s1050 + $0x14] sm:$0xf]
    %v4346 = vld [vmem:[%s1050 + $0x18] sm:$0xf]
    %v4347 = vld [vmem:[%s1050 + $0x1c] sm:$0xf]
    %v4348 = vld [vmem:[%s1050 + $0x20] sm:$0xf]
    %v4349 = vld [vmem:[%s1050 + $0x24] sm:$0xf]
    %v4350 = vld [vmem:[%s1050 + $0x28] sm:$0xf]
    %v4351 = vld [vmem:[%s1050 + $0x2c] sm:$0xf]
    %v4352 = vld [vmem:[%s1050 + $0x30] sm:$0xf]
    %v4353 = vld [vmem:[%s1050 + $0x34] sm:$0xf]
    %v4354 = vld [vmem:[%s1050 + $0x38] sm:$0xf]
    %v4355 = vld [vmem:[%s1050 + $0x3c] sm:$0xf]
    %v4357 = vrot.slane %v4124, 1
    %v4375 = vunpack.c.l.b16 %v4340
    %v4376 = vunpack.c.l.b16 %v4341
    %v4377 = vunpack.c.l.b16 %v4342
    %v4378 = vunpack.c.l.b16 %v4343
    %v4379 = vunpack.c.l.b16 %v4344
    %v4380 = vunpack.c.l.b16 %v4345
    %v4381 = vunpack.c.l.b16 %v4346
    %v4382 = vunpack.c.l.b16 %v4347
    %v4383 = vunpack.c.l.b16 %v4348
    %v4384 = vunpack.c.l.b16 %v4349
    %v4385 = vunpack.c.l.b16 %v4350
    %v4386 = vunpack.c.l.b16 %v4351
    %v4387 = vunpack.c.l.b16 %v4352
    %v4388 = vunpack.c.l.b16 %v4353
    %v4389 = vunpack.c.l.b16 %v4354
    %v4390 = vunpack.c.l.b16 %v4355
    %v4391 = vpack.c.b16 %v4376, %v4375
    %v4392 = vpack.c.b16 %v4378, %v4377
    %v4393 = vpack.c.b16 %v4380, %v4379
    %v4394 = vpack.c.b16 %v4382, %v4381
    %v4395 = vpack.c.b16 %v4384, %v4383
    %v4396 = vpack.c.b16 %v4386, %v4385
    %v4397 = vpack.c.b16 %v4388, %v4387
    %v4398 = vpack.c.b16 %v4390, %v4389
    %4407 = vmatprep.subr.bf16.mxu0 0
    %4408 = vmatpush1.bf16.msra.mxu0 %v4391
    %4409 = vmatprep.subr.bf16.mxu0 0
    %4410 = vmatpush1.bf16.msra.mxu0 %v4392
    %4411 = vmatprep.subr.bf16.mxu0 0
    %4412 = vmatpush1.bf16.msra.mxu0 %v4393
    %4413 = vmatprep.subr.bf16.mxu0 0
    %4414 = vmatpush1.bf16.msra.mxu0 %v4394
    %4415 = vmatprep.subr.bf16.mxu0 0
    %4416 = vmatpush1.bf16.msra.mxu0 %v4395
    %4417 = vmatprep.subr.bf16.mxu0 0
    %4418 = vmatpush1.bf16.msra.mxu0 %v4396
    %4419 = vmatprep.subr.bf16.mxu0 0
    %4420 = vmatpush1.bf16.msra.mxu0 %v4397
    %4421 = vmatprep.subr.bf16.mxu0 0
    %4422 = vmatpush1.bf16.msra.mxu0 %v4398
    %4423 = vmatprep.subr.bf16.mxu0 0
    %4424 = vmatpush1.bf16.msra.mxu0 0
    %4425 = vmatprep.subr.bf16.mxu0 0
    %4426 = vmatpush1.bf16.msra.mxu0 0
    %4427 = vmatprep.subr.bf16.mxu0 0
    %4428 = vmatpush1.bf16.msra.mxu0 0
    %4429 = vmatprep.subr.bf16.mxu0 0
    %4430 = vmatpush1.bf16.msra.mxu0 0
    %4431 = vmatprep.subr.bf16.mxu0 0
    %4432 = vmatpush1.bf16.msra.mxu0 0
    %4433 = vmatprep.subr.bf16.mxu0 0
    %4434 = vmatpush1.bf16.msra.mxu0 0
    %4435 = vmatprep.subr.bf16.mxu0 0
    %4436 = vmatpush1.bf16.msra.mxu0 0
    %4437 = vmatprep.subr.bf16.mxu0 0
    %4438 = vmatpush1.bf16.msra.mxu0 0
    %4439 = vmatprep.mubr.bf16.mxu0 0
    %4440 = vmatmul.mubr.bf16.gmra.mrb[0].mxu0 %v4357
    %v4441 = vpop.f32.mrb[0].mxu0
    %v4442 = vadd.f32 0.0, %v4441
    %v4443 = vpop.f32.mrb[0].mxu0
    %v4444 = vpop.f32.mrb[0].mxu0
    %v4445 = vpop.f32.mrb[0].mxu0
    %4446 = vdwg.mxu0
    %v4447 = vadd.f32 %v4339, %v4442
    %v4448 = vld [vmem:[%s1159] sm:$0xf]
    %v4449 = vld [vmem:[%s1159 + $0x4] sm:$0xf]
    %v4450 = vld [vmem:[%s1159 + $0x8] sm:$0xf]
    %v4451 = vld [vmem:[%s1159 + $0xc] sm:$0xf]
    %v4452 = vld [vmem:[%s1159 + $0x10] sm:$0xf]
    %v4453 = vld [vmem:[%s1159 + $0x14] sm:$0xf]
    %v4454 = vld [vmem:[%s1159 + $0x18] sm:$0xf]
    %v4455 = vld [vmem:[%s1159 + $0x1c] sm:$0xf]
    %v4456 = vld [vmem:[%s1159 + $0x20] sm:$0xf]
    %v4457 = vld [vmem:[%s1159 + $0x24] sm:$0xf]
    %v4458 = vld [vmem:[%s1159 + $0x28] sm:$0xf]
    %v4459 = vld [vmem:[%s1159 + $0x2c] sm:$0xf]
    %v4460 = vld [vmem:[%s1159 + $0x30] sm:$0xf]
    %v4461 = vld [vmem:[%s1159 + $0x34] sm:$0xf]
    %v4462 = vld [vmem:[%s1159 + $0x38] sm:$0xf]
    %v4463 = vld [vmem:[%s1159 + $0x3c] sm:$0xf]
    %v4464 = vrot.slane %v4248, 1
    %v4482 = vunpack.c.l.b16 %v4448
    %v4483 = vunpack.c.l.b16 %v4449
    %v4484 = vunpack.c.l.b16 %v4450
    %v4485 = vunpack.c.l.b16 %v4451
    %v4486 = vunpack.c.l.b16 %v4452
    %v4487 = vunpack.c.l.b16 %v4453
    %v4488 = vunpack.c.l.b16 %v4454
    %v4489 = vunpack.c.l.b16 %v4455
    %v4490 = vunpack.c.l.b16 %v4456
    %v4491 = vunpack.c.l.b16 %v4457
    %v4492 = vunpack.c.l.b16 %v4458
    %v4493 = vunpack.c.l.b16 %v4459
    %v4494 = vunpack.c.l.b16 %v4460
    %v4495 = vunpack.c.l.b16 %v4461
    %v4496 = vunpack.c.l.b16 %v4462
    %v4497 = vunpack.c.l.b16 %v4463
    %v4498 = vpack.c.b16 %v4483, %v4482
    %v4499 = vpack.c.b16 %v4485, %v4484
    %v4500 = vpack.c.b16 %v4487, %v4486
    %v4501 = vpack.c.b16 %v4489, %v4488
    %v4502 = vpack.c.b16 %v4491, %v4490
    %v4503 = vpack.c.b16 %v4493, %v4492
    %v4504 = vpack.c.b16 %v4495, %v4494
    %v4505 = vpack.c.b16 %v4497, %v4496
    %4514 = vmatprep.subr.bf16.mxu0 0
    %4515 = vmatpush1.bf16.msra.mxu0 %v4498
    %4516 = vmatprep.subr.bf16.mxu0 0
    %4517 = vmatpush1.bf16.msra.mxu0 %v4499
    %4518 = vmatprep.subr.bf16.mxu0 0
    %4519 = vmatpush1.bf16.msra.mxu0 %v4500
    %4520 = vmatprep.subr.bf16.mxu0 0
    %4521 = vmatpush1.bf16.msra.mxu0 %v4501
    %4522 = vmatprep.subr.bf16.mxu0 0
    %4523 = vmatpush1.bf16.msra.mxu0 %v4502
    %4524 = vmatprep.subr.bf16.mxu0 0
    %4525 = vmatpush1.bf16.msra.mxu0 %v4503
    %4526 = vmatprep.subr.bf16.mxu0 0
    %4527 = vmatpush1.bf16.msra.mxu0 %v4504
    %4528 = vmatprep.subr.bf16.mxu0 0
    %4529 = vmatpush1.bf16.msra.mxu0 %v4505
    %4530 = vmatprep.subr.bf16.mxu0 0
    %4531 = vmatpush1.bf16.msra.mxu0 0
    %4532 = vmatprep.subr.bf16.mxu0 0
    %4533 = vmatpush1.bf16.msra.mxu0 0
    %4534 = vmatprep.subr.bf16.mxu0 0
    %4535 = vmatpush1.bf16.msra.mxu0 0
    %4536 = vmatprep.subr.bf16.mxu0 0
    %4537 = vmatpush1.bf16.msra.mxu0 0
    %4538 = vmatprep.subr.bf16.mxu0 0
    %4539 = vmatpush1.bf16.msra.mxu0 0
    %4540 = vmatprep.subr.bf16.mxu0 0
    %4541 = vmatpush1.bf16.msra.mxu0 0
    %4542 = vmatprep.subr.bf16.mxu0 0
    %4543 = vmatpush1.bf16.msra.mxu0 0
    %4544 = vmatprep.subr.bf16.mxu0 0
    %4545 = vmatpush1.bf16.msra.mxu0 0
    %4546 = vmatprep.mubr.bf16.mxu0 0
    %4547 = vmatmul.mubr.bf16.gmra.mrb[0].mxu0 %v4464
    %v4548 = vpop.f32.mrb[0].mxu0
    %v4549 = vadd.f32 0.0, %v4548
    %v4550 = vpop.f32.mrb[0].mxu0
    %v4551 = vpop.f32.mrb[0].mxu0
    %v4552 = vpop.f32.mrb[0].mxu0
    %4553 = vdwg.mxu0
    %v4554 = vadd.f32 %v4447, %v4549
    %v4555 = vmul.f32 %v4554, 0.5
    %v4556 = vmul.f32 %v4554, %v4554
    %v4557 = vmul.f32 %v4556, %v4554
    %v4558 = vmul.f32 %v4557, 0.044715
    %v4559 = vadd.f32 %v4554, %v4558
    %v4560 = vmul.f32 %v4559, 0.7978846
    %v4561 = vtanh.pop %v4560
    %v4562 = vadd.f32 %v4561, 1.0
    %v4563 = vmul.f32 %v4555, %v4562
    %v4564 = vpack.c.bf16 %v4563, %v4563
    %v4565 = vld [vmem:[%s10] sm:$0xf]
    %v4566 = vld [vmem:[%s10 + $0x4] sm:$0xf]
    %v4567 = vld [vmem:[%s10 + $0x8] sm:$0xf]
    %v4568 = vld [vmem:[%s10 + $0xc] sm:$0xf]
    %v4569 = vld [vmem:[%s10 + $0x10] sm:$0xf]
    %v4570 = vld [vmem:[%s10 + $0x14] sm:$0xf]
    %v4571 = vld [vmem:[%s10 + $0x18] sm:$0xf]
    %v4572 = vld [vmem:[%s10 + $0x1c] sm:$0xf]
    %v4573 = vld [vmem:[%s10 + $0x20] sm:$0xf]
    %v4574 = vld [vmem:[%s10 + $0x24] sm:$0xf]
    %v4575 = vld [vmem:[%s10 + $0x28] sm:$0xf]
    %v4576 = vld [vmem:[%s10 + $0x2c] sm:$0xf]
    %v4577 = vld [vmem:[%s10 + $0x30] sm:$0xf]
    %v4578 = vld [vmem:[%s10 + $0x34] sm:$0xf]
    %v4579 = vld [vmem:[%s10 + $0x38] sm:$0xf]
    %v4580 = vld [vmem:[%s10 + $0x3c] sm:$0xf]
    %v4581 = vld [vmem:[%s12] sm:$0x1]
    %v4598 = vunpack.c.l.b16 %v4565
    %v4599 = vunpack.c.l.b16 %v4566
    %v4600 = vunpack.c.l.b16 %v4567
    %v4601 = vunpack.c.l.b16 %v4568
    %v4602 = vunpack.c.l.b16 %v4569
    %v4603 = vunpack.c.l.b16 %v4570
    %v4604 = vunpack.c.l.b16 %v4571
    %v4605 = vunpack.c.l.b16 %v4572
    %v4606 = vunpack.c.l.b16 %v4573
    %v4607 = vunpack.c.l.b16 %v4574
    %v4608 = vunpack.c.l.b16 %v4575
    %v4609 = vunpack.c.l.b16 %v4576
    %v4610 = vunpack.c.l.b16 %v4577
    %v4611 = vunpack.c.l.b16 %v4578
    %v4612 = vunpack.c.l.b16 %v4579
    %v4613 = vunpack.c.l.b16 %v4580
    %v4614 = vpack.c.b16 %v4599, %v4598
    %v4615 = vpack.c.b16 %v4601, %v4600
    %v4616 = vpack.c.b16 %v4603, %v4602
    %v4617 = vpack.c.b16 %v4605, %v4604
    %v4618 = vpack.c.b16 %v4607, %v4606
    %v4619 = vpack.c.b16 %v4609, %v4608
    %v4620 = vpack.c.b16 %v4611, %v4610
    %v4621 = vpack.c.b16 %v4613, %v4612
    %4630 = vmatprep.subr.bf16.mxu0 0
    %4631 = vmatpush1.bf16.msra.mxu0 %v4614
    %4632 = vmatprep.subr.bf16.mxu0 0
    %4633 = vmatpush1.bf16.msra.mxu0 %v4615
    %4634 = vmatprep.subr.bf16.mxu0 0
    %4635 = vmatpush1.bf16.msra.mxu0 %v4616
    %4636 = vmatprep.subr.bf16.mxu0 0
    %4637 = vmatpush1.bf16.msra.mxu0 %v4617
    %4638 = vmatprep.subr.bf16.mxu0 0
    %4639 = vmatpush1.bf16.msra.mxu0 %v4618
    %4640 = vmatprep.subr.bf16.mxu0 0
    %4641 = vmatpush1.bf16.msra.mxu0 %v4619
    %4642 = vmatprep.subr.bf16.mxu0 0
    %4643 = vmatpush1.bf16.msra.mxu0 %v4620
    %4644 = vmatprep.subr.bf16.mxu0 0
    %4645 = vmatpush1.bf16.msra.mxu0 %v4621
    %4646 = vmatprep.subr.bf16.mxu0 0
    %4647 = vmatpush1.bf16.msra.mxu0 0
    %4648 = vmatprep.subr.bf16.mxu0 0
    %4649 = vmatpush1.bf16.msra.mxu0 0
    %4650 = vmatprep.subr.bf16.mxu0 0
    %4651 = vmatpush1.bf16.msra.mxu0 0
    %4652 = vmatprep.subr.bf16.mxu0 0
    %4653 = vmatpush1.bf16.msra.mxu0 0
    %4654 = vmatprep.subr.bf16.mxu0 0
    %4655 = vmatpush1.bf16.msra.mxu0 0
    %4656 = vmatprep.subr.bf16.mxu0 0
    %4657 = vmatpush1.bf16.msra.mxu0 0
    %4658 = vmatprep.subr.bf16.mxu0 0
    %4659 = vmatpush1.bf16.msra.mxu0 0
    %4660 = vmatprep.subr.bf16.mxu0 0
    %4661 = vmatpush1.bf16.msra.mxu0 0
    %4662 = vmatprep.mubr.bf16.mxu0 0
    %4663 = vmatmul.mubr.bf16.gmra.mrb[0].mxu0 %v4564
    %v4664 = vpop.f32.mrb[0].mxu0
    %v4665 = vadd.f32 %v4581, %v4664
    %v4666 = vpop.f32.mrb[0].mxu0
    %v4667 = vpop.f32.mrb[0].mxu0
    %v4668 = vpop.f32.mrb[0].mxu0
    %4669 = vdwg.mxu0
    %4670 = vst [vmem:[#allocation3 + $0x3] sm:$0x1] %v4665
    %v4671 = vld [vmem:[#allocation2 + $0x4] sm:$0xf]
    %v4672 = vpack.c.bf16 %v4671, %v4671
    %v4673 = vld [vmem:[%s7] sm:$0x1]
    %v4674 = vld [vmem:[%s5] sm:$0xf]
    %v4675 = vld [vmem:[%s5 + $0x4] sm:$0xf]
    %v4676 = vld [vmem:[%s5 + $0x8] sm:$0xf]
    %v4677 = vld [vmem:[%s5 + $0xc] sm:$0xf]
    %v4678 = vld [vmem:[%s5 + $0x10] sm:$0xf]
    %v4679 = vld [vmem:[%s5 + $0x14] sm:$0xf]
    %v4680 = vld [vmem:[%s5 + $0x18] sm:$0xf]
    %v4681 = vld [vmem:[%s5 + $0x1c] sm:$0xf]
    %v4682 = vld [vmem:[%s5 + $0x20] sm:$0xf]
    %v4683 = vld [vmem:[%s5 + $0x24] sm:$0xf]
    %v4684 = vld [vmem:[%s5 + $0x28] sm:$0xf]
    %v4685 = vld [vmem:[%s5 + $0x2c] sm:$0xf]
    %v4686 = vld [vmem:[%s5 + $0x30] sm:$0xf]
    %v4687 = vld [vmem:[%s5 + $0x34] sm:$0xf]
    %v4688 = vld [vmem:[%s5 + $0x38] sm:$0xf]
    %v4689 = vld [vmem:[%s5 + $0x3c] sm:$0xf]
    %v4706 = vunpack.c.l.b16 %v4674
    %v4707 = vunpack.c.l.b16 %v4675
    %v4708 = vunpack.c.l.b16 %v4676
    %v4709 = vunpack.c.l.b16 %v4677
    %v4710 = vunpack.c.l.b16 %v4678
    %v4711 = vunpack.c.l.b16 %v4679
    %v4712 = vunpack.c.l.b16 %v4680
    %v4713 = vunpack.c.l.b16 %v4681
    %v4714 = vunpack.c.l.b16 %v4682
    %v4715 = vunpack.c.l.b16 %v4683
    %v4716 = vunpack.c.l.b16 %v4684
    %v4717 = vunpack.c.l.b16 %v4685
    %v4718 = vunpack.c.l.b16 %v4686
    %v4719 = vunpack.c.l.b16 %v4687
    %v4720 = vunpack.c.l.b16 %v4688
    %v4721 = vunpack.c.l.b16 %v4689
    %v4722 = vpack.c.b16 %v4707, %v4706
    %v4723 = vpack.c.b16 %v4709, %v4708
    %v4724 = vpack.c.b16 %v4711, %v4710
    %v4725 = vpack.c.b16 %v4713, %v4712
    %v4726 = vpack.c.b16 %v4715, %v4714
    %v4727 = vpack.c.b16 %v4717, %v4716
    %v4728 = vpack.c.b16 %v4719, %v4718
    %v4729 = vpack.c.b16 %v4721, %v4720
    %4738 = vmatprep.subr.bf16.mxu0 0
    %4739 = vmatpush1.bf16.msra.mxu0 %v4722
    %4740 = vmatprep.subr.bf16.mxu0 0
    %4741 = vmatpush1.bf16.msra.mxu0 %v4723
    %4742 = vmatprep.subr.bf16.mxu0 0
    %4743 = vmatpush1.bf16.msra.mxu0 %v4724
    %4744 = vmatprep.subr.bf16.mxu0 0
    %4745 = vmatpush1.bf16.msra.mxu0 %v4725
    %4746 = vmatprep.subr.bf16.mxu0 0
    %4747 = vmatpush1.bf16.msra.mxu0 %v4726
    %4748 = vmatprep.subr.bf16.mxu0 0
    %4749 = vmatpush1.bf16.msra.mxu0 %v4727
    %4750 = vmatprep.subr.bf16.mxu0 0
    %4751 = vmatpush1.bf16.msra.mxu0 %v4728
    %4752 = vmatprep.subr.bf16.mxu0 0
    %4753 = vmatpush1.bf16.msra.mxu0 %v4729
    %4754 = vmatprep.subr.bf16.mxu0 0
    %4755 = vmatpush1.bf16.msra.mxu0 0
    %4756 = vmatprep.subr.bf16.mxu0 0
    %4757 = vmatpush1.bf16.msra.mxu0 0
    %4758 = vmatprep.subr.bf16.mxu0 0
    %4759 = vmatpush1.bf16.msra.mxu0 0
    %4760 = vmatprep.subr.bf16.mxu0 0
    %4761 = vmatpush1.bf16.msra.mxu0 0
    %4762 = vmatprep.subr.bf16.mxu0 0
    %4763 = vmatpush1.bf16.msra.mxu0 0
    %4764 = vmatprep.subr.bf16.mxu0 0
    %4765 = vmatpush1.bf16.msra.mxu0 0
    %4766 = vmatprep.subr.bf16.mxu0 0
    %4767 = vmatpush1.bf16.msra.mxu0 0
    %4768 = vmatprep.subr.bf16.mxu0 0
    %4769 = vmatpush1.bf16.msra.mxu0 0
    %4770 = vmatprep.mubr.bf16.mxu0 0
    %4771 = vmatmul.mubr.bf16.gmra.mrb[0].mxu0 %v4672
    %v4772 = vpop.f32.mrb[0].mxu0
    %v4773 = vadd.f32 0.0, %v4772
    %v4774 = vpop.f32.mrb[0].mxu0
    %v4775 = vpop.f32.mrb[0].mxu0
    %v4776 = vpop.f32.mrb[0].mxu0
    %4777 = vdwg.mxu0
    %v4778 = vadd.f32 %v4673, %v4773
    %v4779 = vld [vmem:[%s389] sm:$0xf]
    %v4780 = vld [vmem:[%s389 + $0x4] sm:$0xf]
    %v4781 = vld [vmem:[%s389 + $0x8] sm:$0xf]
    %v4782 = vld [vmem:[%s389 + $0xc] sm:$0xf]
    %v4783 = vld [vmem:[%s389 + $0x10] sm:$0xf]
    %v4784 = vld [vmem:[%s389 + $0x14] sm:$0xf]
    %v4785 = vld [vmem:[%s389 + $0x18] sm:$0xf]
    %v4786 = vld [vmem:[%s389 + $0x1c] sm:$0xf]
    %v4787 = vld [vmem:[%s389 + $0x20] sm:$0xf]
    %v4788 = vld [vmem:[%s389 + $0x24] sm:$0xf]
    %v4789 = vld [vmem:[%s389 + $0x28] sm:$0xf]
    %v4790 = vld [vmem:[%s389 + $0x2c] sm:$0xf]
    %v4791 = vld [vmem:[%s389 + $0x30] sm:$0xf]
    %v4792 = vld [vmem:[%s389 + $0x34] sm:$0xf]
    %v4793 = vld [vmem:[%s389 + $0x38] sm:$0xf]
    %v4794 = vld [vmem:[%s389 + $0x3c] sm:$0xf]
    %v4796 = vshrl.u32 %v4672, 16
    %v4815 = vunpack.c.l.b16 %v4779
    %v4816 = vunpack.c.l.b16 %v4780
    %v4817 = vunpack.c.l.b16 %v4781
    %v4818 = vunpack.c.l.b16 %v4782
    %v4819 = vunpack.c.l.b16 %v4783
    %v4820 = vunpack.c.l.b16 %v4784
    %v4821 = vunpack.c.l.b16 %v4785
    %v4822 = vunpack.c.l.b16 %v4786
    %v4823 = vunpack.c.l.b16 %v4787
    %v4824 = vunpack.c.l.b16 %v4788
    %v4825 = vunpack.c.l.b16 %v4789
    %v4826 = vunpack.c.l.b16 %v4790
    %v4827 = vunpack.c.l.b16 %v4791
    %v4828 = vunpack.c.l.b16 %v4792
    %v4829 = vunpack.c.l.b16 %v4793
    %v4830 = vunpack.c.l.b16 %v4794
    %v4831 = vpack.c.b16 %v4816, %v4815
    %v4832 = vpack.c.b16 %v4818, %v4817
    %v4833 = vpack.c.b16 %v4820, %v4819
    %v4834 = vpack.c.b16 %v4822, %v4821
    %v4835 = vpack.c.b16 %v4824, %v4823
    %v4836 = vpack.c.b16 %v4826, %v4825
    %v4837 = vpack.c.b16 %v4828, %v4827
    %v4838 = vpack.c.b16 %v4830, %v4829
    %4847 = vmatprep.subr.bf16.mxu0 0
    %4848 = vmatpush1.bf16.msra.mxu0 %v4831
    %4849 = vmatprep.subr.bf16.mxu0 0
    %4850 = vmatpush1.bf16.msra.mxu0 %v4832
    %4851 = vmatprep.subr.bf16.mxu0 0
    %4852 = vmatpush1.bf16.msra.mxu0 %v4833
    %4853 = vmatprep.subr.bf16.mxu0 0
    %4854 = vmatpush1.bf16.msra.mxu0 %v4834
    %4855 = vmatprep.subr.bf16.mxu0 0
    %4856 = vmatpush1.bf16.msra.mxu0 %v4835
    %4857 = vmatprep.subr.bf16.mxu0 0
    %4858 = vmatpush1.bf16.msra.mxu0 %v4836
    %4859 = vmatprep.subr.bf16.mxu0 0
    %4860 = vmatpush1.bf16.msra.mxu0 %v4837
    %4861 = vmatprep.subr.bf16.mxu0 0
    %4862 = vmatpush1.bf16.msra.mxu0 %v4838
    %4863 = vmatprep.subr.bf16.mxu0 0
    %4864 = vmatpush1.bf16.msra.mxu0 0
    %4865 = vmatprep.subr.bf16.mxu0 0
    %4866 = vmatpush1.bf16.msra.mxu0 0
    %4867 = vmatprep.subr.bf16.mxu0 0
    %4868 = vmatpush1.bf16.msra.mxu0 0
    %4869 = vmatprep.subr.bf16.mxu0 0
    %4870 = vmatpush1.bf16.msra.mxu0 0
    %4871 = vmatprep.subr.bf16.mxu0 0
    %4872 = vmatpush1.bf16.msra.mxu0 0
    %4873 = vmatprep.subr.bf16.mxu0 0
    %4874 = vmatpush1.bf16.msra.mxu0 0
    %4875 = vmatprep.subr.bf16.mxu0 0
    %4876 = vmatpush1.bf16.msra.mxu0 0
    %4877 = vmatprep.subr.bf16.mxu0 0
    %4878 = vmatpush1.bf16.msra.mxu0 0
    %4879 = vmatprep.mubr.bf16.mxu0 0
    %4880 = vmatmul.mubr.bf16.gmra.mrb[0].mxu0 %v4796
    %v4881 = vpop.f32.mrb[0].mxu0
    %v4882 = vadd.f32 0.0, %v4881
    %v4883 = vpop.f32.mrb[0].mxu0
    %v4884 = vpop.f32.mrb[0].mxu0
    %v4885 = vpop.f32.mrb[0].mxu0
    %4886 = vdwg.mxu0
    %v4887 = vadd.f32 %v4778, %v4882
    %v4888 = vld [vmem:[%s499] sm:$0xf]
    %v4889 = vld [vmem:[%s499 + $0x4] sm:$0xf]
    %v4890 = vld [vmem:[%s499 + $0x8] sm:$0xf]
    %v4891 = vld [vmem:[%s499 + $0xc] sm:$0xf]
    %v4892 = vld [vmem:[%s499 + $0x10] sm:$0xf]
    %v4893 = vld [vmem:[%s499 + $0x14] sm:$0xf]
    %v4894 = vld [vmem:[%s499 + $0x18] sm:$0xf]
    %v4895 = vld [vmem:[%s499 + $0x1c] sm:$0xf]
    %v4896 = vld [vmem:[%s499 + $0x20] sm:$0xf]
    %v4897 = vld [vmem:[%s499 + $0x24] sm:$0xf]
    %v4898 = vld [vmem:[%s499 + $0x28] sm:$0xf]
    %v4899 = vld [vmem:[%s499 + $0x2c] sm:$0xf]
    %v4900 = vld [vmem:[%s499 + $0x30] sm:$0xf]
    %v4901 = vld [vmem:[%s499 + $0x34] sm:$0xf]
    %v4902 = vld [vmem:[%s499 + $0x38] sm:$0xf]
    %v4903 = vld [vmem:[%s499 + $0x3c] sm:$0xf]
    %v4905 = vrot.slane %v4672, 1
    %v4923 = vunpack.c.l.b16 %v4888
    %v4924 = vunpack.c.l.b16 %v4889
    %v4925 = vunpack.c.l.b16 %v4890
    %v4926 = vunpack.c.l.b16 %v4891
    %v4927 = vunpack.c.l.b16 %v4892
    %v4928 = vunpack.c.l.b16 %v4893
    %v4929 = vunpack.c.l.b16 %v4894
    %v4930 = vunpack.c.l.b16 %v4895
    %v4931 = vunpack.c.l.b16 %v4896
    %v4932 = vunpack.c.l.b16 %v4897
    %v4933 = vunpack.c.l.b16 %v4898
    %v4934 = vunpack.c.l.b16 %v4899
    %v4935 = vunpack.c.l.b16 %v4900
    %v4936 = vunpack.c.l.b16 %v4901
    %v4937 = vunpack.c.l.b16 %v4902
    %v4938 = vunpack.c.l.b16 %v4903
    %v4939 = vpack.c.b16 %v4924, %v4923
    %v4940 = vpack.c.b16 %v4926, %v4925
    %v4941 = vpack.c.b16 %v4928, %v4927
    %v4942 = vpack.c.b16 %v4930, %v4929
    %v4943 = vpack.c.b16 %v4932, %v4931
    %v4944 = vpack.c.b16 %v4934, %v4933
    %v4945 = vpack.c.b16 %v4936, %v4935
    %v4946 = vpack.c.b16 %v4938, %v4937
    %4955 = vmatprep.subr.bf16.mxu0 0
    %4956 = vmatpush1.bf16.msra.mxu0 %v4939
    %4957 = vmatprep.subr.bf16.mxu0 0
    %4958 = vmatpush1.bf16.msra.mxu0 %v4940
    %4959 = vmatprep.subr.bf16.mxu0 0
    %4960 = vmatpush1.bf16.msra.mxu0 %v4941
    %4961 = vmatprep.subr.bf16.mxu0 0
    %4962 = vmatpush1.bf16.msra.mxu0 %v4942
    %4963 = vmatprep.subr.bf16.mxu0 0
    %4964 = vmatpush1.bf16.msra.mxu0 %v4943
    %4965 = vmatprep.subr.bf16.mxu0 0
    %4966 = vmatpush1.bf16.msra.mxu0 %v4944
    %4967 = vmatprep.subr.bf16.mxu0 0
    %4968 = vmatpush1.bf16.msra.mxu0 %v4945
    %4969 = vmatprep.subr.bf16.mxu0 0
    %4970 = vmatpush1.bf16.msra.mxu0 %v4946
    %4971 = vmatprep.subr.bf16.mxu0 0
    %4972 = vmatpush1.bf16.msra.mxu0 0
    %4973 = vmatprep.subr.bf16.mxu0 0
    %4974 = vmatpush1.bf16.msra.mxu0 0
    %4975 = vmatprep.subr.bf16.mxu0 0
    %4976 = vmatpush1.bf16.msra.mxu0 0
    %4977 = vmatprep.subr.bf16.mxu0 0
    %4978 = vmatpush1.bf16.msra.mxu0 0
    %4979 = vmatprep.subr.bf16.mxu0 0
    %4980 = vmatpush1.bf16.msra.mxu0 0
    %4981 = vmatprep.subr.bf16.mxu0 0
    %4982 = vmatpush1.bf16.msra.mxu0 0
    %4983 = vmatprep.subr.bf16.mxu0 0
    %4984 = vmatpush1.bf16.msra.mxu0 0
    %4985 = vmatprep.subr.bf16.mxu0 0
    %4986 = vmatpush1.bf16.msra.mxu0 0
    %4987 = vmatprep.mubr.bf16.mxu0 0
    %4988 = vmatmul.mubr.bf16.gmra.mrb[0].mxu0 %v4905
    %v4989 = vpop.f32.mrb[0].mxu0
    %v4990 = vadd.f32 0.0, %v4989
    %v4991 = vpop.f32.mrb[0].mxu0
    %v4992 = vpop.f32.mrb[0].mxu0
    %v4993 = vpop.f32.mrb[0].mxu0
    %4994 = vdwg.mxu0
    %v4995 = vadd.f32 %v4887, %v4990
    %v4996 = vld [vmem:[%s608] sm:$0xf]
    %v4997 = vld [vmem:[%s608 + $0x4] sm:$0xf]
    %v4998 = vld [vmem:[%s608 + $0x8] sm:$0xf]
    %v4999 = vld [vmem:[%s608 + $0xc] sm:$0xf]
    %v5000 = vld [vmem:[%s608 + $0x10] sm:$0xf]
    %v5001 = vld [vmem:[%s608 + $0x14] sm:$0xf]
    %v5002 = vld [vmem:[%s608 + $0x18] sm:$0xf]
    %v5003 = vld [vmem:[%s608 + $0x1c] sm:$0xf]
    %v5004 = vld [vmem:[%s608 + $0x20] sm:$0xf]
    %v5005 = vld [vmem:[%s608 + $0x24] sm:$0xf]
    %v5006 = vld [vmem:[%s608 + $0x28] sm:$0xf]
    %v5007 = vld [vmem:[%s608 + $0x2c] sm:$0xf]
    %v5008 = vld [vmem:[%s608 + $0x30] sm:$0xf]
    %v5009 = vld [vmem:[%s608 + $0x34] sm:$0xf]
    %v5010 = vld [vmem:[%s608 + $0x38] sm:$0xf]
    %v5011 = vld [vmem:[%s608 + $0x3c] sm:$0xf]
    %v5012 = vrot.slane %v4796, 1
    %v5030 = vunpack.c.l.b16 %v4996
    %v5031 = vunpack.c.l.b16 %v4997
    %v5032 = vunpack.c.l.b16 %v4998
    %v5033 = vunpack.c.l.b16 %v4999
    %v5034 = vunpack.c.l.b16 %v5000
    %v5035 = vunpack.c.l.b16 %v5001
    %v5036 = vunpack.c.l.b16 %v5002
    %v5037 = vunpack.c.l.b16 %v5003
    %v5038 = vunpack.c.l.b16 %v5004
    %v5039 = vunpack.c.l.b16 %v5005
    %v5040 = vunpack.c.l.b16 %v5006
    %v5041 = vunpack.c.l.b16 %v5007
    %v5042 = vunpack.c.l.b16 %v5008
    %v5043 = vunpack.c.l.b16 %v5009
    %v5044 = vunpack.c.l.b16 %v5010
    %v5045 = vunpack.c.l.b16 %v5011
    %v5046 = vpack.c.b16 %v5031, %v5030
    %v5047 = vpack.c.b16 %v5033, %v5032
    %v5048 = vpack.c.b16 %v5035, %v5034
    %v5049 = vpack.c.b16 %v5037, %v5036
    %v5050 = vpack.c.b16 %v5039, %v5038
    %v5051 = vpack.c.b16 %v5041, %v5040
    %v5052 = vpack.c.b16 %v5043, %v5042
    %v5053 = vpack.c.b16 %v5045, %v5044
    %5062 = vmatprep.subr.bf16.mxu0 0
    %5063 = vmatpush1.bf16.msra.mxu0 %v5046
    %5064 = vmatprep.subr.bf16.mxu0 0
    %5065 = vmatpush1.bf16.msra.mxu0 %v5047
    %5066 = vmatprep.subr.bf16.mxu0 0
    %5067 = vmatpush1.bf16.msra.mxu0 %v5048
    %5068 = vmatprep.subr.bf16.mxu0 0
    %5069 = vmatpush1.bf16.msra.mxu0 %v5049
    %5070 = vmatprep.subr.bf16.mxu0 0
    %5071 = vmatpush1.bf16.msra.mxu0 %v5050
    %5072 = vmatprep.subr.bf16.mxu0 0
    %5073 = vmatpush1.bf16.msra.mxu0 %v5051
    %5074 = vmatprep.subr.bf16.mxu0 0
    %5075 = vmatpush1.bf16.msra.mxu0 %v5052
    %5076 = vmatprep.subr.bf16.mxu0 0
    %5077 = vmatpush1.bf16.msra.mxu0 %v5053
    %5078 = vmatprep.subr.bf16.mxu0 0
    %5079 = vmatpush1.bf16.msra.mxu0 0
    %5080 = vmatprep.subr.bf16.mxu0 0
    %5081 = vmatpush1.bf16.msra.mxu0 0
    %5082 = vmatprep.subr.bf16.mxu0 0
    %5083 = vmatpush1.bf16.msra.mxu0 0
    %5084 = vmatprep.subr.bf16.mxu0 0
    %5085 = vmatpush1.bf16.msra.mxu0 0
    %5086 = vmatprep.subr.bf16.mxu0 0
    %5087 = vmatpush1.bf16.msra.mxu0 0
    %5088 = vmatprep.subr.bf16.mxu0 0
    %5089 = vmatpush1.bf16.msra.mxu0 0
    %5090 = vmatprep.subr.bf16.mxu0 0
    %5091 = vmatpush1.bf16.msra.mxu0 0
    %5092 = vmatprep.subr.bf16.mxu0 0
    %5093 = vmatpush1.bf16.msra.mxu0 0
    %5094 = vmatprep.mubr.bf16.mxu0 0
    %5095 = vmatmul.mubr.bf16.gmra.mrb[0].mxu0 %v5012
    %v5096 = vpop.f32.mrb[0].mxu0
    %v5097 = vadd.f32 0.0, %v5096
    %v5098 = vpop.f32.mrb[0].mxu0
    %v5099 = vpop.f32.mrb[0].mxu0
    %v5100 = vpop.f32.mrb[0].mxu0
    %5101 = vdwg.mxu0
    %v5102 = vadd.f32 %v4995, %v5097
    %v5103 = vmul.f32 %v5102, 0.5
    %v5104 = vmul.f32 %v5102, %v5102
    %v5105 = vmul.f32 %v5104, %v5102
    %v5106 = vmul.f32 %v5105, 0.044715
    %v5107 = vadd.f32 %v5102, %v5106
    %v5108 = vmul.f32 %v5107, 0.7978846
    %v5109 = vtanh.pop %v5108
    %v5110 = vadd.f32 %v5109, 1.0
    %v5111 = vmul.f32 %v5103, %v5110
    %v5112 = vpack.c.bf16 %v5111, %v5111
    %v5113 = vld [vmem:[%s6] sm:$0xf]
    %v5114 = vld [vmem:[%s6 + $0x4] sm:$0xf]
    %v5115 = vld [vmem:[%s6 + $0x8] sm:$0xf]
    %v5116 = vld [vmem:[%s6 + $0xc] sm:$0xf]
    %v5117 = vld [vmem:[%s6 + $0x10] sm:$0xf]
    %v5118 = vld [vmem:[%s6 + $0x14] sm:$0xf]
    %v5119 = vld [vmem:[%s6 + $0x18] sm:$0xf]
    %v5120 = vld [vmem:[%s6 + $0x1c] sm:$0xf]
    %v5121 = vld [vmem:[%s6 + $0x20] sm:$0xf]
    %v5122 = vld [vmem:[%s6 + $0x24] sm:$0xf]
    %v5123 = vld [vmem:[%s6 + $0x28] sm:$0xf]
    %v5124 = vld [vmem:[%s6 + $0x2c] sm:$0xf]
    %v5125 = vld [vmem:[%s6 + $0x30] sm:$0xf]
    %v5126 = vld [vmem:[%s6 + $0x34] sm:$0xf]
    %v5127 = vld [vmem:[%s6 + $0x38] sm:$0xf]
    %v5128 = vld [vmem:[%s6 + $0x3c] sm:$0xf]
    %v5129 = vld [vmem:[%s8] sm:$0x1]
    %v5146 = vunpack.c.l.b16 %v5113
    %v5147 = vunpack.c.l.b16 %v5114
    %v5148 = vunpack.c.l.b16 %v5115
    %v5149 = vunpack.c.l.b16 %v5116
    %v5150 = vunpack.c.l.b16 %v5117
    %v5151 = vunpack.c.l.b16 %v5118
    %v5152 = vunpack.c.l.b16 %v5119
    %v5153 = vunpack.c.l.b16 %v5120
    %v5154 = vunpack.c.l.b16 %v5121
    %v5155 = vunpack.c.l.b16 %v5122
    %v5156 = vunpack.c.l.b16 %v5123
    %v5157 = vunpack.c.l.b16 %v5124
    %v5158 = vunpack.c.l.b16 %v5125
    %v5159 = vunpack.c.l.b16 %v5126
    %v5160 = vunpack.c.l.b16 %v5127
    %v5161 = vunpack.c.l.b16 %v5128
    %v5162 = vpack.c.b16 %v5147, %v5146
    %v5163 = vpack.c.b16 %v5149, %v5148
    %v5164 = vpack.c.b16 %v5151, %v5150
    %v5165 = vpack.c.b16 %v5153, %v5152
    %v5166 = vpack.c.b16 %v5155, %v5154
    %v5167 = vpack.c.b16 %v5157, %v5156
    %v5168 = vpack.c.b16 %v5159, %v5158
    %v5169 = vpack.c.b16 %v5161, %v5160
    %5178 = vmatprep.subr.bf16.mxu0 0
    %5179 = vmatpush1.bf16.msra.mxu0 %v5162
    %5180 = vmatprep.subr.bf16.mxu0 0
    %5181 = vmatpush1.bf16.msra.mxu0 %v5163
    %5182 = vmatprep.subr.bf16.mxu0 0
    %5183 = vmatpush1.bf16.msra.mxu0 %v5164
    %5184 = vmatprep.subr.bf16.mxu0 0
    %5185 = vmatpush1.bf16.msra.mxu0 %v5165
    %5186 = vmatprep.subr.bf16.mxu0 0
    %5187 = vmatpush1.bf16.msra.mxu0 %v5166
    %5188 = vmatprep.subr.bf16.mxu0 0
    %5189 = vmatpush1.bf16.msra.mxu0 %v5167
    %5190 = vmatprep.subr.bf16.mxu0 0
    %5191 = vmatpush1.bf16.msra.mxu0 %v5168
    %5192 = vmatprep.subr.bf16.mxu0 0
    %5193 = vmatpush1.bf16.msra.mxu0 %v5169
    %5194 = vmatprep.subr.bf16.mxu0 0
    %5195 = vmatpush1.bf16.msra.mxu0 0
    %5196 = vmatprep.subr.bf16.mxu0 0
    %5197 = vmatpush1.bf16.msra.mxu0 0
    %5198 = vmatprep.subr.bf16.mxu0 0
    %5199 = vmatpush1.bf16.msra.mxu0 0
    %5200 = vmatprep.subr.bf16.mxu0 0
    %5201 = vmatpush1.bf16.msra.mxu0 0
    %5202 = vmatprep.subr.bf16.mxu0 0
    %5203 = vmatpush1.bf16.msra.mxu0 0
    %5204 = vmatprep.subr.bf16.mxu0 0
    %5205 = vmatpush1.bf16.msra.mxu0 0
    %5206 = vmatprep.subr.bf16.mxu0 0
    %5207 = vmatpush1.bf16.msra.mxu0 0
    %5208 = vmatprep.subr.bf16.mxu0 0
    %5209 = vmatpush1.bf16.msra.mxu0 0
    %5210 = vmatprep.mubr.bf16.mxu0 0
    %5211 = vmatmul.mubr.bf16.gmra.mrb[0].mxu0 %v5112
    %v5212 = vpop.f32.mrb[0].mxu0
    %v5213 = vadd.f32 %v5129, %v5212
    %v5214 = vpop.f32.mrb[0].mxu0
    %v5215 = vpop.f32.mrb[0].mxu0
    %v5216 = vpop.f32.mrb[0].mxu0
    %5217 = vdwg.mxu0
    %5218 = vst [vmem:[#allocation2 + $0xc] sm:$0x1] %v5213
    %v5219 = vld [vmem:[#allocation2 + $0x9] sm:$0xf]
    %v5220 = vpack.c.bf16 %v5219, %v5219
    %v5221 = vld [vmem:[%s11] sm:$0x1]
    %v5222 = vld [vmem:[%s9] sm:$0xf]
    %v5223 = vld [vmem:[%s9 + $0x4] sm:$0xf]
    %v5224 = vld [vmem:[%s9 + $0x8] sm:$0xf]
    %v5225 = vld [vmem:[%s9 + $0xc] sm:$0xf]
    %v5226 = vld [vmem:[%s9 + $0x10] sm:$0xf]
    %v5227 = vld [vmem:[%s9 + $0x14] sm:$0xf]
    %v5228 = vld [vmem:[%s9 + $0x18] sm:$0xf]
    %v5229 = vld [vmem:[%s9 + $0x1c] sm:$0xf]
    %v5230 = vld [vmem:[%s9 + $0x20] sm:$0xf]
    %v5231 = vld [vmem:[%s9 + $0x24] sm:$0xf]
    %v5232 = vld [vmem:[%s9 + $0x28] sm:$0xf]
    %v5233 = vld [vmem:[%s9 + $0x2c] sm:$0xf]
    %v5234 = vld [vmem:[%s9 + $0x30] sm:$0xf]
    %v5235 = vld [vmem:[%s9 + $0x34] sm:$0xf]
    %v5236 = vld [vmem:[%s9 + $0x38] sm:$0xf]
    %v5237 = vld [vmem:[%s9 + $0x3c] sm:$0xf]
    %v5254 = vunpack.c.l.b16 %v5222
    %v5255 = vunpack.c.l.b16 %v5223
    %v5256 = vunpack.c.l.b16 %v5224
    %v5257 = vunpack.c.l.b16 %v5225
    %v5258 = vunpack.c.l.b16 %v5226
    %v5259 = vunpack.c.l.b16 %v5227
    %v5260 = vunpack.c.l.b16 %v5228
    %v5261 = vunpack.c.l.b16 %v5229
    %v5262 = vunpack.c.l.b16 %v5230
    %v5263 = vunpack.c.l.b16 %v5231
    %v5264 = vunpack.c.l.b16 %v5232
    %v5265 = vunpack.c.l.b16 %v5233
    %v5266 = vunpack.c.l.b16 %v5234
    %v5267 = vunpack.c.l.b16 %v5235
    %v5268 = vunpack.c.l.b16 %v5236
    %v5269 = vunpack.c.l.b16 %v5237
    %v5270 = vpack.c.b16 %v5255, %v5254
    %v5271 = vpack.c.b16 %v5257, %v5256
    %v5272 = vpack.c.b16 %v5259, %v5258
    %v5273 = vpack.c.b16 %v5261, %v5260
    %v5274 = vpack.c.b16 %v5263, %v5262
    %v5275 = vpack.c.b16 %v5265, %v5264
    %v5276 = vpack.c.b16 %v5267, %v5266
    %v5277 = vpack.c.b16 %v5269, %v5268
    %5286 = vmatprep.subr.bf16.mxu0 0
    %5287 = vmatpush1.bf16.msra.mxu0 %v5270
    %5288 = vmatprep.subr.bf16.mxu0 0
    %5289 = vmatpush1.bf16.msra.mxu0 %v5271
    %5290 = vmatprep.subr.bf16.mxu0 0
    %5291 = vmatpush1.bf16.msra.mxu0 %v5272
    %5292 = vmatprep.subr.bf16.mxu0 0
    %5293 = vmatpush1.bf16.msra.mxu0 %v5273
    %5294 = vmatprep.subr.bf16.mxu0 0
    %5295 = vmatpush1.bf16.msra.mxu0 %v5274
    %5296 = vmatprep.subr.bf16.mxu0 0
    %5297 = vmatpush1.bf16.msra.mxu0 %v5275
    %5298 = vmatprep.subr.bf16.mxu0 0
    %5299 = vmatpush1.bf16.msra.mxu0 %v5276
    %5300 = vmatprep.subr.bf16.mxu0 0
    %5301 = vmatpush1.bf16.msra.mxu0 %v5277
    %5302 = vmatprep.subr.bf16.mxu0 0
    %5303 = vmatpush1.bf16.msra.mxu0 0
    %5304 = vmatprep.subr.bf16.mxu0 0
    %5305 = vmatpush1.bf16.msra.mxu0 0
    %5306 = vmatprep.subr.bf16.mxu0 0
    %5307 = vmatpush1.bf16.msra.mxu0 0
    %5308 = vmatprep.subr.bf16.mxu0 0
    %5309 = vmatpush1.bf16.msra.mxu0 0
    %5310 = vmatprep.subr.bf16.mxu0 0
    %5311 = vmatpush1.bf16.msra.mxu0 0
    %5312 = vmatprep.subr.bf16.mxu0 0
    %5313 = vmatpush1.bf16.msra.mxu0 0
    %5314 = vmatprep.subr.bf16.mxu0 0
    %5315 = vmatpush1.bf16.msra.mxu0 0
    %5316 = vmatprep.subr.bf16.mxu0 0
    %5317 = vmatpush1.bf16.msra.mxu0 0
    %5318 = vmatprep.mubr.bf16.mxu0 0
    %5319 = vmatmul.mubr.bf16.gmra.mrb[0].mxu0 %v5220
    %v5320 = vpop.f32.mrb[0].mxu0
    %v5321 = vadd.f32 0.0, %v5320
    %v5322 = vpop.f32.mrb[0].mxu0
    %v5323 = vpop.f32.mrb[0].mxu0
    %v5324 = vpop.f32.mrb[0].mxu0
    %5325 = vdwg.mxu0
    %v5326 = vadd.f32 %v5221, %v5321
    %v5327 = vld [vmem:[%s940] sm:$0xf]
    %v5328 = vld [vmem:[%s940 + $0x4] sm:$0xf]
    %v5329 = vld [vmem:[%s940 + $0x8] sm:$0xf]
    %v5330 = vld [vmem:[%s940 + $0xc] sm:$0xf]
    %v5331 = vld [vmem:[%s940 + $0x10] sm:$0xf]
    %v5332 = vld [vmem:[%s940 + $0x14] sm:$0xf]
    %v5333 = vld [vmem:[%s940 + $0x18] sm:$0xf]
    %v5334 = vld [vmem:[%s940 + $0x1c] sm:$0xf]
    %v5335 = vld [vmem:[%s940 + $0x20] sm:$0xf]
    %v5336 = vld [vmem:[%s940 + $0x24] sm:$0xf]
    %v5337 = vld [vmem:[%s940 + $0x28] sm:$0xf]
    %v5338 = vld [vmem:[%s940 + $0x2c] sm:$0xf]
    %v5339 = vld [vmem:[%s940 + $0x30] sm:$0xf]
    %v5340 = vld [vmem:[%s940 + $0x34] sm:$0xf]
    %v5341 = vld [vmem:[%s940 + $0x38] sm:$0xf]
    %v5342 = vld [vmem:[%s940 + $0x3c] sm:$0xf]
    %v5344 = vshrl.u32 %v5220, 16
    %v5363 = vunpack.c.l.b16 %v5327
    %v5364 = vunpack.c.l.b16 %v5328
    %v5365 = vunpack.c.l.b16 %v5329
    %v5366 = vunpack.c.l.b16 %v5330
    %v5367 = vunpack.c.l.b16 %v5331
    %v5368 = vunpack.c.l.b16 %v5332
    %v5369 = vunpack.c.l.b16 %v5333
    %v5370 = vunpack.c.l.b16 %v5334
    %v5371 = vunpack.c.l.b16 %v5335
    %v5372 = vunpack.c.l.b16 %v5336
    %v5373 = vunpack.c.l.b16 %v5337
    %v5374 = vunpack.c.l.b16 %v5338
    %v5375 = vunpack.c.l.b16 %v5339
    %v5376 = vunpack.c.l.b16 %v5340
    %v5377 = vunpack.c.l.b16 %v5341
    %v5378 = vunpack.c.l.b16 %v5342
    %v5379 = vpack.c.b16 %v5364, %v5363
    %v5380 = vpack.c.b16 %v5366, %v5365
    %v5381 = vpack.c.b16 %v5368, %v5367
    %v5382 = vpack.c.b16 %v5370, %v5369
    %v5383 = vpack.c.b16 %v5372, %v5371
    %v5384 = vpack.c.b16 %v5374, %v5373
    %v5385 = vpack.c.b16 %v5376, %v5375
    %v5386 = vpack.c.b16 %v5378, %v5377
    %5395 = vmatprep.subr.bf16.mxu0 0
    %5396 = vmatpush1.bf16.msra.mxu0 %v5379
    %5397 = vmatprep.subr.bf16.mxu0 0
    %5398 = vmatpush1.bf16.msra.mxu0 %v5380
    %5399 = vmatprep.subr.bf16.mxu0 0
    %5400 = vmatpush1.bf16.msra.mxu0 %v5381
    %5401 = vmatprep.subr.bf16.mxu0 0
    %5402 = vmatpush1.bf16.msra.mxu0 %v5382
    %5403 = vmatprep.subr.bf16.mxu0 0
    %5404 = vmatpush1.bf16.msra.mxu0 %v5383
    %5405 = vmatprep.subr.bf16.mxu0 0
    %5406 = vmatpush1.bf16.msra.mxu0 %v5384
    %5407 = vmatprep.subr.bf16.mxu0 0
    %5408 = vmatpush1.bf16.msra.mxu0 %v5385
    %5409 = vmatprep.subr.bf16.mxu0 0
    %5410 = vmatpush1.bf16.msra.mxu0 %v5386
    %5411 = vmatprep.subr.bf16.mxu0 0
    %5412 = vmatpush1.bf16.msra.mxu0 0
    %5413 = vmatprep.subr.bf16.mxu0 0
    %5414 = vmatpush1.bf16.msra.mxu0 0
    %5415 = vmatprep.subr.bf16.mxu0 0
    %5416 = vmatpush1.bf16.msra.mxu0 0
    %5417 = vmatprep.subr.bf16.mxu0 0
    %5418 = vmatpush1.bf16.msra.mxu0 0
    %5419 = vmatprep.subr.bf16.mxu0 0
    %5420 = vmatpush1.bf16.msra.mxu0 0
    %5421 = vmatprep.subr.bf16.mxu0 0
    %5422 = vmatpush1.bf16.msra.mxu0 0
    %5423 = vmatprep.subr.bf16.mxu0 0
    %5424 = vmatpush1.bf16.msra.mxu0 0
    %5425 = vmatprep.subr.bf16.mxu0 0
    %5426 = vmatpush1.bf16.msra.mxu0 0
    %5427 = vmatprep.mubr.bf16.mxu0 0
    %5428 = vmatmul.mubr.bf16.gmra.mrb[0].mxu0 %v5344
    %v5429 = vpop.f32.mrb[0].mxu0
    %v5430 = vadd.f32 0.0, %v5429
    %v5431 = vpop.f32.mrb[0].mxu0
    %v5432 = vpop.f32.mrb[0].mxu0
    %v5433 = vpop.f32.mrb[0].mxu0
    %5434 = vdwg.mxu0
    %v5435 = vadd.f32 %v5326, %v5430
    %v5436 = vld [vmem:[%s1050] sm:$0xf]
    %v5437 = vld [vmem:[%s1050 + $0x4] sm:$0xf]
    %v5438 = vld [vmem:[%s1050 + $0x8] sm:$0xf]
    %v5439 = vld [vmem:[%s1050 + $0xc] sm:$0xf]
    %v5440 = vld [vmem:[%s1050 + $0x10] sm:$0xf]
    %v5441 = vld [vmem:[%s1050 + $0x14] sm:$0xf]
    %v5442 = vld [vmem:[%s1050 + $0x18] sm:$0xf]
    %v5443 = vld [vmem:[%s1050 + $0x1c] sm:$0xf]
    %v5444 = vld [vmem:[%s1050 + $0x20] sm:$0xf]
    %v5445 = vld [vmem:[%s1050 + $0x24] sm:$0xf]
    %v5446 = vld [vmem:[%s1050 + $0x28] sm:$0xf]
    %v5447 = vld [vmem:[%s1050 + $0x2c] sm:$0xf]
    %v5448 = vld [vmem:[%s1050 + $0x30] sm:$0xf]
    %v5449 = vld [vmem:[%s1050 + $0x34] sm:$0xf]
    %v5450 = vld [vmem:[%s1050 + $0x38] sm:$0xf]
    %v5451 = vld [vmem:[%s1050 + $0x3c] sm:$0xf]
    %v5453 = vrot.slane %v5220, 1
    %v5471 = vunpack.c.l.b16 %v5436
    %v5472 = vunpack.c.l.b16 %v5437
    %v5473 = vunpack.c.l.b16 %v5438
    %v5474 = vunpack.c.l.b16 %v5439
    %v5475 = vunpack.c.l.b16 %v5440
    %v5476 = vunpack.c.l.b16 %v5441
    %v5477 = vunpack.c.l.b16 %v5442
    %v5478 = vunpack.c.l.b16 %v5443
    %v5479 = vunpack.c.l.b16 %v5444
    %v5480 = vunpack.c.l.b16 %v5445
    %v5481 = vunpack.c.l.b16 %v5446
    %v5482 = vunpack.c.l.b16 %v5447
    %v5483 = vunpack.c.l.b16 %v5448
    %v5484 = vunpack.c.l.b16 %v5449
    %v5485 = vunpack.c.l.b16 %v5450
    %v5486 = vunpack.c.l.b16 %v5451
    %v5487 = vpack.c.b16 %v5472, %v5471
    %v5488 = vpack.c.b16 %v5474, %v5473
    %v5489 = vpack.c.b16 %v5476, %v5475
    %v5490 = vpack.c.b16 %v5478, %v5477
    %v5491 = vpack.c.b16 %v5480, %v5479
    %v5492 = vpack.c.b16 %v5482, %v5481
    %v5493 = vpack.c.b16 %v5484, %v5483
    %v5494 = vpack.c.b16 %v5486, %v5485
    %5503 = vmatprep.subr.bf16.mxu0 0
    %5504 = vmatpush1.bf16.msra.mxu0 %v5487
    %5505 = vmatprep.subr.bf16.mxu0 0
    %5506 = vmatpush1.bf16.msra.mxu0 %v5488
    %5507 = vmatprep.subr.bf16.mxu0 0
    %5508 = vmatpush1.bf16.msra.mxu0 %v5489
    %5509 = vmatprep.subr.bf16.mxu0 0
    %5510 = vmatpush1.bf16.msra.mxu0 %v5490
    %5511 = vmatprep.subr.bf16.mxu0 0
    %5512 = vmatpush1.bf16.msra.mxu0 %v5491
    %5513 = vmatprep.subr.bf16.mxu0 0
    %5514 = vmatpush1.bf16.msra.mxu0 %v5492
    %5515 = vmatprep.subr.bf16.mxu0 0
    %5516 = vmatpush1.bf16.msra.mxu0 %v5493
    %5517 = vmatprep.subr.bf16.mxu0 0
    %5518 = vmatpush1.bf16.msra.mxu0 %v5494
    %5519 = vmatprep.subr.bf16.mxu0 0
    %5520 = vmatpush1.bf16.msra.mxu0 0
    %5521 = vmatprep.subr.bf16.mxu0 0
    %5522 = vmatpush1.bf16.msra.mxu0 0
    %5523 = vmatprep.subr.bf16.mxu0 0
    %5524 = vmatpush1.bf16.msra.mxu0 0
    %5525 = vmatprep.subr.bf16.mxu0 0
    %5526 = vmatpush1.bf16.msra.mxu0 0
    %5527 = vmatprep.subr.bf16.mxu0 0
    %5528 = vmatpush1.bf16.msra.mxu0 0
    %5529 = vmatprep.subr.bf16.mxu0 0
    %5530 = vmatpush1.bf16.msra.mxu0 0
    %5531 = vmatprep.subr.bf16.mxu0 0
    %5532 = vmatpush1.bf16.msra.mxu0 0
    %5533 = vmatprep.subr.bf16.mxu0 0
    %5534 = vmatpush1.bf16.msra.mxu0 0
    %5535 = vmatprep.mubr.bf16.mxu0 0
    %5536 = vmatmul.mubr.bf16.gmra.mrb[0].mxu0 %v5453
    %v5537 = vpop.f32.mrb[0].mxu0
    %v5538 = vadd.f32 0.0, %v5537
    %v5539 = vpop.f32.mrb[0].mxu0
    %v5540 = vpop.f32.mrb[0].mxu0
    %v5541 = vpop.f32.mrb[0].mxu0
    %5542 = vdwg.mxu0
    %v5543 = vadd.f32 %v5435, %v5538
    %v5544 = vld [vmem:[%s1159] sm:$0xf]
    %v5545 = vld [vmem:[%s1159 + $0x4] sm:$0xf]
    %v5546 = vld [vmem:[%s1159 + $0x8] sm:$0xf]
    %v5547 = vld [vmem:[%s1159 + $0xc] sm:$0xf]
    %v5548 = vld [vmem:[%s1159 + $0x10] sm:$0xf]
    %v5549 = vld [vmem:[%s1159 + $0x14] sm:$0xf]
    %v5550 = vld [vmem:[%s1159 + $0x18] sm:$0xf]
    %v5551 = vld [vmem:[%s1159 + $0x1c] sm:$0xf]
    %v5552 = vld [vmem:[%s1159 + $0x20] sm:$0xf]
    %v5553 = vld [vmem:[%s1159 + $0x24] sm:$0xf]
    %v5554 = vld [vmem:[%s1159 + $0x28] sm:$0xf]
    %v5555 = vld [vmem:[%s1159 + $0x2c] sm:$0xf]
    %v5556 = vld [vmem:[%s1159 + $0x30] sm:$0xf]
    %v5557 = vld [vmem:[%s1159 + $0x34] sm:$0xf]
    %v5558 = vld [vmem:[%s1159 + $0x38] sm:$0xf]
    %v5559 = vld [vmem:[%s1159 + $0x3c] sm:$0xf]
    %v5560 = vrot.slane %v5344, 1
    %v5578 = vunpack.c.l.b16 %v5544
    %v5579 = vunpack.c.l.b16 %v5545
    %v5580 = vunpack.c.l.b16 %v5546
    %v5581 = vunpack.c.l.b16 %v5547
    %v5582 = vunpack.c.l.b16 %v5548
    %v5583 = vunpack.c.l.b16 %v5549
    %v5584 = vunpack.c.l.b16 %v5550
    %v5585 = vunpack.c.l.b16 %v5551
    %v5586 = vunpack.c.l.b16 %v5552
    %v5587 = vunpack.c.l.b16 %v5553
    %v5588 = vunpack.c.l.b16 %v5554
    %v5589 = vunpack.c.l.b16 %v5555
    %v5590 = vunpack.c.l.b16 %v5556
    %v5591 = vunpack.c.l.b16 %v5557
    %v5592 = vunpack.c.l.b16 %v5558
    %v5593 = vunpack.c.l.b16 %v5559
    %v5594 = vpack.c.b16 %v5579, %v5578
    %v5595 = vpack.c.b16 %v5581, %v5580
    %v5596 = vpack.c.b16 %v5583, %v5582
    %v5597 = vpack.c.b16 %v5585, %v5584
    %v5598 = vpack.c.b16 %v5587, %v5586
    %v5599 = vpack.c.b16 %v5589, %v5588
    %v5600 = vpack.c.b16 %v5591, %v5590
    %v5601 = vpack.c.b16 %v5593, %v5592
    %5610 = vmatprep.subr.bf16.mxu0 0
    %5611 = vmatpush1.bf16.msra.mxu0 %v5594
    %5612 = vmatprep.subr.bf16.mxu0 0
    %5613 = vmatpush1.bf16.msra.mxu0 %v5595
    %5614 = vmatprep.subr.bf16.mxu0 0
    %5615 = vmatpush1.bf16.msra.mxu0 %v5596
    %5616 = vmatprep.subr.bf16.mxu0 0
    %5617 = vmatpush1.bf16.msra.mxu0 %v5597
    %5618 = vmatprep.subr.bf16.mxu0 0
    %5619 = vmatpush1.bf16.msra.mxu0 %v5598
    %5620 = vmatprep.subr.bf16.mxu0 0
    %5621 = vmatpush1.bf16.msra.mxu0 %v5599
    %5622 = vmatprep.subr.bf16.mxu0 0
    %5623 = vmatpush1.bf16.msra.mxu0 %v5600
    %5624 = vmatprep.subr.bf16.mxu0 0
    %5625 = vmatpush1.bf16.msra.mxu0 %v5601
    %5626 = vmatprep.subr.bf16.mxu0 0
    %5627 = vmatpush1.bf16.msra.mxu0 0
    %5628 = vmatprep.subr.bf16.mxu0 0
    %5629 = vmatpush1.bf16.msra.mxu0 0
    %5630 = vmatprep.subr.bf16.mxu0 0
    %5631 = vmatpush1.bf16.msra.mxu0 0
    %5632 = vmatprep.subr.bf16.mxu0 0
    %5633 = vmatpush1.bf16.msra.mxu0 0
    %5634 = vmatprep.subr.bf16.mxu0 0
    %5635 = vmatpush1.bf16.msra.mxu0 0
    %5636 = vmatprep.subr.bf16.mxu0 0
    %5637 = vmatpush1.bf16.msra.mxu0 0
    %5638 = vmatprep.subr.bf16.mxu0 0
    %5639 = vmatpush1.bf16.msra.mxu0 0
    %5640 = vmatprep.subr.bf16.mxu0 0
    %5641 = vmatpush1.bf16.msra.mxu0 0
    %5642 = vmatprep.mubr.bf16.mxu0 0
    %5643 = vmatmul.mubr.bf16.gmra.mrb[0].mxu0 %v5560
    %v5644 = vpop.f32.mrb[0].mxu0
    %v5645 = vadd.f32 0.0, %v5644
    %v5646 = vpop.f32.mrb[0].mxu0
    %v5647 = vpop.f32.mrb[0].mxu0
    %v5648 = vpop.f32.mrb[0].mxu0
    %5649 = vdwg.mxu0
    %v5650 = vadd.f32 %v5543, %v5645
    %v5651 = vmul.f32 %v5650, 0.5
    %v5652 = vmul.f32 %v5650, %v5650
    %v5653 = vmul.f32 %v5652, %v5650
    %v5654 = vmul.f32 %v5653, 0.044715
    %v5655 = vadd.f32 %v5650, %v5654
    %v5656 = vmul.f32 %v5655, 0.7978846
    %v5657 = vtanh.pop %v5656
    %v5658 = vadd.f32 %v5657, 1.0
    %v5659 = vmul.f32 %v5651, %v5658
    %v5660 = vpack.c.bf16 %v5659, %v5659
    %v5661 = vld [vmem:[%s10] sm:$0xf]
    %v5662 = vld [vmem:[%s10 + $0x4] sm:$0xf]
    %v5663 = vld [vmem:[%s10 + $0x8] sm:$0xf]
    %v5664 = vld [vmem:[%s10 + $0xc] sm:$0xf]
    %v5665 = vld [vmem:[%s10 + $0x10] sm:$0xf]
    %v5666 = vld [vmem:[%s10 + $0x14] sm:$0xf]
    %v5667 = vld [vmem:[%s10 + $0x18] sm:$0xf]
    %v5668 = vld [vmem:[%s10 + $0x1c] sm:$0xf]
    %v5669 = vld [vmem:[%s10 + $0x20] sm:$0xf]
    %v5670 = vld [vmem:[%s10 + $0x24] sm:$0xf]
    %v5671 = vld [vmem:[%s10 + $0x28] sm:$0xf]
    %v5672 = vld [vmem:[%s10 + $0x2c] sm:$0xf]
    %v5673 = vld [vmem:[%s10 + $0x30] sm:$0xf]
    %v5674 = vld [vmem:[%s10 + $0x34] sm:$0xf]
    %v5675 = vld [vmem:[%s10 + $0x38] sm:$0xf]
    %v5676 = vld [vmem:[%s10 + $0x3c] sm:$0xf]
    %v5677 = vld [vmem:[%s12] sm:$0x1]
    %v5694 = vunpack.c.l.b16 %v5661
    %v5695 = vunpack.c.l.b16 %v5662
    %v5696 = vunpack.c.l.b16 %v5663
    %v5697 = vunpack.c.l.b16 %v5664
    %v5698 = vunpack.c.l.b16 %v5665
    %v5699 = vunpack.c.l.b16 %v5666
    %v5700 = vunpack.c.l.b16 %v5667
    %v5701 = vunpack.c.l.b16 %v5668
    %v5702 = vunpack.c.l.b16 %v5669
    %v5703 = vunpack.c.l.b16 %v5670
    %v5704 = vunpack.c.l.b16 %v5671
    %v5705 = vunpack.c.l.b16 %v5672
    %v5706 = vunpack.c.l.b16 %v5673
    %v5707 = vunpack.c.l.b16 %v5674
    %v5708 = vunpack.c.l.b16 %v5675
    %v5709 = vunpack.c.l.b16 %v5676
    %v5710 = vpack.c.b16 %v5695, %v5694
    %v5711 = vpack.c.b16 %v5697, %v5696
    %v5712 = vpack.c.b16 %v5699, %v5698
    %v5713 = vpack.c.b16 %v5701, %v5700
    %v5714 = vpack.c.b16 %v5703, %v5702
    %v5715 = vpack.c.b16 %v5705, %v5704
    %v5716 = vpack.c.b16 %v5707, %v5706
    %v5717 = vpack.c.b16 %v5709, %v5708
    %5726 = vmatprep.subr.bf16.mxu0 0
    %5727 = vmatpush1.bf16.msra.mxu0 %v5710
    %5728 = vmatprep.subr.bf16.mxu0 0
    %5729 = vmatpush1.bf16.msra.mxu0 %v5711
    %5730 = vmatprep.subr.bf16.mxu0 0
    %5731 = vmatpush1.bf16.msra.mxu0 %v5712
    %5732 = vmatprep.subr.bf16.mxu0 0
    %5733 = vmatpush1.bf16.msra.mxu0 %v5713
    %5734 = vmatprep.subr.bf16.mxu0 0
    %5735 = vmatpush1.bf16.msra.mxu0 %v5714
    %5736 = vmatprep.subr.bf16.mxu0 0
    %5737 = vmatpush1.bf16.msra.mxu0 %v5715
    %5738 = vmatprep.subr.bf16.mxu0 0
    %5739 = vmatpush1.bf16.msra.mxu0 %v5716
    %5740 = vmatprep.subr.bf16.mxu0 0
    %5741 = vmatpush1.bf16.msra.mxu0 %v5717
    %5742 = vmatprep.subr.bf16.mxu0 0
    %5743 = vmatpush1.bf16.msra.mxu0 0
    %5744 = vmatprep.subr.bf16.mxu0 0
    %5745 = vmatpush1.bf16.msra.mxu0 0
    %5746 = vmatprep.subr.bf16.mxu0 0
    %5747 = vmatpush1.bf16.msra.mxu0 0
    %5748 = vmatprep.subr.bf16.mxu0 0
    %5749 = vmatpush1.bf16.msra.mxu0 0
    %5750 = vmatprep.subr.bf16.mxu0 0
    %5751 = vmatpush1.bf16.msra.mxu0 0
    %5752 = vmatprep.subr.bf16.mxu0 0
    %5753 = vmatpush1.bf16.msra.mxu0 0
    %5754 = vmatprep.subr.bf16.mxu0 0
    %5755 = vmatpush1.bf16.msra.mxu0 0
    %5756 = vmatprep.subr.bf16.mxu0 0
    %5757 = vmatpush1.bf16.msra.mxu0 0
    %5758 = vmatprep.mubr.bf16.mxu0 0
    %5759 = vmatmul.mubr.bf16.gmra.mrb[0].mxu0 %v5660
    %v5760 = vpop.f32.mrb[0].mxu0
    %v5761 = vadd.f32 %v5677, %v5760
    %v5762 = vpop.f32.mrb[0].mxu0
    %v5763 = vpop.f32.mrb[0].mxu0
    %v5764 = vpop.f32.mrb[0].mxu0
    %5765 = vdwg.mxu0
    %5766 = vst [vmem:[#allocation3 + $0x4] sm:$0x1] %v5761
    %v5767 = vld [vmem:[#allocation2 + $0x5] sm:$0xf]
    %v5768 = vpack.c.bf16 %v5767, %v5767
    %v5769 = vld [vmem:[%s7] sm:$0x1]
    %v5770 = vld [vmem:[%s5] sm:$0xf]
    %v5771 = vld [vmem:[%s5 + $0x4] sm:$0xf]
    %v5772 = vld [vmem:[%s5 + $0x8] sm:$0xf]
    %v5773 = vld [vmem:[%s5 + $0xc] sm:$0xf]
    %v5774 = vld [vmem:[%s5 + $0x10] sm:$0xf]
    %v5775 = vld [vmem:[%s5 + $0x14] sm:$0xf]
    %v5776 = vld [vmem:[%s5 + $0x18] sm:$0xf]
    %v5777 = vld [vmem:[%s5 + $0x1c] sm:$0xf]
    %v5778 = vld [vmem:[%s5 + $0x20] sm:$0xf]
    %v5779 = vld [vmem:[%s5 + $0x24] sm:$0xf]
    %v5780 = vld [vmem:[%s5 + $0x28] sm:$0xf]
    %v5781 = vld [vmem:[%s5 + $0x2c] sm:$0xf]
    %v5782 = vld [vmem:[%s5 + $0x30] sm:$0xf]
    %v5783 = vld [vmem:[%s5 + $0x34] sm:$0xf]
    %v5784 = vld [vmem:[%s5 + $0x38] sm:$0xf]
    %v5785 = vld [vmem:[%s5 + $0x3c] sm:$0xf]
    %v5802 = vunpack.c.l.b16 %v5770
    %v5803 = vunpack.c.l.b16 %v5771
    %v5804 = vunpack.c.l.b16 %v5772
    %v5805 = vunpack.c.l.b16 %v5773
    %v5806 = vunpack.c.l.b16 %v5774
    %v5807 = vunpack.c.l.b16 %v5775
    %v5808 = vunpack.c.l.b16 %v5776
    %v5809 = vunpack.c.l.b16 %v5777
    %v5810 = vunpack.c.l.b16 %v5778
    %v5811 = vunpack.c.l.b16 %v5779
    %v5812 = vunpack.c.l.b16 %v5780
    %v5813 = vunpack.c.l.b16 %v5781
    %v5814 = vunpack.c.l.b16 %v5782
    %v5815 = vunpack.c.l.b16 %v5783
    %v5816 = vunpack.c.l.b16 %v5784
    %v5817 = vunpack.c.l.b16 %v5785
    %v5818 = vpack.c.b16 %v5803, %v5802
    %v5819 = vpack.c.b16 %v5805, %v5804
    %v5820 = vpack.c.b16 %v5807, %v5806
    %v5821 = vpack.c.b16 %v5809, %v5808
    %v5822 = vpack.c.b16 %v5811, %v5810
    %v5823 = vpack.c.b16 %v5813, %v5812
    %v5824 = vpack.c.b16 %v5815, %v5814
    %v5825 = vpack.c.b16 %v5817, %v5816
    %5834 = vmatprep.subr.bf16.mxu0 0
    %5835 = vmatpush1.bf16.msra.mxu0 %v5818
    %5836 = vmatprep.subr.bf16.mxu0 0
    %5837 = vmatpush1.bf16.msra.mxu0 %v5819
    %5838 = vmatprep.subr.bf16.mxu0 0
    %5839 = vmatpush1.bf16.msra.mxu0 %v5820
    %5840 = vmatprep.subr.bf16.mxu0 0
    %5841 = vmatpush1.bf16.msra.mxu0 %v5821
    %5842 = vmatprep.subr.bf16.mxu0 0
    %5843 = vmatpush1.bf16.msra.mxu0 %v5822
    %5844 = vmatprep.subr.bf16.mxu0 0
    %5845 = vmatpush1.bf16.msra.mxu0 %v5823
    %5846 = vmatprep.subr.bf16.mxu0 0
    %5847 = vmatpush1.bf16.msra.mxu0 %v5824
    %5848 = vmatprep.subr.bf16.mxu0 0
    %5849 = vmatpush1.bf16.msra.mxu0 %v5825
    %5850 = vmatprep.subr.bf16.mxu0 0
    %5851 = vmatpush1.bf16.msra.mxu0 0
    %5852 = vmatprep.subr.bf16.mxu0 0
    %5853 = vmatpush1.bf16.msra.mxu0 0
    %5854 = vmatprep.subr.bf16.mxu0 0
    %5855 = vmatpush1.bf16.msra.mxu0 0
    %5856 = vmatprep.subr.bf16.mxu0 0
    %5857 = vmatpush1.bf16.msra.mxu0 0
    %5858 = vmatprep.subr.bf16.mxu0 0
    %5859 = vmatpush1.bf16.msra.mxu0 0
    %5860 = vmatprep.subr.bf16.mxu0 0
    %5861 = vmatpush1.bf16.msra.mxu0 0
    %5862 = vmatprep.subr.bf16.mxu0 0
    %5863 = vmatpush1.bf16.msra.mxu0 0
    %5864 = vmatprep.subr.bf16.mxu0 0
    %5865 = vmatpush1.bf16.msra.mxu0 0
    %5866 = vmatprep.mubr.bf16.mxu0 0
    %5867 = vmatmul.mubr.bf16.gmra.mrb[0].mxu0 %v5768
    %v5868 = vpop.f32.mrb[0].mxu0
    %v5869 = vadd.f32 0.0, %v5868
    %v5870 = vpop.f32.mrb[0].mxu0
    %v5871 = vpop.f32.mrb[0].mxu0
    %v5872 = vpop.f32.mrb[0].mxu0
    %5873 = vdwg.mxu0
    %v5874 = vadd.f32 %v5769, %v5869
    %v5875 = vld [vmem:[%s389] sm:$0xf]
    %v5876 = vld [vmem:[%s389 + $0x4] sm:$0xf]
    %v5877 = vld [vmem:[%s389 + $0x8] sm:$0xf]
    %v5878 = vld [vmem:[%s389 + $0xc] sm:$0xf]
    %v5879 = vld [vmem:[%s389 + $0x10] sm:$0xf]
    %v5880 = vld [vmem:[%s389 + $0x14] sm:$0xf]
    %v5881 = vld [vmem:[%s389 + $0x18] sm:$0xf]
    %v5882 = vld [vmem:[%s389 + $0x1c] sm:$0xf]
    %v5883 = vld [vmem:[%s389 + $0x20] sm:$0xf]
    %v5884 = vld [vmem:[%s389 + $0x24] sm:$0xf]
    %v5885 = vld [vmem:[%s389 + $0x28] sm:$0xf]
    %v5886 = vld [vmem:[%s389 + $0x2c] sm:$0xf]
    %v5887 = vld [vmem:[%s389 + $0x30] sm:$0xf]
    %v5888 = vld [vmem:[%s389 + $0x34] sm:$0xf]
    %v5889 = vld [vmem:[%s389 + $0x38] sm:$0xf]
    %v5890 = vld [vmem:[%s389 + $0x3c] sm:$0xf]
    %v5892 = vshrl.u32 %v5768, 16
    %v5911 = vunpack.c.l.b16 %v5875
    %v5912 = vunpack.c.l.b16 %v5876
    %v5913 = vunpack.c.l.b16 %v5877
    %v5914 = vunpack.c.l.b16 %v5878
    %v5915 = vunpack.c.l.b16 %v5879
    %v5916 = vunpack.c.l.b16 %v5880
    %v5917 = vunpack.c.l.b16 %v5881
    %v5918 = vunpack.c.l.b16 %v5882
    %v5919 = vunpack.c.l.b16 %v5883
    %v5920 = vunpack.c.l.b16 %v5884
    %v5921 = vunpack.c.l.b16 %v5885
    %v5922 = vunpack.c.l.b16 %v5886
    %v5923 = vunpack.c.l.b16 %v5887
    %v5924 = vunpack.c.l.b16 %v5888
    %v5925 = vunpack.c.l.b16 %v5889
    %v5926 = vunpack.c.l.b16 %v5890
    %v5927 = vpack.c.b16 %v5912, %v5911
    %v5928 = vpack.c.b16 %v5914, %v5913
    %v5929 = vpack.c.b16 %v5916, %v5915
    %v5930 = vpack.c.b16 %v5918, %v5917
    %v5931 = vpack.c.b16 %v5920, %v5919
    %v5932 = vpack.c.b16 %v5922, %v5921
    %v5933 = vpack.c.b16 %v5924, %v5923
    %v5934 = vpack.c.b16 %v5926, %v5925
    %5943 = vmatprep.subr.bf16.mxu0 0
    %5944 = vmatpush1.bf16.msra.mxu0 %v5927
    %5945 = vmatprep.subr.bf16.mxu0 0
    %5946 = vmatpush1.bf16.msra.mxu0 %v5928
    %5947 = vmatprep.subr.bf16.mxu0 0
    %5948 = vmatpush1.bf16.msra.mxu0 %v5929
    %5949 = vmatprep.subr.bf16.mxu0 0
    %5950 = vmatpush1.bf16.msra.mxu0 %v5930
    %5951 = vmatprep.subr.bf16.mxu0 0
    %5952 = vmatpush1.bf16.msra.mxu0 %v5931
    %5953 = vmatprep.subr.bf16.mxu0 0
    %5954 = vmatpush1.bf16.msra.mxu0 %v5932
    %5955 = vmatprep.subr.bf16.mxu0 0
    %5956 = vmatpush1.bf16.msra.mxu0 %v5933
    %5957 = vmatprep.subr.bf16.mxu0 0
    %5958 = vmatpush1.bf16.msra.mxu0 %v5934
    %5959 = vmatprep.subr.bf16.mxu0 0
    %5960 = vmatpush1.bf16.msra.mxu0 0
    %5961 = vmatprep.subr.bf16.mxu0 0
    %5962 = vmatpush1.bf16.msra.mxu0 0
    %5963 = vmatprep.subr.bf16.mxu0 0
    %5964 = vmatpush1.bf16.msra.mxu0 0
    %5965 = vmatprep.subr.bf16.mxu0 0
    %5966 = vmatpush1.bf16.msra.mxu0 0
    %5967 = vmatprep.subr.bf16.mxu0 0
    %5968 = vmatpush1.bf16.msra.mxu0 0
    %5969 = vmatprep.subr.bf16.mxu0 0
    %5970 = vmatpush1.bf16.msra.mxu0 0
    %5971 = vmatprep.subr.bf16.mxu0 0
    %5972 = vmatpush1.bf16.msra.mxu0 0
    %5973 = vmatprep.subr.bf16.mxu0 0
    %5974 = vmatpush1.bf16.msra.mxu0 0
    %5975 = vmatprep.mubr.bf16.mxu0 0
    %5976 = vmatmul.mubr.bf16.gmra.mrb[0].mxu0 %v5892
    %v5977 = vpop.f32.mrb[0].mxu0
    %v5978 = vadd.f32 0.0, %v5977
    %v5979 = vpop.f32.mrb[0].mxu0
    %v5980 = vpop.f32.mrb[0].mxu0
    %v5981 = vpop.f32.mrb[0].mxu0
    %5982 = vdwg.mxu0
    %v5983 = vadd.f32 %v5874, %v5978
    %v5984 = vld [vmem:[%s499] sm:$0xf]
    %v5985 = vld [vmem:[%s499 + $0x4] sm:$0xf]
    %v5986 = vld [vmem:[%s499 + $0x8] sm:$0xf]
    %v5987 = vld [vmem:[%s499 + $0xc] sm:$0xf]
    %v5988 = vld [vmem:[%s499 + $0x10] sm:$0xf]
    %v5989 = vld [vmem:[%s499 + $0x14] sm:$0xf]
    %v5990 = vld [vmem:[%s499 + $0x18] sm:$0xf]
    %v5991 = vld [vmem:[%s499 + $0x1c] sm:$0xf]
    %v5992 = vld [vmem:[%s499 + $0x20] sm:$0xf]
    %v5993 = vld [vmem:[%s499 + $0x24] sm:$0xf]
    %v5994 = vld [vmem:[%s499 + $0x28] sm:$0xf]
    %v5995 = vld [vmem:[%s499 + $0x2c] sm:$0xf]
    %v5996 = vld [vmem:[%s499 + $0x30] sm:$0xf]
    %v5997 = vld [vmem:[%s499 + $0x34] sm:$0xf]
    %v5998 = vld [vmem:[%s499 + $0x38] sm:$0xf]
    %v5999 = vld [vmem:[%s499 + $0x3c] sm:$0xf]
    %v6001 = vrot.slane %v5768, 1
    %v6019 = vunpack.c.l.b16 %v5984
    %v6020 = vunpack.c.l.b16 %v5985
    %v6021 = vunpack.c.l.b16 %v5986
    %v6022 = vunpack.c.l.b16 %v5987
    %v6023 = vunpack.c.l.b16 %v5988
    %v6024 = vunpack.c.l.b16 %v5989
    %v6025 = vunpack.c.l.b16 %v5990
    %v6026 = vunpack.c.l.b16 %v5991
    %v6027 = vunpack.c.l.b16 %v5992
    %v6028 = vunpack.c.l.b16 %v5993
    %v6029 = vunpack.c.l.b16 %v5994
    %v6030 = vunpack.c.l.b16 %v5995
    %v6031 = vunpack.c.l.b16 %v5996
    %v6032 = vunpack.c.l.b16 %v5997
    %v6033 = vunpack.c.l.b16 %v5998
    %v6034 = vunpack.c.l.b16 %v5999
    %v6035 = vpack.c.b16 %v6020, %v6019
    %v6036 = vpack.c.b16 %v6022, %v6021
    %v6037 = vpack.c.b16 %v6024, %v6023
    %v6038 = vpack.c.b16 %v6026, %v6025
    %v6039 = vpack.c.b16 %v6028, %v6027
    %v6040 = vpack.c.b16 %v6030, %v6029
    %v6041 = vpack.c.b16 %v6032, %v6031
    %v6042 = vpack.c.b16 %v6034, %v6033
    %6051 = vmatprep.subr.bf16.mxu0 0
    %6052 = vmatpush1.bf16.msra.mxu0 %v6035
    %6053 = vmatprep.subr.bf16.mxu0 0
    %6054 = vmatpush1.bf16.msra.mxu0 %v6036
    %6055 = vmatprep.subr.bf16.mxu0 0
    %6056 = vmatpush1.bf16.msra.mxu0 %v6037
    %6057 = vmatprep.subr.bf16.mxu0 0
    %6058 = vmatpush1.bf16.msra.mxu0 %v6038
    %6059 = vmatprep.subr.bf16.mxu0 0
    %6060 = vmatpush1.bf16.msra.mxu0 %v6039
    %6061 = vmatprep.subr.bf16.mxu0 0
    %6062 = vmatpush1.bf16.msra.mxu0 %v6040
    %6063 = vmatprep.subr.bf16.mxu0 0
    %6064 = vmatpush1.bf16.msra.mxu0 %v6041
    %6065 = vmatprep.subr.bf16.mxu0 0
    %6066 = vmatpush1.bf16.msra.mxu0 %v6042
    %6067 = vmatprep.subr.bf16.mxu0 0
    %6068 = vmatpush1.bf16.msra.mxu0 0
    %6069 = vmatprep.subr.bf16.mxu0 0
    %6070 = vmatpush1.bf16.msra.mxu0 0
    %6071 = vmatprep.subr.bf16.mxu0 0
    %6072 = vmatpush1.bf16.msra.mxu0 0
    %6073 = vmatprep.subr.bf16.mxu0 0
    %6074 = vmatpush1.bf16.msra.mxu0 0
    %6075 = vmatprep.subr.bf16.mxu0 0
    %6076 = vmatpush1.bf16.msra.mxu0 0
    %6077 = vmatprep.subr.bf16.mxu0 0
    %6078 = vmatpush1.bf16.msra.mxu0 0
    %6079 = vmatprep.subr.bf16.mxu0 0
    %6080 = vmatpush1.bf16.msra.mxu0 0
    %6081 = vmatprep.subr.bf16.mxu0 0
    %6082 = vmatpush1.bf16.msra.mxu0 0
    %6083 = vmatprep.mubr.bf16.mxu0 0
    %6084 = vmatmul.mubr.bf16.gmra.mrb[0].mxu0 %v6001
    %v6085 = vpop.f32.mrb[0].mxu0
    %v6086 = vadd.f32 0.0, %v6085
    %v6087 = vpop.f32.mrb[0].mxu0
    %v6088 = vpop.f32.mrb[0].mxu0
    %v6089 = vpop.f32.mrb[0].mxu0
    %6090 = vdwg.mxu0
    %v6091 = vadd.f32 %v5983, %v6086
    %v6092 = vld [vmem:[%s608] sm:$0xf]
    %v6093 = vld [vmem:[%s608 + $0x4] sm:$0xf]
    %v6094 = vld [vmem:[%s608 + $0x8] sm:$0xf]
    %v6095 = vld [vmem:[%s608 + $0xc] sm:$0xf]
    %v6096 = vld [vmem:[%s608 + $0x10] sm:$0xf]
    %v6097 = vld [vmem:[%s608 + $0x14] sm:$0xf]
    %v6098 = vld [vmem:[%s608 + $0x18] sm:$0xf]
    %v6099 = vld [vmem:[%s608 + $0x1c] sm:$0xf]
    %v6100 = vld [vmem:[%s608 + $0x20] sm:$0xf]
    %v6101 = vld [vmem:[%s608 + $0x24] sm:$0xf]
    %v6102 = vld [vmem:[%s608 + $0x28] sm:$0xf]
    %v6103 = vld [vmem:[%s608 + $0x2c] sm:$0xf]
    %v6104 = vld [vmem:[%s608 + $0x30] sm:$0xf]
    %v6105 = vld [vmem:[%s608 + $0x34] sm:$0xf]
    %v6106 = vld [vmem:[%s608 + $0x38] sm:$0xf]
    %v6107 = vld [vmem:[%s608 + $0x3c] sm:$0xf]
    %v6108 = vrot.slane %v5892, 1
    %v6126 = vunpack.c.l.b16 %v6092
    %v6127 = vunpack.c.l.b16 %v6093
    %v6128 = vunpack.c.l.b16 %v6094
    %v6129 = vunpack.c.l.b16 %v6095
    %v6130 = vunpack.c.l.b16 %v6096
    %v6131 = vunpack.c.l.b16 %v6097
    %v6132 = vunpack.c.l.b16 %v6098
    %v6133 = vunpack.c.l.b16 %v6099
    %v6134 = vunpack.c.l.b16 %v6100
    %v6135 = vunpack.c.l.b16 %v6101
    %v6136 = vunpack.c.l.b16 %v6102
    %v6137 = vunpack.c.l.b16 %v6103
    %v6138 = vunpack.c.l.b16 %v6104
    %v6139 = vunpack.c.l.b16 %v6105
    %v6140 = vunpack.c.l.b16 %v6106
    %v6141 = vunpack.c.l.b16 %v6107
    %v6142 = vpack.c.b16 %v6127, %v6126
    %v6143 = vpack.c.b16 %v6129, %v6128
    %v6144 = vpack.c.b16 %v6131, %v6130
    %v6145 = vpack.c.b16 %v6133, %v6132
    %v6146 = vpack.c.b16 %v6135, %v6134
    %v6147 = vpack.c.b16 %v6137, %v6136
    %v6148 = vpack.c.b16 %v6139, %v6138
    %v6149 = vpack.c.b16 %v6141, %v6140
    %6158 = vmatprep.subr.bf16.mxu0 0
    %6159 = vmatpush1.bf16.msra.mxu0 %v6142
    %6160 = vmatprep.subr.bf16.mxu0 0
    %6161 = vmatpush1.bf16.msra.mxu0 %v6143
    %6162 = vmatprep.subr.bf16.mxu0 0
    %6163 = vmatpush1.bf16.msra.mxu0 %v6144
    %6164 = vmatprep.subr.bf16.mxu0 0
    %6165 = vmatpush1.bf16.msra.mxu0 %v6145
    %6166 = vmatprep.subr.bf16.mxu0 0
    %6167 = vmatpush1.bf16.msra.mxu0 %v6146
    %6168 = vmatprep.subr.bf16.mxu0 0
    %6169 = vmatpush1.bf16.msra.mxu0 %v6147
    %6170 = vmatprep.subr.bf16.mxu0 0
    %6171 = vmatpush1.bf16.msra.mxu0 %v6148
    %6172 = vmatprep.subr.bf16.mxu0 0
    %6173 = vmatpush1.bf16.msra.mxu0 %v6149
    %6174 = vmatprep.subr.bf16.mxu0 0
    %6175 = vmatpush1.bf16.msra.mxu0 0
    %6176 = vmatprep.subr.bf16.mxu0 0
    %6177 = vmatpush1.bf16.msra.mxu0 0
    %6178 = vmatprep.subr.bf16.mxu0 0
    %6179 = vmatpush1.bf16.msra.mxu0 0
    %6180 = vmatprep.subr.bf16.mxu0 0
    %6181 = vmatpush1.bf16.msra.mxu0 0
    %6182 = vmatprep.subr.bf16.mxu0 0
    %6183 = vmatpush1.bf16.msra.mxu0 0
    %6184 = vmatprep.subr.bf16.mxu0 0
    %6185 = vmatpush1.bf16.msra.mxu0 0
    %6186 = vmatprep.subr.bf16.mxu0 0
    %6187 = vmatpush1.bf16.msra.mxu0 0
    %6188 = vmatprep.subr.bf16.mxu0 0
    %6189 = vmatpush1.bf16.msra.mxu0 0
    %6190 = vmatprep.mubr.bf16.mxu0 0
    %6191 = vmatmul.mubr.bf16.gmra.mrb[0].mxu0 %v6108
    %v6192 = vpop.f32.mrb[0].mxu0
    %v6193 = vadd.f32 0.0, %v6192
    %v6194 = vpop.f32.mrb[0].mxu0
    %v6195 = vpop.f32.mrb[0].mxu0
    %v6196 = vpop.f32.mrb[0].mxu0
    %6197 = vdwg.mxu0
    %v6198 = vadd.f32 %v6091, %v6193
    %v6199 = vmul.f32 %v6198, 0.5
    %v6200 = vmul.f32 %v6198, %v6198
    %v6201 = vmul.f32 %v6200, %v6198
    %v6202 = vmul.f32 %v6201, 0.044715
    %v6203 = vadd.f32 %v6198, %v6202
    %v6204 = vmul.f32 %v6203, 0.7978846
    %v6205 = vtanh.pop %v6204
    %v6206 = vadd.f32 %v6205, 1.0
    %v6207 = vmul.f32 %v6199, %v6206
    %v6208 = vpack.c.bf16 %v6207, %v6207
    %v6209 = vld [vmem:[%s6] sm:$0xf]
    %v6210 = vld [vmem:[%s6 + $0x4] sm:$0xf]
    %v6211 = vld [vmem:[%s6 + $0x8] sm:$0xf]
    %v6212 = vld [vmem:[%s6 + $0xc] sm:$0xf]
    %v6213 = vld [vmem:[%s6 + $0x10] sm:$0xf]
    %v6214 = vld [vmem:[%s6 + $0x14] sm:$0xf]
    %v6215 = vld [vmem:[%s6 + $0x18] sm:$0xf]
    %v6216 = vld [vmem:[%s6 + $0x1c] sm:$0xf]
    %v6217 = vld [vmem:[%s6 + $0x20] sm:$0xf]
    %v6218 = vld [vmem:[%s6 + $0x24] sm:$0xf]
    %v6219 = vld [vmem:[%s6 + $0x28] sm:$0xf]
    %v6220 = vld [vmem:[%s6 + $0x2c] sm:$0xf]
    %v6221 = vld [vmem:[%s6 + $0x30] sm:$0xf]
    %v6222 = vld [vmem:[%s6 + $0x34] sm:$0xf]
    %v6223 = vld [vmem:[%s6 + $0x38] sm:$0xf]
    %v6224 = vld [vmem:[%s6 + $0x3c] sm:$0xf]
    %v6225 = vld [vmem:[%s8] sm:$0x1]
    %v6242 = vunpack.c.l.b16 %v6209
    %v6243 = vunpack.c.l.b16 %v6210
    %v6244 = vunpack.c.l.b16 %v6211
    %v6245 = vunpack.c.l.b16 %v6212
    %v6246 = vunpack.c.l.b16 %v6213
    %v6247 = vunpack.c.l.b16 %v6214
    %v6248 = vunpack.c.l.b16 %v6215
    %v6249 = vunpack.c.l.b16 %v6216
    %v6250 = vunpack.c.l.b16 %v6217
    %v6251 = vunpack.c.l.b16 %v6218
    %v6252 = vunpack.c.l.b16 %v6219
    %v6253 = vunpack.c.l.b16 %v6220
    %v6254 = vunpack.c.l.b16 %v6221
    %v6255 = vunpack.c.l.b16 %v6222
    %v6256 = vunpack.c.l.b16 %v6223
    %v6257 = vunpack.c.l.b16 %v6224
    %v6258 = vpack.c.b16 %v6243, %v6242
    %v6259 = vpack.c.b16 %v6245, %v6244
    %v6260 = vpack.c.b16 %v6247, %v6246
    %v6261 = vpack.c.b16 %v6249, %v6248
    %v6262 = vpack.c.b16 %v6251, %v6250
    %v6263 = vpack.c.b16 %v6253, %v6252
    %v6264 = vpack.c.b16 %v6255, %v6254
    %v6265 = vpack.c.b16 %v6257, %v6256
    %6274 = vmatprep.subr.bf16.mxu0 0
    %6275 = vmatpush1.bf16.msra.mxu0 %v6258
    %6276 = vmatprep.subr.bf16.mxu0 0
    %6277 = vmatpush1.bf16.msra.mxu0 %v6259
    %6278 = vmatprep.subr.bf16.mxu0 0
    %6279 = vmatpush1.bf16.msra.mxu0 %v6260
    %6280 = vmatprep.subr.bf16.mxu0 0
    %6281 = vmatpush1.bf16.msra.mxu0 %v6261
    %6282 = vmatprep.subr.bf16.mxu0 0
    %6283 = vmatpush1.bf16.msra.mxu0 %v6262
    %6284 = vmatprep.subr.bf16.mxu0 0
    %6285 = vmatpush1.bf16.msra.mxu0 %v6263
    %6286 = vmatprep.subr.bf16.mxu0 0
    %6287 = vmatpush1.bf16.msra.mxu0 %v6264
    %6288 = vmatprep.subr.bf16.mxu0 0
    %6289 = vmatpush1.bf16.msra.mxu0 %v6265
    %6290 = vmatprep.subr.bf16.mxu0 0
    %6291 = vmatpush1.bf16.msra.mxu0 0
    %6292 = vmatprep.subr.bf16.mxu0 0
    %6293 = vmatpush1.bf16.msra.mxu0 0
    %6294 = vmatprep.subr.bf16.mxu0 0
    %6295 = vmatpush1.bf16.msra.mxu0 0
    %6296 = vmatprep.subr.bf16.mxu0 0
    %6297 = vmatpush1.bf16.msra.mxu0 0
    %6298 = vmatprep.subr.bf16.mxu0 0
    %6299 = vmatpush1.bf16.msra.mxu0 0
    %6300 = vmatprep.subr.bf16.mxu0 0
    %6301 = vmatpush1.bf16.msra.mxu0 0
    %6302 = vmatprep.subr.bf16.mxu0 0
    %6303 = vmatpush1.bf16.msra.mxu0 0
    %6304 = vmatprep.subr.bf16.mxu0 0
    %6305 = vmatpush1.bf16.msra.mxu0 0
    %6306 = vmatprep.mubr.bf16.mxu0 0
    %6307 = vmatmul.mubr.bf16.gmra.mrb[0].mxu0 %v6208
    %v6308 = vpop.f32.mrb[0].mxu0
    %v6309 = vadd.f32 %v6225, %v6308
    %v6310 = vpop.f32.mrb[0].mxu0
    %v6311 = vpop.f32.mrb[0].mxu0
    %v6312 = vpop.f32.mrb[0].mxu0
    %6313 = vdwg.mxu0
    %6314 = vst [vmem:[#allocation2 + $0xd] sm:$0x1] %v6309
    %v6315 = vld [vmem:[#allocation2 + $0xa] sm:$0xf]
    %v6316 = vpack.c.bf16 %v6315, %v6315
    %v6317 = vld [vmem:[%s11] sm:$0x1]
    %v6318 = vld [vmem:[%s9] sm:$0xf]
    %v6319 = vld [vmem:[%s9 + $0x4] sm:$0xf]
    %v6320 = vld [vmem:[%s9 + $0x8] sm:$0xf]
    %v6321 = vld [vmem:[%s9 + $0xc] sm:$0xf]
    %v6322 = vld [vmem:[%s9 + $0x10] sm:$0xf]
    %v6323 = vld [vmem:[%s9 + $0x14] sm:$0xf]
    %v6324 = vld [vmem:[%s9 + $0x18] sm:$0xf]
    %v6325 = vld [vmem:[%s9 + $0x1c] sm:$0xf]
    %v6326 = vld [vmem:[%s9 + $0x20] sm:$0xf]
    %v6327 = vld [vmem:[%s9 + $0x24] sm:$0xf]
    %v6328 = vld [vmem:[%s9 + $0x28] sm:$0xf]
    %v6329 = vld [vmem:[%s9 + $0x2c] sm:$0xf]
    %v6330 = vld [vmem:[%s9 + $0x30] sm:$0xf]
    %v6331 = vld [vmem:[%s9 + $0x34] sm:$0xf]
    %v6332 = vld [vmem:[%s9 + $0x38] sm:$0xf]
    %v6333 = vld [vmem:[%s9 + $0x3c] sm:$0xf]
    %v6350 = vunpack.c.l.b16 %v6318
    %v6351 = vunpack.c.l.b16 %v6319
    %v6352 = vunpack.c.l.b16 %v6320
    %v6353 = vunpack.c.l.b16 %v6321
    %v6354 = vunpack.c.l.b16 %v6322
    %v6355 = vunpack.c.l.b16 %v6323
    %v6356 = vunpack.c.l.b16 %v6324
    %v6357 = vunpack.c.l.b16 %v6325
    %v6358 = vunpack.c.l.b16 %v6326
    %v6359 = vunpack.c.l.b16 %v6327
    %v6360 = vunpack.c.l.b16 %v6328
    %v6361 = vunpack.c.l.b16 %v6329
    %v6362 = vunpack.c.l.b16 %v6330
    %v6363 = vunpack.c.l.b16 %v6331
    %v6364 = vunpack.c.l.b16 %v6332
    %v6365 = vunpack.c.l.b16 %v6333
    %v6366 = vpack.c.b16 %v6351, %v6350
    %v6367 = vpack.c.b16 %v6353, %v6352
    %v6368 = vpack.c.b16 %v6355, %v6354
    %v6369 = vpack.c.b16 %v6357, %v6356
    %v6370 = vpack.c.b16 %v6359, %v6358
    %v6371 = vpack.c.b16 %v6361, %v6360
    %v6372 = vpack.c.b16 %v6363, %v6362
    %v6373 = vpack.c.b16 %v6365, %v6364
    %6382 = vmatprep.subr.bf16.mxu0 0
    %6383 = vmatpush1.bf16.msra.mxu0 %v6366
    %6384 = vmatprep.subr.bf16.mxu0 0
    %6385 = vmatpush1.bf16.msra.mxu0 %v6367
    %6386 = vmatprep.subr.bf16.mxu0 0
    %6387 = vmatpush1.bf16.msra.mxu0 %v6368
    %6388 = vmatprep.subr.bf16.mxu0 0
    %6389 = vmatpush1.bf16.msra.mxu0 %v6369
    %6390 = vmatprep.subr.bf16.mxu0 0
    %6391 = vmatpush1.bf16.msra.mxu0 %v6370
    %6392 = vmatprep.subr.bf16.mxu0 0
    %6393 = vmatpush1.bf16.msra.mxu0 %v6371
    %6394 = vmatprep.subr.bf16.mxu0 0
    %6395 = vmatpush1.bf16.msra.mxu0 %v6372
    %6396 = vmatprep.subr.bf16.mxu0 0
    %6397 = vmatpush1.bf16.msra.mxu0 %v6373
    %6398 = vmatprep.subr.bf16.mxu0 0
    %6399 = vmatpush1.bf16.msra.mxu0 0
    %6400 = vmatprep.subr.bf16.mxu0 0
    %6401 = vmatpush1.bf16.msra.mxu0 0
    %6402 = vmatprep.subr.bf16.mxu0 0
    %6403 = vmatpush1.bf16.msra.mxu0 0
    %6404 = vmatprep.subr.bf16.mxu0 0
    %6405 = vmatpush1.bf16.msra.mxu0 0
    %6406 = vmatprep.subr.bf16.mxu0 0
    %6407 = vmatpush1.bf16.msra.mxu0 0
    %6408 = vmatprep.subr.bf16.mxu0 0
    %6409 = vmatpush1.bf16.msra.mxu0 0
    %6410 = vmatprep.subr.bf16.mxu0 0
    %6411 = vmatpush1.bf16.msra.mxu0 0
    %6412 = vmatprep.subr.bf16.mxu0 0
    %6413 = vmatpush1.bf16.msra.mxu0 0
    %6414 = vmatprep.mubr.bf16.mxu0 0
    %6415 = vmatmul.mubr.bf16.gmra.mrb[0].mxu0 %v6316
    %v6416 = vpop.f32.mrb[0].mxu0
    %v6417 = vadd.f32 0.0, %v6416
    %v6418 = vpop.f32.mrb[0].mxu0
    %v6419 = vpop.f32.mrb[0].mxu0
    %v6420 = vpop.f32.mrb[0].mxu0
    %6421 = vdwg.mxu0
    %v6422 = vadd.f32 %v6317, %v6417
    %v6423 = vld [vmem:[%s940] sm:$0xf]
    %v6424 = vld [vmem:[%s940 + $0x4] sm:$0xf]
    %v6425 = vld [vmem:[%s940 + $0x8] sm:$0xf]
    %v6426 = vld [vmem:[%s940 + $0xc] sm:$0xf]
    %v6427 = vld [vmem:[%s940 + $0x10] sm:$0xf]
    %v6428 = vld [vmem:[%s940 + $0x14] sm:$0xf]
    %v6429 = vld [vmem:[%s940 + $0x18] sm:$0xf]
    %v6430 = vld [vmem:[%s940 + $0x1c] sm:$0xf]
    %v6431 = vld [vmem:[%s940 + $0x20] sm:$0xf]
    %v6432 = vld [vmem:[%s940 + $0x24] sm:$0xf]
    %v6433 = vld [vmem:[%s940 + $0x28] sm:$0xf]
    %v6434 = vld [vmem:[%s940 + $0x2c] sm:$0xf]
    %v6435 = vld [vmem:[%s940 + $0x30] sm:$0xf]
    %v6436 = vld [vmem:[%s940 + $0x34] sm:$0xf]
    %v6437 = vld [vmem:[%s940 + $0x38] sm:$0xf]
    %v6438 = vld [vmem:[%s940 + $0x3c] sm:$0xf]
    %v6440 = vshrl.u32 %v6316, 16
    %v6459 = vunpack.c.l.b16 %v6423
    %v6460 = vunpack.c.l.b16 %v6424
    %v6461 = vunpack.c.l.b16 %v6425
    %v6462 = vunpack.c.l.b16 %v6426
    %v6463 = vunpack.c.l.b16 %v6427
    %v6464 = vunpack.c.l.b16 %v6428
    %v6465 = vunpack.c.l.b16 %v6429
    %v6466 = vunpack.c.l.b16 %v6430
    %v6467 = vunpack.c.l.b16 %v6431
    %v6468 = vunpack.c.l.b16 %v6432
    %v6469 = vunpack.c.l.b16 %v6433
    %v6470 = vunpack.c.l.b16 %v6434
    %v6471 = vunpack.c.l.b16 %v6435
    %v6472 = vunpack.c.l.b16 %v6436
    %v6473 = vunpack.c.l.b16 %v6437
    %v6474 = vunpack.c.l.b16 %v6438
    %v6475 = vpack.c.b16 %v6460, %v6459
    %v6476 = vpack.c.b16 %v6462, %v6461
    %v6477 = vpack.c.b16 %v6464, %v6463
    %v6478 = vpack.c.b16 %v6466, %v6465
    %v6479 = vpack.c.b16 %v6468, %v6467
    %v6480 = vpack.c.b16 %v6470, %v6469
    %v6481 = vpack.c.b16 %v6472, %v6471
    %v6482 = vpack.c.b16 %v6474, %v6473
    %6491 = vmatprep.subr.bf16.mxu0 0
    %6492 = vmatpush1.bf16.msra.mxu0 %v6475
    %6493 = vmatprep.subr.bf16.mxu0 0
    %6494 = vmatpush1.bf16.msra.mxu0 %v6476
    %6495 = vmatprep.subr.bf16.mxu0 0
    %6496 = vmatpush1.bf16.msra.mxu0 %v6477
    %6497 = vmatprep.subr.bf16.mxu0 0
    %6498 = vmatpush1.bf16.msra.mxu0 %v6478
    %6499 = vmatprep.subr.bf16.mxu0 0
    %6500 = vmatpush1.bf16.msra.mxu0 %v6479
    %6501 = vmatprep.subr.bf16.mxu0 0
    %6502 = vmatpush1.bf16.msra.mxu0 %v6480
    %6503 = vmatprep.subr.bf16.mxu0 0
    %6504 = vmatpush1.bf16.msra.mxu0 %v6481
    %6505 = vmatprep.subr.bf16.mxu0 0
    %6506 = vmatpush1.bf16.msra.mxu0 %v6482
    %6507 = vmatprep.subr.bf16.mxu0 0
    %6508 = vmatpush1.bf16.msra.mxu0 0
    %6509 = vmatprep.subr.bf16.mxu0 0
    %6510 = vmatpush1.bf16.msra.mxu0 0
    %6511 = vmatprep.subr.bf16.mxu0 0
    %6512 = vmatpush1.bf16.msra.mxu0 0
    %6513 = vmatprep.subr.bf16.mxu0 0
    %6514 = vmatpush1.bf16.msra.mxu0 0
    %6515 = vmatprep.subr.bf16.mxu0 0
    %6516 = vmatpush1.bf16.msra.mxu0 0
    %6517 = vmatprep.subr.bf16.mxu0 0
    %6518 = vmatpush1.bf16.msra.mxu0 0
    %6519 = vmatprep.subr.bf16.mxu0 0
    %6520 = vmatpush1.bf16.msra.mxu0 0
    %6521 = vmatprep.subr.bf16.mxu0 0
    %6522 = vmatpush1.bf16.msra.mxu0 0
    %6523 = vmatprep.mubr.bf16.mxu0 0
    %6524 = vmatmul.mubr.bf16.gmra.mrb[0].mxu0 %v6440
    %v6525 = vpop.f32.mrb[0].mxu0
    %v6526 = vadd.f32 0.0, %v6525
    %v6527 = vpop.f32.mrb[0].mxu0
    %v6528 = vpop.f32.mrb[0].mxu0
    %v6529 = vpop.f32.mrb[0].mxu0
    %6530 = vdwg.mxu0
    %v6531 = vadd.f32 %v6422, %v6526
    %v6532 = vld [vmem:[%s1050] sm:$0xf]
    %v6533 = vld [vmem:[%s1050 + $0x4] sm:$0xf]
    %v6534 = vld [vmem:[%s1050 + $0x8] sm:$0xf]
    %v6535 = vld [vmem:[%s1050 + $0xc] sm:$0xf]
    %v6536 = vld [vmem:[%s1050 + $0x10] sm:$0xf]
    %v6537 = vld [vmem:[%s1050 + $0x14] sm:$0xf]
    %v6538 = vld [vmem:[%s1050 + $0x18] sm:$0xf]
    %v6539 = vld [vmem:[%s1050 + $0x1c] sm:$0xf]
    %v6540 = vld [vmem:[%s1050 + $0x20] sm:$0xf]
    %v6541 = vld [vmem:[%s1050 + $0x24] sm:$0xf]
    %v6542 = vld [vmem:[%s1050 + $0x28] sm:$0xf]
    %v6543 = vld [vmem:[%s1050 + $0x2c] sm:$0xf]
    %v6544 = vld [vmem:[%s1050 + $0x30] sm:$0xf]
    %v6545 = vld [vmem:[%s1050 + $0x34] sm:$0xf]
    %v6546 = vld [vmem:[%s1050 + $0x38] sm:$0xf]
    %v6547 = vld [vmem:[%s1050 + $0x3c] sm:$0xf]
    %v6549 = vrot.slane %v6316, 1
    %v6567 = vunpack.c.l.b16 %v6532
    %v6568 = vunpack.c.l.b16 %v6533
    %v6569 = vunpack.c.l.b16 %v6534
    %v6570 = vunpack.c.l.b16 %v6535
    %v6571 = vunpack.c.l.b16 %v6536
    %v6572 = vunpack.c.l.b16 %v6537
    %v6573 = vunpack.c.l.b16 %v6538
    %v6574 = vunpack.c.l.b16 %v6539
    %v6575 = vunpack.c.l.b16 %v6540
    %v6576 = vunpack.c.l.b16 %v6541
    %v6577 = vunpack.c.l.b16 %v6542
    %v6578 = vunpack.c.l.b16 %v6543
    %v6579 = vunpack.c.l.b16 %v6544
    %v6580 = vunpack.c.l.b16 %v6545
    %v6581 = vunpack.c.l.b16 %v6546
    %v6582 = vunpack.c.l.b16 %v6547
    %v6583 = vpack.c.b16 %v6568, %v6567
    %v6584 = vpack.c.b16 %v6570, %v6569
    %v6585 = vpack.c.b16 %v6572, %v6571
    %v6586 = vpack.c.b16 %v6574, %v6573
    %v6587 = vpack.c.b16 %v6576, %v6575
    %v6588 = vpack.c.b16 %v6578, %v6577
    %v6589 = vpack.c.b16 %v6580, %v6579
    %v6590 = vpack.c.b16 %v6582, %v6581
    %6599 = vmatprep.subr.bf16.mxu0 0
    %6600 = vmatpush1.bf16.msra.mxu0 %v6583
    %6601 = vmatprep.subr.bf16.mxu0 0
    %6602 = vmatpush1.bf16.msra.mxu0 %v6584
    %6603 = vmatprep.subr.bf16.mxu0 0
    %6604 = vmatpush1.bf16.msra.mxu0 %v6585
    %6605 = vmatprep.subr.bf16.mxu0 0
    %6606 = vmatpush1.bf16.msra.mxu0 %v6586
    %6607 = vmatprep.subr.bf16.mxu0 0
    %6608 = vmatpush1.bf16.msra.mxu0 %v6587
    %6609 = vmatprep.subr.bf16.mxu0 0
    %6610 = vmatpush1.bf16.msra.mxu0 %v6588
    %6611 = vmatprep.subr.bf16.mxu0 0
    %6612 = vmatpush1.bf16.msra.mxu0 %v6589
    %6613 = vmatprep.subr.bf16.mxu0 0
    %6614 = vmatpush1.bf16.msra.mxu0 %v6590
    %6615 = vmatprep.subr.bf16.mxu0 0
    %6616 = vmatpush1.bf16.msra.mxu0 0
    %6617 = vmatprep.subr.bf16.mxu0 0
    %6618 = vmatpush1.bf16.msra.mxu0 0
    %6619 = vmatprep.subr.bf16.mxu0 0
    %6620 = vmatpush1.bf16.msra.mxu0 0
    %6621 = vmatprep.subr.bf16.mxu0 0
    %6622 = vmatpush1.bf16.msra.mxu0 0
    %6623 = vmatprep.subr.bf16.mxu0 0
    %6624 = vmatpush1.bf16.msra.mxu0 0
    %6625 = vmatprep.subr.bf16.mxu0 0
    %6626 = vmatpush1.bf16.msra.mxu0 0
    %6627 = vmatprep.subr.bf16.mxu0 0
    %6628 = vmatpush1.bf16.msra.mxu0 0
    %6629 = vmatprep.subr.bf16.mxu0 0
    %6630 = vmatpush1.bf16.msra.mxu0 0
    %6631 = vmatprep.mubr.bf16.mxu0 0
    %6632 = vmatmul.mubr.bf16.gmra.mrb[0].mxu0 %v6549
    %v6633 = vpop.f32.mrb[0].mxu0
    %v6634 = vadd.f32 0.0, %v6633
    %v6635 = vpop.f32.mrb[0].mxu0
    %v6636 = vpop.f32.mrb[0].mxu0
    %v6637 = vpop.f32.mrb[0].mxu0
    %6638 = vdwg.mxu0
    %v6639 = vadd.f32 %v6531, %v6634
    %v6640 = vld [vmem:[%s1159] sm:$0xf]
    %v6641 = vld [vmem:[%s1159 + $0x4] sm:$0xf]
    %v6642 = vld [vmem:[%s1159 + $0x8] sm:$0xf]
    %v6643 = vld [vmem:[%s1159 + $0xc] sm:$0xf]
    %v6644 = vld [vmem:[%s1159 + $0x10] sm:$0xf]
    %v6645 = vld [vmem:[%s1159 + $0x14] sm:$0xf]
    %v6646 = vld [vmem:[%s1159 + $0x18] sm:$0xf]
    %v6647 = vld [vmem:[%s1159 + $0x1c] sm:$0xf]
    %v6648 = vld [vmem:[%s1159 + $0x20] sm:$0xf]
    %v6649 = vld [vmem:[%s1159 + $0x24] sm:$0xf]
    %v6650 = vld [vmem:[%s1159 + $0x28] sm:$0xf]
    %v6651 = vld [vmem:[%s1159 + $0x2c] sm:$0xf]
    %v6652 = vld [vmem:[%s1159 + $0x30] sm:$0xf]
    %v6653 = vld [vmem:[%s1159 + $0x34] sm:$0xf]
    %v6654 = vld [vmem:[%s1159 + $0x38] sm:$0xf]
    %v6655 = vld [vmem:[%s1159 + $0x3c] sm:$0xf]
    %v6656 = vrot.slane %v6440, 1
    %v6674 = vunpack.c.l.b16 %v6640
    %v6675 = vunpack.c.l.b16 %v6641
    %v6676 = vunpack.c.l.b16 %v6642
    %v6677 = vunpack.c.l.b16 %v6643
    %v6678 = vunpack.c.l.b16 %v6644
    %v6679 = vunpack.c.l.b16 %v6645
    %v6680 = vunpack.c.l.b16 %v6646
    %v6681 = vunpack.c.l.b16 %v6647
    %v6682 = vunpack.c.l.b16 %v6648
    %v6683 = vunpack.c.l.b16 %v6649
    %v6684 = vunpack.c.l.b16 %v6650
    %v6685 = vunpack.c.l.b16 %v6651
    %v6686 = vunpack.c.l.b16 %v6652
    %v6687 = vunpack.c.l.b16 %v6653
    %v6688 = vunpack.c.l.b16 %v6654
    %v6689 = vunpack.c.l.b16 %v6655
    %v6690 = vpack.c.b16 %v6675, %v6674
    %v6691 = vpack.c.b16 %v6677, %v6676
    %v6692 = vpack.c.b16 %v6679, %v6678
    %v6693 = vpack.c.b16 %v6681, %v6680
    %v6694 = vpack.c.b16 %v6683, %v6682
    %v6695 = vpack.c.b16 %v6685, %v6684
    %v6696 = vpack.c.b16 %v6687, %v6686
    %v6697 = vpack.c.b16 %v6689, %v6688
    %6706 = vmatprep.subr.bf16.mxu0 0
    %6707 = vmatpush1.bf16.msra.mxu0 %v6690
    %6708 = vmatprep.subr.bf16.mxu0 0
    %6709 = vmatpush1.bf16.msra.mxu0 %v6691
    %6710 = vmatprep.subr.bf16.mxu0 0
    %6711 = vmatpush1.bf16.msra.mxu0 %v6692
    %6712 = vmatprep.subr.bf16.mxu0 0
    %6713 = vmatpush1.bf16.msra.mxu0 %v6693
    %6714 = vmatprep.subr.bf16.mxu0 0
    %6715 = vmatpush1.bf16.msra.mxu0 %v6694
    %6716 = vmatprep.subr.bf16.mxu0 0
    %6717 = vmatpush1.bf16.msra.mxu0 %v6695
    %6718 = vmatprep.subr.bf16.mxu0 0
    %6719 = vmatpush1.bf16.msra.mxu0 %v6696
    %6720 = vmatprep.subr.bf16.mxu0 0
    %6721 = vmatpush1.bf16.msra.mxu0 %v6697
    %6722 = vmatprep.subr.bf16.mxu0 0
    %6723 = vmatpush1.bf16.msra.mxu0 0
    %6724 = vmatprep.subr.bf16.mxu0 0
    %6725 = vmatpush1.bf16.msra.mxu0 0
    %6726 = vmatprep.subr.bf16.mxu0 0
    %6727 = vmatpush1.bf16.msra.mxu0 0
    %6728 = vmatprep.subr.bf16.mxu0 0
    %6729 = vmatpush1.bf16.msra.mxu0 0
    %6730 = vmatprep.subr.bf16.mxu0 0
    %6731 = vmatpush1.bf16.msra.mxu0 0
    %6732 = vmatprep.subr.bf16.mxu0 0
    %6733 = vmatpush1.bf16.msra.mxu0 0
    %6734 = vmatprep.subr.bf16.mxu0 0
    %6735 = vmatpush1.bf16.msra.mxu0 0
    %6736 = vmatprep.subr.bf16.mxu0 0
    %6737 = vmatpush1.bf16.msra.mxu0 0
    %6738 = vmatprep.mubr.bf16.mxu0 0
    %6739 = vmatmul.mubr.bf16.gmra.mrb[0].mxu0 %v6656
    %v6740 = vpop.f32.mrb[0].mxu0
    %v6741 = vadd.f32 0.0, %v6740
    %v6742 = vpop.f32.mrb[0].mxu0
    %v6743 = vpop.f32.mrb[0].mxu0
    %v6744 = vpop.f32.mrb[0].mxu0
    %6745 = vdwg.mxu0
    %v6746 = vadd.f32 %v6639, %v6741
    %v6747 = vmul.f32 %v6746, 0.5
    %v6748 = vmul.f32 %v6746, %v6746
    %v6749 = vmul.f32 %v6748, %v6746
    %v6750 = vmul.f32 %v6749, 0.044715
    %v6751 = vadd.f32 %v6746, %v6750
    %v6752 = vmul.f32 %v6751, 0.7978846
    %v6753 = vtanh.pop %v6752
    %v6754 = vadd.f32 %v6753, 1.0
    %v6755 = vmul.f32 %v6747, %v6754
    %v6756 = vpack.c.bf16 %v6755, %v6755
    %v6757 = vld [vmem:[%s10] sm:$0xf]
    %v6758 = vld [vmem:[%s10 + $0x4] sm:$0xf]
    %v6759 = vld [vmem:[%s10 + $0x8] sm:$0xf]
    %v6760 = vld [vmem:[%s10 + $0xc] sm:$0xf]
    %v6761 = vld [vmem:[%s10 + $0x10] sm:$0xf]
    %v6762 = vld [vmem:[%s10 + $0x14] sm:$0xf]
    %v6763 = vld [vmem:[%s10 + $0x18] sm:$0xf]
    %v6764 = vld [vmem:[%s10 + $0x1c] sm:$0xf]
    %v6765 = vld [vmem:[%s10 + $0x20] sm:$0xf]
    %v6766 = vld [vmem:[%s10 + $0x24] sm:$0xf]
    %v6767 = vld [vmem:[%s10 + $0x28] sm:$0xf]
    %v6768 = vld [vmem:[%s10 + $0x2c] sm:$0xf]
    %v6769 = vld [vmem:[%s10 + $0x30] sm:$0xf]
    %v6770 = vld [vmem:[%s10 + $0x34] sm:$0xf]
    %v6771 = vld [vmem:[%s10 + $0x38] sm:$0xf]
    %v6772 = vld [vmem:[%s10 + $0x3c] sm:$0xf]
    %v6773 = vld [vmem:[%s12] sm:$0x1]
    %v6790 = vunpack.c.l.b16 %v6757
    %v6791 = vunpack.c.l.b16 %v6758
    %v6792 = vunpack.c.l.b16 %v6759
    %v6793 = vunpack.c.l.b16 %v6760
    %v6794 = vunpack.c.l.b16 %v6761
    %v6795 = vunpack.c.l.b16 %v6762
    %v6796 = vunpack.c.l.b16 %v6763
    %v6797 = vunpack.c.l.b16 %v6764
    %v6798 = vunpack.c.l.b16 %v6765
    %v6799 = vunpack.c.l.b16 %v6766
    %v6800 = vunpack.c.l.b16 %v6767
    %v6801 = vunpack.c.l.b16 %v6768
    %v6802 = vunpack.c.l.b16 %v6769
    %v6803 = vunpack.c.l.b16 %v6770
    %v6804 = vunpack.c.l.b16 %v6771
    %v6805 = vunpack.c.l.b16 %v6772
    %v6806 = vpack.c.b16 %v6791, %v6790
    %v6807 = vpack.c.b16 %v6793, %v6792
    %v6808 = vpack.c.b16 %v6795, %v6794
    %v6809 = vpack.c.b16 %v6797, %v6796
    %v6810 = vpack.c.b16 %v6799, %v6798
    %v6811 = vpack.c.b16 %v6801, %v6800
    %v6812 = vpack.c.b16 %v6803, %v6802
    %v6813 = vpack.c.b16 %v6805, %v6804
    %6822 = vmatprep.subr.bf16.mxu0 0
    %6823 = vmatpush1.bf16.msra.mxu0 %v6806
    %6824 = vmatprep.subr.bf16.mxu0 0
    %6825 = vmatpush1.bf16.msra.mxu0 %v6807
    %6826 = vmatprep.subr.bf16.mxu0 0
    %6827 = vmatpush1.bf16.msra.mxu0 %v6808
    %6828 = vmatprep.subr.bf16.mxu0 0
    %6829 = vmatpush1.bf16.msra.mxu0 %v6809
    %6830 = vmatprep.subr.bf16.mxu0 0
    %6831 = vmatpush1.bf16.msra.mxu0 %v6810
    %6832 = vmatprep.subr.bf16.mxu0 0
    %6833 = vmatpush1.bf16.msra.mxu0 %v6811
    %6834 = vmatprep.subr.bf16.mxu0 0
    %6835 = vmatpush1.bf16.msra.mxu0 %v6812
    %6836 = vmatprep.subr.bf16.mxu0 0
    %6837 = vmatpush1.bf16.msra.mxu0 %v6813
    %6838 = vmatprep.subr.bf16.mxu0 0
    %6839 = vmatpush1.bf16.msra.mxu0 0
    %6840 = vmatprep.subr.bf16.mxu0 0
    %6841 = vmatpush1.bf16.msra.mxu0 0
    %6842 = vmatprep.subr.bf16.mxu0 0
    %6843 = vmatpush1.bf16.msra.mxu0 0
    %6844 = vmatprep.subr.bf16.mxu0 0
    %6845 = vmatpush1.bf16.msra.mxu0 0
    %6846 = vmatprep.subr.bf16.mxu0 0
    %6847 = vmatpush1.bf16.msra.mxu0 0
    %6848 = vmatprep.subr.bf16.mxu0 0
    %6849 = vmatpush1.bf16.msra.mxu0 0
    %6850 = vmatprep.subr.bf16.mxu0 0
    %6851 = vmatpush1.bf16.msra.mxu0 0
    %6852 = vmatprep.subr.bf16.mxu0 0
    %6853 = vmatpush1.bf16.msra.mxu0 0
    %6854 = vmatprep.mubr.bf16.mxu0 0
    %6855 = vmatmul.mubr.bf16.gmra.mrb[0].mxu0 %v6756
    %v6856 = vpop.f32.mrb[0].mxu0
    %v6857 = vadd.f32 %v6773, %v6856
    %v6858 = vpop.f32.mrb[0].mxu0
    %v6859 = vpop.f32.mrb[0].mxu0
    %v6860 = vpop.f32.mrb[0].mxu0
    %6861 = vdwg.mxu0
    %6862 = vst [vmem:[#allocation3 + $0x5] sm:$0x1] %v6857
    %v6863 = vld [vmem:[#allocation2 + $0x6] sm:$0xf]
    %v6864 = vpack.c.bf16 %v6863, %v6863
    %v6865 = vld [vmem:[%s7] sm:$0x1]
    %v6866 = vld [vmem:[%s5] sm:$0xf]
    %v6867 = vld [vmem:[%s5 + $0x4] sm:$0xf]
    %v6868 = vld [vmem:[%s5 + $0x8] sm:$0xf]
    %v6869 = vld [vmem:[%s5 + $0xc] sm:$0xf]
    %v6870 = vld [vmem:[%s5 + $0x10] sm:$0xf]
    %v6871 = vld [vmem:[%s5 + $0x14] sm:$0xf]
    %v6872 = vld [vmem:[%s5 + $0x18] sm:$0xf]
    %v6873 = vld [vmem:[%s5 + $0x1c] sm:$0xf]
    %v6874 = vld [vmem:[%s5 + $0x20] sm:$0xf]
    %v6875 = vld [vmem:[%s5 + $0x24] sm:$0xf]
    %v6876 = vld [vmem:[%s5 + $0x28] sm:$0xf]
    %v6877 = vld [vmem:[%s5 + $0x2c] sm:$0xf]
    %v6878 = vld [vmem:[%s5 + $0x30] sm:$0xf]
    %v6879 = vld [vmem:[%s5 + $0x34] sm:$0xf]
    %v6880 = vld [vmem:[%s5 + $0x38] sm:$0xf]
    %v6881 = vld [vmem:[%s5 + $0x3c] sm:$0xf]
    %v6898 = vunpack.c.l.b16 %v6866
    %v6899 = vunpack.c.l.b16 %v6867
    %v6900 = vunpack.c.l.b16 %v6868
    %v6901 = vunpack.c.l.b16 %v6869
    %v6902 = vunpack.c.l.b16 %v6870
    %v6903 = vunpack.c.l.b16 %v6871
    %v6904 = vunpack.c.l.b16 %v6872
    %v6905 = vunpack.c.l.b16 %v6873
    %v6906 = vunpack.c.l.b16 %v6874
    %v6907 = vunpack.c.l.b16 %v6875
    %v6908 = vunpack.c.l.b16 %v6876
    %v6909 = vunpack.c.l.b16 %v6877
    %v6910 = vunpack.c.l.b16 %v6878
    %v6911 = vunpack.c.l.b16 %v6879
    %v6912 = vunpack.c.l.b16 %v6880
    %v6913 = vunpack.c.l.b16 %v6881
    %v6914 = vpack.c.b16 %v6899, %v6898
    %v6915 = vpack.c.b16 %v6901, %v6900
    %v6916 = vpack.c.b16 %v6903, %v6902
    %v6917 = vpack.c.b16 %v6905, %v6904
    %v6918 = vpack.c.b16 %v6907, %v6906
    %v6919 = vpack.c.b16 %v6909, %v6908
    %v6920 = vpack.c.b16 %v6911, %v6910
    %v6921 = vpack.c.b16 %v6913, %v6912
    %6930 = vmatprep.subr.bf16.mxu0 0
    %6931 = vmatpush1.bf16.msra.mxu0 %v6914
    %6932 = vmatprep.subr.bf16.mxu0 0
    %6933 = vmatpush1.bf16.msra.mxu0 %v6915
    %6934 = vmatprep.subr.bf16.mxu0 0
    %6935 = vmatpush1.bf16.msra.mxu0 %v6916
    %6936 = vmatprep.subr.bf16.mxu0 0
    %6937 = vmatpush1.bf16.msra.mxu0 %v6917
    %6938 = vmatprep.subr.bf16.mxu0 0
    %6939 = vmatpush1.bf16.msra.mxu0 %v6918
    %6940 = vmatprep.subr.bf16.mxu0 0
    %6941 = vmatpush1.bf16.msra.mxu0 %v6919
    %6942 = vmatprep.subr.bf16.mxu0 0
    %6943 = vmatpush1.bf16.msra.mxu0 %v6920
    %6944 = vmatprep.subr.bf16.mxu0 0
    %6945 = vmatpush1.bf16.msra.mxu0 %v6921
    %6946 = vmatprep.subr.bf16.mxu0 0
    %6947 = vmatpush1.bf16.msra.mxu0 0
    %6948 = vmatprep.subr.bf16.mxu0 0
    %6949 = vmatpush1.bf16.msra.mxu0 0
    %6950 = vmatprep.subr.bf16.mxu0 0
    %6951 = vmatpush1.bf16.msra.mxu0 0
    %6952 = vmatprep.subr.bf16.mxu0 0
    %6953 = vmatpush1.bf16.msra.mxu0 0
    %6954 = vmatprep.subr.bf16.mxu0 0
    %6955 = vmatpush1.bf16.msra.mxu0 0
    %6956 = vmatprep.subr.bf16.mxu0 0
    %6957 = vmatpush1.bf16.msra.mxu0 0
    %6958 = vmatprep.subr.bf16.mxu0 0
    %6959 = vmatpush1.bf16.msra.mxu0 0
    %6960 = vmatprep.subr.bf16.mxu0 0
    %6961 = vmatpush1.bf16.msra.mxu0 0
    %6962 = vmatprep.mubr.bf16.mxu0 0
    %6963 = vmatmul.mubr.bf16.gmra.mrb[0].mxu0 %v6864
    %v6964 = vpop.f32.mrb[0].mxu0
    %v6965 = vadd.f32 0.0, %v6964
    %v6966 = vpop.f32.mrb[0].mxu0
    %v6967 = vpop.f32.mrb[0].mxu0
    %v6968 = vpop.f32.mrb[0].mxu0
    %6969 = vdwg.mxu0
    %v6970 = vadd.f32 %v6865, %v6965
    %v6971 = vld [vmem:[%s389] sm:$0xf]
    %v6972 = vld [vmem:[%s389 + $0x4] sm:$0xf]
    %v6973 = vld [vmem:[%s389 + $0x8] sm:$0xf]
    %v6974 = vld [vmem:[%s389 + $0xc] sm:$0xf]
    %v6975 = vld [vmem:[%s389 + $0x10] sm:$0xf]
    %v6976 = vld [vmem:[%s389 + $0x14] sm:$0xf]
    %v6977 = vld [vmem:[%s389 + $0x18] sm:$0xf]
    %v6978 = vld [vmem:[%s389 + $0x1c] sm:$0xf]
    %v6979 = vld [vmem:[%s389 + $0x20] sm:$0xf]
    %v6980 = vld [vmem:[%s389 + $0x24] sm:$0xf]
    %v6981 = vld [vmem:[%s389 + $0x28] sm:$0xf]
    %v6982 = vld [vmem:[%s389 + $0x2c] sm:$0xf]
    %v6983 = vld [vmem:[%s389 + $0x30] sm:$0xf]
    %v6984 = vld [vmem:[%s389 + $0x34] sm:$0xf]
    %v6985 = vld [vmem:[%s389 + $0x38] sm:$0xf]
    %v6986 = vld [vmem:[%s389 + $0x3c] sm:$0xf]
    %v6988 = vshrl.u32 %v6864, 16
    %v7007 = vunpack.c.l.b16 %v6971
    %v7008 = vunpack.c.l.b16 %v6972
    %v7009 = vunpack.c.l.b16 %v6973
    %v7010 = vunpack.c.l.b16 %v6974
    %v7011 = vunpack.c.l.b16 %v6975
    %v7012 = vunpack.c.l.b16 %v6976
    %v7013 = vunpack.c.l.b16 %v6977
    %v7014 = vunpack.c.l.b16 %v6978
    %v7015 = vunpack.c.l.b16 %v6979
    %v7016 = vunpack.c.l.b16 %v6980
    %v7017 = vunpack.c.l.b16 %v6981
    %v7018 = vunpack.c.l.b16 %v6982
    %v7019 = vunpack.c.l.b16 %v6983
    %v7020 = vunpack.c.l.b16 %v6984
    %v7021 = vunpack.c.l.b16 %v6985
    %v7022 = vunpack.c.l.b16 %v6986
    %v7023 = vpack.c.b16 %v7008, %v7007
    %v7024 = vpack.c.b16 %v7010, %v7009
    %v7025 = vpack.c.b16 %v7012, %v7011
    %v7026 = vpack.c.b16 %v7014, %v7013
    %v7027 = vpack.c.b16 %v7016, %v7015
    %v7028 = vpack.c.b16 %v7018, %v7017
    %v7029 = vpack.c.b16 %v7020, %v7019
    %v7030 = vpack.c.b16 %v7022, %v7021
    %7039 = vmatprep.subr.bf16.mxu0 0
    %7040 = vmatpush1.bf16.msra.mxu0 %v7023
    %7041 = vmatprep.subr.bf16.mxu0 0
    %7042 = vmatpush1.bf16.msra.mxu0 %v7024
    %7043 = vmatprep.subr.bf16.mxu0 0
    %7044 = vmatpush1.bf16.msra.mxu0 %v7025
    %7045 = vmatprep.subr.bf16.mxu0 0
    %7046 = vmatpush1.bf16.msra.mxu0 %v7026
    %7047 = vmatprep.subr.bf16.mxu0 0
    %7048 = vmatpush1.bf16.msra.mxu0 %v7027
    %7049 = vmatprep.subr.bf16.mxu0 0
    %7050 = vmatpush1.bf16.msra.mxu0 %v7028
    %7051 = vmatprep.subr.bf16.mxu0 0
    %7052 = vmatpush1.bf16.msra.mxu0 %v7029
    %7053 = vmatprep.subr.bf16.mxu0 0
    %7054 = vmatpush1.bf16.msra.mxu0 %v7030
    %7055 = vmatprep.subr.bf16.mxu0 0
    %7056 = vmatpush1.bf16.msra.mxu0 0
    %7057 = vmatprep.subr.bf16.mxu0 0
    %7058 = vmatpush1.bf16.msra.mxu0 0
    %7059 = vmatprep.subr.bf16.mxu0 0
    %7060 = vmatpush1.bf16.msra.mxu0 0
    %7061 = vmatprep.subr.bf16.mxu0 0
    %7062 = vmatpush1.bf16.msra.mxu0 0
    %7063 = vmatprep.subr.bf16.mxu0 0
    %7064 = vmatpush1.bf16.msra.mxu0 0
    %7065 = vmatprep.subr.bf16.mxu0 0
    %7066 = vmatpush1.bf16.msra.mxu0 0
    %7067 = vmatprep.subr.bf16.mxu0 0
    %7068 = vmatpush1.bf16.msra.mxu0 0
    %7069 = vmatprep.subr.bf16.mxu0 0
    %7070 = vmatpush1.bf16.msra.mxu0 0
    %7071 = vmatprep.mubr.bf16.mxu0 0
    %7072 = vmatmul.mubr.bf16.gmra.mrb[0].mxu0 %v6988
    %v7073 = vpop.f32.mrb[0].mxu0
    %v7074 = vadd.f32 0.0, %v7073
    %v7075 = vpop.f32.mrb[0].mxu0
    %v7076 = vpop.f32.mrb[0].mxu0
    %v7077 = vpop.f32.mrb[0].mxu0
    %7078 = vdwg.mxu0
    %v7079 = vadd.f32 %v6970, %v7074
    %v7080 = vld [vmem:[%s499] sm:$0xf]
    %v7081 = vld [vmem:[%s499 + $0x4] sm:$0xf]
    %v7082 = vld [vmem:[%s499 + $0x8] sm:$0xf]
    %v7083 = vld [vmem:[%s499 + $0xc] sm:$0xf]
    %v7084 = vld [vmem:[%s499 + $0x10] sm:$0xf]
    %v7085 = vld [vmem:[%s499 + $0x14] sm:$0xf]
    %v7086 = vld [vmem:[%s499 + $0x18] sm:$0xf]
    %v7087 = vld [vmem:[%s499 + $0x1c] sm:$0xf]
    %v7088 = vld [vmem:[%s499 + $0x20] sm:$0xf]
    %v7089 = vld [vmem:[%s499 + $0x24] sm:$0xf]
    %v7090 = vld [vmem:[%s499 + $0x28] sm:$0xf]
    %v7091 = vld [vmem:[%s499 + $0x2c] sm:$0xf]
    %v7092 = vld [vmem:[%s499 + $0x30] sm:$0xf]
    %v7093 = vld [vmem:[%s499 + $0x34] sm:$0xf]
    %v7094 = vld [vmem:[%s499 + $0x38] sm:$0xf]
    %v7095 = vld [vmem:[%s499 + $0x3c] sm:$0xf]
    %v7097 = vrot.slane %v6864, 1
    %v7115 = vunpack.c.l.b16 %v7080
    %v7116 = vunpack.c.l.b16 %v7081
    %v7117 = vunpack.c.l.b16 %v7082
    %v7118 = vunpack.c.l.b16 %v7083
    %v7119 = vunpack.c.l.b16 %v7084
    %v7120 = vunpack.c.l.b16 %v7085
    %v7121 = vunpack.c.l.b16 %v7086
    %v7122 = vunpack.c.l.b16 %v7087
    %v7123 = vunpack.c.l.b16 %v7088
    %v7124 = vunpack.c.l.b16 %v7089
    %v7125 = vunpack.c.l.b16 %v7090
    %v7126 = vunpack.c.l.b16 %v7091
    %v7127 = vunpack.c.l.b16 %v7092
    %v7128 = vunpack.c.l.b16 %v7093
    %v7129 = vunpack.c.l.b16 %v7094
    %v7130 = vunpack.c.l.b16 %v7095
    %v7131 = vpack.c.b16 %v7116, %v7115
    %v7132 = vpack.c.b16 %v7118, %v7117
    %v7133 = vpack.c.b16 %v7120, %v7119
    %v7134 = vpack.c.b16 %v7122, %v7121
    %v7135 = vpack.c.b16 %v7124, %v7123
    %v7136 = vpack.c.b16 %v7126, %v7125
    %v7137 = vpack.c.b16 %v7128, %v7127
    %v7138 = vpack.c.b16 %v7130, %v7129
    %7147 = vmatprep.subr.bf16.mxu0 0
    %7148 = vmatpush1.bf16.msra.mxu0 %v7131
    %7149 = vmatprep.subr.bf16.mxu0 0
    %7150 = vmatpush1.bf16.msra.mxu0 %v7132
    %7151 = vmatprep.subr.bf16.mxu0 0
    %7152 = vmatpush1.bf16.msra.mxu0 %v7133
    %7153 = vmatprep.subr.bf16.mxu0 0
    %7154 = vmatpush1.bf16.msra.mxu0 %v7134
    %7155 = vmatprep.subr.bf16.mxu0 0
    %7156 = vmatpush1.bf16.msra.mxu0 %v7135
    %7157 = vmatprep.subr.bf16.mxu0 0
    %7158 = vmatpush1.bf16.msra.mxu0 %v7136
    %7159 = vmatprep.subr.bf16.mxu0 0
    %7160 = vmatpush1.bf16.msra.mxu0 %v7137
    %7161 = vmatprep.subr.bf16.mxu0 0
    %7162 = vmatpush1.bf16.msra.mxu0 %v7138
    %7163 = vmatprep.subr.bf16.mxu0 0
    %7164 = vmatpush1.bf16.msra.mxu0 0
    %7165 = vmatprep.subr.bf16.mxu0 0
    %7166 = vmatpush1.bf16.msra.mxu0 0
    %7167 = vmatprep.subr.bf16.mxu0 0
    %7168 = vmatpush1.bf16.msra.mxu0 0
    %7169 = vmatprep.subr.bf16.mxu0 0
    %7170 = vmatpush1.bf16.msra.mxu0 0
    %7171 = vmatprep.subr.bf16.mxu0 0
    %7172 = vmatpush1.bf16.msra.mxu0 0
    %7173 = vmatprep.subr.bf16.mxu0 0
    %7174 = vmatpush1.bf16.msra.mxu0 0
    %7175 = vmatprep.subr.bf16.mxu0 0
    %7176 = vmatpush1.bf16.msra.mxu0 0
    %7177 = vmatprep.subr.bf16.mxu0 0
    %7178 = vmatpush1.bf16.msra.mxu0 0
    %7179 = vmatprep.mubr.bf16.mxu0 0
    %7180 = vmatmul.mubr.bf16.gmra.mrb[0].mxu0 %v7097
    %v7181 = vpop.f32.mrb[0].mxu0
    %v7182 = vadd.f32 0.0, %v7181
    %v7183 = vpop.f32.mrb[0].mxu0
    %v7184 = vpop.f32.mrb[0].mxu0
    %v7185 = vpop.f32.mrb[0].mxu0
    %7186 = vdwg.mxu0
    %v7187 = vadd.f32 %v7079, %v7182
    %v7188 = vld [vmem:[%s608] sm:$0xf]
    %v7189 = vld [vmem:[%s608 + $0x4] sm:$0xf]
    %v7190 = vld [vmem:[%s608 + $0x8] sm:$0xf]
    %v7191 = vld [vmem:[%s608 + $0xc] sm:$0xf]
    %v7192 = vld [vmem:[%s608 + $0x10] sm:$0xf]
    %v7193 = vld [vmem:[%s608 + $0x14] sm:$0xf]
    %v7194 = vld [vmem:[%s608 + $0x18] sm:$0xf]
    %v7195 = vld [vmem:[%s608 + $0x1c] sm:$0xf]
    %v7196 = vld [vmem:[%s608 + $0x20] sm:$0xf]
    %v7197 = vld [vmem:[%s608 + $0x24] sm:$0xf]
    %v7198 = vld [vmem:[%s608 + $0x28] sm:$0xf]
    %v7199 = vld [vmem:[%s608 + $0x2c] sm:$0xf]
    %v7200 = vld [vmem:[%s608 + $0x30] sm:$0xf]
    %v7201 = vld [vmem:[%s608 + $0x34] sm:$0xf]
    %v7202 = vld [vmem:[%s608 + $0x38] sm:$0xf]
    %v7203 = vld [vmem:[%s608 + $0x3c] sm:$0xf]
    %v7204 = vrot.slane %v6988, 1
    %v7222 = vunpack.c.l.b16 %v7188
    %v7223 = vunpack.c.l.b16 %v7189
    %v7224 = vunpack.c.l.b16 %v7190
    %v7225 = vunpack.c.l.b16 %v7191
    %v7226 = vunpack.c.l.b16 %v7192
    %v7227 = vunpack.c.l.b16 %v7193
    %v7228 = vunpack.c.l.b16 %v7194
    %v7229 = vunpack.c.l.b16 %v7195
    %v7230 = vunpack.c.l.b16 %v7196
    %v7231 = vunpack.c.l.b16 %v7197
    %v7232 = vunpack.c.l.b16 %v7198
    %v7233 = vunpack.c.l.b16 %v7199
    %v7234 = vunpack.c.l.b16 %v7200
    %v7235 = vunpack.c.l.b16 %v7201
    %v7236 = vunpack.c.l.b16 %v7202
    %v7237 = vunpack.c.l.b16 %v7203
    %v7238 = vpack.c.b16 %v7223, %v7222
    %v7239 = vpack.c.b16 %v7225, %v7224
    %v7240 = vpack.c.b16 %v7227, %v7226
    %v7241 = vpack.c.b16 %v7229, %v7228
    %v7242 = vpack.c.b16 %v7231, %v7230
    %v7243 = vpack.c.b16 %v7233, %v7232
    %v7244 = vpack.c.b16 %v7235, %v7234
    %v7245 = vpack.c.b16 %v7237, %v7236
    %7254 = vmatprep.subr.bf16.mxu0 0
    %7255 = vmatpush1.bf16.msra.mxu0 %v7238
    %7256 = vmatprep.subr.bf16.mxu0 0
    %7257 = vmatpush1.bf16.msra.mxu0 %v7239
    %7258 = vmatprep.subr.bf16.mxu0 0
    %7259 = vmatpush1.bf16.msra.mxu0 %v7240
    %7260 = vmatprep.subr.bf16.mxu0 0
    %7261 = vmatpush1.bf16.msra.mxu0 %v7241
    %7262 = vmatprep.subr.bf16.mxu0 0
    %7263 = vmatpush1.bf16.msra.mxu0 %v7242
    %7264 = vmatprep.subr.bf16.mxu0 0
    %7265 = vmatpush1.bf16.msra.mxu0 %v7243
    %7266 = vmatprep.subr.bf16.mxu0 0
    %7267 = vmatpush1.bf16.msra.mxu0 %v7244
    %7268 = vmatprep.subr.bf16.mxu0 0
    %7269 = vmatpush1.bf16.msra.mxu0 %v7245
    %7270 = vmatprep.subr.bf16.mxu0 0
    %7271 = vmatpush1.bf16.msra.mxu0 0
    %7272 = vmatprep.subr.bf16.mxu0 0
    %7273 = vmatpush1.bf16.msra.mxu0 0
    %7274 = vmatprep.subr.bf16.mxu0 0
    %7275 = vmatpush1.bf16.msra.mxu0 0
    %7276 = vmatprep.subr.bf16.mxu0 0
    %7277 = vmatpush1.bf16.msra.mxu0 0
    %7278 = vmatprep.subr.bf16.mxu0 0
    %7279 = vmatpush1.bf16.msra.mxu0 0
    %7280 = vmatprep.subr.bf16.mxu0 0
    %7281 = vmatpush1.bf16.msra.mxu0 0
    %7282 = vmatprep.subr.bf16.mxu0 0
    %7283 = vmatpush1.bf16.msra.mxu0 0
    %7284 = vmatprep.subr.bf16.mxu0 0
    %7285 = vmatpush1.bf16.msra.mxu0 0
    %7286 = vmatprep.mubr.bf16.mxu0 0
    %7287 = vmatmul.mubr.bf16.gmra.mrb[0].mxu0 %v7204
    %v7288 = vpop.f32.mrb[0].mxu0
    %v7289 = vadd.f32 0.0, %v7288
    %v7290 = vpop.f32.mrb[0].mxu0
    %v7291 = vpop.f32.mrb[0].mxu0
    %v7292 = vpop.f32.mrb[0].mxu0
    %7293 = vdwg.mxu0
    %v7294 = vadd.f32 %v7187, %v7289
    %v7295 = vmul.f32 %v7294, 0.5
    %v7296 = vmul.f32 %v7294, %v7294
    %v7297 = vmul.f32 %v7296, %v7294
    %v7298 = vmul.f32 %v7297, 0.044715
    %v7299 = vadd.f32 %v7294, %v7298
    %v7300 = vmul.f32 %v7299, 0.7978846
    %v7301 = vtanh.pop %v7300
    %v7302 = vadd.f32 %v7301, 1.0
    %v7303 = vmul.f32 %v7295, %v7302
    %v7304 = vpack.c.bf16 %v7303, %v7303
    %v7305 = vld [vmem:[%s6] sm:$0xf]
    %v7306 = vld [vmem:[%s6 + $0x4] sm:$0xf]
    %v7307 = vld [vmem:[%s6 + $0x8] sm:$0xf]
    %v7308 = vld [vmem:[%s6 + $0xc] sm:$0xf]
    %v7309 = vld [vmem:[%s6 + $0x10] sm:$0xf]
    %v7310 = vld [vmem:[%s6 + $0x14] sm:$0xf]
    %v7311 = vld [vmem:[%s6 + $0x18] sm:$0xf]
    %v7312 = vld [vmem:[%s6 + $0x1c] sm:$0xf]
    %v7313 = vld [vmem:[%s6 + $0x20] sm:$0xf]
    %v7314 = vld [vmem:[%s6 + $0x24] sm:$0xf]
    %v7315 = vld [vmem:[%s6 + $0x28] sm:$0xf]
    %v7316 = vld [vmem:[%s6 + $0x2c] sm:$0xf]
    %v7317 = vld [vmem:[%s6 + $0x30] sm:$0xf]
    %v7318 = vld [vmem:[%s6 + $0x34] sm:$0xf]
    %v7319 = vld [vmem:[%s6 + $0x38] sm:$0xf]
    %v7320 = vld [vmem:[%s6 + $0x3c] sm:$0xf]
    %v7321 = vld [vmem:[%s8] sm:$0x1]
    %v7338 = vunpack.c.l.b16 %v7305
    %v7339 = vunpack.c.l.b16 %v7306
    %v7340 = vunpack.c.l.b16 %v7307
    %v7341 = vunpack.c.l.b16 %v7308
    %v7342 = vunpack.c.l.b16 %v7309
    %v7343 = vunpack.c.l.b16 %v7310
    %v7344 = vunpack.c.l.b16 %v7311
    %v7345 = vunpack.c.l.b16 %v7312
    %v7346 = vunpack.c.l.b16 %v7313
    %v7347 = vunpack.c.l.b16 %v7314
    %v7348 = vunpack.c.l.b16 %v7315
    %v7349 = vunpack.c.l.b16 %v7316
    %v7350 = vunpack.c.l.b16 %v7317
    %v7351 = vunpack.c.l.b16 %v7318
    %v7352 = vunpack.c.l.b16 %v7319
    %v7353 = vunpack.c.l.b16 %v7320
    %v7354 = vpack.c.b16 %v7339, %v7338
    %v7355 = vpack.c.b16 %v7341, %v7340
    %v7356 = vpack.c.b16 %v7343, %v7342
    %v7357 = vpack.c.b16 %v7345, %v7344
    %v7358 = vpack.c.b16 %v7347, %v7346
    %v7359 = vpack.c.b16 %v7349, %v7348
    %v7360 = vpack.c.b16 %v7351, %v7350
    %v7361 = vpack.c.b16 %v7353, %v7352
    %7370 = vmatprep.subr.bf16.mxu0 0
    %7371 = vmatpush1.bf16.msra.mxu0 %v7354
    %7372 = vmatprep.subr.bf16.mxu0 0
    %7373 = vmatpush1.bf16.msra.mxu0 %v7355
    %7374 = vmatprep.subr.bf16.mxu0 0
    %7375 = vmatpush1.bf16.msra.mxu0 %v7356
    %7376 = vmatprep.subr.bf16.mxu0 0
    %7377 = vmatpush1.bf16.msra.mxu0 %v7357
    %7378 = vmatprep.subr.bf16.mxu0 0
    %7379 = vmatpush1.bf16.msra.mxu0 %v7358
    %7380 = vmatprep.subr.bf16.mxu0 0
    %7381 = vmatpush1.bf16.msra.mxu0 %v7359
    %7382 = vmatprep.subr.bf16.mxu0 0
    %7383 = vmatpush1.bf16.msra.mxu0 %v7360
    %7384 = vmatprep.subr.bf16.mxu0 0
    %7385 = vmatpush1.bf16.msra.mxu0 %v7361
    %7386 = vmatprep.subr.bf16.mxu0 0
    %7387 = vmatpush1.bf16.msra.mxu0 0
    %7388 = vmatprep.subr.bf16.mxu0 0
    %7389 = vmatpush1.bf16.msra.mxu0 0
    %7390 = vmatprep.subr.bf16.mxu0 0
    %7391 = vmatpush1.bf16.msra.mxu0 0
    %7392 = vmatprep.subr.bf16.mxu0 0
    %7393 = vmatpush1.bf16.msra.mxu0 0
    %7394 = vmatprep.subr.bf16.mxu0 0
    %7395 = vmatpush1.bf16.msra.mxu0 0
    %7396 = vmatprep.subr.bf16.mxu0 0
    %7397 = vmatpush1.bf16.msra.mxu0 0
    %7398 = vmatprep.subr.bf16.mxu0 0
    %7399 = vmatpush1.bf16.msra.mxu0 0
    %7400 = vmatprep.subr.bf16.mxu0 0
    %7401 = vmatpush1.bf16.msra.mxu0 0
    %7402 = vmatprep.mubr.bf16.mxu0 0
    %7403 = vmatmul.mubr.bf16.gmra.mrb[0].mxu0 %v7304
    %v7404 = vpop.f32.mrb[0].mxu0
    %v7405 = vadd.f32 %v7321, %v7404
    %v7406 = vpop.f32.mrb[0].mxu0
    %v7407 = vpop.f32.mrb[0].mxu0
    %v7408 = vpop.f32.mrb[0].mxu0
    %7409 = vdwg.mxu0
    %7410 = vst [vmem:[#allocation2 + $0xe] sm:$0x1] %v7405
    %v7411 = vld [vmem:[#allocation2 + $0xb] sm:$0xf]
    %v7412 = vpack.c.bf16 %v7411, %v7411
    %v7413 = vld [vmem:[%s11] sm:$0x1]
    %v7414 = vld [vmem:[%s9] sm:$0xf]
    %v7415 = vld [vmem:[%s9 + $0x4] sm:$0xf]
    %v7416 = vld [vmem:[%s9 + $0x8] sm:$0xf]
    %v7417 = vld [vmem:[%s9 + $0xc] sm:$0xf]
    %v7418 = vld [vmem:[%s9 + $0x10] sm:$0xf]
    %v7419 = vld [vmem:[%s9 + $0x14] sm:$0xf]
    %v7420 = vld [vmem:[%s9 + $0x18] sm:$0xf]
    %v7421 = vld [vmem:[%s9 + $0x1c] sm:$0xf]
    %v7422 = vld [vmem:[%s9 + $0x20] sm:$0xf]
    %v7423 = vld [vmem:[%s9 + $0x24] sm:$0xf]
    %v7424 = vld [vmem:[%s9 + $0x28] sm:$0xf]
    %v7425 = vld [vmem:[%s9 + $0x2c] sm:$0xf]
    %v7426 = vld [vmem:[%s9 + $0x30] sm:$0xf]
    %v7427 = vld [vmem:[%s9 + $0x34] sm:$0xf]
    %v7428 = vld [vmem:[%s9 + $0x38] sm:$0xf]
    %v7429 = vld [vmem:[%s9 + $0x3c] sm:$0xf]
    %v7446 = vunpack.c.l.b16 %v7414
    %v7447 = vunpack.c.l.b16 %v7415
    %v7448 = vunpack.c.l.b16 %v7416
    %v7449 = vunpack.c.l.b16 %v7417
    %v7450 = vunpack.c.l.b16 %v7418
    %v7451 = vunpack.c.l.b16 %v7419
    %v7452 = vunpack.c.l.b16 %v7420
    %v7453 = vunpack.c.l.b16 %v7421
    %v7454 = vunpack.c.l.b16 %v7422
    %v7455 = vunpack.c.l.b16 %v7423
    %v7456 = vunpack.c.l.b16 %v7424
    %v7457 = vunpack.c.l.b16 %v7425
    %v7458 = vunpack.c.l.b16 %v7426
    %v7459 = vunpack.c.l.b16 %v7427
    %v7460 = vunpack.c.l.b16 %v7428
    %v7461 = vunpack.c.l.b16 %v7429
    %v7462 = vpack.c.b16 %v7447, %v7446
    %v7463 = vpack.c.b16 %v7449, %v7448
    %v7464 = vpack.c.b16 %v7451, %v7450
    %v7465 = vpack.c.b16 %v7453, %v7452
    %v7466 = vpack.c.b16 %v7455, %v7454
    %v7467 = vpack.c.b16 %v7457, %v7456
    %v7468 = vpack.c.b16 %v7459, %v7458
    %v7469 = vpack.c.b16 %v7461, %v7460
    %7478 = vmatprep.subr.bf16.mxu0 0
    %7479 = vmatpush1.bf16.msra.mxu0 %v7462
    %7480 = vmatprep.subr.bf16.mxu0 0
    %7481 = vmatpush1.bf16.msra.mxu0 %v7463
    %7482 = vmatprep.subr.bf16.mxu0 0
    %7483 = vmatpush1.bf16.msra.mxu0 %v7464
    %7484 = vmatprep.subr.bf16.mxu0 0
    %7485 = vmatpush1.bf16.msra.mxu0 %v7465
    %7486 = vmatprep.subr.bf16.mxu0 0
    %7487 = vmatpush1.bf16.msra.mxu0 %v7466
    %7488 = vmatprep.subr.bf16.mxu0 0
    %7489 = vmatpush1.bf16.msra.mxu0 %v7467
    %7490 = vmatprep.subr.bf16.mxu0 0
    %7491 = vmatpush1.bf16.msra.mxu0 %v7468
    %7492 = vmatprep.subr.bf16.mxu0 0
    %7493 = vmatpush1.bf16.msra.mxu0 %v7469
    %7494 = vmatprep.subr.bf16.mxu0 0
    %7495 = vmatpush1.bf16.msra.mxu0 0
    %7496 = vmatprep.subr.bf16.mxu0 0
    %7497 = vmatpush1.bf16.msra.mxu0 0
    %7498 = vmatprep.subr.bf16.mxu0 0
    %7499 = vmatpush1.bf16.msra.mxu0 0
    %7500 = vmatprep.subr.bf16.mxu0 0
    %7501 = vmatpush1.bf16.msra.mxu0 0
    %7502 = vmatprep.subr.bf16.mxu0 0
    %7503 = vmatpush1.bf16.msra.mxu0 0
    %7504 = vmatprep.subr.bf16.mxu0 0
    %7505 = vmatpush1.bf16.msra.mxu0 0
    %7506 = vmatprep.subr.bf16.mxu0 0
    %7507 = vmatpush1.bf16.msra.mxu0 0
    %7508 = vmatprep.subr.bf16.mxu0 0
    %7509 = vmatpush1.bf16.msra.mxu0 0
    %7510 = vmatprep.mubr.bf16.mxu0 0
    %7511 = vmatmul.mubr.bf16.gmra.mrb[0].mxu0 %v7412
    %v7512 = vpop.f32.mrb[0].mxu0
    %v7513 = vadd.f32 0.0, %v7512
    %v7514 = vpop.f32.mrb[0].mxu0
    %v7515 = vpop.f32.mrb[0].mxu0
    %v7516 = vpop.f32.mrb[0].mxu0
    %7517 = vdwg.mxu0
    %v7518 = vadd.f32 %v7413, %v7513
    %v7519 = vld [vmem:[%s940] sm:$0xf]
    %v7520 = vld [vmem:[%s940 + $0x4] sm:$0xf]
    %v7521 = vld [vmem:[%s940 + $0x8] sm:$0xf]
    %v7522 = vld [vmem:[%s940 + $0xc] sm:$0xf]
    %v7523 = vld [vmem:[%s940 + $0x10] sm:$0xf]
    %v7524 = vld [vmem:[%s940 + $0x14] sm:$0xf]
    %v7525 = vld [vmem:[%s940 + $0x18] sm:$0xf]
    %v7526 = vld [vmem:[%s940 + $0x1c] sm:$0xf]
    %v7527 = vld [vmem:[%s940 + $0x20] sm:$0xf]
    %v7528 = vld [vmem:[%s940 + $0x24] sm:$0xf]
    %v7529 = vld [vmem:[%s940 + $0x28] sm:$0xf]
    %v7530 = vld [vmem:[%s940 + $0x2c] sm:$0xf]
    %v7531 = vld [vmem:[%s940 + $0x30] sm:$0xf]
    %v7532 = vld [vmem:[%s940 + $0x34] sm:$0xf]
    %v7533 = vld [vmem:[%s940 + $0x38] sm:$0xf]
    %v7534 = vld [vmem:[%s940 + $0x3c] sm:$0xf]
    %v7536 = vshrl.u32 %v7412, 16
    %v7555 = vunpack.c.l.b16 %v7519
    %v7556 = vunpack.c.l.b16 %v7520
    %v7557 = vunpack.c.l.b16 %v7521
    %v7558 = vunpack.c.l.b16 %v7522
    %v7559 = vunpack.c.l.b16 %v7523
    %v7560 = vunpack.c.l.b16 %v7524
    %v7561 = vunpack.c.l.b16 %v7525
    %v7562 = vunpack.c.l.b16 %v7526
    %v7563 = vunpack.c.l.b16 %v7527
    %v7564 = vunpack.c.l.b16 %v7528
    %v7565 = vunpack.c.l.b16 %v7529
    %v7566 = vunpack.c.l.b16 %v7530
    %v7567 = vunpack.c.l.b16 %v7531
    %v7568 = vunpack.c.l.b16 %v7532
    %v7569 = vunpack.c.l.b16 %v7533
    %v7570 = vunpack.c.l.b16 %v7534
    %v7571 = vpack.c.b16 %v7556, %v7555
    %v7572 = vpack.c.b16 %v7558, %v7557
    %v7573 = vpack.c.b16 %v7560, %v7559
    %v7574 = vpack.c.b16 %v7562, %v7561
    %v7575 = vpack.c.b16 %v7564, %v7563
    %v7576 = vpack.c.b16 %v7566, %v7565
    %v7577 = vpack.c.b16 %v7568, %v7567
    %v7578 = vpack.c.b16 %v7570, %v7569
    %7587 = vmatprep.subr.bf16.mxu0 0
    %7588 = vmatpush1.bf16.msra.mxu0 %v7571
    %7589 = vmatprep.subr.bf16.mxu0 0
    %7590 = vmatpush1.bf16.msra.mxu0 %v7572
    %7591 = vmatprep.subr.bf16.mxu0 0
    %7592 = vmatpush1.bf16.msra.mxu0 %v7573
    %7593 = vmatprep.subr.bf16.mxu0 0
    %7594 = vmatpush1.bf16.msra.mxu0 %v7574
    %7595 = vmatprep.subr.bf16.mxu0 0
    %7596 = vmatpush1.bf16.msra.mxu0 %v7575
    %7597 = vmatprep.subr.bf16.mxu0 0
    %7598 = vmatpush1.bf16.msra.mxu0 %v7576
    %7599 = vmatprep.subr.bf16.mxu0 0
    %7600 = vmatpush1.bf16.msra.mxu0 %v7577
    %7601 = vmatprep.subr.bf16.mxu0 0
    %7602 = vmatpush1.bf16.msra.mxu0 %v7578
    %7603 = vmatprep.subr.bf16.mxu0 0
    %7604 = vmatpush1.bf16.msra.mxu0 0
    %7605 = vmatprep.subr.bf16.mxu0 0
    %7606 = vmatpush1.bf16.msra.mxu0 0
    %7607 = vmatprep.subr.bf16.mxu0 0
    %7608 = vmatpush1.bf16.msra.mxu0 0
    %7609 = vmatprep.subr.bf16.mxu0 0
    %7610 = vmatpush1.bf16.msra.mxu0 0
    %7611 = vmatprep.subr.bf16.mxu0 0
    %7612 = vmatpush1.bf16.msra.mxu0 0
    %7613 = vmatprep.subr.bf16.mxu0 0
    %7614 = vmatpush1.bf16.msra.mxu0 0
    %7615 = vmatprep.subr.bf16.mxu0 0
    %7616 = vmatpush1.bf16.msra.mxu0 0
    %7617 = vmatprep.subr.bf16.mxu0 0
    %7618 = vmatpush1.bf16.msra.mxu0 0
    %7619 = vmatprep.mubr.bf16.mxu0 0
    %7620 = vmatmul.mubr.bf16.gmra.mrb[0].mxu0 %v7536
    %v7621 = vpop.f32.mrb[0].mxu0
    %v7622 = vadd.f32 0.0, %v7621
    %v7623 = vpop.f32.mrb[0].mxu0
    %v7624 = vpop.f32.mrb[0].mxu0
    %v7625 = vpop.f32.mrb[0].mxu0
    %7626 = vdwg.mxu0
    %v7627 = vadd.f32 %v7518, %v7622
    %v7628 = vld [vmem:[%s1050] sm:$0xf]
    %v7629 = vld [vmem:[%s1050 + $0x4] sm:$0xf]
    %v7630 = vld [vmem:[%s1050 + $0x8] sm:$0xf]
    %v7631 = vld [vmem:[%s1050 + $0xc] sm:$0xf]
    %v7632 = vld [vmem:[%s1050 + $0x10] sm:$0xf]
    %v7633 = vld [vmem:[%s1050 + $0x14] sm:$0xf]
    %v7634 = vld [vmem:[%s1050 + $0x18] sm:$0xf]
    %v7635 = vld [vmem:[%s1050 + $0x1c] sm:$0xf]
    %v7636 = vld [vmem:[%s1050 + $0x20] sm:$0xf]
    %v7637 = vld [vmem:[%s1050 + $0x24] sm:$0xf]
    %v7638 = vld [vmem:[%s1050 + $0x28] sm:$0xf]
    %v7639 = vld [vmem:[%s1050 + $0x2c] sm:$0xf]
    %v7640 = vld [vmem:[%s1050 + $0x30] sm:$0xf]
    %v7641 = vld [vmem:[%s1050 + $0x34] sm:$0xf]
    %v7642 = vld [vmem:[%s1050 + $0x38] sm:$0xf]
    %v7643 = vld [vmem:[%s1050 + $0x3c] sm:$0xf]
    %v7645 = vrot.slane %v7412, 1
    %v7663 = vunpack.c.l.b16 %v7628
    %v7664 = vunpack.c.l.b16 %v7629
    %v7665 = vunpack.c.l.b16 %v7630
    %v7666 = vunpack.c.l.b16 %v7631
    %v7667 = vunpack.c.l.b16 %v7632
    %v7668 = vunpack.c.l.b16 %v7633
    %v7669 = vunpack.c.l.b16 %v7634
    %v7670 = vunpack.c.l.b16 %v7635
    %v7671 = vunpack.c.l.b16 %v7636
    %v7672 = vunpack.c.l.b16 %v7637
    %v7673 = vunpack.c.l.b16 %v7638
    %v7674 = vunpack.c.l.b16 %v7639
    %v7675 = vunpack.c.l.b16 %v7640
    %v7676 = vunpack.c.l.b16 %v7641
    %v7677 = vunpack.c.l.b16 %v7642
    %v7678 = vunpack.c.l.b16 %v7643
    %v7679 = vpack.c.b16 %v7664, %v7663
    %v7680 = vpack.c.b16 %v7666, %v7665
    %v7681 = vpack.c.b16 %v7668, %v7667
    %v7682 = vpack.c.b16 %v7670, %v7669
    %v7683 = vpack.c.b16 %v7672, %v7671
    %v7684 = vpack.c.b16 %v7674, %v7673
    %v7685 = vpack.c.b16 %v7676, %v7675
    %v7686 = vpack.c.b16 %v7678, %v7677
    %7695 = vmatprep.subr.bf16.mxu0 0
    %7696 = vmatpush1.bf16.msra.mxu0 %v7679
    %7697 = vmatprep.subr.bf16.mxu0 0
    %7698 = vmatpush1.bf16.msra.mxu0 %v7680
    %7699 = vmatprep.subr.bf16.mxu0 0
    %7700 = vmatpush1.bf16.msra.mxu0 %v7681
    %7701 = vmatprep.subr.bf16.mxu0 0
    %7702 = vmatpush1.bf16.msra.mxu0 %v7682
    %7703 = vmatprep.subr.bf16.mxu0 0
    %7704 = vmatpush1.bf16.msra.mxu0 %v7683
    %7705 = vmatprep.subr.bf16.mxu0 0
    %7706 = vmatpush1.bf16.msra.mxu0 %v7684
    %7707 = vmatprep.subr.bf16.mxu0 0
    %7708 = vmatpush1.bf16.msra.mxu0 %v7685
    %7709 = vmatprep.subr.bf16.mxu0 0
    %7710 = vmatpush1.bf16.msra.mxu0 %v7686
    %7711 = vmatprep.subr.bf16.mxu0 0
    %7712 = vmatpush1.bf16.msra.mxu0 0
    %7713 = vmatprep.subr.bf16.mxu0 0
    %7714 = vmatpush1.bf16.msra.mxu0 0
    %7715 = vmatprep.subr.bf16.mxu0 0
    %7716 = vmatpush1.bf16.msra.mxu0 0
    %7717 = vmatprep.subr.bf16.mxu0 0
    %7718 = vmatpush1.bf16.msra.mxu0 0
    %7719 = vmatprep.subr.bf16.mxu0 0
    %7720 = vmatpush1.bf16.msra.mxu0 0
    %7721 = vmatprep.subr.bf16.mxu0 0
    %7722 = vmatpush1.bf16.msra.mxu0 0
    %7723 = vmatprep.subr.bf16.mxu0 0
    %7724 = vmatpush1.bf16.msra.mxu0 0
    %7725 = vmatprep.subr.bf16.mxu0 0
    %7726 = vmatpush1.bf16.msra.mxu0 0
    %7727 = vmatprep.mubr.bf16.mxu0 0
    %7728 = vmatmul.mubr.bf16.gmra.mrb[0].mxu0 %v7645
    %v7729 = vpop.f32.mrb[0].mxu0
    %v7730 = vadd.f32 0.0, %v7729
    %v7731 = vpop.f32.mrb[0].mxu0
    %v7732 = vpop.f32.mrb[0].mxu0
    %v7733 = vpop.f32.mrb[0].mxu0
    %7734 = vdwg.mxu0
    %v7735 = vadd.f32 %v7627, %v7730
    %v7736 = vld [vmem:[%s1159] sm:$0xf]
    %v7737 = vld [vmem:[%s1159 + $0x4] sm:$0xf]
    %v7738 = vld [vmem:[%s1159 + $0x8] sm:$0xf]
    %v7739 = vld [vmem:[%s1159 + $0xc] sm:$0xf]
    %v7740 = vld [vmem:[%s1159 + $0x10] sm:$0xf]
    %v7741 = vld [vmem:[%s1159 + $0x14] sm:$0xf]
    %v7742 = vld [vmem:[%s1159 + $0x18] sm:$0xf]
    %v7743 = vld [vmem:[%s1159 + $0x1c] sm:$0xf]
    %v7744 = vld [vmem:[%s1159 + $0x20] sm:$0xf]
    %v7745 = vld [vmem:[%s1159 + $0x24] sm:$0xf]
    %v7746 = vld [vmem:[%s1159 + $0x28] sm:$0xf]
    %v7747 = vld [vmem:[%s1159 + $0x2c] sm:$0xf]
    %v7748 = vld [vmem:[%s1159 + $0x30] sm:$0xf]
    %v7749 = vld [vmem:[%s1159 + $0x34] sm:$0xf]
    %v7750 = vld [vmem:[%s1159 + $0x38] sm:$0xf]
    %v7751 = vld [vmem:[%s1159 + $0x3c] sm:$0xf]
    %v7752 = vrot.slane %v7536, 1
    %v7770 = vunpack.c.l.b16 %v7736
    %v7771 = vunpack.c.l.b16 %v7737
    %v7772 = vunpack.c.l.b16 %v7738
    %v7773 = vunpack.c.l.b16 %v7739
    %v7774 = vunpack.c.l.b16 %v7740
    %v7775 = vunpack.c.l.b16 %v7741
    %v7776 = vunpack.c.l.b16 %v7742
    %v7777 = vunpack.c.l.b16 %v7743
    %v7778 = vunpack.c.l.b16 %v7744
    %v7779 = vunpack.c.l.b16 %v7745
    %v7780 = vunpack.c.l.b16 %v7746
    %v7781 = vunpack.c.l.b16 %v7747
    %v7782 = vunpack.c.l.b16 %v7748
    %v7783 = vunpack.c.l.b16 %v7749
    %v7784 = vunpack.c.l.b16 %v7750
    %v7785 = vunpack.c.l.b16 %v7751
    %v7786 = vpack.c.b16 %v7771, %v7770
    %v7787 = vpack.c.b16 %v7773, %v7772
    %v7788 = vpack.c.b16 %v7775, %v7774
    %v7789 = vpack.c.b16 %v7777, %v7776
    %v7790 = vpack.c.b16 %v7779, %v7778
    %v7791 = vpack.c.b16 %v7781, %v7780
    %v7792 = vpack.c.b16 %v7783, %v7782
    %v7793 = vpack.c.b16 %v7785, %v7784
    %7802 = vmatprep.subr.bf16.mxu0 0
    %7803 = vmatpush1.bf16.msra.mxu0 %v7786
    %7804 = vmatprep.subr.bf16.mxu0 0
    %7805 = vmatpush1.bf16.msra.mxu0 %v7787
    %7806 = vmatprep.subr.bf16.mxu0 0
    %7807 = vmatpush1.bf16.msra.mxu0 %v7788
    %7808 = vmatprep.subr.bf16.mxu0 0
    %7809 = vmatpush1.bf16.msra.mxu0 %v7789
    %7810 = vmatprep.subr.bf16.mxu0 0
    %7811 = vmatpush1.bf16.msra.mxu0 %v7790
    %7812 = vmatprep.subr.bf16.mxu0 0
    %7813 = vmatpush1.bf16.msra.mxu0 %v7791
    %7814 = vmatprep.subr.bf16.mxu0 0
    %7815 = vmatpush1.bf16.msra.mxu0 %v7792
    %7816 = vmatprep.subr.bf16.mxu0 0
    %7817 = vmatpush1.bf16.msra.mxu0 %v7793
    %7818 = vmatprep.subr.bf16.mxu0 0
    %7819 = vmatpush1.bf16.msra.mxu0 0
    %7820 = vmatprep.subr.bf16.mxu0 0
    %7821 = vmatpush1.bf16.msra.mxu0 0
    %7822 = vmatprep.subr.bf16.mxu0 0
    %7823 = vmatpush1.bf16.msra.mxu0 0
    %7824 = vmatprep.subr.bf16.mxu0 0
    %7825 = vmatpush1.bf16.msra.mxu0 0
    %7826 = vmatprep.subr.bf16.mxu0 0
    %7827 = vmatpush1.bf16.msra.mxu0 0
    %7828 = vmatprep.subr.bf16.mxu0 0
    %7829 = vmatpush1.bf16.msra.mxu0 0
    %7830 = vmatprep.subr.bf16.mxu0 0
    %7831 = vmatpush1.bf16.msra.mxu0 0
    %7832 = vmatprep.subr.bf16.mxu0 0
    %7833 = vmatpush1.bf16.msra.mxu0 0
    %7834 = vmatprep.mubr.bf16.mxu0 0
    %7835 = vmatmul.mubr.bf16.gmra.mrb[0].mxu0 %v7752
    %v7836 = vpop.f32.mrb[0].mxu0
    %v7837 = vadd.f32 0.0, %v7836
    %v7838 = vpop.f32.mrb[0].mxu0
    %v7839 = vpop.f32.mrb[0].mxu0
    %v7840 = vpop.f32.mrb[0].mxu0
    %7841 = vdwg.mxu0
    %v7842 = vadd.f32 %v7735, %v7837
    %v7843 = vmul.f32 %v7842, 0.5
    %v7844 = vmul.f32 %v7842, %v7842
    %v7845 = vmul.f32 %v7844, %v7842
    %v7846 = vmul.f32 %v7845, 0.044715
    %v7847 = vadd.f32 %v7842, %v7846
    %v7848 = vmul.f32 %v7847, 0.7978846
    %v7849 = vtanh.pop %v7848
    %v7850 = vadd.f32 %v7849, 1.0
    %v7851 = vmul.f32 %v7843, %v7850
    %v7852 = vpack.c.bf16 %v7851, %v7851
    %v7853 = vld [vmem:[%s10] sm:$0xf]
    %v7854 = vld [vmem:[%s10 + $0x4] sm:$0xf]
    %v7855 = vld [vmem:[%s10 + $0x8] sm:$0xf]
    %v7856 = vld [vmem:[%s10 + $0xc] sm:$0xf]
    %v7857 = vld [vmem:[%s10 + $0x10] sm:$0xf]
    %v7858 = vld [vmem:[%s10 + $0x14] sm:$0xf]
    %v7859 = vld [vmem:[%s10 + $0x18] sm:$0xf]
    %v7860 = vld [vmem:[%s10 + $0x1c] sm:$0xf]
    %v7861 = vld [vmem:[%s10 + $0x20] sm:$0xf]
    %v7862 = vld [vmem:[%s10 + $0x24] sm:$0xf]
    %v7863 = vld [vmem:[%s10 + $0x28] sm:$0xf]
    %v7864 = vld [vmem:[%s10 + $0x2c] sm:$0xf]
    %v7865 = vld [vmem:[%s10 + $0x30] sm:$0xf]
    %v7866 = vld [vmem:[%s10 + $0x34] sm:$0xf]
    %v7867 = vld [vmem:[%s10 + $0x38] sm:$0xf]
    %v7868 = vld [vmem:[%s10 + $0x3c] sm:$0xf]
    %v7869 = vld [vmem:[%s12] sm:$0x1]
    %v7886 = vunpack.c.l.b16 %v7853
    %v7887 = vunpack.c.l.b16 %v7854
    %v7888 = vunpack.c.l.b16 %v7855
    %v7889 = vunpack.c.l.b16 %v7856
    %v7890 = vunpack.c.l.b16 %v7857
    %v7891 = vunpack.c.l.b16 %v7858
    %v7892 = vunpack.c.l.b16 %v7859
    %v7893 = vunpack.c.l.b16 %v7860
    %v7894 = vunpack.c.l.b16 %v7861
    %v7895 = vunpack.c.l.b16 %v7862
    %v7896 = vunpack.c.l.b16 %v7863
    %v7897 = vunpack.c.l.b16 %v7864
    %v7898 = vunpack.c.l.b16 %v7865
    %v7899 = vunpack.c.l.b16 %v7866
    %v7900 = vunpack.c.l.b16 %v7867
    %v7901 = vunpack.c.l.b16 %v7868
    %v7902 = vpack.c.b16 %v7887, %v7886
    %v7903 = vpack.c.b16 %v7889, %v7888
    %v7904 = vpack.c.b16 %v7891, %v7890
    %v7905 = vpack.c.b16 %v7893, %v7892
    %v7906 = vpack.c.b16 %v7895, %v7894
    %v7907 = vpack.c.b16 %v7897, %v7896
    %v7908 = vpack.c.b16 %v7899, %v7898
    %v7909 = vpack.c.b16 %v7901, %v7900
    %7918 = vmatprep.subr.bf16.mxu0 0
    %7919 = vmatpush1.bf16.msra.mxu0 %v7902
    %7920 = vmatprep.subr.bf16.mxu0 0
    %7921 = vmatpush1.bf16.msra.mxu0 %v7903
    %7922 = vmatprep.subr.bf16.mxu0 0
    %7923 = vmatpush1.bf16.msra.mxu0 %v7904
    %7924 = vmatprep.subr.bf16.mxu0 0
    %7925 = vmatpush1.bf16.msra.mxu0 %v7905
    %7926 = vmatprep.subr.bf16.mxu0 0
    %7927 = vmatpush1.bf16.msra.mxu0 %v7906
    %7928 = vmatprep.subr.bf16.mxu0 0
    %7929 = vmatpush1.bf16.msra.mxu0 %v7907
    %7930 = vmatprep.subr.bf16.mxu0 0
    %7931 = vmatpush1.bf16.msra.mxu0 %v7908
    %7932 = vmatprep.subr.bf16.mxu0 0
    %7933 = vmatpush1.bf16.msra.mxu0 %v7909
    %7934 = vmatprep.subr.bf16.mxu0 0
    %7935 = vmatpush1.bf16.msra.mxu0 0
    %7936 = vmatprep.subr.bf16.mxu0 0
    %7937 = vmatpush1.bf16.msra.mxu0 0
    %7938 = vmatprep.subr.bf16.mxu0 0
    %7939 = vmatpush1.bf16.msra.mxu0 0
    %7940 = vmatprep.subr.bf16.mxu0 0
    %7941 = vmatpush1.bf16.msra.mxu0 0
    %7942 = vmatprep.subr.bf16.mxu0 0
    %7943 = vmatpush1.bf16.msra.mxu0 0
    %7944 = vmatprep.subr.bf16.mxu0 0
    %7945 = vmatpush1.bf16.msra.mxu0 0
    %7946 = vmatprep.subr.bf16.mxu0 0
    %7947 = vmatpush1.bf16.msra.mxu0 0
    %7948 = vmatprep.subr.bf16.mxu0 0
    %7949 = vmatpush1.bf16.msra.mxu0 0
    %7950 = vmatprep.mubr.bf16.mxu0 0
    %7951 = vmatmul.mubr.bf16.gmra.mrb[0].mxu0 %v7852
    %v7952 = vpop.f32.mrb[0].mxu0
    %v7953 = vadd.f32 %v7869, %v7952
    %v7954 = vpop.f32.mrb[0].mxu0
    %v7955 = vpop.f32.mrb[0].mxu0
    %v7956 = vpop.f32.mrb[0].mxu0
    %7957 = vdwg.mxu0
    %7958 = vst [vmem:[#allocation3 + $0x6] sm:$0x1] %v7953
    %v7959 = vld [vmem:[#allocation2 + $0x7] sm:$0xf]
    %v7960 = vpack.c.bf16 %v7959, %v7959
    %v7961 = vld [vmem:[%s7] sm:$0x1]
    %v7962 = vld [vmem:[%s5] sm:$0xf]
    %v7963 = vld [vmem:[%s5 + $0x4] sm:$0xf]
    %v7964 = vld [vmem:[%s5 + $0x8] sm:$0xf]
    %v7965 = vld [vmem:[%s5 + $0xc] sm:$0xf]
    %v7966 = vld [vmem:[%s5 + $0x10] sm:$0xf]
    %v7967 = vld [vmem:[%s5 + $0x14] sm:$0xf]
    %v7968 = vld [vmem:[%s5 + $0x18] sm:$0xf]
    %v7969 = vld [vmem:[%s5 + $0x1c] sm:$0xf]
    %v7970 = vld [vmem:[%s5 + $0x20] sm:$0xf]
    %v7971 = vld [vmem:[%s5 + $0x24] sm:$0xf]
    %v7972 = vld [vmem:[%s5 + $0x28] sm:$0xf]
    %v7973 = vld [vmem:[%s5 + $0x2c] sm:$0xf]
    %v7974 = vld [vmem:[%s5 + $0x30] sm:$0xf]
    %v7975 = vld [vmem:[%s5 + $0x34] sm:$0xf]
    %v7976 = vld [vmem:[%s5 + $0x38] sm:$0xf]
    %v7977 = vld [vmem:[%s5 + $0x3c] sm:$0xf]
    %v7994 = vunpack.c.l.b16 %v7962
    %v7995 = vunpack.c.l.b16 %v7963
    %v7996 = vunpack.c.l.b16 %v7964
    %v7997 = vunpack.c.l.b16 %v7965
    %v7998 = vunpack.c.l.b16 %v7966
    %v7999 = vunpack.c.l.b16 %v7967
    %v8000 = vunpack.c.l.b16 %v7968
    %v8001 = vunpack.c.l.b16 %v7969
    %v8002 = vunpack.c.l.b16 %v7970
    %v8003 = vunpack.c.l.b16 %v7971
    %v8004 = vunpack.c.l.b16 %v7972
    %v8005 = vunpack.c.l.b16 %v7973
    %v8006 = vunpack.c.l.b16 %v7974
    %v8007 = vunpack.c.l.b16 %v7975
    %v8008 = vunpack.c.l.b16 %v7976
    %v8009 = vunpack.c.l.b16 %v7977
    %v8010 = vpack.c.b16 %v7995, %v7994
    %v8011 = vpack.c.b16 %v7997, %v7996
    %v8012 = vpack.c.b16 %v7999, %v7998
    %v8013 = vpack.c.b16 %v8001, %v8000
    %v8014 = vpack.c.b16 %v8003, %v8002
    %v8015 = vpack.c.b16 %v8005, %v8004
    %v8016 = vpack.c.b16 %v8007, %v8006
    %v8017 = vpack.c.b16 %v8009, %v8008
    %8026 = vmatprep.subr.bf16.mxu0 0
    %8027 = vmatpush1.bf16.msra.mxu0 %v8010
    %8028 = vmatprep.subr.bf16.mxu0 0
    %8029 = vmatpush1.bf16.msra.mxu0 %v8011
    %8030 = vmatprep.subr.bf16.mxu0 0
    %8031 = vmatpush1.bf16.msra.mxu0 %v8012
    %8032 = vmatprep.subr.bf16.mxu0 0
    %8033 = vmatpush1.bf16.msra.mxu0 %v8013
    %8034 = vmatprep.subr.bf16.mxu0 0
    %8035 = vmatpush1.bf16.msra.mxu0 %v8014
    %8036 = vmatprep.subr.bf16.mxu0 0
    %8037 = vmatpush1.bf16.msra.mxu0 %v8015
    %8038 = vmatprep.subr.bf16.mxu0 0
    %8039 = vmatpush1.bf16.msra.mxu0 %v8016
    %8040 = vmatprep.subr.bf16.mxu0 0
    %8041 = vmatpush1.bf16.msra.mxu0 %v8017
    %8042 = vmatprep.subr.bf16.mxu0 0
    %8043 = vmatpush1.bf16.msra.mxu0 0
    %8044 = vmatprep.subr.bf16.mxu0 0
    %8045 = vmatpush1.bf16.msra.mxu0 0
    %8046 = vmatprep.subr.bf16.mxu0 0
    %8047 = vmatpush1.bf16.msra.mxu0 0
    %8048 = vmatprep.subr.bf16.mxu0 0
    %8049 = vmatpush1.bf16.msra.mxu0 0
    %8050 = vmatprep.subr.bf16.mxu0 0
    %8051 = vmatpush1.bf16.msra.mxu0 0
    %8052 = vmatprep.subr.bf16.mxu0 0
    %8053 = vmatpush1.bf16.msra.mxu0 0
    %8054 = vmatprep.subr.bf16.mxu0 0
    %8055 = vmatpush1.bf16.msra.mxu0 0
    %8056 = vmatprep.subr.bf16.mxu0 0
    %8057 = vmatpush1.bf16.msra.mxu0 0
    %8058 = vmatprep.mubr.bf16.mxu0 0
    %8059 = vmatmul.mubr.bf16.gmra.mrb[0].mxu0 %v7960
    %v8060 = vpop.f32.mrb[0].mxu0
    %v8061 = vadd.f32 0.0, %v8060
    %v8062 = vpop.f32.mrb[0].mxu0
    %v8063 = vpop.f32.mrb[0].mxu0
    %v8064 = vpop.f32.mrb[0].mxu0
    %8065 = vdwg.mxu0
    %v8066 = vadd.f32 %v7961, %v8061
    %v8067 = vld [vmem:[%s389] sm:$0xf]
    %v8068 = vld [vmem:[%s389 + $0x4] sm:$0xf]
    %v8069 = vld [vmem:[%s389 + $0x8] sm:$0xf]
    %v8070 = vld [vmem:[%s389 + $0xc] sm:$0xf]
    %v8071 = vld [vmem:[%s389 + $0x10] sm:$0xf]
    %v8072 = vld [vmem:[%s389 + $0x14] sm:$0xf]
    %v8073 = vld [vmem:[%s389 + $0x18] sm:$0xf]
    %v8074 = vld [vmem:[%s389 + $0x1c] sm:$0xf]
    %v8075 = vld [vmem:[%s389 + $0x20] sm:$0xf]
    %v8076 = vld [vmem:[%s389 + $0x24] sm:$0xf]
    %v8077 = vld [vmem:[%s389 + $0x28] sm:$0xf]
    %v8078 = vld [vmem:[%s389 + $0x2c] sm:$0xf]
    %v8079 = vld [vmem:[%s389 + $0x30] sm:$0xf]
    %v8080 = vld [vmem:[%s389 + $0x34] sm:$0xf]
    %v8081 = vld [vmem:[%s389 + $0x38] sm:$0xf]
    %v8082 = vld [vmem:[%s389 + $0x3c] sm:$0xf]
    %v8084 = vshrl.u32 %v7960, 16
    %v8103 = vunpack.c.l.b16 %v8067
    %v8104 = vunpack.c.l.b16 %v8068
    %v8105 = vunpack.c.l.b16 %v8069
    %v8106 = vunpack.c.l.b16 %v8070
    %v8107 = vunpack.c.l.b16 %v8071
    %v8108 = vunpack.c.l.b16 %v8072
    %v8109 = vunpack.c.l.b16 %v8073
    %v8110 = vunpack.c.l.b16 %v8074
    %v8111 = vunpack.c.l.b16 %v8075
    %v8112 = vunpack.c.l.b16 %v8076
    %v8113 = vunpack.c.l.b16 %v8077
    %v8114 = vunpack.c.l.b16 %v8078
    %v8115 = vunpack.c.l.b16 %v8079
    %v8116 = vunpack.c.l.b16 %v8080
    %v8117 = vunpack.c.l.b16 %v8081
    %v8118 = vunpack.c.l.b16 %v8082
    %v8119 = vpack.c.b16 %v8104, %v8103
    %v8120 = vpack.c.b16 %v8106, %v8105
    %v8121 = vpack.c.b16 %v8108, %v8107
    %v8122 = vpack.c.b16 %v8110, %v8109
    %v8123 = vpack.c.b16 %v8112, %v8111
    %v8124 = vpack.c.b16 %v8114, %v8113
    %v8125 = vpack.c.b16 %v8116, %v8115
    %v8126 = vpack.c.b16 %v8118, %v8117
    %8135 = vmatprep.subr.bf16.mxu0 0
    %8136 = vmatpush1.bf16.msra.mxu0 %v8119
    %8137 = vmatprep.subr.bf16.mxu0 0
    %8138 = vmatpush1.bf16.msra.mxu0 %v8120
    %8139 = vmatprep.subr.bf16.mxu0 0
    %8140 = vmatpush1.bf16.msra.mxu0 %v8121
    %8141 = vmatprep.subr.bf16.mxu0 0
    %8142 = vmatpush1.bf16.msra.mxu0 %v8122
    %8143 = vmatprep.subr.bf16.mxu0 0
    %8144 = vmatpush1.bf16.msra.mxu0 %v8123
    %8145 = vmatprep.subr.bf16.mxu0 0
    %8146 = vmatpush1.bf16.msra.mxu0 %v8124
    %8147 = vmatprep.subr.bf16.mxu0 0
    %8148 = vmatpush1.bf16.msra.mxu0 %v8125
    %8149 = vmatprep.subr.bf16.mxu0 0
    %8150 = vmatpush1.bf16.msra.mxu0 %v8126
    %8151 = vmatprep.subr.bf16.mxu0 0
    %8152 = vmatpush1.bf16.msra.mxu0 0
    %8153 = vmatprep.subr.bf16.mxu0 0
    %8154 = vmatpush1.bf16.msra.mxu0 0
    %8155 = vmatprep.subr.bf16.mxu0 0
    %8156 = vmatpush1.bf16.msra.mxu0 0
    %8157 = vmatprep.subr.bf16.mxu0 0
    %8158 = vmatpush1.bf16.msra.mxu0 0
    %8159 = vmatprep.subr.bf16.mxu0 0
    %8160 = vmatpush1.bf16.msra.mxu0 0
    %8161 = vmatprep.subr.bf16.mxu0 0
    %8162 = vmatpush1.bf16.msra.mxu0 0
    %8163 = vmatprep.subr.bf16.mxu0 0
    %8164 = vmatpush1.bf16.msra.mxu0 0
    %8165 = vmatprep.subr.bf16.mxu0 0
    %8166 = vmatpush1.bf16.msra.mxu0 0
    %8167 = vmatprep.mubr.bf16.mxu0 0
    %8168 = vmatmul.mubr.bf16.gmra.mrb[0].mxu0 %v8084
    %v8169 = vpop.f32.mrb[0].mxu0
    %v8170 = vadd.f32 0.0, %v8169
    %v8171 = vpop.f32.mrb[0].mxu0
    %v8172 = vpop.f32.mrb[0].mxu0
    %v8173 = vpop.f32.mrb[0].mxu0
    %8174 = vdwg.mxu0
    %v8175 = vadd.f32 %v8066, %v8170
    %v8176 = vld [vmem:[%s499] sm:$0xf]
    %v8177 = vld [vmem:[%s499 + $0x4] sm:$0xf]
    %v8178 = vld [vmem:[%s499 + $0x8] sm:$0xf]
    %v8179 = vld [vmem:[%s499 + $0xc] sm:$0xf]
    %v8180 = vld [vmem:[%s499 + $0x10] sm:$0xf]
    %v8181 = vld [vmem:[%s499 + $0x14] sm:$0xf]
    %v8182 = vld [vmem:[%s499 + $0x18] sm:$0xf]
    %v8183 = vld [vmem:[%s499 + $0x1c] sm:$0xf]
    %v8184 = vld [vmem:[%s499 + $0x20] sm:$0xf]
    %v8185 = vld [vmem:[%s499 + $0x24] sm:$0xf]
    %v8186 = vld [vmem:[%s499 + $0x28] sm:$0xf]
    %v8187 = vld [vmem:[%s499 + $0x2c] sm:$0xf]
    %v8188 = vld [vmem:[%s499 + $0x30] sm:$0xf]
    %v8189 = vld [vmem:[%s499 + $0x34] sm:$0xf]
    %v8190 = vld [vmem:[%s499 + $0x38] sm:$0xf]
    %v8191 = vld [vmem:[%s499 + $0x3c] sm:$0xf]
    %v8193 = vrot.slane %v7960, 1
    %v8211 = vunpack.c.l.b16 %v8176
    %v8212 = vunpack.c.l.b16 %v8177
    %v8213 = vunpack.c.l.b16 %v8178
    %v8214 = vunpack.c.l.b16 %v8179
    %v8215 = vunpack.c.l.b16 %v8180
    %v8216 = vunpack.c.l.b16 %v8181
    %v8217 = vunpack.c.l.b16 %v8182
    %v8218 = vunpack.c.l.b16 %v8183
    %v8219 = vunpack.c.l.b16 %v8184
    %v8220 = vunpack.c.l.b16 %v8185
    %v8221 = vunpack.c.l.b16 %v8186
    %v8222 = vunpack.c.l.b16 %v8187
    %v8223 = vunpack.c.l.b16 %v8188
    %v8224 = vunpack.c.l.b16 %v8189
    %v8225 = vunpack.c.l.b16 %v8190
    %v8226 = vunpack.c.l.b16 %v8191
    %v8227 = vpack.c.b16 %v8212, %v8211
    %v8228 = vpack.c.b16 %v8214, %v8213
    %v8229 = vpack.c.b16 %v8216, %v8215
    %v8230 = vpack.c.b16 %v8218, %v8217
    %v8231 = vpack.c.b16 %v8220, %v8219
    %v8232 = vpack.c.b16 %v8222, %v8221
    %v8233 = vpack.c.b16 %v8224, %v8223
    %v8234 = vpack.c.b16 %v8226, %v8225
    %8243 = vmatprep.subr.bf16.mxu0 0
    %8244 = vmatpush1.bf16.msra.mxu0 %v8227
    %8245 = vmatprep.subr.bf16.mxu0 0
    %8246 = vmatpush1.bf16.msra.mxu0 %v8228
    %8247 = vmatprep.subr.bf16.mxu0 0
    %8248 = vmatpush1.bf16.msra.mxu0 %v8229
    %8249 = vmatprep.subr.bf16.mxu0 0
    %8250 = vmatpush1.bf16.msra.mxu0 %v8230
    %8251 = vmatprep.subr.bf16.mxu0 0
    %8252 = vmatpush1.bf16.msra.mxu0 %v8231
    %8253 = vmatprep.subr.bf16.mxu0 0
    %8254 = vmatpush1.bf16.msra.mxu0 %v8232
    %8255 = vmatprep.subr.bf16.mxu0 0
    %8256 = vmatpush1.bf16.msra.mxu0 %v8233
    %8257 = vmatprep.subr.bf16.mxu0 0
    %8258 = vmatpush1.bf16.msra.mxu0 %v8234
    %8259 = vmatprep.subr.bf16.mxu0 0
    %8260 = vmatpush1.bf16.msra.mxu0 0
    %8261 = vmatprep.subr.bf16.mxu0 0
    %8262 = vmatpush1.bf16.msra.mxu0 0
    %8263 = vmatprep.subr.bf16.mxu0 0
    %8264 = vmatpush1.bf16.msra.mxu0 0
    %8265 = vmatprep.subr.bf16.mxu0 0
    %8266 = vmatpush1.bf16.msra.mxu0 0
    %8267 = vmatprep.subr.bf16.mxu0 0
    %8268 = vmatpush1.bf16.msra.mxu0 0
    %8269 = vmatprep.subr.bf16.mxu0 0
    %8270 = vmatpush1.bf16.msra.mxu0 0
    %8271 = vmatprep.subr.bf16.mxu0 0
    %8272 = vmatpush1.bf16.msra.mxu0 0
    %8273 = vmatprep.subr.bf16.mxu0 0
    %8274 = vmatpush1.bf16.msra.mxu0 0
    %8275 = vmatprep.mubr.bf16.mxu0 0
    %8276 = vmatmul.mubr.bf16.gmra.mrb[0].mxu0 %v8193
    %v8277 = vpop.f32.mrb[0].mxu0
    %v8278 = vadd.f32 0.0, %v8277
    %v8279 = vpop.f32.mrb[0].mxu0
    %v8280 = vpop.f32.mrb[0].mxu0
    %v8281 = vpop.f32.mrb[0].mxu0
    %8282 = vdwg.mxu0
    %v8283 = vadd.f32 %v8175, %v8278
    %v8284 = vld [vmem:[%s608] sm:$0xf]
    %v8285 = vld [vmem:[%s608 + $0x4] sm:$0xf]
    %v8286 = vld [vmem:[%s608 + $0x8] sm:$0xf]
    %v8287 = vld [vmem:[%s608 + $0xc] sm:$0xf]
    %v8288 = vld [vmem:[%s608 + $0x10] sm:$0xf]
    %v8289 = vld [vmem:[%s608 + $0x14] sm:$0xf]
    %v8290 = vld [vmem:[%s608 + $0x18] sm:$0xf]
    %v8291 = vld [vmem:[%s608 + $0x1c] sm:$0xf]
    %v8292 = vld [vmem:[%s608 + $0x20] sm:$0xf]
    %v8293 = vld [vmem:[%s608 + $0x24] sm:$0xf]
    %v8294 = vld [vmem:[%s608 + $0x28] sm:$0xf]
    %v8295 = vld [vmem:[%s608 + $0x2c] sm:$0xf]
    %v8296 = vld [vmem:[%s608 + $0x30] sm:$0xf]
    %v8297 = vld [vmem:[%s608 + $0x34] sm:$0xf]
    %v8298 = vld [vmem:[%s608 + $0x38] sm:$0xf]
    %v8299 = vld [vmem:[%s608 + $0x3c] sm:$0xf]
    %v8300 = vrot.slane %v8084, 1
    %v8318 = vunpack.c.l.b16 %v8284
    %v8319 = vunpack.c.l.b16 %v8285
    %v8320 = vunpack.c.l.b16 %v8286
    %v8321 = vunpack.c.l.b16 %v8287
    %v8322 = vunpack.c.l.b16 %v8288
    %v8323 = vunpack.c.l.b16 %v8289
    %v8324 = vunpack.c.l.b16 %v8290
    %v8325 = vunpack.c.l.b16 %v8291
    %v8326 = vunpack.c.l.b16 %v8292
    %v8327 = vunpack.c.l.b16 %v8293
    %v8328 = vunpack.c.l.b16 %v8294
    %v8329 = vunpack.c.l.b16 %v8295
    %v8330 = vunpack.c.l.b16 %v8296
    %v8331 = vunpack.c.l.b16 %v8297
    %v8332 = vunpack.c.l.b16 %v8298
    %v8333 = vunpack.c.l.b16 %v8299
    %v8334 = vpack.c.b16 %v8319, %v8318
    %v8335 = vpack.c.b16 %v8321, %v8320
    %v8336 = vpack.c.b16 %v8323, %v8322
    %v8337 = vpack.c.b16 %v8325, %v8324
    %v8338 = vpack.c.b16 %v8327, %v8326
    %v8339 = vpack.c.b16 %v8329, %v8328
    %v8340 = vpack.c.b16 %v8331, %v8330
    %v8341 = vpack.c.b16 %v8333, %v8332
    %8350 = vmatprep.subr.bf16.mxu0 0
    %8351 = vmatpush1.bf16.msra.mxu0 %v8334
    %8352 = vmatprep.subr.bf16.mxu0 0
    %8353 = vmatpush1.bf16.msra.mxu0 %v8335
    %8354 = vmatprep.subr.bf16.mxu0 0
    %8355 = vmatpush1.bf16.msra.mxu0 %v8336
    %8356 = vmatprep.subr.bf16.mxu0 0
    %8357 = vmatpush1.bf16.msra.mxu0 %v8337
    %8358 = vmatprep.subr.bf16.mxu0 0
    %8359 = vmatpush1.bf16.msra.mxu0 %v8338
    %8360 = vmatprep.subr.bf16.mxu0 0
    %8361 = vmatpush1.bf16.msra.mxu0 %v8339
    %8362 = vmatprep.subr.bf16.mxu0 0
    %8363 = vmatpush1.bf16.msra.mxu0 %v8340
    %8364 = vmatprep.subr.bf16.mxu0 0
    %8365 = vmatpush1.bf16.msra.mxu0 %v8341
    %8366 = vmatprep.subr.bf16.mxu0 0
    %8367 = vmatpush1.bf16.msra.mxu0 0
    %8368 = vmatprep.subr.bf16.mxu0 0
    %8369 = vmatpush1.bf16.msra.mxu0 0
    %8370 = vmatprep.subr.bf16.mxu0 0
    %8371 = vmatpush1.bf16.msra.mxu0 0
    %8372 = vmatprep.subr.bf16.mxu0 0
    %8373 = vmatpush1.bf16.msra.mxu0 0
    %8374 = vmatprep.subr.bf16.mxu0 0
    %8375 = vmatpush1.bf16.msra.mxu0 0
    %8376 = vmatprep.subr.bf16.mxu0 0
    %8377 = vmatpush1.bf16.msra.mxu0 0
    %8378 = vmatprep.subr.bf16.mxu0 0
    %8379 = vmatpush1.bf16.msra.mxu0 0
    %8380 = vmatprep.subr.bf16.mxu0 0
    %8381 = vmatpush1.bf16.msra.mxu0 0
    %8382 = vmatprep.mubr.bf16.mxu0 0
    %8383 = vmatmul.mubr.bf16.gmra.mrb[0].mxu0 %v8300
    %v8384 = vpop.f32.mrb[0].mxu0
    %v8385 = vadd.f32 0.0, %v8384
    %v8386 = vpop.f32.mrb[0].mxu0
    %v8387 = vpop.f32.mrb[0].mxu0
    %v8388 = vpop.f32.mrb[0].mxu0
    %8389 = vdwg.mxu0
    %v8390 = vadd.f32 %v8283, %v8385
    %v8391 = vmul.f32 %v8390, 0.5
    %v8392 = vmul.f32 %v8390, %v8390
    %v8393 = vmul.f32 %v8392, %v8390
    %v8394 = vmul.f32 %v8393, 0.044715
    %v8395 = vadd.f32 %v8390, %v8394
    %v8396 = vmul.f32 %v8395, 0.7978846
    %v8397 = vtanh.pop %v8396
    %v8398 = vadd.f32 %v8397, 1.0
    %v8399 = vmul.f32 %v8391, %v8398
    %v8400 = vpack.c.bf16 %v8399, %v8399
    %v8401 = vld [vmem:[%s6] sm:$0xf]
    %v8402 = vld [vmem:[%s6 + $0x4] sm:$0xf]
    %v8403 = vld [vmem:[%s6 + $0x8] sm:$0xf]
    %v8404 = vld [vmem:[%s6 + $0xc] sm:$0xf]
    %v8405 = vld [vmem:[%s6 + $0x10] sm:$0xf]
    %v8406 = vld [vmem:[%s6 + $0x14] sm:$0xf]
    %v8407 = vld [vmem:[%s6 + $0x18] sm:$0xf]
    %v8408 = vld [vmem:[%s6 + $0x1c] sm:$0xf]
    %v8409 = vld [vmem:[%s6 + $0x20] sm:$0xf]
    %v8410 = vld [vmem:[%s6 + $0x24] sm:$0xf]
    %v8411 = vld [vmem:[%s6 + $0x28] sm:$0xf]
    %v8412 = vld [vmem:[%s6 + $0x2c] sm:$0xf]
    %v8413 = vld [vmem:[%s6 + $0x30] sm:$0xf]
    %v8414 = vld [vmem:[%s6 + $0x34] sm:$0xf]
    %v8415 = vld [vmem:[%s6 + $0x38] sm:$0xf]
    %v8416 = vld [vmem:[%s6 + $0x3c] sm:$0xf]
    %v8417 = vld [vmem:[%s8] sm:$0x1]
    %v8434 = vunpack.c.l.b16 %v8401
    %v8435 = vunpack.c.l.b16 %v8402
    %v8436 = vunpack.c.l.b16 %v8403
    %v8437 = vunpack.c.l.b16 %v8404
    %v8438 = vunpack.c.l.b16 %v8405
    %v8439 = vunpack.c.l.b16 %v8406
    %v8440 = vunpack.c.l.b16 %v8407
    %v8441 = vunpack.c.l.b16 %v8408
    %v8442 = vunpack.c.l.b16 %v8409
    %v8443 = vunpack.c.l.b16 %v8410
    %v8444 = vunpack.c.l.b16 %v8411
    %v8445 = vunpack.c.l.b16 %v8412
    %v8446 = vunpack.c.l.b16 %v8413
    %v8447 = vunpack.c.l.b16 %v8414
    %v8448 = vunpack.c.l.b16 %v8415
    %v8449 = vunpack.c.l.b16 %v8416
    %v8450 = vpack.c.b16 %v8435, %v8434
    %v8451 = vpack.c.b16 %v8437, %v8436
    %v8452 = vpack.c.b16 %v8439, %v8438
    %v8453 = vpack.c.b16 %v8441, %v8440
    %v8454 = vpack.c.b16 %v8443, %v8442
    %v8455 = vpack.c.b16 %v8445, %v8444
    %v8456 = vpack.c.b16 %v8447, %v8446
    %v8457 = vpack.c.b16 %v8449, %v8448
    %8466 = vmatprep.subr.bf16.mxu0 0
    %8467 = vmatpush1.bf16.msra.mxu0 %v8450
    %8468 = vmatprep.subr.bf16.mxu0 0
    %8469 = vmatpush1.bf16.msra.mxu0 %v8451
    %8470 = vmatprep.subr.bf16.mxu0 0
    %8471 = vmatpush1.bf16.msra.mxu0 %v8452
    %8472 = vmatprep.subr.bf16.mxu0 0
    %8473 = vmatpush1.bf16.msra.mxu0 %v8453
    %8474 = vmatprep.subr.bf16.mxu0 0
    %8475 = vmatpush1.bf16.msra.mxu0 %v8454
    %8476 = vmatprep.subr.bf16.mxu0 0
    %8477 = vmatpush1.bf16.msra.mxu0 %v8455
    %8478 = vmatprep.subr.bf16.mxu0 0
    %8479 = vmatpush1.bf16.msra.mxu0 %v8456
    %8480 = vmatprep.subr.bf16.mxu0 0
    %8481 = vmatpush1.bf16.msra.mxu0 %v8457
    %8482 = vmatprep.subr.bf16.mxu0 0
    %8483 = vmatpush1.bf16.msra.mxu0 0
    %8484 = vmatprep.subr.bf16.mxu0 0
    %8485 = vmatpush1.bf16.msra.mxu0 0
    %8486 = vmatprep.subr.bf16.mxu0 0
    %8487 = vmatpush1.bf16.msra.mxu0 0
    %8488 = vmatprep.subr.bf16.mxu0 0
    %8489 = vmatpush1.bf16.msra.mxu0 0
    %8490 = vmatprep.subr.bf16.mxu0 0
    %8491 = vmatpush1.bf16.msra.mxu0 0
    %8492 = vmatprep.subr.bf16.mxu0 0
    %8493 = vmatpush1.bf16.msra.mxu0 0
    %8494 = vmatprep.subr.bf16.mxu0 0
    %8495 = vmatpush1.bf16.msra.mxu0 0
    %8496 = vmatprep.subr.bf16.mxu0 0
    %8497 = vmatpush1.bf16.msra.mxu0 0
    %8498 = vmatprep.mubr.bf16.mxu0 0
    %8499 = vmatmul.mubr.bf16.gmra.mrb[0].mxu0 %v8400
    %v8500 = vpop.f32.mrb[0].mxu0
    %v8501 = vadd.f32 %v8417, %v8500
    %v8502 = vpop.f32.mrb[0].mxu0
    %v8503 = vpop.f32.mrb[0].mxu0
    %v8504 = vpop.f32.mrb[0].mxu0
    %8505 = vdwg.mxu0
    %8506 = vst [vmem:[#allocation2 + $0xf] sm:$0x1] %v8501
    %v8507 = vld [vmem:[#allocation2 + $0xc] sm:$0xf]
    %v8508 = vpack.c.bf16 %v8507, %v8507
    %v8509 = vld [vmem:[%s11] sm:$0x1]
    %v8510 = vld [vmem:[%s9] sm:$0xf]
    %v8511 = vld [vmem:[%s9 + $0x4] sm:$0xf]
    %v8512 = vld [vmem:[%s9 + $0x8] sm:$0xf]
    %v8513 = vld [vmem:[%s9 + $0xc] sm:$0xf]
    %v8514 = vld [vmem:[%s9 + $0x10] sm:$0xf]
    %v8515 = vld [vmem:[%s9 + $0x14] sm:$0xf]
    %v8516 = vld [vmem:[%s9 + $0x18] sm:$0xf]
    %v8517 = vld [vmem:[%s9 + $0x1c] sm:$0xf]
    %v8518 = vld [vmem:[%s9 + $0x20] sm:$0xf]
    %v8519 = vld [vmem:[%s9 + $0x24] sm:$0xf]
    %v8520 = vld [vmem:[%s9 + $0x28] sm:$0xf]
    %v8521 = vld [vmem:[%s9 + $0x2c] sm:$0xf]
    %v8522 = vld [vmem:[%s9 + $0x30] sm:$0xf]
    %v8523 = vld [vmem:[%s9 + $0x34] sm:$0xf]
    %v8524 = vld [vmem:[%s9 + $0x38] sm:$0xf]
    %v8525 = vld [vmem:[%s9 + $0x3c] sm:$0xf]
    %v8542 = vunpack.c.l.b16 %v8510
    %v8543 = vunpack.c.l.b16 %v8511
    %v8544 = vunpack.c.l.b16 %v8512
    %v8545 = vunpack.c.l.b16 %v8513
    %v8546 = vunpack.c.l.b16 %v8514
    %v8547 = vunpack.c.l.b16 %v8515
    %v8548 = vunpack.c.l.b16 %v8516
    %v8549 = vunpack.c.l.b16 %v8517
    %v8550 = vunpack.c.l.b16 %v8518
    %v8551 = vunpack.c.l.b16 %v8519
    %v8552 = vunpack.c.l.b16 %v8520
    %v8553 = vunpack.c.l.b16 %v8521
    %v8554 = vunpack.c.l.b16 %v8522
    %v8555 = vunpack.c.l.b16 %v8523
    %v8556 = vunpack.c.l.b16 %v8524
    %v8557 = vunpack.c.l.b16 %v8525
    %v8558 = vpack.c.b16 %v8543, %v8542
    %v8559 = vpack.c.b16 %v8545, %v8544
    %v8560 = vpack.c.b16 %v8547, %v8546
    %v8561 = vpack.c.b16 %v8549, %v8548
    %v8562 = vpack.c.b16 %v8551, %v8550
    %v8563 = vpack.c.b16 %v8553, %v8552
    %v8564 = vpack.c.b16 %v8555, %v8554
    %v8565 = vpack.c.b16 %v8557, %v8556
    %8574 = vmatprep.subr.bf16.mxu0 0
    %8575 = vmatpush1.bf16.msra.mxu0 %v8558
    %8576 = vmatprep.subr.bf16.mxu0 0
    %8577 = vmatpush1.bf16.msra.mxu0 %v8559
    %8578 = vmatprep.subr.bf16.mxu0 0
    %8579 = vmatpush1.bf16.msra.mxu0 %v8560
    %8580 = vmatprep.subr.bf16.mxu0 0
    %8581 = vmatpush1.bf16.msra.mxu0 %v8561
    %8582 = vmatprep.subr.bf16.mxu0 0
    %8583 = vmatpush1.bf16.msra.mxu0 %v8562
    %8584 = vmatprep.subr.bf16.mxu0 0
    %8585 = vmatpush1.bf16.msra.mxu0 %v8563
    %8586 = vmatprep.subr.bf16.mxu0 0
    %8587 = vmatpush1.bf16.msra.mxu0 %v8564
    %8588 = vmatprep.subr.bf16.mxu0 0
    %8589 = vmatpush1.bf16.msra.mxu0 %v8565
    %8590 = vmatprep.subr.bf16.mxu0 0
    %8591 = vmatpush1.bf16.msra.mxu0 0
    %8592 = vmatprep.subr.bf16.mxu0 0
    %8593 = vmatpush1.bf16.msra.mxu0 0
    %8594 = vmatprep.subr.bf16.mxu0 0
    %8595 = vmatpush1.bf16.msra.mxu0 0
    %8596 = vmatprep.subr.bf16.mxu0 0
    %8597 = vmatpush1.bf16.msra.mxu0 0
    %8598 = vmatprep.subr.bf16.mxu0 0
    %8599 = vmatpush1.bf16.msra.mxu0 0
    %8600 = vmatprep.subr.bf16.mxu0 0
    %8601 = vmatpush1.bf16.msra.mxu0 0
    %8602 = vmatprep.subr.bf16.mxu0 0
    %8603 = vmatpush1.bf16.msra.mxu0 0
    %8604 = vmatprep.subr.bf16.mxu0 0
    %8605 = vmatpush1.bf16.msra.mxu0 0
    %8606 = vmatprep.mubr.bf16.mxu0 0
    %8607 = vmatmul.mubr.bf16.gmra.mrb[0].mxu0 %v8508
    %v8608 = vpop.f32.mrb[0].mxu0
    %v8609 = vadd.f32 0.0, %v8608
    %v8610 = vpop.f32.mrb[0].mxu0
    %v8611 = vpop.f32.mrb[0].mxu0
    %v8612 = vpop.f32.mrb[0].mxu0
    %8613 = vdwg.mxu0
    %v8614 = vadd.f32 %v8509, %v8609
    %v8615 = vld [vmem:[%s940] sm:$0xf]
    %v8616 = vld [vmem:[%s940 + $0x4] sm:$0xf]
    %v8617 = vld [vmem:[%s940 + $0x8] sm:$0xf]
    %v8618 = vld [vmem:[%s940 + $0xc] sm:$0xf]
    %v8619 = vld [vmem:[%s940 + $0x10] sm:$0xf]
    %v8620 = vld [vmem:[%s940 + $0x14] sm:$0xf]
    %v8621 = vld [vmem:[%s940 + $0x18] sm:$0xf]
    %v8622 = vld [vmem:[%s940 + $0x1c] sm:$0xf]
    %v8623 = vld [vmem:[%s940 + $0x20] sm:$0xf]
    %v8624 = vld [vmem:[%s940 + $0x24] sm:$0xf]
    %v8625 = vld [vmem:[%s940 + $0x28] sm:$0xf]
    %v8626 = vld [vmem:[%s940 + $0x2c] sm:$0xf]
    %v8627 = vld [vmem:[%s940 + $0x30] sm:$0xf]
    %v8628 = vld [vmem:[%s940 + $0x34] sm:$0xf]
    %v8629 = vld [vmem:[%s940 + $0x38] sm:$0xf]
    %v8630 = vld [vmem:[%s940 + $0x3c] sm:$0xf]
    %v8632 = vshrl.u32 %v8508, 16
    %v8651 = vunpack.c.l.b16 %v8615
    %v8652 = vunpack.c.l.b16 %v8616
    %v8653 = vunpack.c.l.b16 %v8617
    %v8654 = vunpack.c.l.b16 %v8618
    %v8655 = vunpack.c.l.b16 %v8619
    %v8656 = vunpack.c.l.b16 %v8620
    %v8657 = vunpack.c.l.b16 %v8621
    %v8658 = vunpack.c.l.b16 %v8622
    %v8659 = vunpack.c.l.b16 %v8623
    %v8660 = vunpack.c.l.b16 %v8624
    %v8661 = vunpack.c.l.b16 %v8625
    %v8662 = vunpack.c.l.b16 %v8626
    %v8663 = vunpack.c.l.b16 %v8627
    %v8664 = vunpack.c.l.b16 %v8628
    %v8665 = vunpack.c.l.b16 %v8629
    %v8666 = vunpack.c.l.b16 %v8630
    %v8667 = vpack.c.b16 %v8652, %v8651
    %v8668 = vpack.c.b16 %v8654, %v8653
    %v8669 = vpack.c.b16 %v8656, %v8655
    %v8670 = vpack.c.b16 %v8658, %v8657
    %v8671 = vpack.c.b16 %v8660, %v8659
    %v8672 = vpack.c.b16 %v8662, %v8661
    %v8673 = vpack.c.b16 %v8664, %v8663
    %v8674 = vpack.c.b16 %v8666, %v8665
    %8683 = vmatprep.subr.bf16.mxu0 0
    %8684 = vmatpush1.bf16.msra.mxu0 %v8667
    %8685 = vmatprep.subr.bf16.mxu0 0
    %8686 = vmatpush1.bf16.msra.mxu0 %v8668
    %8687 = vmatprep.subr.bf16.mxu0 0
    %8688 = vmatpush1.bf16.msra.mxu0 %v8669
    %8689 = vmatprep.subr.bf16.mxu0 0
    %8690 = vmatpush1.bf16.msra.mxu0 %v8670
    %8691 = vmatprep.subr.bf16.mxu0 0
    %8692 = vmatpush1.bf16.msra.mxu0 %v8671
    %8693 = vmatprep.subr.bf16.mxu0 0
    %8694 = vmatpush1.bf16.msra.mxu0 %v8672
    %8695 = vmatprep.subr.bf16.mxu0 0
    %8696 = vmatpush1.bf16.msra.mxu0 %v8673
    %8697 = vmatprep.subr.bf16.mxu0 0
    %8698 = vmatpush1.bf16.msra.mxu0 %v8674
    %8699 = vmatprep.subr.bf16.mxu0 0
    %8700 = vmatpush1.bf16.msra.mxu0 0
    %8701 = vmatprep.subr.bf16.mxu0 0
    %8702 = vmatpush1.bf16.msra.mxu0 0
    %8703 = vmatprep.subr.bf16.mxu0 0
    %8704 = vmatpush1.bf16.msra.mxu0 0
    %8705 = vmatprep.subr.bf16.mxu0 0
    %8706 = vmatpush1.bf16.msra.mxu0 0
    %8707 = vmatprep.subr.bf16.mxu0 0
    %8708 = vmatpush1.bf16.msra.mxu0 0
    %8709 = vmatprep.subr.bf16.mxu0 0
    %8710 = vmatpush1.bf16.msra.mxu0 0
    %8711 = vmatprep.subr.bf16.mxu0 0
    %8712 = vmatpush1.bf16.msra.mxu0 0
    %8713 = vmatprep.subr.bf16.mxu0 0
    %8714 = vmatpush1.bf16.msra.mxu0 0
    %8715 = vmatprep.mubr.bf16.mxu0 0
    %8716 = vmatmul.mubr.bf16.gmra.mrb[0].mxu0 %v8632
    %v8717 = vpop.f32.mrb[0].mxu0
    %v8718 = vadd.f32 0.0, %v8717
    %v8719 = vpop.f32.mrb[0].mxu0
    %v8720 = vpop.f32.mrb[0].mxu0
    %v8721 = vpop.f32.mrb[0].mxu0
    %8722 = vdwg.mxu0
    %v8723 = vadd.f32 %v8614, %v8718
    %v8724 = vld [vmem:[%s1050] sm:$0xf]
    %v8725 = vld [vmem:[%s1050 + $0x4] sm:$0xf]
    %v8726 = vld [vmem:[%s1050 + $0x8] sm:$0xf]
    %v8727 = vld [vmem:[%s1050 + $0xc] sm:$0xf]
    %v8728 = vld [vmem:[%s1050 + $0x10] sm:$0xf]
    %v8729 = vld [vmem:[%s1050 + $0x14] sm:$0xf]
    %v8730 = vld [vmem:[%s1050 + $0x18] sm:$0xf]
    %v8731 = vld [vmem:[%s1050 + $0x1c] sm:$0xf]
    %v8732 = vld [vmem:[%s1050 + $0x20] sm:$0xf]
    %v8733 = vld [vmem:[%s1050 + $0x24] sm:$0xf]
    %v8734 = vld [vmem:[%s1050 + $0x28] sm:$0xf]
    %v8735 = vld [vmem:[%s1050 + $0x2c] sm:$0xf]
    %v8736 = vld [vmem:[%s1050 + $0x30] sm:$0xf]
    %v8737 = vld [vmem:[%s1050 + $0x34] sm:$0xf]
    %v8738 = vld [vmem:[%s1050 + $0x38] sm:$0xf]
    %v8739 = vld [vmem:[%s1050 + $0x3c] sm:$0xf]
    %v8741 = vrot.slane %v8508, 1
    %v8759 = vunpack.c.l.b16 %v8724
    %v8760 = vunpack.c.l.b16 %v8725
    %v8761 = vunpack.c.l.b16 %v8726
    %v8762 = vunpack.c.l.b16 %v8727
    %v8763 = vunpack.c.l.b16 %v8728
    %v8764 = vunpack.c.l.b16 %v8729
    %v8765 = vunpack.c.l.b16 %v8730
    %v8766 = vunpack.c.l.b16 %v8731
    %v8767 = vunpack.c.l.b16 %v8732
    %v8768 = vunpack.c.l.b16 %v8733
    %v8769 = vunpack.c.l.b16 %v8734
    %v8770 = vunpack.c.l.b16 %v8735
    %v8771 = vunpack.c.l.b16 %v8736
    %v8772 = vunpack.c.l.b16 %v8737
    %v8773 = vunpack.c.l.b16 %v8738
    %v8774 = vunpack.c.l.b16 %v8739
    %v8775 = vpack.c.b16 %v8760, %v8759
    %v8776 = vpack.c.b16 %v8762, %v8761
    %v8777 = vpack.c.b16 %v8764, %v8763
    %v8778 = vpack.c.b16 %v8766, %v8765
    %v8779 = vpack.c.b16 %v8768, %v8767
    %v8780 = vpack.c.b16 %v8770, %v8769
    %v8781 = vpack.c.b16 %v8772, %v8771
    %v8782 = vpack.c.b16 %v8774, %v8773
    %8791 = vmatprep.subr.bf16.mxu0 0
    %8792 = vmatpush1.bf16.msra.mxu0 %v8775
    %8793 = vmatprep.subr.bf16.mxu0 0
    %8794 = vmatpush1.bf16.msra.mxu0 %v8776
    %8795 = vmatprep.subr.bf16.mxu0 0
    %8796 = vmatpush1.bf16.msra.mxu0 %v8777
    %8797 = vmatprep.subr.bf16.mxu0 0
    %8798 = vmatpush1.bf16.msra.mxu0 %v8778
    %8799 = vmatprep.subr.bf16.mxu0 0
    %8800 = vmatpush1.bf16.msra.mxu0 %v8779
    %8801 = vmatprep.subr.bf16.mxu0 0
    %8802 = vmatpush1.bf16.msra.mxu0 %v8780
    %8803 = vmatprep.subr.bf16.mxu0 0
    %8804 = vmatpush1.bf16.msra.mxu0 %v8781
    %8805 = vmatprep.subr.bf16.mxu0 0
    %8806 = vmatpush1.bf16.msra.mxu0 %v8782
    %8807 = vmatprep.subr.bf16.mxu0 0
    %8808 = vmatpush1.bf16.msra.mxu0 0
    %8809 = vmatprep.subr.bf16.mxu0 0
    %8810 = vmatpush1.bf16.msra.mxu0 0
    %8811 = vmatprep.subr.bf16.mxu0 0
    %8812 = vmatpush1.bf16.msra.mxu0 0
    %8813 = vmatprep.subr.bf16.mxu0 0
    %8814 = vmatpush1.bf16.msra.mxu0 0
    %8815 = vmatprep.subr.bf16.mxu0 0
    %8816 = vmatpush1.bf16.msra.mxu0 0
    %8817 = vmatprep.subr.bf16.mxu0 0
    %8818 = vmatpush1.bf16.msra.mxu0 0
    %8819 = vmatprep.subr.bf16.mxu0 0
    %8820 = vmatpush1.bf16.msra.mxu0 0
    %8821 = vmatprep.subr.bf16.mxu0 0
    %8822 = vmatpush1.bf16.msra.mxu0 0
    %8823 = vmatprep.mubr.bf16.mxu0 0
    %8824 = vmatmul.mubr.bf16.gmra.mrb[0].mxu0 %v8741
    %v8825 = vpop.f32.mrb[0].mxu0
    %v8826 = vadd.f32 0.0, %v8825
    %v8827 = vpop.f32.mrb[0].mxu0
    %v8828 = vpop.f32.mrb[0].mxu0
    %v8829 = vpop.f32.mrb[0].mxu0
    %8830 = vdwg.mxu0
    %v8831 = vadd.f32 %v8723, %v8826
    %v8832 = vld [vmem:[%s1159] sm:$0xf]
    %v8833 = vld [vmem:[%s1159 + $0x4] sm:$0xf]
    %v8834 = vld [vmem:[%s1159 + $0x8] sm:$0xf]
    %v8835 = vld [vmem:[%s1159 + $0xc] sm:$0xf]
    %v8836 = vld [vmem:[%s1159 + $0x10] sm:$0xf]
    %v8837 = vld [vmem:[%s1159 + $0x14] sm:$0xf]
    %v8838 = vld [vmem:[%s1159 + $0x18] sm:$0xf]
    %v8839 = vld [vmem:[%s1159 + $0x1c] sm:$0xf]
    %v8840 = vld [vmem:[%s1159 + $0x20] sm:$0xf]
    %v8841 = vld [vmem:[%s1159 + $0x24] sm:$0xf]
    %v8842 = vld [vmem:[%s1159 + $0x28] sm:$0xf]
    %v8843 = vld [vmem:[%s1159 + $0x2c] sm:$0xf]
    %v8844 = vld [vmem:[%s1159 + $0x30] sm:$0xf]
    %v8845 = vld [vmem:[%s1159 + $0x34] sm:$0xf]
    %v8846 = vld [vmem:[%s1159 + $0x38] sm:$0xf]
    %v8847 = vld [vmem:[%s1159 + $0x3c] sm:$0xf]
    %v8848 = vrot.slane %v8632, 1
    %v8866 = vunpack.c.l.b16 %v8832
    %v8867 = vunpack.c.l.b16 %v8833
    %v8868 = vunpack.c.l.b16 %v8834
    %v8869 = vunpack.c.l.b16 %v8835
    %v8870 = vunpack.c.l.b16 %v8836
    %v8871 = vunpack.c.l.b16 %v8837
    %v8872 = vunpack.c.l.b16 %v8838
    %v8873 = vunpack.c.l.b16 %v8839
    %v8874 = vunpack.c.l.b16 %v8840
    %v8875 = vunpack.c.l.b16 %v8841
    %v8876 = vunpack.c.l.b16 %v8842
    %v8877 = vunpack.c.l.b16 %v8843
    %v8878 = vunpack.c.l.b16 %v8844
    %v8879 = vunpack.c.l.b16 %v8845
    %v8880 = vunpack.c.l.b16 %v8846
    %v8881 = vunpack.c.l.b16 %v8847
    %v8882 = vpack.c.b16 %v8867, %v8866
    %v8883 = vpack.c.b16 %v8869, %v8868
    %v8884 = vpack.c.b16 %v8871, %v8870
    %v8885 = vpack.c.b16 %v8873, %v8872
    %v8886 = vpack.c.b16 %v8875, %v8874
    %v8887 = vpack.c.b16 %v8877, %v8876
    %v8888 = vpack.c.b16 %v8879, %v8878
    %v8889 = vpack.c.b16 %v8881, %v8880
    %8898 = vmatprep.subr.bf16.mxu0 0
    %8899 = vmatpush1.bf16.msra.mxu0 %v8882
    %8900 = vmatprep.subr.bf16.mxu0 0
    %8901 = vmatpush1.bf16.msra.mxu0 %v8883
    %8902 = vmatprep.subr.bf16.mxu0 0
    %8903 = vmatpush1.bf16.msra.mxu0 %v8884
    %8904 = vmatprep.subr.bf16.mxu0 0
    %8905 = vmatpush1.bf16.msra.mxu0 %v8885
    %8906 = vmatprep.subr.bf16.mxu0 0
    %8907 = vmatpush1.bf16.msra.mxu0 %v8886
    %8908 = vmatprep.subr.bf16.mxu0 0
    %8909 = vmatpush1.bf16.msra.mxu0 %v8887
    %8910 = vmatprep.subr.bf16.mxu0 0
    %8911 = vmatpush1.bf16.msra.mxu0 %v8888
    %8912 = vmatprep.subr.bf16.mxu0 0
    %8913 = vmatpush1.bf16.msra.mxu0 %v8889
    %8914 = vmatprep.subr.bf16.mxu0 0
    %8915 = vmatpush1.bf16.msra.mxu0 0
    %8916 = vmatprep.subr.bf16.mxu0 0
    %8917 = vmatpush1.bf16.msra.mxu0 0
    %8918 = vmatprep.subr.bf16.mxu0 0
    %8919 = vmatpush1.bf16.msra.mxu0 0
    %8920 = vmatprep.subr.bf16.mxu0 0
    %8921 = vmatpush1.bf16.msra.mxu0 0
    %8922 = vmatprep.subr.bf16.mxu0 0
    %8923 = vmatpush1.bf16.msra.mxu0 0
    %8924 = vmatprep.subr.bf16.mxu0 0
    %8925 = vmatpush1.bf16.msra.mxu0 0
    %8926 = vmatprep.subr.bf16.mxu0 0
    %8927 = vmatpush1.bf16.msra.mxu0 0
    %8928 = vmatprep.subr.bf16.mxu0 0
    %8929 = vmatpush1.bf16.msra.mxu0 0
    %8930 = vmatprep.mubr.bf16.mxu0 0
    %8931 = vmatmul.mubr.bf16.gmra.mrb[0].mxu0 %v8848
    %v8932 = vpop.f32.mrb[0].mxu0
    %v8933 = vadd.f32 0.0, %v8932
    %v8934 = vpop.f32.mrb[0].mxu0
    %v8935 = vpop.f32.mrb[0].mxu0
    %v8936 = vpop.f32.mrb[0].mxu0
    %8937 = vdwg.mxu0
    %v8938 = vadd.f32 %v8831, %v8933
    %v8939 = vmul.f32 %v8938, 0.5
    %v8940 = vmul.f32 %v8938, %v8938
    %v8941 = vmul.f32 %v8940, %v8938
    %v8942 = vmul.f32 %v8941, 0.044715
    %v8943 = vadd.f32 %v8938, %v8942
    %v8944 = vmul.f32 %v8943, 0.7978846
    %v8945 = vtanh.pop %v8944
    %v8946 = vadd.f32 %v8945, 1.0
    %v8947 = vmul.f32 %v8939, %v8946
    %v8948 = vpack.c.bf16 %v8947, %v8947
    %v8949 = vld [vmem:[%s10] sm:$0xf]
    %v8950 = vld [vmem:[%s10 + $0x4] sm:$0xf]
    %v8951 = vld [vmem:[%s10 + $0x8] sm:$0xf]
    %v8952 = vld [vmem:[%s10 + $0xc] sm:$0xf]
    %v8953 = vld [vmem:[%s10 + $0x10] sm:$0xf]
    %v8954 = vld [vmem:[%s10 + $0x14] sm:$0xf]
    %v8955 = vld [vmem:[%s10 + $0x18] sm:$0xf]
    %v8956 = vld [vmem:[%s10 + $0x1c] sm:$0xf]
    %v8957 = vld [vmem:[%s10 + $0x20] sm:$0xf]
    %v8958 = vld [vmem:[%s10 + $0x24] sm:$0xf]
    %v8959 = vld [vmem:[%s10 + $0x28] sm:$0xf]
    %v8960 = vld [vmem:[%s10 + $0x2c] sm:$0xf]
    %v8961 = vld [vmem:[%s10 + $0x30] sm:$0xf]
    %v8962 = vld [vmem:[%s10 + $0x34] sm:$0xf]
    %v8963 = vld [vmem:[%s10 + $0x38] sm:$0xf]
    %v8964 = vld [vmem:[%s10 + $0x3c] sm:$0xf]
    %v8965 = vld [vmem:[%s12] sm:$0x1]
    %v8982 = vunpack.c.l.b16 %v8949
    %v8983 = vunpack.c.l.b16 %v8950
    %v8984 = vunpack.c.l.b16 %v8951
    %v8985 = vunpack.c.l.b16 %v8952
    %v8986 = vunpack.c.l.b16 %v8953
    %v8987 = vunpack.c.l.b16 %v8954
    %v8988 = vunpack.c.l.b16 %v8955
    %v8989 = vunpack.c.l.b16 %v8956
    %v8990 = vunpack.c.l.b16 %v8957
    %v8991 = vunpack.c.l.b16 %v8958
    %v8992 = vunpack.c.l.b16 %v8959
    %v8993 = vunpack.c.l.b16 %v8960
    %v8994 = vunpack.c.l.b16 %v8961
    %v8995 = vunpack.c.l.b16 %v8962
    %v8996 = vunpack.c.l.b16 %v8963
    %v8997 = vunpack.c.l.b16 %v8964
    %v8998 = vpack.c.b16 %v8983, %v8982
    %v8999 = vpack.c.b16 %v8985, %v8984
    %v9000 = vpack.c.b16 %v8987, %v8986
    %v9001 = vpack.c.b16 %v8989, %v8988
    %v9002 = vpack.c.b16 %v8991, %v8990
    %v9003 = vpack.c.b16 %v8993, %v8992
    %v9004 = vpack.c.b16 %v8995, %v8994
    %v9005 = vpack.c.b16 %v8997, %v8996
    %9014 = vmatprep.subr.bf16.mxu0 0
    %9015 = vmatpush1.bf16.msra.mxu0 %v8998
    %9016 = vmatprep.subr.bf16.mxu0 0
    %9017 = vmatpush1.bf16.msra.mxu0 %v8999
    %9018 = vmatprep.subr.bf16.mxu0 0
    %9019 = vmatpush1.bf16.msra.mxu0 %v9000
    %9020 = vmatprep.subr.bf16.mxu0 0
    %9021 = vmatpush1.bf16.msra.mxu0 %v9001
    %9022 = vmatprep.subr.bf16.mxu0 0
    %9023 = vmatpush1.bf16.msra.mxu0 %v9002
    %9024 = vmatprep.subr.bf16.mxu0 0
    %9025 = vmatpush1.bf16.msra.mxu0 %v9003
    %9026 = vmatprep.subr.bf16.mxu0 0
    %9027 = vmatpush1.bf16.msra.mxu0 %v9004
    %9028 = vmatprep.subr.bf16.mxu0 0
    %9029 = vmatpush1.bf16.msra.mxu0 %v9005
    %9030 = vmatprep.subr.bf16.mxu0 0
    %9031 = vmatpush1.bf16.msra.mxu0 0
    %9032 = vmatprep.subr.bf16.mxu0 0
    %9033 = vmatpush1.bf16.msra.mxu0 0
    %9034 = vmatprep.subr.bf16.mxu0 0
    %9035 = vmatpush1.bf16.msra.mxu0 0
    %9036 = vmatprep.subr.bf16.mxu0 0
    %9037 = vmatpush1.bf16.msra.mxu0 0
    %9038 = vmatprep.subr.bf16.mxu0 0
    %9039 = vmatpush1.bf16.msra.mxu0 0
    %9040 = vmatprep.subr.bf16.mxu0 0
    %9041 = vmatpush1.bf16.msra.mxu0 0
    %9042 = vmatprep.subr.bf16.mxu0 0
    %9043 = vmatpush1.bf16.msra.mxu0 0
    %9044 = vmatprep.subr.bf16.mxu0 0
    %9045 = vmatpush1.bf16.msra.mxu0 0
    %9046 = vmatprep.mubr.bf16.mxu0 0
    %9047 = vmatmul.mubr.bf16.gmra.mrb[0].mxu0 %v8948
    %v9048 = vpop.f32.mrb[0].mxu0
    %v9049 = vadd.f32 %v8965, %v9048
    %v9050 = vpop.f32.mrb[0].mxu0
    %v9051 = vpop.f32.mrb[0].mxu0
    %v9052 = vpop.f32.mrb[0].mxu0
    %9053 = vdwg.mxu0
    %9054 = vst [vmem:[#allocation3 + $0x7] sm:$0x1] %v9049
    // Predicated region
    $region54: #{music_generator_forward.1} parent=1 // pred_check
      _
    $region55: #{music_generator_forward.1} parent=1 // pred_check_branch
      %9056 = sbr.rel (0) target = $region57
    $region56: #{music_generator_forward.1} parent=1 // pred_region
      %s9058 = ssub.s32 128, 128
      %9059 = vsyncadd [#allocation4], %s9058
      %s9061 = sshll.u32 [#allocation3], 4
      %s9062 = int_to_ptr.vmem [resolvable:$true] %s9061
      %9064 = dma.vmem_to_hbm [thread:$0]  %s9062, 128, %s13, [#allocation4]
    $region57: #{music_generator_forward.1} parent=1 // pred_fallthru
      _
    // Predicated region
    $region58: #{music_generator_forward.1} parent=1 // pred_check
      _
    $region59: #{music_generator_forward.1} parent=1 // pred_check_branch
      %9066 = sbr.rel (0) target = $region61
    $region60: #{music_generator_forward.1} parent=1 // pred_region
      %9067 = dma.done [#allocation4], 128
    $region61: #{music_generator_forward.1} parent=1 // pred_fallthru
      _
    %9068 = vsyncpa [#allocation4], 1

</llo_original>
